<compile_context>
chip_gen: v6e
topology: v6e:2x2x1
jax: 0.10.0
libtpu: 0.0.40
codegen_flags: <defaults>
</compile_context>

<pallas_src>
import jax
import jax.numpy as jnp
from jax.experimental import pallas as pl
from jax.experimental.pallas import tpu as pltpu

EPS = 1e-5


def basic_block_kernel(x_ref, w1_ref, w2_ref, g1_ref, b1_ref, g2_ref, b2_ref,
                       o_ref, p_scr):
    """Fused conv3x3->bn->relu->conv3x3->bn->(+x)->relu.

    x_ref : (N, H, W, C)  f32   input (NHWC)
    w1_ref: (9*C, C)      bf16  conv1 weights, tap-major rows (t*C + cin)
    w2_ref: (9*C, C)      bf16  conv2 weights
    g*/b* : (1, C)        f32   BN gamma / beta
    o_ref : (N, H, W, C)  f32   output
    p_scr : (N, H, W, 9*C) bf16 im2col patch scratch (reused by both convs)
    """
    N, H, W, C = x_ref.shape
    Cout = w1_ref.shape[-1]
    NHW = N * H * W

    # Zero once: the out-of-bounds (halo) positions of every tap stay zero and
    # are identical for both convs, so no re-zeroing is needed before conv2.
    p_scr[...] = jnp.zeros_like(p_scr)

    taps = [(ky, kx) for ky in range(3) for kx in range(3)]

    def fill_patches(img_bf16, cin):
        # img_bf16: (N, H, W, cin) bf16 value. For tap (ky,kx) the patch at
        # output pixel (y,x) is img[y+ky-1, x+kx-1] (zero outside the image).
        for t, (ky, kx) in enumerate(taps):
            dy0, dy1 = max(0, 1 - ky), min(H, H + 1 - ky)
            dx0, dx1 = max(0, 1 - kx), min(W, W + 1 - kx)
            sy0 = dy0 + ky - 1
            sx0 = dx0 + kx - 1
            p_scr[:, dy0:dy1, dx0:dx1, t * cin:(t + 1) * cin] = (
                img_bf16[:, sy0:sy0 + (dy1 - dy0), sx0:sx0 + (dx1 - dx0), :])

    def batchnorm(acc, g_ref, b_ref):
        # Single-pass batch statistics (f32), folded scale/shift.
        inv_n = 1.0 / acc.shape[0]
        s = jnp.sum(acc, axis=0, keepdims=True)
        ss = jnp.sum(acc * acc, axis=0, keepdims=True)
        mean = s * inv_n
        var = jnp.maximum(ss * inv_n - mean * mean, 0.0)
        scale = jax.lax.rsqrt(var + EPS) * g_ref[...]
        shift = b_ref[...] - mean * scale
        return acc * scale + shift

    # ---- conv1 -> bn1 -> relu ----------------------------------------------
    xv = x_ref[...]                                   # (N,H,W,C) f32
    fill_patches(xv.astype(jnp.bfloat16), C)
    patches1 = p_scr[...].reshape(NHW, 9 * C)         # collapse majors (safe)
    acc1 = jnp.dot(patches1, w1_ref[...], preferred_element_type=jnp.float32)
    h = jnp.maximum(batchnorm(acc1, g1_ref, b1_ref), 0.0)     # (NHW, Cout) f32
    # TODO(synk): dropout branch (drop_rate > 0.0) not implemented; default 0.0 skips it.

    # ---- conv2 -> bn2 -> (+x) -> relu --------------------------------------
    fill_patches(h.reshape(N, H, W, Cout).astype(jnp.bfloat16), Cout)
    patches2 = p_scr[...].reshape(NHW, 9 * Cout)
    acc2 = jnp.dot(patches2, w2_ref[...], preferred_element_type=jnp.float32)
    y = batchnorm(acc2, g2_ref, b2_ref) + xv.reshape(NHW, C)  # residual in f32
    o_ref[...] = jnp.maximum(y, 0.0).reshape(N, H, W, Cout)


def basic_block_forward(x_nchw, params):
    """BasicBlock forward. x_nchw: (N, C, H, W) f32, inplanes == planes."""
    w1, g1, b1, w2, g2, b2 = params
    x = jnp.transpose(x_nchw, (0, 2, 3, 1)).astype(jnp.float32)   # NHWC
    N, H, W, C = x.shape
    Cout = w1.shape[-1]
    assert C == Cout, "downsample=None path requires inplanes == planes"

    # (9, Cin, Cout) tap-major -> (9*Cin, Cout), bf16 for the MXU.
    w1f = w1.reshape(9 * C, Cout).astype(jnp.bfloat16)
    w2f = w2.reshape(9 * Cout, Cout).astype(jnp.bfloat16)

    vmem = pl.BlockSpec(memory_space=pltpu.MemorySpace.VMEM)

    out = pl.pallas_call(
        basic_block_kernel,
        out_shape=jax.ShapeDtypeStruct((N, H, W, Cout), jnp.float32),
        in_specs=[vmem, vmem, vmem, vmem, vmem, vmem, vmem],
        out_specs=vmem,
        scratch_shapes=[pltpu.VMEM((N, H, W, 9 * C), jnp.bfloat16)],
        compiler_params=pltpu.CompilerParams(
            vmem_limit_bytes=32 * 1024 * 1024),
    )(x, w1f, w2f, g1, b1, g2, b2)

    return jnp.transpose(out, (0, 3, 1, 2))   # back to NCHW


def init_params(key, inplanes, planes):
    """Deterministic parameter init matching BasicBlock shapes.

    Conv weights are stored tap-major as (9, Cin, Cout) (PyTorch (Cout,Cin,3,3)
    reorganized for the kernel). BN: gamma=1, beta=0 (PyTorch default init)."""
    k1, k2 = jax.random.split(key)
    w1 = jax.random.normal(k1, (9, inplanes, planes), jnp.float32) * 0.1
    w2 = jax.random.normal(k2, (9, planes, planes), jnp.float32) * 0.1
    g1 = jnp.ones((1, planes), jnp.float32)
    b1 = jnp.zeros((1, planes), jnp.float32)
    g2 = jnp.ones((1, planes), jnp.float32)
    b2 = jnp.zeros((1, planes), jnp.float32)
    return (w1, g1, b1, w2, g2, b2)


if __name__ == "__main__":
    key = jax.random.PRNGKey(0)
    kx, kp = jax.random.split(key)

    N, C, H, W = 2, 8, 16, 16          # inplanes == planes (downsample=None)
    x = jax.random.normal(kx, (N, C, H, W), jnp.float32)
    params = init_params(kp, inplanes=C, planes=C)

    out = basic_block_forward(x, params)
    jax.block_until_ready(out)
    assert out.shape == (N, C, H, W)
    print("KERNEL_OK")
</pallas_src>

<mosaic_0001>
module attributes {stable_mosaic.version = 11 : i64} {
  func.func @basic_block_kernel(%arg0: memref<2x16x16x8xf32, #tpu.memory_space<vmem>>, %arg1: memref<72x8xbf16, #tpu.memory_space<vmem>>, %arg2: memref<72x8xbf16, #tpu.memory_space<vmem>>, %arg3: memref<1x8xf32, #tpu.memory_space<vmem>>, %arg4: memref<1x8xf32, #tpu.memory_space<vmem>>, %arg5: memref<1x8xf32, #tpu.memory_space<vmem>>, %arg6: memref<1x8xf32, #tpu.memory_space<vmem>>, %arg7: memref<2x16x16x8xf32, #tpu.memory_space<vmem>>, %arg8: memref<2x16x16x72xbf16, #tpu.memory_space<vmem>>) attributes {dimension_semantics = [], scalar_prefetch = 0 : i64, scratch_operands = 1 : i64, tpu.core_type = #tpu.core_type<tc>} {
    %cst = arith.constant 0.000000e+00 : bf16
    %0 = vector.broadcast %cst : bf16 to vector<2x16x16x72xbf16>
    %c0 = arith.constant 0 : index
    %c0_0 = arith.constant 0 : index
    %c0_1 = arith.constant 0 : index
    %c0_2 = arith.constant 0 : index
    %1 = vector.load %arg8[%c0, %c0_0, %c0_1, %c0_2] : memref<2x16x16x72xbf16, #tpu.memory_space<vmem>>, vector<2x16x16x72xbf16>
    tpu.vector_store %arg8[%c0, %c0_0, %c0_1, %c0_2], %0 {strides = array<i32>} : memref<2x16x16x72xbf16, #tpu.memory_space<vmem>>, vector<2x16x16x72xbf16>,
    %c0_3 = arith.constant 0 : index
    %c0_4 = arith.constant 0 : index
    %c0_5 = arith.constant 0 : index
    %c0_6 = arith.constant 0 : index
    %2 = vector.load %arg0[%c0_3, %c0_4, %c0_5, %c0_6] : memref<2x16x16x8xf32, #tpu.memory_space<vmem>>, vector<2x16x16x8xf32>
    %3 = arith.truncf %2 : vector<2x16x16x8xf32> to vector<2x16x16x8xbf16>
    %4 = vector.extract_strided_slice %3 {offsets = [0, 0, 0, 0], sizes = [2, 15, 15, 8], strides = [1, 1, 1, 1]} : vector<2x16x16x8xbf16> to vector<2x15x15x8xbf16>
    %c0_7 = arith.constant 0 : index
    %c1 = arith.constant 1 : index
    %c1_8 = arith.constant 1 : index
    %c0_9 = arith.constant 0 : index
    %5 = vector.load %arg8[%c0_7, %c1, %c1_8, %c0_9] : memref<2x16x16x72xbf16, #tpu.memory_space<vmem>>, vector<2x15x15x8xbf16>
    tpu.vector_store %arg8[%c0_7, %c1, %c1_8, %c0_9], %4 {strides = array<i32>} : memref<2x16x16x72xbf16, #tpu.memory_space<vmem>>, vector<2x15x15x8xbf16>,
    %6 = vector.extract_strided_slice %3 {offsets = [0, 0, 0, 0], sizes = [2, 15, 16, 8], strides = [1, 1, 1, 1]} : vector<2x16x16x8xbf16> to vector<2x15x16x8xbf16>
    %c0_10 = arith.constant 0 : index
    %c1_11 = arith.constant 1 : index
    %c0_12 = arith.constant 0 : index
    %c8 = arith.constant 8 : index
    %7 = vector.load %arg8[%c0_10, %c1_11, %c0_12, %c8] : memref<2x16x16x72xbf16, #tpu.memory_space<vmem>>, vector<2x15x16x8xbf16>
    tpu.vector_store %arg8[%c0_10, %c1_11, %c0_12, %c8], %6 {strides = array<i32>} : memref<2x16x16x72xbf16, #tpu.memory_space<vmem>>, vector<2x15x16x8xbf16>,
    %8 = vector.extract_strided_slice %3 {offsets = [0, 0, 1, 0], sizes = [2, 15, 15, 8], strides = [1, 1, 1, 1]} : vector<2x16x16x8xbf16> to vector<2x15x15x8xbf16>
    %c0_13 = arith.constant 0 : index
    %c1_14 = arith.constant 1 : index
    %c0_15 = arith.constant 0 : index
    %c16 = arith.constant 16 : index
    %9 = vector.load %arg8[%c0_13, %c1_14, %c0_15, %c16] : memref<2x16x16x72xbf16, #tpu.memory_space<vmem>>, vector<2x15x15x8xbf16>
    tpu.vector_store %arg8[%c0_13, %c1_14, %c0_15, %c16], %8 {strides = array<i32>} : memref<2x16x16x72xbf16, #tpu.memory_space<vmem>>, vector<2x15x15x8xbf16>,
    %10 = vector.extract_strided_slice %3 {offsets = [0, 0, 0, 0], sizes = [2, 16, 15, 8], strides = [1, 1, 1, 1]} : vector<2x16x16x8xbf16> to vector<2x16x15x8xbf16>
    %c0_16 = arith.constant 0 : index
    %c0_17 = arith.constant 0 : index
    %c1_18 = arith.constant 1 : index
    %c24 = arith.constant 24 : index
    %11 = vector.load %arg8[%c0_16, %c0_17, %c1_18, %c24] : memref<2x16x16x72xbf16, #tpu.memory_space<vmem>>, vector<2x16x15x8xbf16>
    tpu.vector_store %arg8[%c0_16, %c0_17, %c1_18, %c24], %10 {strides = array<i32>} : memref<2x16x16x72xbf16, #tpu.memory_space<vmem>>, vector<2x16x15x8xbf16>,
    %c0_19 = arith.constant 0 : index
    %c0_20 = arith.constant 0 : index
    %c0_21 = arith.constant 0 : index
    %c32 = arith.constant 32 : index
    %12 = vector.load %arg8[%c0_19, %c0_20, %c0_21, %c32] : memref<2x16x16x72xbf16, #tpu.memory_space<vmem>>, vector<2x16x16x8xbf16>
    tpu.vector_store %arg8[%c0_19, %c0_20, %c0_21, %c32], %3 {strides = array<i32>} : memref<2x16x16x72xbf16, #tpu.memory_space<vmem>>, vector<2x16x16x8xbf16>,
    %13 = vector.extract_strided_slice %3 {offsets = [0, 0, 1, 0], sizes = [2, 16, 15, 8], strides = [1, 1, 1, 1]} : vector<2x16x16x8xbf16> to vector<2x16x15x8xbf16>
    %c0_22 = arith.constant 0 : index
    %c0_23 = arith.constant 0 : index
    %c0_24 = arith.constant 0 : index
    %c40 = arith.constant 40 : index
    %14 = vector.load %arg8[%c0_22, %c0_23, %c0_24, %c40] : memref<2x16x16x72xbf16, #tpu.memory_space<vmem>>, vector<2x16x15x8xbf16>
    tpu.vector_store %arg8[%c0_22, %c0_23, %c0_24, %c40], %13 {strides = array<i32>} : memref<2x16x16x72xbf16, #tpu.memory_space<vmem>>, vector<2x16x15x8xbf16>,
    %15 = vector.extract_strided_slice %3 {offsets = [0, 1, 0, 0], sizes = [2, 15, 15, 8], strides = [1, 1, 1, 1]} : vector<2x16x16x8xbf16> to vector<2x15x15x8xbf16>
    %c0_25 = arith.constant 0 : index
    %c0_26 = arith.constant 0 : index
    %c1_27 = arith.constant 1 : index
    %c48 = arith.constant 48 : index
    %16 = vector.load %arg8[%c0_25, %c0_26, %c1_27, %c48] : memref<2x16x16x72xbf16, #tpu.memory_space<vmem>>, vector<2x15x15x8xbf16>
    tpu.vector_store %arg8[%c0_25, %c0_26, %c1_27, %c48], %15 {strides = array<i32>} : memref<2x16x16x72xbf16, #tpu.memory_space<vmem>>, vector<2x15x15x8xbf16>,
    %17 = vector.extract_strided_slice %3 {offsets = [0, 1, 0, 0], sizes = [2, 15, 16, 8], strides = [1, 1, 1, 1]} : vector<2x16x16x8xbf16> to vector<2x15x16x8xbf16>
    %c0_28 = arith.constant 0 : index
    %c0_29 = arith.constant 0 : index
    %c0_30 = arith.constant 0 : index
    %c56 = arith.constant 56 : index
    %18 = vector.load %arg8[%c0_28, %c0_29, %c0_30, %c56] : memref<2x16x16x72xbf16, #tpu.memory_space<vmem>>, vector<2x15x16x8xbf16>
    tpu.vector_store %arg8[%c0_28, %c0_29, %c0_30, %c56], %17 {strides = array<i32>} : memref<2x16x16x72xbf16, #tpu.memory_space<vmem>>, vector<2x15x16x8xbf16>,
    %19 = vector.extract_strided_slice %3 {offsets = [0, 1, 1, 0], sizes = [2, 15, 15, 8], strides = [1, 1, 1, 1]} : vector<2x16x16x8xbf16> to vector<2x15x15x8xbf16>
    %c0_31 = arith.constant 0 : index
    %c0_32 = arith.constant 0 : index
    %c0_33 = arith.constant 0 : index
    %c64 = arith.constant 64 : index
    %20 = vector.load %arg8[%c0_31, %c0_32, %c0_33, %c64] : memref<2x16x16x72xbf16, #tpu.memory_space<vmem>>, vector<2x15x15x8xbf16>
    tpu.vector_store %arg8[%c0_31, %c0_32, %c0_33, %c64], %19 {strides = array<i32>} : memref<2x16x16x72xbf16, #tpu.memory_space<vmem>>, vector<2x15x15x8xbf16>,
    %c0_34 = arith.constant 0 : index
    %c0_35 = arith.constant 0 : index
    %c0_36 = arith.constant 0 : index
    %c0_37 = arith.constant 0 : index
    %21 = vector.load %arg8[%c0_34, %c0_35, %c0_36, %c0_37] : memref<2x16x16x72xbf16, #tpu.memory_space<vmem>>, vector<2x16x16x72xbf16>
    %22 = vector.shape_cast %21 : vector<2x16x16x72xbf16> to vector<512x72xbf16>
    %c0_38 = arith.constant 0 : index
    %c0_39 = arith.constant 0 : index
    %23 = vector.load %arg1[%c0_38, %c0_39] : memref<72x8xbf16, #tpu.memory_space<vmem>>, vector<72x8xbf16>
    %cst_40 = arith.constant dense<0.000000e+00> : vector<512x8xf32>
    %24 = tpu.matmul %22, %23, %cst_40 {dimension_numbers = #tpu.dot_dimension_numbers<[1], [0], [0], [1], [0, 0, 1, 1], [], []>} : vector<512x72xbf16>, vector<72x8xbf16>, vector<512x8xf32> -> vector<512x8xf32>
    %cst_41 = arith.constant dense<0.000000e+00> : vector<8xf32>
    %25 = vector.multi_reduction <add>, %24, %cst_41 [0] : vector<512x8xf32> to vector<8xf32>
    %26 = vector.shape_cast %25 : vector<8xf32> to vector<1x8xf32>
    %27 = arith.mulf %24, %24 : vector<512x8xf32>
    %cst_42 = arith.constant dense<0.000000e+00> : vector<8xf32>
    %28 = vector.multi_reduction <add>, %27, %cst_42 [0] : vector<512x8xf32> to vector<8xf32>
    %29 = vector.shape_cast %28 : vector<8xf32> to vector<1x8xf32>
    %cst_43 = arith.constant 0.001953125 : f32
    %30 = vector.broadcast %cst_43 : f32 to vector<1x8xf32>
    %31 = arith.mulf %26, %30 : vector<1x8xf32>
    %cst_44 = arith.constant 0.001953125 : f32
    %32 = vector.broadcast %cst_44 : f32 to vector<1x8xf32>
    %33 = arith.mulf %29, %32 : vector<1x8xf32>
    %34 = arith.mulf %31, %31 : vector<1x8xf32>
    %35 = arith.subf %33, %34 : vector<1x8xf32>
    %cst_45 = arith.constant 0.000000e+00 : f32
    %36 = vector.broadcast %cst_45 : f32 to vector<1x8xf32>
    %37 = arith.maximumf %35, %36 : vector<1x8xf32>
    %cst_46 = arith.constant 9.99999974E-6 : f32
    %38 = vector.broadcast %cst_46 : f32 to vector<1x8xf32>
    %39 = arith.addf %37, %38 : vector<1x8xf32>
    %40 = math.rsqrt %39 : vector<1x8xf32>
    %c0_47 = arith.constant 0 : index
    %c0_48 = arith.constant 0 : index
    %41 = vector.load %arg3[%c0_47, %c0_48] : memref<1x8xf32, #tpu.memory_space<vmem>>, vector<1x8xf32>
    %42 = arith.mulf %40, %41 : vector<1x8xf32>
    %c0_49 = arith.constant 0 : index
    %c0_50 = arith.constant 0 : index
    %43 = vector.load %arg4[%c0_49, %c0_50] : memref<1x8xf32, #tpu.memory_space<vmem>>, vector<1x8xf32>
    %44 = arith.mulf %31, %42 : vector<1x8xf32>
    %45 = arith.subf %43, %44 : vector<1x8xf32>
    %46 = vector.broadcast %42 : vector<1x8xf32> to vector<512x8xf32>
    %47 = arith.mulf %24, %46 : vector<512x8xf32>
    %48 = vector.broadcast %45 : vector<1x8xf32> to vector<512x8xf32>
    %49 = arith.addf %47, %48 : vector<512x8xf32>
    %cst_51 = arith.constant 0.000000e+00 : f32
    %50 = vector.broadcast %cst_51 : f32 to vector<512x8xf32>
    %51 = arith.maximumf %49, %50 : vector<512x8xf32>
    %52 = vector.shape_cast %51 : vector<512x8xf32> to vector<2x16x16x8xf32>
    %53 = arith.truncf %52 : vector<2x16x16x8xf32> to vector<2x16x16x8xbf16>
    %54 = vector.extract_strided_slice %53 {offsets = [0, 0, 0, 0], sizes = [2, 15, 15, 8], strides = [1, 1, 1, 1]} : vector<2x16x16x8xbf16> to vector<2x15x15x8xbf16>
    %c0_52 = arith.constant 0 : index
    %c1_53 = arith.constant 1 : index
    %c1_54 = arith.constant 1 : index
    %c0_55 = arith.constant 0 : index
    %55 = vector.load %arg8[%c0_52, %c1_53, %c1_54, %c0_55] : memref<2x16x16x72xbf16, #tpu.memory_space<vmem>>, vector<2x15x15x8xbf16>
    tpu.vector_store %arg8[%c0_52, %c1_53, %c1_54, %c0_55], %54 {strides = array<i32>} : memref<2x16x16x72xbf16, #tpu.memory_space<vmem>>, vector<2x15x15x8xbf16>,
    %56 = vector.extract_strided_slice %53 {offsets = [0, 0, 0, 0], sizes = [2, 15, 16, 8], strides = [1, 1, 1, 1]} : vector<2x16x16x8xbf16> to vector<2x15x16x8xbf16>
    %c0_56 = arith.constant 0 : index
    %c1_57 = arith.constant 1 : index
    %c0_58 = arith.constant 0 : index
    %c8_59 = arith.constant 8 : index
    %57 = vector.load %arg8[%c0_56, %c1_57, %c0_58, %c8_59] : memref<2x16x16x72xbf16, #tpu.memory_space<vmem>>, vector<2x15x16x8xbf16>
    tpu.vector_store %arg8[%c0_56, %c1_57, %c0_58, %c8_59], %56 {strides = array<i32>} : memref<2x16x16x72xbf16, #tpu.memory_space<vmem>>, vector<2x15x16x8xbf16>,
    %58 = vector.extract_strided_slice %53 {offsets = [0, 0, 1, 0], sizes = [2, 15, 15, 8], strides = [1, 1, 1, 1]} : vector<2x16x16x8xbf16> to vector<2x15x15x8xbf16>
    %c0_60 = arith.constant 0 : index
    %c1_61 = arith.constant 1 : index
    %c0_62 = arith.constant 0 : index
    %c16_63 = arith.constant 16 : index
    %59 = vector.load %arg8[%c0_60, %c1_61, %c0_62, %c16_63] : memref<2x16x16x72xbf16, #tpu.memory_space<vmem>>, vector<2x15x15x8xbf16>
    tpu.vector_store %arg8[%c0_60, %c1_61, %c0_62, %c16_63], %58 {strides = array<i32>} : memref<2x16x16x72xbf16, #tpu.memory_space<vmem>>, vector<2x15x15x8xbf16>,
    %60 = vector.extract_strided_slice %53 {offsets = [0, 0, 0, 0], sizes = [2, 16, 15, 8], strides = [1, 1, 1, 1]} : vector<2x16x16x8xbf16> to vector<2x16x15x8xbf16>
    %c0_64 = arith.constant 0 : index
    %c0_65 = arith.constant 0 : index
    %c1_66 = arith.constant 1 : index
    %c24_67 = arith.constant 24 : index
    %61 = vector.load %arg8[%c0_64, %c0_65, %c1_66, %c24_67] : memref<2x16x16x72xbf16, #tpu.memory_space<vmem>>, vector<2x16x15x8xbf16>
    tpu.vector_store %arg8[%c0_64, %c0_65, %c1_66, %c24_67], %60 {strides = array<i32>} : memref<2x16x16x72xbf16, #tpu.memory_space<vmem>>, vector<2x16x15x8xbf16>,
    %c0_68 = arith.constant 0 : index
    %c0_69 = arith.constant 0 : index
    %c0_70 = arith.constant 0 : index
    %c32_71 = arith.constant 32 : index
    %62 = vector.load %arg8[%c0_68, %c0_69, %c0_70, %c32_71] : memref<2x16x16x72xbf16, #tpu.memory_space<vmem>>, vector<2x16x16x8xbf16>
    tpu.vector_store %arg8[%c0_68, %c0_69, %c0_70, %c32_71], %53 {strides = array<i32>} : memref<2x16x16x72xbf16, #tpu.memory_space<vmem>>, vector<2x16x16x8xbf16>,
    %63 = vector.extract_strided_slice %53 {offsets = [0, 0, 1, 0], sizes = [2, 16, 15, 8], strides = [1, 1, 1, 1]} : vector<2x16x16x8xbf16> to vector<2x16x15x8xbf16>
    %c0_72 = arith.constant 0 : index
    %c0_73 = arith.constant 0 : index
    %c0_74 = arith.constant 0 : index
    %c40_75 = arith.constant 40 : index
    %64 = vector.load %arg8[%c0_72, %c0_73, %c0_74, %c40_75] : memref<2x16x16x72xbf16, #tpu.memory_space<vmem>>, vector<2x16x15x8xbf16>
    tpu.vector_store %arg8[%c0_72, %c0_73, %c0_74, %c40_75], %63 {strides = array<i32>} : memref<2x16x16x72xbf16, #tpu.memory_space<vmem>>, vector<2x16x15x8xbf16>,
    %65 = vector.extract_strided_slice %53 {offsets = [0, 1, 0, 0], sizes = [2, 15, 15, 8], strides = [1, 1, 1, 1]} : vector<2x16x16x8xbf16> to vector<2x15x15x8xbf16>
    %c0_76 = arith.constant 0 : index
    %c0_77 = arith.constant 0 : index
    %c1_78 = arith.constant 1 : index
    %c48_79 = arith.constant 48 : index
    %66 = vector.load %arg8[%c0_76, %c0_77, %c1_78, %c48_79] : memref<2x16x16x72xbf16, #tpu.memory_space<vmem>>, vector<2x15x15x8xbf16>
    tpu.vector_store %arg8[%c0_76, %c0_77, %c1_78, %c48_79], %65 {strides = array<i32>} : memref<2x16x16x72xbf16, #tpu.memory_space<vmem>>, vector<2x15x15x8xbf16>,
    %67 = vector.extract_strided_slice %53 {offsets = [0, 1, 0, 0], sizes = [2, 15, 16, 8], strides = [1, 1, 1, 1]} : vector<2x16x16x8xbf16> to vector<2x15x16x8xbf16>
    %c0_80 = arith.constant 0 : index
    %c0_81 = arith.constant 0 : index
    %c0_82 = arith.constant 0 : index
    %c56_83 = arith.constant 56 : index
    %68 = vector.load %arg8[%c0_80, %c0_81, %c0_82, %c56_83] : memref<2x16x16x72xbf16, #tpu.memory_space<vmem>>, vector<2x15x16x8xbf16>
    tpu.vector_store %arg8[%c0_80, %c0_81, %c0_82, %c56_83], %67 {strides = array<i32>} : memref<2x16x16x72xbf16, #tpu.memory_space<vmem>>, vector<2x15x16x8xbf16>,
    %69 = vector.extract_strided_slice %53 {offsets = [0, 1, 1, 0], sizes = [2, 15, 15, 8], strides = [1, 1, 1, 1]} : vector<2x16x16x8xbf16> to vector<2x15x15x8xbf16>
    %c0_84 = arith.constant 0 : index
    %c0_85 = arith.constant 0 : index
    %c0_86 = arith.constant 0 : index
    %c64_87 = arith.constant 64 : index
    %70 = vector.load %arg8[%c0_84, %c0_85, %c0_86, %c64_87] : memref<2x16x16x72xbf16, #tpu.memory_space<vmem>>, vector<2x15x15x8xbf16>
    tpu.vector_store %arg8[%c0_84, %c0_85, %c0_86, %c64_87], %69 {strides = array<i32>} : memref<2x16x16x72xbf16, #tpu.memory_space<vmem>>, vector<2x15x15x8xbf16>,
    %c0_88 = arith.constant 0 : index
    %c0_89 = arith.constant 0 : index
    %c0_90 = arith.constant 0 : index
    %c0_91 = arith.constant 0 : index
    %71 = vector.load %arg8[%c0_88, %c0_89, %c0_90, %c0_91] : memref<2x16x16x72xbf16, #tpu.memory_space<vmem>>, vector<2x16x16x72xbf16>
    %72 = vector.shape_cast %71 : vector<2x16x16x72xbf16> to vector<512x72xbf16>
    %c0_92 = arith.constant 0 : index
    %c0_93 = arith.constant 0 : index
    %73 = vector.load %arg2[%c0_92, %c0_93] : memref<72x8xbf16, #tpu.memory_space<vmem>>, vector<72x8xbf16>
    %cst_94 = arith.constant dense<0.000000e+00> : vector<512x8xf32>
    %74 = tpu.matmul %72, %73, %cst_94 {dimension_numbers = #tpu.dot_dimension_numbers<[1], [0], [0], [1], [0, 0, 1, 1], [], []>} : vector<512x72xbf16>, vector<72x8xbf16>, vector<512x8xf32> -> vector<512x8xf32>
    %cst_95 = arith.constant dense<0.000000e+00> : vector<8xf32>
    %75 = vector.multi_reduction <add>, %74, %cst_95 [0] : vector<512x8xf32> to vector<8xf32>
    %76 = vector.shape_cast %75 : vector<8xf32> to vector<1x8xf32>
    %77 = arith.mulf %74, %74 : vector<512x8xf32>
    %cst_96 = arith.constant dense<0.000000e+00> : vector<8xf32>
    %78 = vector.multi_reduction <add>, %77, %cst_96 [0] : vector<512x8xf32> to vector<8xf32>
    %79 = vector.shape_cast %78 : vector<8xf32> to vector<1x8xf32>
    %cst_97 = arith.constant 0.001953125 : f32
    %80 = vector.broadcast %cst_97 : f32 to vector<1x8xf32>
    %81 = arith.mulf %76, %80 : vector<1x8xf32>
    %cst_98 = arith.constant 0.001953125 : f32
    %82 = vector.broadcast %cst_98 : f32 to vector<1x8xf32>
    %83 = arith.mulf %79, %82 : vector<1x8xf32>
    %84 = arith.mulf %81, %81 : vector<1x8xf32>
    %85 = arith.subf %83, %84 : vector<1x8xf32>
    %cst_99 = arith.constant 0.000000e+00 : f32
    %86 = vector.broadcast %cst_99 : f32 to vector<1x8xf32>
    %87 = arith.maximumf %85, %86 : vector<1x8xf32>
    %cst_100 = arith.constant 9.99999974E-6 : f32
    %88 = vector.broadcast %cst_100 : f32 to vector<1x8xf32>
    %89 = arith.addf %87, %88 : vector<1x8xf32>
    %90 = math.rsqrt %89 : vector<1x8xf32>
    %c0_101 = arith.constant 0 : index
    %c0_102 = arith.constant 0 : index
    %91 = vector.load %arg5[%c0_101, %c0_102] : memref<1x8xf32, #tpu.memory_space<vmem>>, vector<1x8xf32>
    %92 = arith.mulf %90, %91 : vector<1x8xf32>
    %c0_103 = arith.constant 0 : index
    %c0_104 = arith.constant 0 : index
    %93 = vector.load %arg6[%c0_103, %c0_104] : memref<1x8xf32, #tpu.memory_space<vmem>>, vector<1x8xf32>
    %94 = arith.mulf %81, %92 : vector<1x8xf32>
    %95 = arith.subf %93, %94 : vector<1x8xf32>
    %96 = vector.broadcast %92 : vector<1x8xf32> to vector<512x8xf32>
    %97 = arith.mulf %74, %96 : vector<512x8xf32>
    %98 = vector.broadcast %95 : vector<1x8xf32> to vector<512x8xf32>
    %99 = arith.addf %97, %98 : vector<512x8xf32>
    %100 = vector.shape_cast %2 : vector<2x16x16x8xf32> to vector<512x8xf32>
    %101 = arith.addf %99, %100 : vector<512x8xf32>
    %cst_105 = arith.constant 0.000000e+00 : f32
    %102 = vector.broadcast %cst_105 : f32 to vector<512x8xf32>
    %103 = arith.maximumf %101, %102 : vector<512x8xf32>
    %104 = vector.shape_cast %103 : vector<512x8xf32> to vector<2x16x16x8xf32>
    %c0_106 = arith.constant 0 : index
    %c0_107 = arith.constant 0 : index
    %c0_108 = arith.constant 0 : index
    %c0_109 = arith.constant 0 : index
    %105 = vector.load %arg7[%c0_106, %c0_107, %c0_108, %c0_109] : memref<2x16x16x8xf32, #tpu.memory_space<vmem>>, vector<2x16x16x8xf32>
    tpu.vector_store %arg7[%c0_106, %c0_107, %c0_108, %c0_109], %104 {strides = array<i32>} : memref<2x16x16x8xf32, #tpu.memory_space<vmem>>, vector<2x16x16x8xf32>,
    return
  }
}

</mosaic_0001>

<llo_original>
// kernel: tpu_custom_call.1
$region0: #{tpu_custom_call.1}
  #allocation0 [shape = 'u32[]', space=smem, size = 0x4, offset = 0x4, fixed_abs, tag = 'smem constant byte address 0x4 - core index']
  #allocation1 [shape = 'u32[144,128]{1,0:T(1,128)}', space=vmem, size = 0x12000, scoped, tag = 'internal scratch']
  #allocation2 [shape = 'bf16[2,16,16,72]{3,2,1,0:T(8,128)(2,1)}', space=vmem, size = 0x20000, scoped, tag = 'scratch operand']
  %s0 = inlined_call_operand.vmem [shape: f32[2,16,16,8], index: 0, kind: input, shape index: {}]
  %s1 = inlined_call_operand.vmem [shape: bf16[72,8], index: 1, kind: input, shape index: {}]
  %s2 = inlined_call_operand.vmem [shape: bf16[72,8], index: 2, kind: input, shape index: {}]
  %s3 = inlined_call_operand.vmem [shape: f32[1,8], index: 3, kind: input, shape index: {}]
  %s4 = inlined_call_operand.vmem [shape: f32[1,8], index: 4, kind: input, shape index: {}]
  %s5 = inlined_call_operand.vmem [shape: f32[1,8], index: 5, kind: input, shape index: {}]
  %s6 = inlined_call_operand.vmem [shape: f32[1,8], index: 6, kind: input, shape index: {}]
  %s7 = inlined_call_operand.vmem [shape: f32[2,16,16,8], index: 7, kind: output, shape index: {}]
  %s8 = sld [smem:[#allocation0]]
  $region38: #{tpu_custom_call.1} parent=0
    _
  %s10 = ssub.s32 1, %s8
  %s11 = scalar_select 0, %s10, %s8
  // Predicated region
  $region2: #{tpu_custom_call.1} parent=0 // pred_check
    _
  $region3: #{tpu_custom_call.1} parent=0 // pred_check_branch
    %13 = sbr.rel (0) target = $region5
  $region4: #{tpu_custom_call.1} parent=0 // pred_region
    _
  $region5: #{tpu_custom_call.1} parent=0 // pred_fallthru
    _
  // Predicated region
  $region6: #{tpu_custom_call.1} parent=0 // pred_check
    _
  $region7: #{tpu_custom_call.1} parent=0 // pred_check_branch
    %15 = sbr.rel (0) target = $region9
  $region8: #{tpu_custom_call.1} parent=0 // pred_region
    _
  $region9: #{tpu_custom_call.1} parent=0 // pred_fallthru
    _
  // Predicated region
  $region10: #{tpu_custom_call.1} parent=0 // pred_check
    _
  $region11: #{tpu_custom_call.1} parent=0 // pred_check_branch
    %17 = sbr.rel (0) target = $region13
  $region12: #{tpu_custom_call.1} parent=0 // pred_region
    _
  $region13: #{tpu_custom_call.1} parent=0 // pred_fallthru
    _
  // Predicated region
  $region14: #{tpu_custom_call.1} parent=0 // pred_check
    _
  $region15: #{tpu_custom_call.1} parent=0 // pred_check_branch
    %19 = sbr.rel (0) target = $region17
  $region16: #{tpu_custom_call.1} parent=0 // pred_region
    _
  $region17: #{tpu_custom_call.1} parent=0 // pred_fallthru
    _
  // Predicated region
  $region18: #{tpu_custom_call.1} parent=0 // pred_check
    _
  $region19: #{tpu_custom_call.1} parent=0 // pred_check_branch
    %21 = sbr.rel (0) target = $region21
  $region20: #{tpu_custom_call.1} parent=0 // pred_region
    _
  $region21: #{tpu_custom_call.1} parent=0 // pred_fallthru
    _
  // Predicated region
  $region22: #{tpu_custom_call.1} parent=0 // pred_check
    _
  $region23: #{tpu_custom_call.1} parent=0 // pred_check_branch
    %23 = sbr.rel (0) target = $region25
  $region24: #{tpu_custom_call.1} parent=0 // pred_region
    _
  $region25: #{tpu_custom_call.1} parent=0 // pred_fallthru
    _
  // Predicated region
  $region26: #{tpu_custom_call.1} parent=0 // pred_check
    _
  $region27: #{tpu_custom_call.1} parent=0 // pred_check_branch
    %25 = sbr.rel (0) target = $region29
  $region28: #{tpu_custom_call.1} parent=0 // pred_region
    _
  $region29: #{tpu_custom_call.1} parent=0 // pred_fallthru
    _
  %vm27 = vcmask 584704
  %28 = vst.msk [vmem:[#allocation2] sm:$0xf] %vm27, 0
  %29 = vst.msk [vmem:[#allocation2 + $0x4] sm:$0xf] %vm27, 0
  %30 = vst.msk [vmem:[#allocation2 + $0x8] sm:$0xf] %vm27, 0
  %31 = vst.msk [vmem:[#allocation2 + $0xc] sm:$0xf] %vm27, 0
  %32 = vst.msk [vmem:[#allocation2 + $0x10] sm:$0xf] %vm27, 0
  %33 = vst.msk [vmem:[#allocation2 + $0x14] sm:$0xf] %vm27, 0
  %34 = vst.msk [vmem:[#allocation2 + $0x18] sm:$0xf] %vm27, 0
  %35 = vst.msk [vmem:[#allocation2 + $0x1c] sm:$0xf] %vm27, 0
  %36 = vst.msk [vmem:[#allocation2 + $0x20] sm:$0xf] %vm27, 0
  %37 = vst.msk [vmem:[#allocation2 + $0x24] sm:$0xf] %vm27, 0
  %38 = vst.msk [vmem:[#allocation2 + $0x28] sm:$0xf] %vm27, 0
  %39 = vst.msk [vmem:[#allocation2 + $0x2c] sm:$0xf] %vm27, 0
  %40 = vst.msk [vmem:[#allocation2 + $0x30] sm:$0xf] %vm27, 0
  %41 = vst.msk [vmem:[#allocation2 + $0x34] sm:$0xf] %vm27, 0
  %42 = vst.msk [vmem:[#allocation2 + $0x38] sm:$0xf] %vm27, 0
  %43 = vst.msk [vmem:[#allocation2 + $0x3c] sm:$0xf] %vm27, 0
  %44 = vst.msk [vmem:[#allocation2 + $0x40] sm:$0xf] %vm27, 0
  %45 = vst.msk [vmem:[#allocation2 + $0x44] sm:$0xf] %vm27, 0
  %46 = vst.msk [vmem:[#allocation2 + $0x48] sm:$0xf] %vm27, 0
  %47 = vst.msk [vmem:[#allocation2 + $0x4c] sm:$0xf] %vm27, 0
  %48 = vst.msk [vmem:[#allocation2 + $0x50] sm:$0xf] %vm27, 0
  %49 = vst.msk [vmem:[#allocation2 + $0x54] sm:$0xf] %vm27, 0
  %50 = vst.msk [vmem:[#allocation2 + $0x58] sm:$0xf] %vm27, 0
  %51 = vst.msk [vmem:[#allocation2 + $0x5c] sm:$0xf] %vm27, 0
  %52 = vst.msk [vmem:[#allocation2 + $0x60] sm:$0xf] %vm27, 0
  %53 = vst.msk [vmem:[#allocation2 + $0x64] sm:$0xf] %vm27, 0
  %54 = vst.msk [vmem:[#allocation2 + $0x68] sm:$0xf] %vm27, 0
  %55 = vst.msk [vmem:[#allocation2 + $0x6c] sm:$0xf] %vm27, 0
  %56 = vst.msk [vmem:[#allocation2 + $0x70] sm:$0xf] %vm27, 0
  %57 = vst.msk [vmem:[#allocation2 + $0x74] sm:$0xf] %vm27, 0
  %58 = vst.msk [vmem:[#allocation2 + $0x78] sm:$0xf] %vm27, 0
  %59 = vst.msk [vmem:[#allocation2 + $0x7c] sm:$0xf] %vm27, 0
  %60 = vst.msk [vmem:[#allocation2 + $0x80] sm:$0xf] %vm27, 0
  %61 = vst.msk [vmem:[#allocation2 + $0x84] sm:$0xf] %vm27, 0
  %62 = vst.msk [vmem:[#allocation2 + $0x88] sm:$0xf] %vm27, 0
  %63 = vst.msk [vmem:[#allocation2 + $0x8c] sm:$0xf] %vm27, 0
  %64 = vst.msk [vmem:[#allocation2 + $0x90] sm:$0xf] %vm27, 0
  %65 = vst.msk [vmem:[#allocation2 + $0x94] sm:$0xf] %vm27, 0
  %66 = vst.msk [vmem:[#allocation2 + $0x98] sm:$0xf] %vm27, 0
  %67 = vst.msk [vmem:[#allocation2 + $0x9c] sm:$0xf] %vm27, 0
  %68 = vst.msk [vmem:[#allocation2 + $0xa0] sm:$0xf] %vm27, 0
  %69 = vst.msk [vmem:[#allocation2 + $0xa4] sm:$0xf] %vm27, 0
  %70 = vst.msk [vmem:[#allocation2 + $0xa8] sm:$0xf] %vm27, 0
  %71 = vst.msk [vmem:[#allocation2 + $0xac] sm:$0xf] %vm27, 0
  %72 = vst.msk [vmem:[#allocation2 + $0xb0] sm:$0xf] %vm27, 0
  %73 = vst.msk [vmem:[#allocation2 + $0xb4] sm:$0xf] %vm27, 0
  %74 = vst.msk [vmem:[#allocation2 + $0xb8] sm:$0xf] %vm27, 0
  %75 = vst.msk [vmem:[#allocation2 + $0xbc] sm:$0xf] %vm27, 0
  %76 = vst.msk [vmem:[#allocation2 + $0xc0] sm:$0xf] %vm27, 0
  %77 = vst.msk [vmem:[#allocation2 + $0xc4] sm:$0xf] %vm27, 0
  %78 = vst.msk [vmem:[#allocation2 + $0xc8] sm:$0xf] %vm27, 0
  %79 = vst.msk [vmem:[#allocation2 + $0xcc] sm:$0xf] %vm27, 0
  %80 = vst.msk [vmem:[#allocation2 + $0xd0] sm:$0xf] %vm27, 0
  %81 = vst.msk [vmem:[#allocation2 + $0xd4] sm:$0xf] %vm27, 0
  %82 = vst.msk [vmem:[#allocation2 + $0xd8] sm:$0xf] %vm27, 0
  %83 = vst.msk [vmem:[#allocation2 + $0xdc] sm:$0xf] %vm27, 0
  %84 = vst.msk [vmem:[#allocation2 + $0xe0] sm:$0xf] %vm27, 0
  %85 = vst.msk [vmem:[#allocation2 + $0xe4] sm:$0xf] %vm27, 0
  %86 = vst.msk [vmem:[#allocation2 + $0xe8] sm:$0xf] %vm27, 0
  %87 = vst.msk [vmem:[#allocation2 + $0xec] sm:$0xf] %vm27, 0
  %88 = vst.msk [vmem:[#allocation2 + $0xf0] sm:$0xf] %vm27, 0
  %89 = vst.msk [vmem:[#allocation2 + $0xf4] sm:$0xf] %vm27, 0
  %90 = vst.msk [vmem:[#allocation2 + $0xf8] sm:$0xf] %vm27, 0
  %91 = vst.msk [vmem:[#allocation2 + $0xfc] sm:$0xf] %vm27, 0
  %v92 = vld [vmem:[%s0] sm:$0xff]
  %v93 = vld [vmem:[%s0 + $0x8] sm:$0xff]
  %v94 = vld [vmem:[%s0 + $0x10] sm:$0xff]
  %v95 = vld [vmem:[%s0 + $0x18] sm:$0xff]
  %v96 = vld [vmem:[%s0 + $0x20] sm:$0xff]
  %v97 = vld [vmem:[%s0 + $0x28] sm:$0xff]
  %v98 = vld [vmem:[%s0 + $0x30] sm:$0xff]
  %v99 = vld [vmem:[%s0 + $0x38] sm:$0xff]
  %v100 = vld [vmem:[%s0 + $0x40] sm:$0xff]
  %v101 = vld [vmem:[%s0 + $0x48] sm:$0xff]
  %v102 = vld [vmem:[%s0 + $0x50] sm:$0xff]
  %v103 = vld [vmem:[%s0 + $0x58] sm:$0xff]
  %v104 = vld [vmem:[%s0 + $0x60] sm:$0xff]
  %v105 = vld [vmem:[%s0 + $0x68] sm:$0xff]
  %v106 = vld [vmem:[%s0 + $0x70] sm:$0xff]
  %v107 = vld [vmem:[%s0 + $0x78] sm:$0xff]
  %v108 = vld [vmem:[%s0 + $0x80] sm:$0xff]
  %v109 = vld [vmem:[%s0 + $0x88] sm:$0xff]
  %v110 = vld [vmem:[%s0 + $0x90] sm:$0xff]
  %v111 = vld [vmem:[%s0 + $0x98] sm:$0xff]
  %v112 = vld [vmem:[%s0 + $0xa0] sm:$0xff]
  %v113 = vld [vmem:[%s0 + $0xa8] sm:$0xff]
  %v114 = vld [vmem:[%s0 + $0xb0] sm:$0xff]
  %v115 = vld [vmem:[%s0 + $0xb8] sm:$0xff]
  %v116 = vld [vmem:[%s0 + $0xc0] sm:$0xff]
  %v117 = vld [vmem:[%s0 + $0xc8] sm:$0xff]
  %v118 = vld [vmem:[%s0 + $0xd0] sm:$0xff]
  %v119 = vld [vmem:[%s0 + $0xd8] sm:$0xff]
  %v120 = vld [vmem:[%s0 + $0xe0] sm:$0xff]
  %v121 = vld [vmem:[%s0 + $0xe8] sm:$0xff]
  %v122 = vld [vmem:[%s0 + $0xf0] sm:$0xff]
  %v123 = vld [vmem:[%s0 + $0xf8] sm:$0xff]
  %v124 = vld [vmem:[%s0 + $0x100] sm:$0xff]
  %v125 = vld [vmem:[%s0 + $0x108] sm:$0xff]
  %v126 = vld [vmem:[%s0 + $0x110] sm:$0xff]
  %v127 = vld [vmem:[%s0 + $0x118] sm:$0xff]
  %v128 = vld [vmem:[%s0 + $0x120] sm:$0xff]
  %v129 = vld [vmem:[%s0 + $0x128] sm:$0xff]
  %v130 = vld [vmem:[%s0 + $0x130] sm:$0xff]
  %v131 = vld [vmem:[%s0 + $0x138] sm:$0xff]
  %v132 = vld [vmem:[%s0 + $0x140] sm:$0xff]
  %v133 = vld [vmem:[%s0 + $0x148] sm:$0xff]
  %v134 = vld [vmem:[%s0 + $0x150] sm:$0xff]
  %v135 = vld [vmem:[%s0 + $0x158] sm:$0xff]
  %v136 = vld [vmem:[%s0 + $0x160] sm:$0xff]
  %v137 = vld [vmem:[%s0 + $0x168] sm:$0xff]
  %v138 = vld [vmem:[%s0 + $0x170] sm:$0xff]
  %v139 = vld [vmem:[%s0 + $0x178] sm:$0xff]
  %v140 = vld [vmem:[%s0 + $0x180] sm:$0xff]
  %v141 = vld [vmem:[%s0 + $0x188] sm:$0xff]
  %v142 = vld [vmem:[%s0 + $0x190] sm:$0xff]
  %v143 = vld [vmem:[%s0 + $0x198] sm:$0xff]
  %v144 = vld [vmem:[%s0 + $0x1a0] sm:$0xff]
  %v145 = vld [vmem:[%s0 + $0x1a8] sm:$0xff]
  %v146 = vld [vmem:[%s0 + $0x1b0] sm:$0xff]
  %v147 = vld [vmem:[%s0 + $0x1b8] sm:$0xff]
  %v148 = vld [vmem:[%s0 + $0x1c0] sm:$0xff]
  %v149 = vld [vmem:[%s0 + $0x1c8] sm:$0xff]
  %v150 = vld [vmem:[%s0 + $0x1d0] sm:$0xff]
  %v151 = vld [vmem:[%s0 + $0x1d8] sm:$0xff]
  %v152 = vld [vmem:[%s0 + $0x1e0] sm:$0xff]
  %v153 = vld [vmem:[%s0 + $0x1e8] sm:$0xff]
  %v154 = vld [vmem:[%s0 + $0x1f0] sm:$0xff]
  %v155 = vld [vmem:[%s0 + $0x1f8] sm:$0xff]
  %v156 = vpack.c.bf16 %v93, %v92
  %v157 = vpack.c.bf16 %v95, %v94
  %v158 = vpack.c.bf16 %v97, %v96
  %v159 = vpack.c.bf16 %v99, %v98
  %v160 = vpack.c.bf16 %v101, %v100
  %v161 = vpack.c.bf16 %v103, %v102
  %v162 = vpack.c.bf16 %v105, %v104
  %v163 = vpack.c.bf16 %v107, %v106
  %v164 = vpack.c.bf16 %v109, %v108
  %v165 = vpack.c.bf16 %v111, %v110
  %v166 = vpack.c.bf16 %v113, %v112
  %v167 = vpack.c.bf16 %v115, %v114
  %v168 = vpack.c.bf16 %v117, %v116
  %v169 = vpack.c.bf16 %v119, %v118
  %v170 = vpack.c.bf16 %v121, %v120
  %v171 = vpack.c.bf16 %v123, %v122
  %v172 = vpack.c.bf16 %v125, %v124
  %v173 = vpack.c.bf16 %v127, %v126
  %v174 = vpack.c.bf16 %v129, %v128
  %v175 = vpack.c.bf16 %v131, %v130
  %v176 = vpack.c.bf16 %v133, %v132
  %v177 = vpack.c.bf16 %v135, %v134
  %v178 = vpack.c.bf16 %v137, %v136
  %v179 = vpack.c.bf16 %v139, %v138
  %v180 = vpack.c.bf16 %v141, %v140
  %v181 = vpack.c.bf16 %v143, %v142
  %v182 = vpack.c.bf16 %v145, %v144
  %v183 = vpack.c.bf16 %v147, %v146
  %v184 = vpack.c.bf16 %v149, %v148
  %v185 = vpack.c.bf16 %v151, %v150
  %v186 = vpack.c.bf16 %v153, %v152
  %v187 = vpack.c.bf16 %v155, %v154
  %v218 = vunpack.c.l.b16 %v156
  %v219 = vunpack.c.h.b16 %v156
  %v220 = vunpack.c.l.b16 %v157
  %v221 = vunpack.c.h.b16 %v157
  %v222 = vunpack.c.l.b16 %v158
  %v223 = vunpack.c.h.b16 %v158
  %v224 = vunpack.c.l.b16 %v159
  %v225 = vunpack.c.h.b16 %v159
  %v226 = vunpack.c.l.b16 %v160
  %v227 = vunpack.c.h.b16 %v160
  %v228 = vunpack.c.l.b16 %v161
  %v229 = vunpack.c.h.b16 %v161
  %v230 = vunpack.c.l.b16 %v162
  %v231 = vunpack.c.h.b16 %v162
  %v232 = vunpack.c.l.b16 %v163
  %v233 = vunpack.c.h.b16 %v163
  %v234 = vunpack.c.l.b16 %v164
  %v235 = vunpack.c.h.b16 %v164
  %v236 = vunpack.c.l.b16 %v165
  %v237 = vunpack.c.h.b16 %v165
  %v238 = vunpack.c.l.b16 %v166
  %v239 = vunpack.c.h.b16 %v166
  %v240 = vunpack.c.l.b16 %v167
  %v241 = vunpack.c.h.b16 %v167
  %v242 = vunpack.c.l.b16 %v168
  %v243 = vunpack.c.h.b16 %v168
  %v244 = vunpack.c.l.b16 %v169
  %v245 = vunpack.c.h.b16 %v169
  %v246 = vunpack.c.l.b16 %v170
  %v247 = vunpack.c.h.b16 %v170
  %v248 = vunpack.c.l.b16 %v172
  %v249 = vunpack.c.h.b16 %v172
  %v250 = vunpack.c.l.b16 %v173
  %v251 = vunpack.c.h.b16 %v173
  %v252 = vunpack.c.l.b16 %v174
  %v253 = vunpack.c.h.b16 %v174
  %v254 = vunpack.c.l.b16 %v175
  %v255 = vunpack.c.h.b16 %v175
  %v256 = vunpack.c.l.b16 %v176
  %v257 = vunpack.c.h.b16 %v176
  %v258 = vunpack.c.l.b16 %v177
  %v259 = vunpack.c.h.b16 %v177
  %v260 = vunpack.c.l.b16 %v178
  %v261 = vunpack.c.h.b16 %v178
  %v262 = vunpack.c.l.b16 %v179
  %v263 = vunpack.c.h.b16 %v179
  %v264 = vunpack.c.l.b16 %v180
  %v265 = vunpack.c.h.b16 %v180
  %v266 = vunpack.c.l.b16 %v181
  %v267 = vunpack.c.h.b16 %v181
  %v268 = vunpack.c.l.b16 %v182
  %v269 = vunpack.c.h.b16 %v182
  %v270 = vunpack.c.l.b16 %v183
  %v271 = vunpack.c.h.b16 %v183
  %v272 = vunpack.c.l.b16 %v184
  %v273 = vunpack.c.h.b16 %v184
  %v274 = vunpack.c.l.b16 %v185
  %v275 = vunpack.c.h.b16 %v185
  %v276 = vunpack.c.l.b16 %v186
  %v277 = vunpack.c.h.b16 %v186
  %v278 = vpack.c.b16 %v218, %v218
  %v279 = vpack.c.b16 %v219, %v219
  %v280 = vpack.c.b16 %v220, %v220
  %v281 = vpack.c.b16 %v221, %v221
  %v282 = vpack.c.b16 %v222, %v222
  %v283 = vpack.c.b16 %v223, %v223
  %v284 = vpack.c.b16 %v224, %v224
  %v285 = vpack.c.b16 %v225, %v225
  %v286 = vpack.c.b16 %v226, %v226
  %v287 = vpack.c.b16 %v227, %v227
  %v288 = vpack.c.b16 %v228, %v228
  %v289 = vpack.c.b16 %v229, %v229
  %v290 = vpack.c.b16 %v230, %v230
  %v291 = vpack.c.b16 %v231, %v231
  %v292 = vpack.c.b16 %v232, %v232
  %v293 = vpack.c.b16 %v233, %v233
  %v294 = vpack.c.b16 %v234, %v234
  %v295 = vpack.c.b16 %v235, %v235
  %v296 = vpack.c.b16 %v236, %v236
  %v297 = vpack.c.b16 %v237, %v237
  %v298 = vpack.c.b16 %v238, %v238
  %v299 = vpack.c.b16 %v239, %v239
  %v300 = vpack.c.b16 %v240, %v240
  %v301 = vpack.c.b16 %v241, %v241
  %v302 = vpack.c.b16 %v242, %v242
  %v303 = vpack.c.b16 %v243, %v243
  %v304 = vpack.c.b16 %v244, %v244
  %v305 = vpack.c.b16 %v245, %v245
  %v306 = vpack.c.b16 %v246, %v246
  %v307 = vpack.c.b16 %v247, %v247
  %v308 = vpack.c.b16 %v248, %v248
  %v309 = vpack.c.b16 %v249, %v249
  %v310 = vpack.c.b16 %v250, %v250
  %v311 = vpack.c.b16 %v251, %v251
  %v312 = vpack.c.b16 %v252, %v252
  %v313 = vpack.c.b16 %v253, %v253
  %v314 = vpack.c.b16 %v254, %v254
  %v315 = vpack.c.b16 %v255, %v255
  %v316 = vpack.c.b16 %v256, %v256
  %v317 = vpack.c.b16 %v257, %v257
  %v318 = vpack.c.b16 %v258, %v258
  %v319 = vpack.c.b16 %v259, %v259
  %v320 = vpack.c.b16 %v260, %v260
  %v321 = vpack.c.b16 %v261, %v261
  %v322 = vpack.c.b16 %v262, %v262
  %v323 = vpack.c.b16 %v263, %v263
  %v324 = vpack.c.b16 %v264, %v264
  %v325 = vpack.c.b16 %v265, %v265
  %v326 = vpack.c.b16 %v266, %v266
  %v327 = vpack.c.b16 %v267, %v267
  %v328 = vpack.c.b16 %v268, %v268
  %v329 = vpack.c.b16 %v269, %v269
  %v330 = vpack.c.b16 %v270, %v270
  %v331 = vpack.c.b16 %v271, %v271
  %v332 = vpack.c.b16 %v272, %v272
  %v333 = vpack.c.b16 %v273, %v273
  %v334 = vpack.c.b16 %v274, %v274
  %v335 = vpack.c.b16 %v275, %v275
  %v336 = vpack.c.b16 %v276, %v276
  %v337 = vpack.c.b16 %v277, %v277
  %vm338 = vsmask.f32 256
  %vm339 = vsmask.f32 4368
  %vm340 = vmor %vm338, %vm339
  %v342 = vshrl.u32 %v278, 16
  %v344 = vrot.slane %v342, 7
  %v345 = vshll.u32 %v278, 16
  %v347 = vor.u32 %v344, %v345
  %v348 = vrot.slane %v344, 4
  %v350 = vshrl.u32 %v279, 16
  %v352 = vrot.slane %v350, 7
  %v353 = vshll.u32 %v279, 16
  %v355 = vor.u32 %v352, %v353
  %v356 = vsel %vm340, %v348, %v355
  %v358 = vshrl.u32 %v280, 16
  %v360 = vrot.slane %v358, 7
  %v361 = vshll.u32 %v280, 16
  %v363 = vor.u32 %v360, %v361
  %v364 = vrot.slane %v360, 4
  %v366 = vshrl.u32 %v281, 16
  %v368 = vrot.slane %v366, 7
  %v369 = vshll.u32 %v281, 16
  %v371 = vor.u32 %v368, %v369
  %v372 = vsel %vm340, %v364, %v371
  %v374 = vshrl.u32 %v282, 16
  %v376 = vrot.slane %v374, 7
  %v377 = vshll.u32 %v282, 16
  %v379 = vor.u32 %v376, %v377
  %v380 = vrot.slane %v376, 4
  %v382 = vshrl.u32 %v283, 16
  %v384 = vrot.slane %v382, 7
  %v385 = vshll.u32 %v283, 16
  %v387 = vor.u32 %v384, %v385
  %v388 = vsel %vm340, %v380, %v387
  %v390 = vshrl.u32 %v284, 16
  %v392 = vrot.slane %v390, 7
  %v393 = vshll.u32 %v284, 16
  %v395 = vor.u32 %v392, %v393
  %v396 = vrot.slane %v392, 4
  %v398 = vshrl.u32 %v285, 16
  %v400 = vrot.slane %v398, 7
  %v401 = vshll.u32 %v285, 16
  %v403 = vor.u32 %v400, %v401
  %v404 = vsel %vm340, %v396, %v403
  %v406 = vshrl.u32 %v286, 16
  %v408 = vrot.slane %v406, 7
  %v409 = vshll.u32 %v286, 16
  %v411 = vor.u32 %v408, %v409
  %v412 = vrot.slane %v408, 4
  %v414 = vshrl.u32 %v287, 16
  %v416 = vrot.slane %v414, 7
  %v417 = vshll.u32 %v287, 16
  %v419 = vor.u32 %v416, %v417
  %v420 = vsel %vm340, %v412, %v419
  %v422 = vshrl.u32 %v288, 16
  %v424 = vrot.slane %v422, 7
  %v425 = vshll.u32 %v288, 16
  %v427 = vor.u32 %v424, %v425
  %v428 = vrot.slane %v424, 4
  %v430 = vshrl.u32 %v289, 16
  %v432 = vrot.slane %v430, 7
  %v433 = vshll.u32 %v289, 16
  %v435 = vor.u32 %v432, %v433
  %v436 = vsel %vm340, %v428, %v435
  %v438 = vshrl.u32 %v290, 16
  %v440 = vrot.slane %v438, 7
  %v441 = vshll.u32 %v290, 16
  %v443 = vor.u32 %v440, %v441
  %v444 = vrot.slane %v440, 4
  %v446 = vshrl.u32 %v291, 16
  %v448 = vrot.slane %v446, 7
  %v449 = vshll.u32 %v291, 16
  %v451 = vor.u32 %v448, %v449
  %v452 = vsel %vm340, %v444, %v451
  %v454 = vshrl.u32 %v292, 16
  %v456 = vrot.slane %v454, 7
  %v457 = vshll.u32 %v292, 16
  %v459 = vor.u32 %v456, %v457
  %v460 = vrot.slane %v456, 4
  %v462 = vshrl.u32 %v293, 16
  %v464 = vrot.slane %v462, 7
  %v465 = vshll.u32 %v293, 16
  %v467 = vor.u32 %v464, %v465
  %v468 = vsel %vm340, %v460, %v467
  %v470 = vshrl.u32 %v294, 16
  %v472 = vrot.slane %v470, 7
  %v473 = vshll.u32 %v294, 16
  %v475 = vor.u32 %v472, %v473
  %v476 = vrot.slane %v472, 4
  %v478 = vshrl.u32 %v295, 16
  %v480 = vrot.slane %v478, 7
  %v481 = vshll.u32 %v295, 16
  %v483 = vor.u32 %v480, %v481
  %v484 = vsel %vm340, %v476, %v483
  %v486 = vshrl.u32 %v296, 16
  %v488 = vrot.slane %v486, 7
  %v489 = vshll.u32 %v296, 16
  %v491 = vor.u32 %v488, %v489
  %v492 = vrot.slane %v488, 4
  %v494 = vshrl.u32 %v297, 16
  %v496 = vrot.slane %v494, 7
  %v497 = vshll.u32 %v297, 16
  %v499 = vor.u32 %v496, %v497
  %v500 = vsel %vm340, %v492, %v499
  %v502 = vshrl.u32 %v298, 16
  %v504 = vrot.slane %v502, 7
  %v505 = vshll.u32 %v298, 16
  %v507 = vor.u32 %v504, %v505
  %v508 = vrot.slane %v504, 4
  %v510 = vshrl.u32 %v299, 16
  %v512 = vrot.slane %v510, 7
  %v513 = vshll.u32 %v299, 16
  %v515 = vor.u32 %v512, %v513
  %v516 = vsel %vm340, %v508, %v515
  %v518 = vshrl.u32 %v300, 16
  %v520 = vrot.slane %v518, 7
  %v521 = vshll.u32 %v300, 16
  %v523 = vor.u32 %v520, %v521
  %v524 = vrot.slane %v520, 4
  %v526 = vshrl.u32 %v301, 16
  %v528 = vrot.slane %v526, 7
  %v529 = vshll.u32 %v301, 16
  %v531 = vor.u32 %v528, %v529
  %v532 = vsel %vm340, %v524, %v531
  %v534 = vshrl.u32 %v302, 16
  %v536 = vrot.slane %v534, 7
  %v537 = vshll.u32 %v302, 16
  %v539 = vor.u32 %v536, %v537
  %v540 = vrot.slane %v536, 4
  %v542 = vshrl.u32 %v303, 16
  %v544 = vrot.slane %v542, 7
  %v545 = vshll.u32 %v303, 16
  %v547 = vor.u32 %v544, %v545
  %v548 = vsel %vm340, %v540, %v547
  %v550 = vshrl.u32 %v304, 16
  %v552 = vrot.slane %v550, 7
  %v553 = vshll.u32 %v304, 16
  %v555 = vor.u32 %v552, %v553
  %v556 = vrot.slane %v552, 4
  %v558 = vshrl.u32 %v305, 16
  %v560 = vrot.slane %v558, 7
  %v561 = vshll.u32 %v305, 16
  %v563 = vor.u32 %v560, %v561
  %v564 = vsel %vm340, %v556, %v563
  %v566 = vshrl.u32 %v306, 16
  %v568 = vrot.slane %v566, 7
  %v569 = vshll.u32 %v306, 16
  %v571 = vor.u32 %v568, %v569
  %v572 = vrot.slane %v568, 4
  %v574 = vshrl.u32 %v307, 16
  %v576 = vrot.slane %v574, 7
  %v577 = vshll.u32 %v307, 16
  %v579 = vor.u32 %v576, %v577
  %v580 = vsel %vm340, %v572, %v579
  %v582 = vshrl.u32 %v308, 16
  %v584 = vrot.slane %v582, 7
  %v585 = vshll.u32 %v308, 16
  %v587 = vor.u32 %v584, %v585
  %v588 = vrot.slane %v584, 4
  %v590 = vshrl.u32 %v309, 16
  %v592 = vrot.slane %v590, 7
  %v593 = vshll.u32 %v309, 16
  %v595 = vor.u32 %v592, %v593
  %v596 = vsel %vm340, %v588, %v595
  %v598 = vshrl.u32 %v310, 16
  %v600 = vrot.slane %v598, 7
  %v601 = vshll.u32 %v310, 16
  %v603 = vor.u32 %v600, %v601
  %v604 = vrot.slane %v600, 4
  %v606 = vshrl.u32 %v311, 16
  %v608 = vrot.slane %v606, 7
  %v609 = vshll.u32 %v311, 16
  %v611 = vor.u32 %v608, %v609
  %v612 = vsel %vm340, %v604, %v611
  %v614 = vshrl.u32 %v312, 16
  %v616 = vrot.slane %v614, 7
  %v617 = vshll.u32 %v312, 16
  %v619 = vor.u32 %v616, %v617
  %v620 = vrot.slane %v616, 4
  %v622 = vshrl.u32 %v313, 16
  %v624 = vrot.slane %v622, 7
  %v625 = vshll.u32 %v313, 16
  %v627 = vor.u32 %v624, %v625
  %v628 = vsel %vm340, %v620, %v627
  %v630 = vshrl.u32 %v314, 16
  %v632 = vrot.slane %v630, 7
  %v633 = vshll.u32 %v314, 16
  %v635 = vor.u32 %v632, %v633
  %v636 = vrot.slane %v632, 4
  %v638 = vshrl.u32 %v315, 16
  %v640 = vrot.slane %v638, 7
  %v641 = vshll.u32 %v315, 16
  %v643 = vor.u32 %v640, %v641
  %v644 = vsel %vm340, %v636, %v643
  %v646 = vshrl.u32 %v316, 16
  %v648 = vrot.slane %v646, 7
  %v649 = vshll.u32 %v316, 16
  %v651 = vor.u32 %v648, %v649
  %v652 = vrot.slane %v648, 4
  %v654 = vshrl.u32 %v317, 16
  %v656 = vrot.slane %v654, 7
  %v657 = vshll.u32 %v317, 16
  %v659 = vor.u32 %v656, %v657
  %v660 = vsel %vm340, %v652, %v659
  %v662 = vshrl.u32 %v318, 16
  %v664 = vrot.slane %v662, 7
  %v665 = vshll.u32 %v318, 16
  %v667 = vor.u32 %v664, %v665
  %v668 = vrot.slane %v664, 4
  %v670 = vshrl.u32 %v319, 16
  %v672 = vrot.slane %v670, 7
  %v673 = vshll.u32 %v319, 16
  %v675 = vor.u32 %v672, %v673
  %v676 = vsel %vm340, %v668, %v675
  %v678 = vshrl.u32 %v320, 16
  %v680 = vrot.slane %v678, 7
  %v681 = vshll.u32 %v320, 16
  %v683 = vor.u32 %v680, %v681
  %v684 = vrot.slane %v680, 4
  %v686 = vshrl.u32 %v321, 16
  %v688 = vrot.slane %v686, 7
  %v689 = vshll.u32 %v321, 16
  %v691 = vor.u32 %v688, %v689
  %v692 = vsel %vm340, %v684, %v691
  %v694 = vshrl.u32 %v322, 16
  %v696 = vrot.slane %v694, 7
  %v697 = vshll.u32 %v322, 16
  %v699 = vor.u32 %v696, %v697
  %v700 = vrot.slane %v696, 4
  %v702 = vshrl.u32 %v323, 16
  %v704 = vrot.slane %v702, 7
  %v705 = vshll.u32 %v323, 16
  %v707 = vor.u32 %v704, %v705
  %v708 = vsel %vm340, %v700, %v707
  %v710 = vshrl.u32 %v324, 16
  %v712 = vrot.slane %v710, 7
  %v713 = vshll.u32 %v324, 16
  %v715 = vor.u32 %v712, %v713
  %v716 = vrot.slane %v712, 4
  %v718 = vshrl.u32 %v325, 16
  %v720 = vrot.slane %v718, 7
  %v721 = vshll.u32 %v325, 16
  %v723 = vor.u32 %v720, %v721
  %v724 = vsel %vm340, %v716, %v723
  %v726 = vshrl.u32 %v326, 16
  %v728 = vrot.slane %v726, 7
  %v729 = vshll.u32 %v326, 16
  %v731 = vor.u32 %v728, %v729
  %v732 = vrot.slane %v728, 4
  %v734 = vshrl.u32 %v327, 16
  %v736 = vrot.slane %v734, 7
  %v737 = vshll.u32 %v327, 16
  %v739 = vor.u32 %v736, %v737
  %v740 = vsel %vm340, %v732, %v739
  %v742 = vshrl.u32 %v328, 16
  %v744 = vrot.slane %v742, 7
  %v745 = vshll.u32 %v328, 16
  %v747 = vor.u32 %v744, %v745
  %v748 = vrot.slane %v744, 4
  %v750 = vshrl.u32 %v329, 16
  %v752 = vrot.slane %v750, 7
  %v753 = vshll.u32 %v329, 16
  %v755 = vor.u32 %v752, %v753
  %v756 = vsel %vm340, %v748, %v755
  %v758 = vshrl.u32 %v330, 16
  %v760 = vrot.slane %v758, 7
  %v761 = vshll.u32 %v330, 16
  %v763 = vor.u32 %v760, %v761
  %v764 = vrot.slane %v760, 4
  %v766 = vshrl.u32 %v331, 16
  %v768 = vrot.slane %v766, 7
  %v769 = vshll.u32 %v331, 16
  %v771 = vor.u32 %v768, %v769
  %v772 = vsel %vm340, %v764, %v771
  %v774 = vshrl.u32 %v332, 16
  %v776 = vrot.slane %v774, 7
  %v777 = vshll.u32 %v332, 16
  %v779 = vor.u32 %v776, %v777
  %v780 = vrot.slane %v776, 4
  %v782 = vshrl.u32 %v333, 16
  %v784 = vrot.slane %v782, 7
  %v785 = vshll.u32 %v333, 16
  %v787 = vor.u32 %v784, %v785
  %v788 = vsel %vm340, %v780, %v787
  %v790 = vshrl.u32 %v334, 16
  %v792 = vrot.slane %v790, 7
  %v793 = vshll.u32 %v334, 16
  %v795 = vor.u32 %v792, %v793
  %v796 = vrot.slane %v792, 4
  %v798 = vshrl.u32 %v335, 16
  %v800 = vrot.slane %v798, 7
  %v801 = vshll.u32 %v335, 16
  %v803 = vor.u32 %v800, %v801
  %v804 = vsel %vm340, %v796, %v803
  %v806 = vshrl.u32 %v336, 16
  %v808 = vrot.slane %v806, 7
  %v809 = vshll.u32 %v336, 16
  %v811 = vor.u32 %v808, %v809
  %v812 = vrot.slane %v808, 4
  %v814 = vshrl.u32 %v337, 16
  %v816 = vrot.slane %v814, 7
  %v817 = vshll.u32 %v337, 16
  %v819 = vor.u32 %v816, %v817
  %v820 = vsel %vm340, %v812, %v819
  %s881 = scalar_lea.vmem [#allocation2], 8
  %vm882 = vcmask 60416
  %vm883 = vsmask.f32 7938
  %vm884 = vmand %vm882, %vm883
  %v885 = vld [vmem:[%s881] sm:$0xf]
  %v886 = vsel %vm884, %v347, %v885
  %887 = vst [vmem:[%s881] sm:$0xf] %v886
  %vm888 = vcmask 60416
  %889 = vst.msk [vmem:[%s881 + $0x4] sm:$0xf] %vm888, %v356
  %v890 = vld [vmem:[%s881 + $0x8] sm:$0xf]
  %v891 = vsel %vm884, %v363, %v890
  %892 = vst [vmem:[%s881 + $0x8] sm:$0xf] %v891
  %893 = vst.msk [vmem:[%s881 + $0xc] sm:$0xf] %vm888, %v372
  %v894 = vld [vmem:[%s881 + $0x10] sm:$0xf]
  %v895 = vsel %vm884, %v379, %v894
  %896 = vst [vmem:[%s881 + $0x10] sm:$0xf] %v895
  %897 = vst.msk [vmem:[%s881 + $0x14] sm:$0xf] %vm888, %v388
  %v898 = vld [vmem:[%s881 + $0x18] sm:$0xf]
  %v899 = vsel %vm884, %v395, %v898
  %900 = vst [vmem:[%s881 + $0x18] sm:$0xf] %v899
  %901 = vst.msk [vmem:[%s881 + $0x1c] sm:$0xf] %vm888, %v404
  %v902 = vld [vmem:[%s881 + $0x20] sm:$0xf]
  %v903 = vsel %vm884, %v411, %v902
  %904 = vst [vmem:[%s881 + $0x20] sm:$0xf] %v903
  %905 = vst.msk [vmem:[%s881 + $0x24] sm:$0xf] %vm888, %v420
  %v906 = vld [vmem:[%s881 + $0x28] sm:$0xf]
  %v907 = vsel %vm884, %v427, %v906
  %908 = vst [vmem:[%s881 + $0x28] sm:$0xf] %v907
  %909 = vst.msk [vmem:[%s881 + $0x2c] sm:$0xf] %vm888, %v436
  %v910 = vld [vmem:[%s881 + $0x30] sm:$0xf]
  %v911 = vsel %vm884, %v443, %v910
  %912 = vst [vmem:[%s881 + $0x30] sm:$0xf] %v911
  %913 = vst.msk [vmem:[%s881 + $0x34] sm:$0xf] %vm888, %v452
  %v914 = vld [vmem:[%s881 + $0x38] sm:$0xf]
  %v915 = vsel %vm884, %v459, %v914
  %916 = vst [vmem:[%s881 + $0x38] sm:$0xf] %v915
  %917 = vst.msk [vmem:[%s881 + $0x3c] sm:$0xf] %vm888, %v468
  %v918 = vld [vmem:[%s881 + $0x40] sm:$0xf]
  %v919 = vsel %vm884, %v475, %v918
  %920 = vst [vmem:[%s881 + $0x40] sm:$0xf] %v919
  %921 = vst.msk [vmem:[%s881 + $0x44] sm:$0xf] %vm888, %v484
  %v922 = vld [vmem:[%s881 + $0x48] sm:$0xf]
  %v923 = vsel %vm884, %v491, %v922
  %924 = vst [vmem:[%s881 + $0x48] sm:$0xf] %v923
  %925 = vst.msk [vmem:[%s881 + $0x4c] sm:$0xf] %vm888, %v500
  %v926 = vld [vmem:[%s881 + $0x50] sm:$0xf]
  %v927 = vsel %vm884, %v507, %v926
  %928 = vst [vmem:[%s881 + $0x50] sm:$0xf] %v927
  %929 = vst.msk [vmem:[%s881 + $0x54] sm:$0xf] %vm888, %v516
  %v930 = vld [vmem:[%s881 + $0x58] sm:$0xf]
  %v931 = vsel %vm884, %v523, %v930
  %932 = vst [vmem:[%s881 + $0x58] sm:$0xf] %v931
  %933 = vst.msk [vmem:[%s881 + $0x5c] sm:$0xf] %vm888, %v532
  %v934 = vld [vmem:[%s881 + $0x60] sm:$0xf]
  %v935 = vsel %vm884, %v539, %v934
  %936 = vst [vmem:[%s881 + $0x60] sm:$0xf] %v935
  %937 = vst.msk [vmem:[%s881 + $0x64] sm:$0xf] %vm888, %v548
  %v938 = vld [vmem:[%s881 + $0x68] sm:$0xf]
  %v939 = vsel %vm884, %v555, %v938
  %940 = vst [vmem:[%s881 + $0x68] sm:$0xf] %v939
  %941 = vst.msk [vmem:[%s881 + $0x6c] sm:$0xf] %vm888, %v564
  %v942 = vld [vmem:[%s881 + $0x70] sm:$0xf]
  %v943 = vsel %vm884, %v571, %v942
  %944 = vst [vmem:[%s881 + $0x70] sm:$0xf] %v943
  %945 = vst.msk [vmem:[%s881 + $0x74] sm:$0xf] %vm888, %v580
  %v946 = vld [vmem:[%s881 + $0x80] sm:$0xf]
  %v947 = vsel %vm884, %v587, %v946
  %948 = vst [vmem:[%s881 + $0x80] sm:$0xf] %v947
  %949 = vst.msk [vmem:[%s881 + $0x84] sm:$0xf] %vm888, %v596
  %v950 = vld [vmem:[%s881 + $0x88] sm:$0xf]
  %v951 = vsel %vm884, %v603, %v950
  %952 = vst [vmem:[%s881 + $0x88] sm:$0xf] %v951
  %953 = vst.msk [vmem:[%s881 + $0x8c] sm:$0xf] %vm888, %v612
  %v954 = vld [vmem:[%s881 + $0x90] sm:$0xf]
  %v955 = vsel %vm884, %v619, %v954
  %956 = vst [vmem:[%s881 + $0x90] sm:$0xf] %v955
  %957 = vst.msk [vmem:[%s881 + $0x94] sm:$0xf] %vm888, %v628
  %v958 = vld [vmem:[%s881 + $0x98] sm:$0xf]
  %v959 = vsel %vm884, %v635, %v958
  %960 = vst [vmem:[%s881 + $0x98] sm:$0xf] %v959
  %961 = vst.msk [vmem:[%s881 + $0x9c] sm:$0xf] %vm888, %v644
  %v962 = vld [vmem:[%s881 + $0xa0] sm:$0xf]
  %v963 = vsel %vm884, %v651, %v962
  %964 = vst [vmem:[%s881 + $0xa0] sm:$0xf] %v963
  %965 = vst.msk [vmem:[%s881 + $0xa4] sm:$0xf] %vm888, %v660
  %v966 = vld [vmem:[%s881 + $0xa8] sm:$0xf]
  %v967 = vsel %vm884, %v667, %v966
  %968 = vst [vmem:[%s881 + $0xa8] sm:$0xf] %v967
  %969 = vst.msk [vmem:[%s881 + $0xac] sm:$0xf] %vm888, %v676
  %v970 = vld [vmem:[%s881 + $0xb0] sm:$0xf]
  %v971 = vsel %vm884, %v683, %v970
  %972 = vst [vmem:[%s881 + $0xb0] sm:$0xf] %v971
  %973 = vst.msk [vmem:[%s881 + $0xb4] sm:$0xf] %vm888, %v692
  %v974 = vld [vmem:[%s881 + $0xb8] sm:$0xf]
  %v975 = vsel %vm884, %v699, %v974
  %976 = vst [vmem:[%s881 + $0xb8] sm:$0xf] %v975
  %977 = vst.msk [vmem:[%s881 + $0xbc] sm:$0xf] %vm888, %v708
  %v978 = vld [vmem:[%s881 + $0xc0] sm:$0xf]
  %v979 = vsel %vm884, %v715, %v978
  %980 = vst [vmem:[%s881 + $0xc0] sm:$0xf] %v979
  %981 = vst.msk [vmem:[%s881 + $0xc4] sm:$0xf] %vm888, %v724
  %v982 = vld [vmem:[%s881 + $0xc8] sm:$0xf]
  %v983 = vsel %vm884, %v731, %v982
  %984 = vst [vmem:[%s881 + $0xc8] sm:$0xf] %v983
  %985 = vst.msk [vmem:[%s881 + $0xcc] sm:$0xf] %vm888, %v740
  %v986 = vld [vmem:[%s881 + $0xd0] sm:$0xf]
  %v987 = vsel %vm884, %v747, %v986
  %988 = vst [vmem:[%s881 + $0xd0] sm:$0xf] %v987
  %989 = vst.msk [vmem:[%s881 + $0xd4] sm:$0xf] %vm888, %v756
  %v990 = vld [vmem:[%s881 + $0xd8] sm:$0xf]
  %v991 = vsel %vm884, %v763, %v990
  %992 = vst [vmem:[%s881 + $0xd8] sm:$0xf] %v991
  %993 = vst.msk [vmem:[%s881 + $0xdc] sm:$0xf] %vm888, %v772
  %v994 = vld [vmem:[%s881 + $0xe0] sm:$0xf]
  %v995 = vsel %vm884, %v779, %v994
  %996 = vst [vmem:[%s881 + $0xe0] sm:$0xf] %v995
  %997 = vst.msk [vmem:[%s881 + $0xe4] sm:$0xf] %vm888, %v788
  %v998 = vld [vmem:[%s881 + $0xe8] sm:$0xf]
  %v999 = vsel %vm884, %v795, %v998
  %1000 = vst [vmem:[%s881 + $0xe8] sm:$0xf] %v999
  %1001 = vst.msk [vmem:[%s881 + $0xec] sm:$0xf] %vm888, %v804
  %v1002 = vld [vmem:[%s881 + $0xf0] sm:$0xf]
  %v1003 = vsel %vm884, %v811, %v1002
  %1004 = vst [vmem:[%s881 + $0xf0] sm:$0xf] %v1003
  %1005 = vst.msk [vmem:[%s881 + $0xf4] sm:$0xf] %vm888, %v820
  %1006 = vrot.lane.b32.xlu0 %v278, 8
  %v1007 = vpop.permute.xlu0 %1006
  %1008 = vrot.lane.b32.xlu0 %v279, 8
  %v1009 = vpop.permute.xlu0 %1008
  %1010 = vrot.lane.b32.xlu0 %v280, 8
  %v1011 = vpop.permute.xlu0 %1010
  %1012 = vrot.lane.b32.xlu0 %v281, 8
  %v1013 = vpop.permute.xlu0 %1012
  %1014 = vrot.lane.b32.xlu0 %v282, 8
  %v1015 = vpop.permute.xlu0 %1014
  %1016 = vrot.lane.b32.xlu0 %v283, 8
  %v1017 = vpop.permute.xlu0 %1016
  %1018 = vrot.lane.b32.xlu0 %v284, 8
  %v1019 = vpop.permute.xlu0 %1018
  %1020 = vrot.lane.b32.xlu0 %v285, 8
  %v1021 = vpop.permute.xlu0 %1020
  %1022 = vrot.lane.b32.xlu0 %v286, 8
  %v1023 = vpop.permute.xlu0 %1022
  %1024 = vrot.lane.b32.xlu0 %v287, 8
  %v1025 = vpop.permute.xlu0 %1024
  %1026 = vrot.lane.b32.xlu0 %v288, 8
  %v1027 = vpop.permute.xlu0 %1026
  %1028 = vrot.lane.b32.xlu0 %v289, 8
  %v1029 = vpop.permute.xlu0 %1028
  %1030 = vrot.lane.b32.xlu0 %v290, 8
  %v1031 = vpop.permute.xlu0 %1030
  %1032 = vrot.lane.b32.xlu0 %v291, 8
  %v1033 = vpop.permute.xlu0 %1032
  %1034 = vrot.lane.b32.xlu0 %v292, 8
  %v1035 = vpop.permute.xlu0 %1034
  %1036 = vrot.lane.b32.xlu0 %v293, 8
  %v1037 = vpop.permute.xlu0 %1036
  %1038 = vrot.lane.b32.xlu0 %v294, 8
  %v1039 = vpop.permute.xlu0 %1038
  %1040 = vrot.lane.b32.xlu0 %v295, 8
  %v1041 = vpop.permute.xlu0 %1040
  %1042 = vrot.lane.b32.xlu0 %v296, 8
  %v1043 = vpop.permute.xlu0 %1042
  %1044 = vrot.lane.b32.xlu0 %v297, 8
  %v1045 = vpop.permute.xlu0 %1044
  %1046 = vrot.lane.b32.xlu0 %v298, 8
  %v1047 = vpop.permute.xlu0 %1046
  %1048 = vrot.lane.b32.xlu0 %v299, 8
  %v1049 = vpop.permute.xlu0 %1048
  %1050 = vrot.lane.b32.xlu0 %v300, 8
  %v1051 = vpop.permute.xlu0 %1050
  %1052 = vrot.lane.b32.xlu0 %v301, 8
  %v1053 = vpop.permute.xlu0 %1052
  %1054 = vrot.lane.b32.xlu0 %v302, 8
  %v1055 = vpop.permute.xlu0 %1054
  %1056 = vrot.lane.b32.xlu0 %v303, 8
  %v1057 = vpop.permute.xlu0 %1056
  %1058 = vrot.lane.b32.xlu0 %v304, 8
  %v1059 = vpop.permute.xlu0 %1058
  %1060 = vrot.lane.b32.xlu0 %v305, 8
  %v1061 = vpop.permute.xlu0 %1060
  %1062 = vrot.lane.b32.xlu0 %v306, 8
  %v1063 = vpop.permute.xlu0 %1062
  %1064 = vrot.lane.b32.xlu0 %v307, 8
  %v1065 = vpop.permute.xlu0 %1064
  %1066 = vrot.lane.b32.xlu0 %v308, 8
  %v1067 = vpop.permute.xlu0 %1066
  %1068 = vrot.lane.b32.xlu0 %v309, 8
  %v1069 = vpop.permute.xlu0 %1068
  %1070 = vrot.lane.b32.xlu0 %v310, 8
  %v1071 = vpop.permute.xlu0 %1070
  %1072 = vrot.lane.b32.xlu0 %v311, 8
  %v1073 = vpop.permute.xlu0 %1072
  %1074 = vrot.lane.b32.xlu0 %v312, 8
  %v1075 = vpop.permute.xlu0 %1074
  %1076 = vrot.lane.b32.xlu0 %v313, 8
  %v1077 = vpop.permute.xlu0 %1076
  %1078 = vrot.lane.b32.xlu0 %v314, 8
  %v1079 = vpop.permute.xlu0 %1078
  %1080 = vrot.lane.b32.xlu0 %v315, 8
  %v1081 = vpop.permute.xlu0 %1080
  %1082 = vrot.lane.b32.xlu0 %v316, 8
  %v1083 = vpop.permute.xlu0 %1082
  %1084 = vrot.lane.b32.xlu0 %v317, 8
  %v1085 = vpop.permute.xlu0 %1084
  %1086 = vrot.lane.b32.xlu0 %v318, 8
  %v1087 = vpop.permute.xlu0 %1086
  %1088 = vrot.lane.b32.xlu0 %v319, 8
  %v1089 = vpop.permute.xlu0 %1088
  %1090 = vrot.lane.b32.xlu0 %v320, 8
  %v1091 = vpop.permute.xlu0 %1090
  %1092 = vrot.lane.b32.xlu0 %v321, 8
  %v1093 = vpop.permute.xlu0 %1092
  %1094 = vrot.lane.b32.xlu0 %v322, 8
  %v1095 = vpop.permute.xlu0 %1094
  %1096 = vrot.lane.b32.xlu0 %v323, 8
  %v1097 = vpop.permute.xlu0 %1096
  %1098 = vrot.lane.b32.xlu0 %v324, 8
  %v1099 = vpop.permute.xlu0 %1098
  %1100 = vrot.lane.b32.xlu0 %v325, 8
  %v1101 = vpop.permute.xlu0 %1100
  %1102 = vrot.lane.b32.xlu0 %v326, 8
  %v1103 = vpop.permute.xlu0 %1102
  %1104 = vrot.lane.b32.xlu0 %v327, 8
  %v1105 = vpop.permute.xlu0 %1104
  %1106 = vrot.lane.b32.xlu0 %v328, 8
  %v1107 = vpop.permute.xlu0 %1106
  %1108 = vrot.lane.b32.xlu0 %v329, 8
  %v1109 = vpop.permute.xlu0 %1108
  %1110 = vrot.lane.b32.xlu0 %v330, 8
  %v1111 = vpop.permute.xlu0 %1110
  %1112 = vrot.lane.b32.xlu0 %v331, 8
  %v1113 = vpop.permute.xlu0 %1112
  %1114 = vrot.lane.b32.xlu0 %v332, 8
  %v1115 = vpop.permute.xlu0 %1114
  %1116 = vrot.lane.b32.xlu0 %v333, 8
  %v1117 = vpop.permute.xlu0 %1116
  %1118 = vrot.lane.b32.xlu0 %v334, 8
  %v1119 = vpop.permute.xlu0 %1118
  %1120 = vrot.lane.b32.xlu0 %v335, 8
  %v1121 = vpop.permute.xlu0 %1120
  %1122 = vrot.lane.b32.xlu0 %v336, 8
  %v1123 = vpop.permute.xlu0 %1122
  %1124 = vrot.lane.b32.xlu0 %v337, 8
  %v1125 = vpop.permute.xlu0 %1124
  %vm1186 = vcmask 126016
  %1187 = vst.msk [vmem:[%s881] sm:$0xf] %vm1186, %v1007
  %1188 = vst.msk [vmem:[%s881 + $0x4] sm:$0xf] %vm1186, %v1009
  %1189 = vst.msk [vmem:[%s881 + $0x8] sm:$0xf] %vm1186, %v1011
  %1190 = vst.msk [vmem:[%s881 + $0xc] sm:$0xf] %vm1186, %v1013
  %1191 = vst.msk [vmem:[%s881 + $0x10] sm:$0xf] %vm1186, %v1015
  %1192 = vst.msk [vmem:[%s881 + $0x14] sm:$0xf] %vm1186, %v1017
  %1193 = vst.msk [vmem:[%s881 + $0x18] sm:$0xf] %vm1186, %v1019
  %1194 = vst.msk [vmem:[%s881 + $0x1c] sm:$0xf] %vm1186, %v1021
  %1195 = vst.msk [vmem:[%s881 + $0x20] sm:$0xf] %vm1186, %v1023
  %1196 = vst.msk [vmem:[%s881 + $0x24] sm:$0xf] %vm1186, %v1025
  %1197 = vst.msk [vmem:[%s881 + $0x28] sm:$0xf] %vm1186, %v1027
  %1198 = vst.msk [vmem:[%s881 + $0x2c] sm:$0xf] %vm1186, %v1029
  %1199 = vst.msk [vmem:[%s881 + $0x30] sm:$0xf] %vm1186, %v1031
  %1200 = vst.msk [vmem:[%s881 + $0x34] sm:$0xf] %vm1186, %v1033
  %1201 = vst.msk [vmem:[%s881 + $0x38] sm:$0xf] %vm1186, %v1035
  %1202 = vst.msk [vmem:[%s881 + $0x3c] sm:$0xf] %vm1186, %v1037
  %1203 = vst.msk [vmem:[%s881 + $0x40] sm:$0xf] %vm1186, %v1039
  %1204 = vst.msk [vmem:[%s881 + $0x44] sm:$0xf] %vm1186, %v1041
  %1205 = vst.msk [vmem:[%s881 + $0x48] sm:$0xf] %vm1186, %v1043
  %1206 = vst.msk [vmem:[%s881 + $0x4c] sm:$0xf] %vm1186, %v1045
  %1207 = vst.msk [vmem:[%s881 + $0x50] sm:$0xf] %vm1186, %v1047
  %1208 = vst.msk [vmem:[%s881 + $0x54] sm:$0xf] %vm1186, %v1049
  %1209 = vst.msk [vmem:[%s881 + $0x58] sm:$0xf] %vm1186, %v1051
  %1210 = vst.msk [vmem:[%s881 + $0x5c] sm:$0xf] %vm1186, %v1053
  %1211 = vst.msk [vmem:[%s881 + $0x60] sm:$0xf] %vm1186, %v1055
  %1212 = vst.msk [vmem:[%s881 + $0x64] sm:$0xf] %vm1186, %v1057
  %1213 = vst.msk [vmem:[%s881 + $0x68] sm:$0xf] %vm1186, %v1059
  %1214 = vst.msk [vmem:[%s881 + $0x6c] sm:$0xf] %vm1186, %v1061
  %1215 = vst.msk [vmem:[%s881 + $0x70] sm:$0xf] %vm1186, %v1063
  %1216 = vst.msk [vmem:[%s881 + $0x74] sm:$0xf] %vm1186, %v1065
  %1217 = vst.msk [vmem:[%s881 + $0x80] sm:$0xf] %vm1186, %v1067
  %1218 = vst.msk [vmem:[%s881 + $0x84] sm:$0xf] %vm1186, %v1069
  %1219 = vst.msk [vmem:[%s881 + $0x88] sm:$0xf] %vm1186, %v1071
  %1220 = vst.msk [vmem:[%s881 + $0x8c] sm:$0xf] %vm1186, %v1073
  %1221 = vst.msk [vmem:[%s881 + $0x90] sm:$0xf] %vm1186, %v1075
  %1222 = vst.msk [vmem:[%s881 + $0x94] sm:$0xf] %vm1186, %v1077
  %1223 = vst.msk [vmem:[%s881 + $0x98] sm:$0xf] %vm1186, %v1079
  %1224 = vst.msk [vmem:[%s881 + $0x9c] sm:$0xf] %vm1186, %v1081
  %1225 = vst.msk [vmem:[%s881 + $0xa0] sm:$0xf] %vm1186, %v1083
  %1226 = vst.msk [vmem:[%s881 + $0xa4] sm:$0xf] %vm1186, %v1085
  %1227 = vst.msk [vmem:[%s881 + $0xa8] sm:$0xf] %vm1186, %v1087
  %1228 = vst.msk [vmem:[%s881 + $0xac] sm:$0xf] %vm1186, %v1089
  %1229 = vst.msk [vmem:[%s881 + $0xb0] sm:$0xf] %vm1186, %v1091
  %1230 = vst.msk [vmem:[%s881 + $0xb4] sm:$0xf] %vm1186, %v1093
  %1231 = vst.msk [vmem:[%s881 + $0xb8] sm:$0xf] %vm1186, %v1095
  %1232 = vst.msk [vmem:[%s881 + $0xbc] sm:$0xf] %vm1186, %v1097
  %1233 = vst.msk [vmem:[%s881 + $0xc0] sm:$0xf] %vm1186, %v1099
  %1234 = vst.msk [vmem:[%s881 + $0xc4] sm:$0xf] %vm1186, %v1101
  %1235 = vst.msk [vmem:[%s881 + $0xc8] sm:$0xf] %vm1186, %v1103
  %1236 = vst.msk [vmem:[%s881 + $0xcc] sm:$0xf] %vm1186, %v1105
  %1237 = vst.msk [vmem:[%s881 + $0xd0] sm:$0xf] %vm1186, %v1107
  %1238 = vst.msk [vmem:[%s881 + $0xd4] sm:$0xf] %vm1186, %v1109
  %1239 = vst.msk [vmem:[%s881 + $0xd8] sm:$0xf] %vm1186, %v1111
  %1240 = vst.msk [vmem:[%s881 + $0xdc] sm:$0xf] %vm1186, %v1113
  %1241 = vst.msk [vmem:[%s881 + $0xe0] sm:$0xf] %vm1186, %v1115
  %1242 = vst.msk [vmem:[%s881 + $0xe4] sm:$0xf] %vm1186, %v1117
  %1243 = vst.msk [vmem:[%s881 + $0xe8] sm:$0xf] %vm1186, %v1119
  %1244 = vst.msk [vmem:[%s881 + $0xec] sm:$0xf] %vm1186, %v1121
  %1245 = vst.msk [vmem:[%s881 + $0xf0] sm:$0xf] %vm1186, %v1123
  %1246 = vst.msk [vmem:[%s881 + $0xf4] sm:$0xf] %vm1186, %v1125
  %vm1247 = vsmask.f32 3328
  %vm1248 = vsmask.f32 7440
  %vm1249 = vmor %vm1247, %vm1248
  %v1250 = vrot.slane %v342, 4
  %v1251 = vrot.slane %v345, 5
  %v1252 = vor.u32 %v1250, %v1251
  %v1253 = vrot.slane %v1252, 4
  %v1254 = vrot.slane %v353, 5
  %v1255 = vsel %vm1249, %v1253, %v1254
  %v1256 = vrot.slane %v350, 4
  %v1257 = vor.u32 %v1256, %v1254
  %v1258 = vrot.slane %v1257, 4
  %v1259 = vrot.slane %v358, 4
  %v1260 = vrot.slane %v361, 5
  %v1261 = vor.u32 %v1259, %v1260
  %v1262 = vrot.slane %v1261, 4
  %v1263 = vrot.slane %v369, 5
  %v1264 = vsel %vm1249, %v1262, %v1263
  %v1265 = vrot.slane %v366, 4
  %v1266 = vor.u32 %v1265, %v1263
  %v1267 = vrot.slane %v1266, 4
  %v1268 = vrot.slane %v374, 4
  %v1269 = vrot.slane %v377, 5
  %v1270 = vor.u32 %v1268, %v1269
  %v1271 = vrot.slane %v1270, 4
  %v1272 = vrot.slane %v385, 5
  %v1273 = vsel %vm1249, %v1271, %v1272
  %v1274 = vrot.slane %v382, 4
  %v1275 = vor.u32 %v1274, %v1272
  %v1276 = vrot.slane %v1275, 4
  %v1277 = vrot.slane %v390, 4
  %v1278 = vrot.slane %v393, 5
  %v1279 = vor.u32 %v1277, %v1278
  %v1280 = vrot.slane %v1279, 4
  %v1281 = vrot.slane %v401, 5
  %v1282 = vsel %vm1249, %v1280, %v1281
  %v1283 = vrot.slane %v398, 4
  %v1284 = vor.u32 %v1283, %v1281
  %v1285 = vrot.slane %v1284, 4
  %v1286 = vrot.slane %v406, 4
  %v1287 = vrot.slane %v409, 5
  %v1288 = vor.u32 %v1286, %v1287
  %v1289 = vrot.slane %v1288, 4
  %v1290 = vrot.slane %v417, 5
  %v1291 = vsel %vm1249, %v1289, %v1290
  %v1292 = vrot.slane %v414, 4
  %v1293 = vor.u32 %v1292, %v1290
  %v1294 = vrot.slane %v1293, 4
  %v1295 = vrot.slane %v422, 4
  %v1296 = vrot.slane %v425, 5
  %v1297 = vor.u32 %v1295, %v1296
  %v1298 = vrot.slane %v1297, 4
  %v1299 = vrot.slane %v433, 5
  %v1300 = vsel %vm1249, %v1298, %v1299
  %v1301 = vrot.slane %v430, 4
  %v1302 = vor.u32 %v1301, %v1299
  %v1303 = vrot.slane %v1302, 4
  %v1304 = vrot.slane %v438, 4
  %v1305 = vrot.slane %v441, 5
  %v1306 = vor.u32 %v1304, %v1305
  %v1307 = vrot.slane %v1306, 4
  %v1308 = vrot.slane %v449, 5
  %v1309 = vsel %vm1249, %v1307, %v1308
  %v1310 = vrot.slane %v446, 4
  %v1311 = vor.u32 %v1310, %v1308
  %v1312 = vrot.slane %v1311, 4
  %v1313 = vrot.slane %v454, 4
  %v1314 = vrot.slane %v457, 5
  %v1315 = vor.u32 %v1313, %v1314
  %v1316 = vrot.slane %v1315, 4
  %v1317 = vrot.slane %v465, 5
  %v1318 = vsel %vm1249, %v1316, %v1317
  %v1319 = vrot.slane %v462, 4
  %v1320 = vor.u32 %v1319, %v1317
  %v1321 = vrot.slane %v1320, 4
  %v1322 = vrot.slane %v470, 4
  %v1323 = vrot.slane %v473, 5
  %v1324 = vor.u32 %v1322, %v1323
  %v1325 = vrot.slane %v1324, 4
  %v1326 = vrot.slane %v481, 5
  %v1327 = vsel %vm1249, %v1325, %v1326
  %v1328 = vrot.slane %v478, 4
  %v1329 = vor.u32 %v1328, %v1326
  %v1330 = vrot.slane %v1329, 4
  %v1331 = vrot.slane %v486, 4
  %v1332 = vrot.slane %v489, 5
  %v1333 = vor.u32 %v1331, %v1332
  %v1334 = vrot.slane %v1333, 4
  %v1335 = vrot.slane %v497, 5
  %v1336 = vsel %vm1249, %v1334, %v1335
  %v1337 = vrot.slane %v494, 4
  %v1338 = vor.u32 %v1337, %v1335
  %v1339 = vrot.slane %v1338, 4
  %v1340 = vrot.slane %v502, 4
  %v1341 = vrot.slane %v505, 5
  %v1342 = vor.u32 %v1340, %v1341
  %v1343 = vrot.slane %v1342, 4
  %v1344 = vrot.slane %v513, 5
  %v1345 = vsel %vm1249, %v1343, %v1344
  %v1346 = vrot.slane %v510, 4
  %v1347 = vor.u32 %v1346, %v1344
  %v1348 = vrot.slane %v1347, 4
  %v1349 = vrot.slane %v518, 4
  %v1350 = vrot.slane %v521, 5
  %v1351 = vor.u32 %v1349, %v1350
  %v1352 = vrot.slane %v1351, 4
  %v1353 = vrot.slane %v529, 5
  %v1354 = vsel %vm1249, %v1352, %v1353
  %v1355 = vrot.slane %v526, 4
  %v1356 = vor.u32 %v1355, %v1353
  %v1357 = vrot.slane %v1356, 4
  %v1358 = vrot.slane %v534, 4
  %v1359 = vrot.slane %v537, 5
  %v1360 = vor.u32 %v1358, %v1359
  %v1361 = vrot.slane %v1360, 4
  %v1362 = vrot.slane %v545, 5
  %v1363 = vsel %vm1249, %v1361, %v1362
  %v1364 = vrot.slane %v542, 4
  %v1365 = vor.u32 %v1364, %v1362
  %v1366 = vrot.slane %v1365, 4
  %v1367 = vrot.slane %v550, 4
  %v1368 = vrot.slane %v553, 5
  %v1369 = vor.u32 %v1367, %v1368
  %v1370 = vrot.slane %v1369, 4
  %v1371 = vrot.slane %v561, 5
  %v1372 = vsel %vm1249, %v1370, %v1371
  %v1373 = vrot.slane %v558, 4
  %v1374 = vor.u32 %v1373, %v1371
  %v1375 = vrot.slane %v1374, 4
  %v1376 = vrot.slane %v566, 4
  %v1377 = vrot.slane %v569, 5
  %v1378 = vor.u32 %v1376, %v1377
  %v1379 = vrot.slane %v1378, 4
  %v1380 = vrot.slane %v577, 5
  %v1381 = vsel %vm1249, %v1379, %v1380
  %v1382 = vrot.slane %v574, 4
  %v1383 = vor.u32 %v1382, %v1380
  %v1384 = vrot.slane %v1383, 4
  %v1385 = vrot.slane %v582, 4
  %v1386 = vrot.slane %v585, 5
  %v1387 = vor.u32 %v1385, %v1386
  %v1388 = vrot.slane %v1387, 4
  %v1389 = vrot.slane %v593, 5
  %v1390 = vsel %vm1249, %v1388, %v1389
  %v1391 = vrot.slane %v590, 4
  %v1392 = vor.u32 %v1391, %v1389
  %v1393 = vrot.slane %v1392, 4
  %v1394 = vrot.slane %v598, 4
  %v1395 = vrot.slane %v601, 5
  %v1396 = vor.u32 %v1394, %v1395
  %v1397 = vrot.slane %v1396, 4
  %v1398 = vrot.slane %v609, 5
  %v1399 = vsel %vm1249, %v1397, %v1398
  %v1400 = vrot.slane %v606, 4
  %v1401 = vor.u32 %v1400, %v1398
  %v1402 = vrot.slane %v1401, 4
  %v1403 = vrot.slane %v614, 4
  %v1404 = vrot.slane %v617, 5
  %v1405 = vor.u32 %v1403, %v1404
  %v1406 = vrot.slane %v1405, 4
  %v1407 = vrot.slane %v625, 5
  %v1408 = vsel %vm1249, %v1406, %v1407
  %v1409 = vrot.slane %v622, 4
  %v1410 = vor.u32 %v1409, %v1407
  %v1411 = vrot.slane %v1410, 4
  %v1412 = vrot.slane %v630, 4
  %v1413 = vrot.slane %v633, 5
  %v1414 = vor.u32 %v1412, %v1413
  %v1415 = vrot.slane %v1414, 4
  %v1416 = vrot.slane %v641, 5
  %v1417 = vsel %vm1249, %v1415, %v1416
  %v1418 = vrot.slane %v638, 4
  %v1419 = vor.u32 %v1418, %v1416
  %v1420 = vrot.slane %v1419, 4
  %v1421 = vrot.slane %v646, 4
  %v1422 = vrot.slane %v649, 5
  %v1423 = vor.u32 %v1421, %v1422
  %v1424 = vrot.slane %v1423, 4
  %v1425 = vrot.slane %v657, 5
  %v1426 = vsel %vm1249, %v1424, %v1425
  %v1427 = vrot.slane %v654, 4
  %v1428 = vor.u32 %v1427, %v1425
  %v1429 = vrot.slane %v1428, 4
  %v1430 = vrot.slane %v662, 4
  %v1431 = vrot.slane %v665, 5
  %v1432 = vor.u32 %v1430, %v1431
  %v1433 = vrot.slane %v1432, 4
  %v1434 = vrot.slane %v673, 5
  %v1435 = vsel %vm1249, %v1433, %v1434
  %v1436 = vrot.slane %v670, 4
  %v1437 = vor.u32 %v1436, %v1434
  %v1438 = vrot.slane %v1437, 4
  %v1439 = vrot.slane %v678, 4
  %v1440 = vrot.slane %v681, 5
  %v1441 = vor.u32 %v1439, %v1440
  %v1442 = vrot.slane %v1441, 4
  %v1443 = vrot.slane %v689, 5
  %v1444 = vsel %vm1249, %v1442, %v1443
  %v1445 = vrot.slane %v686, 4
  %v1446 = vor.u32 %v1445, %v1443
  %v1447 = vrot.slane %v1446, 4
  %v1448 = vrot.slane %v694, 4
  %v1449 = vrot.slane %v697, 5
  %v1450 = vor.u32 %v1448, %v1449
  %v1451 = vrot.slane %v1450, 4
  %v1452 = vrot.slane %v705, 5
  %v1453 = vsel %vm1249, %v1451, %v1452
  %v1454 = vrot.slane %v702, 4
  %v1455 = vor.u32 %v1454, %v1452
  %v1456 = vrot.slane %v1455, 4
  %v1457 = vrot.slane %v710, 4
  %v1458 = vrot.slane %v713, 5
  %v1459 = vor.u32 %v1457, %v1458
  %v1460 = vrot.slane %v1459, 4
  %v1461 = vrot.slane %v721, 5
  %v1462 = vsel %vm1249, %v1460, %v1461
  %v1463 = vrot.slane %v718, 4
  %v1464 = vor.u32 %v1463, %v1461
  %v1465 = vrot.slane %v1464, 4
  %v1466 = vrot.slane %v726, 4
  %v1467 = vrot.slane %v729, 5
  %v1468 = vor.u32 %v1466, %v1467
  %v1469 = vrot.slane %v1468, 4
  %v1470 = vrot.slane %v737, 5
  %v1471 = vsel %vm1249, %v1469, %v1470
  %v1472 = vrot.slane %v734, 4
  %v1473 = vor.u32 %v1472, %v1470
  %v1474 = vrot.slane %v1473, 4
  %v1475 = vrot.slane %v742, 4
  %v1476 = vrot.slane %v745, 5
  %v1477 = vor.u32 %v1475, %v1476
  %v1478 = vrot.slane %v1477, 4
  %v1479 = vrot.slane %v753, 5
  %v1480 = vsel %vm1249, %v1478, %v1479
  %v1481 = vrot.slane %v750, 4
  %v1482 = vor.u32 %v1481, %v1479
  %v1483 = vrot.slane %v1482, 4
  %v1484 = vrot.slane %v758, 4
  %v1485 = vrot.slane %v761, 5
  %v1486 = vor.u32 %v1484, %v1485
  %v1487 = vrot.slane %v1486, 4
  %v1488 = vrot.slane %v769, 5
  %v1489 = vsel %vm1249, %v1487, %v1488
  %v1490 = vrot.slane %v766, 4
  %v1491 = vor.u32 %v1490, %v1488
  %v1492 = vrot.slane %v1491, 4
  %v1493 = vrot.slane %v774, 4
  %v1494 = vrot.slane %v777, 5
  %v1495 = vor.u32 %v1493, %v1494
  %v1496 = vrot.slane %v1495, 4
  %v1497 = vrot.slane %v785, 5
  %v1498 = vsel %vm1249, %v1496, %v1497
  %v1499 = vrot.slane %v782, 4
  %v1500 = vor.u32 %v1499, %v1497
  %v1501 = vrot.slane %v1500, 4
  %v1502 = vrot.slane %v790, 4
  %v1503 = vrot.slane %v793, 5
  %v1504 = vor.u32 %v1502, %v1503
  %v1505 = vrot.slane %v1504, 4
  %v1506 = vrot.slane %v801, 5
  %v1507 = vsel %vm1249, %v1505, %v1506
  %v1508 = vrot.slane %v798, 4
  %v1509 = vor.u32 %v1508, %v1506
  %v1510 = vrot.slane %v1509, 4
  %v1511 = vrot.slane %v806, 4
  %v1512 = vrot.slane %v809, 5
  %v1513 = vor.u32 %v1511, %v1512
  %v1514 = vrot.slane %v1513, 4
  %v1515 = vrot.slane %v817, 5
  %v1516 = vsel %vm1249, %v1514, %v1515
  %v1517 = vrot.slane %v814, 4
  %v1518 = vor.u32 %v1517, %v1515
  %v1519 = vrot.slane %v1518, 4
  %1520 = vrot.lane.b32.xlu0 %v1255, 16
  %v1521 = vpop.permute.xlu0 %1520
  %1522 = vrot.lane.b32.xlu0 %v1258, 16
  %v1523 = vpop.permute.xlu0 %1522
  %1524 = vrot.lane.b32.xlu0 %v1264, 16
  %v1525 = vpop.permute.xlu0 %1524
  %1526 = vrot.lane.b32.xlu0 %v1267, 16
  %v1527 = vpop.permute.xlu0 %1526
  %1528 = vrot.lane.b32.xlu0 %v1273, 16
  %v1529 = vpop.permute.xlu0 %1528
  %1530 = vrot.lane.b32.xlu0 %v1276, 16
  %v1531 = vpop.permute.xlu0 %1530
  %1532 = vrot.lane.b32.xlu0 %v1282, 16
  %v1533 = vpop.permute.xlu0 %1532
  %1534 = vrot.lane.b32.xlu0 %v1285, 16
  %v1535 = vpop.permute.xlu0 %1534
  %1536 = vrot.lane.b32.xlu0 %v1291, 16
  %v1537 = vpop.permute.xlu0 %1536
  %1538 = vrot.lane.b32.xlu0 %v1294, 16
  %v1539 = vpop.permute.xlu0 %1538
  %1540 = vrot.lane.b32.xlu0 %v1300, 16
  %v1541 = vpop.permute.xlu0 %1540
  %1542 = vrot.lane.b32.xlu0 %v1303, 16
  %v1543 = vpop.permute.xlu0 %1542
  %1544 = vrot.lane.b32.xlu0 %v1309, 16
  %v1545 = vpop.permute.xlu0 %1544
  %1546 = vrot.lane.b32.xlu0 %v1312, 16
  %v1547 = vpop.permute.xlu0 %1546
  %1548 = vrot.lane.b32.xlu0 %v1318, 16
  %v1549 = vpop.permute.xlu0 %1548
  %1550 = vrot.lane.b32.xlu0 %v1321, 16
  %v1551 = vpop.permute.xlu0 %1550
  %1552 = vrot.lane.b32.xlu0 %v1327, 16
  %v1553 = vpop.permute.xlu0 %1552
  %1554 = vrot.lane.b32.xlu0 %v1330, 16
  %v1555 = vpop.permute.xlu0 %1554
  %1556 = vrot.lane.b32.xlu0 %v1336, 16
  %v1557 = vpop.permute.xlu0 %1556
  %1558 = vrot.lane.b32.xlu0 %v1339, 16
  %v1559 = vpop.permute.xlu0 %1558
  %1560 = vrot.lane.b32.xlu0 %v1345, 16
  %v1561 = vpop.permute.xlu0 %1560
  %1562 = vrot.lane.b32.xlu0 %v1348, 16
  %v1563 = vpop.permute.xlu0 %1562
  %1564 = vrot.lane.b32.xlu0 %v1354, 16
  %v1565 = vpop.permute.xlu0 %1564
  %1566 = vrot.lane.b32.xlu0 %v1357, 16
  %v1567 = vpop.permute.xlu0 %1566
  %1568 = vrot.lane.b32.xlu0 %v1363, 16
  %v1569 = vpop.permute.xlu0 %1568
  %1570 = vrot.lane.b32.xlu0 %v1366, 16
  %v1571 = vpop.permute.xlu0 %1570
  %1572 = vrot.lane.b32.xlu0 %v1372, 16
  %v1573 = vpop.permute.xlu0 %1572
  %1574 = vrot.lane.b32.xlu0 %v1375, 16
  %v1575 = vpop.permute.xlu0 %1574
  %1576 = vrot.lane.b32.xlu0 %v1381, 16
  %v1577 = vpop.permute.xlu0 %1576
  %1578 = vrot.lane.b32.xlu0 %v1384, 16
  %v1579 = vpop.permute.xlu0 %1578
  %1580 = vrot.lane.b32.xlu0 %v1390, 16
  %v1581 = vpop.permute.xlu0 %1580
  %1582 = vrot.lane.b32.xlu0 %v1393, 16
  %v1583 = vpop.permute.xlu0 %1582
  %1584 = vrot.lane.b32.xlu0 %v1399, 16
  %v1585 = vpop.permute.xlu0 %1584
  %1586 = vrot.lane.b32.xlu0 %v1402, 16
  %v1587 = vpop.permute.xlu0 %1586
  %1588 = vrot.lane.b32.xlu0 %v1408, 16
  %v1589 = vpop.permute.xlu0 %1588
  %1590 = vrot.lane.b32.xlu0 %v1411, 16
  %v1591 = vpop.permute.xlu0 %1590
  %1592 = vrot.lane.b32.xlu0 %v1417, 16
  %v1593 = vpop.permute.xlu0 %1592
  %1594 = vrot.lane.b32.xlu0 %v1420, 16
  %v1595 = vpop.permute.xlu0 %1594
  %1596 = vrot.lane.b32.xlu0 %v1426, 16
  %v1597 = vpop.permute.xlu0 %1596
  %1598 = vrot.lane.b32.xlu0 %v1429, 16
  %v1599 = vpop.permute.xlu0 %1598
  %1600 = vrot.lane.b32.xlu0 %v1435, 16
  %v1601 = vpop.permute.xlu0 %1600
  %1602 = vrot.lane.b32.xlu0 %v1438, 16
  %v1603 = vpop.permute.xlu0 %1602
  %1604 = vrot.lane.b32.xlu0 %v1444, 16
  %v1605 = vpop.permute.xlu0 %1604
  %1606 = vrot.lane.b32.xlu0 %v1447, 16
  %v1607 = vpop.permute.xlu0 %1606
  %1608 = vrot.lane.b32.xlu0 %v1453, 16
  %v1609 = vpop.permute.xlu0 %1608
  %1610 = vrot.lane.b32.xlu0 %v1456, 16
  %v1611 = vpop.permute.xlu0 %1610
  %1612 = vrot.lane.b32.xlu0 %v1462, 16
  %v1613 = vpop.permute.xlu0 %1612
  %1614 = vrot.lane.b32.xlu0 %v1465, 16
  %v1615 = vpop.permute.xlu0 %1614
  %1616 = vrot.lane.b32.xlu0 %v1471, 16
  %v1617 = vpop.permute.xlu0 %1616
  %1618 = vrot.lane.b32.xlu0 %v1474, 16
  %v1619 = vpop.permute.xlu0 %1618
  %1620 = vrot.lane.b32.xlu0 %v1480, 16
  %v1621 = vpop.permute.xlu0 %1620
  %1622 = vrot.lane.b32.xlu0 %v1483, 16
  %v1623 = vpop.permute.xlu0 %1622
  %1624 = vrot.lane.b32.xlu0 %v1489, 16
  %v1625 = vpop.permute.xlu0 %1624
  %1626 = vrot.lane.b32.xlu0 %v1492, 16
  %v1627 = vpop.permute.xlu0 %1626
  %1628 = vrot.lane.b32.xlu0 %v1498, 16
  %v1629 = vpop.permute.xlu0 %1628
  %1630 = vrot.lane.b32.xlu0 %v1501, 16
  %v1631 = vpop.permute.xlu0 %1630
  %1632 = vrot.lane.b32.xlu0 %v1507, 16
  %v1633 = vpop.permute.xlu0 %1632
  %1634 = vrot.lane.b32.xlu0 %v1510, 16
  %v1635 = vpop.permute.xlu0 %1634
  %1636 = vrot.lane.b32.xlu0 %v1516, 16
  %v1637 = vpop.permute.xlu0 %1636
  %1638 = vrot.lane.b32.xlu0 %v1519, 16
  %v1639 = vpop.permute.xlu0 %1638
  %vm1700 = vcmask 191616
  %1701 = vst.msk [vmem:[%s881] sm:$0xf] %vm1700, %v1521
  %vm1702 = vcmask 191616
  %vm1703 = vmand %vm1702, %vm1247
  %v1704 = vld [vmem:[%s881 + $0x4] sm:$0xf]
  %v1705 = vsel %vm1703, %v1523, %v1704
  %1706 = vst [vmem:[%s881 + $0x4] sm:$0xf] %v1705
  %1707 = vst.msk [vmem:[%s881 + $0x8] sm:$0xf] %vm1700, %v1525
  %v1708 = vld [vmem:[%s881 + $0xc] sm:$0xf]
  %v1709 = vsel %vm1703, %v1527, %v1708
  %1710 = vst [vmem:[%s881 + $0xc] sm:$0xf] %v1709
  %1711 = vst.msk [vmem:[%s881 + $0x10] sm:$0xf] %vm1700, %v1529
  %v1712 = vld [vmem:[%s881 + $0x14] sm:$0xf]
  %v1713 = vsel %vm1703, %v1531, %v1712
  %1714 = vst [vmem:[%s881 + $0x14] sm:$0xf] %v1713
  %1715 = vst.msk [vmem:[%s881 + $0x18] sm:$0xf] %vm1700, %v1533
  %v1716 = vld [vmem:[%s881 + $0x1c] sm:$0xf]
  %v1717 = vsel %vm1703, %v1535, %v1716
  %1718 = vst [vmem:[%s881 + $0x1c] sm:$0xf] %v1717
  %1719 = vst.msk [vmem:[%s881 + $0x20] sm:$0xf] %vm1700, %v1537
  %v1720 = vld [vmem:[%s881 + $0x24] sm:$0xf]
  %v1721 = vsel %vm1703, %v1539, %v1720
  %1722 = vst [vmem:[%s881 + $0x24] sm:$0xf] %v1721
  %1723 = vst.msk [vmem:[%s881 + $0x28] sm:$0xf] %vm1700, %v1541
  %v1724 = vld [vmem:[%s881 + $0x2c] sm:$0xf]
  %v1725 = vsel %vm1703, %v1543, %v1724
  %1726 = vst [vmem:[%s881 + $0x2c] sm:$0xf] %v1725
  %1727 = vst.msk [vmem:[%s881 + $0x30] sm:$0xf] %vm1700, %v1545
  %v1728 = vld [vmem:[%s881 + $0x34] sm:$0xf]
  %v1729 = vsel %vm1703, %v1547, %v1728
  %1730 = vst [vmem:[%s881 + $0x34] sm:$0xf] %v1729
  %1731 = vst.msk [vmem:[%s881 + $0x38] sm:$0xf] %vm1700, %v1549
  %v1732 = vld [vmem:[%s881 + $0x3c] sm:$0xf]
  %v1733 = vsel %vm1703, %v1551, %v1732
  %1734 = vst [vmem:[%s881 + $0x3c] sm:$0xf] %v1733
  %1735 = vst.msk [vmem:[%s881 + $0x40] sm:$0xf] %vm1700, %v1553
  %v1736 = vld [vmem:[%s881 + $0x44] sm:$0xf]
  %v1737 = vsel %vm1703, %v1555, %v1736
  %1738 = vst [vmem:[%s881 + $0x44] sm:$0xf] %v1737
  %1739 = vst.msk [vmem:[%s881 + $0x48] sm:$0xf] %vm1700, %v1557
  %v1740 = vld [vmem:[%s881 + $0x4c] sm:$0xf]
  %v1741 = vsel %vm1703, %v1559, %v1740
  %1742 = vst [vmem:[%s881 + $0x4c] sm:$0xf] %v1741
  %1743 = vst.msk [vmem:[%s881 + $0x50] sm:$0xf] %vm1700, %v1561
  %v1744 = vld [vmem:[%s881 + $0x54] sm:$0xf]
  %v1745 = vsel %vm1703, %v1563, %v1744
  %1746 = vst [vmem:[%s881 + $0x54] sm:$0xf] %v1745
  %1747 = vst.msk [vmem:[%s881 + $0x58] sm:$0xf] %vm1700, %v1565
  %v1748 = vld [vmem:[%s881 + $0x5c] sm:$0xf]
  %v1749 = vsel %vm1703, %v1567, %v1748
  %1750 = vst [vmem:[%s881 + $0x5c] sm:$0xf] %v1749
  %1751 = vst.msk [vmem:[%s881 + $0x60] sm:$0xf] %vm1700, %v1569
  %v1752 = vld [vmem:[%s881 + $0x64] sm:$0xf]
  %v1753 = vsel %vm1703, %v1571, %v1752
  %1754 = vst [vmem:[%s881 + $0x64] sm:$0xf] %v1753
  %1755 = vst.msk [vmem:[%s881 + $0x68] sm:$0xf] %vm1700, %v1573
  %v1756 = vld [vmem:[%s881 + $0x6c] sm:$0xf]
  %v1757 = vsel %vm1703, %v1575, %v1756
  %1758 = vst [vmem:[%s881 + $0x6c] sm:$0xf] %v1757
  %1759 = vst.msk [vmem:[%s881 + $0x70] sm:$0xf] %vm1700, %v1577
  %v1760 = vld [vmem:[%s881 + $0x74] sm:$0xf]
  %v1761 = vsel %vm1703, %v1579, %v1760
  %1762 = vst [vmem:[%s881 + $0x74] sm:$0xf] %v1761
  %1763 = vst.msk [vmem:[%s881 + $0x80] sm:$0xf] %vm1700, %v1581
  %v1764 = vld [vmem:[%s881 + $0x84] sm:$0xf]
  %v1765 = vsel %vm1703, %v1583, %v1764
  %1766 = vst [vmem:[%s881 + $0x84] sm:$0xf] %v1765
  %1767 = vst.msk [vmem:[%s881 + $0x88] sm:$0xf] %vm1700, %v1585
  %v1768 = vld [vmem:[%s881 + $0x8c] sm:$0xf]
  %v1769 = vsel %vm1703, %v1587, %v1768
  %1770 = vst [vmem:[%s881 + $0x8c] sm:$0xf] %v1769
  %1771 = vst.msk [vmem:[%s881 + $0x90] sm:$0xf] %vm1700, %v1589
  %v1772 = vld [vmem:[%s881 + $0x94] sm:$0xf]
  %v1773 = vsel %vm1703, %v1591, %v1772
  %1774 = vst [vmem:[%s881 + $0x94] sm:$0xf] %v1773
  %1775 = vst.msk [vmem:[%s881 + $0x98] sm:$0xf] %vm1700, %v1593
  %v1776 = vld [vmem:[%s881 + $0x9c] sm:$0xf]
  %v1777 = vsel %vm1703, %v1595, %v1776
  %1778 = vst [vmem:[%s881 + $0x9c] sm:$0xf] %v1777
  %1779 = vst.msk [vmem:[%s881 + $0xa0] sm:$0xf] %vm1700, %v1597
  %v1780 = vld [vmem:[%s881 + $0xa4] sm:$0xf]
  %v1781 = vsel %vm1703, %v1599, %v1780
  %1782 = vst [vmem:[%s881 + $0xa4] sm:$0xf] %v1781
  %1783 = vst.msk [vmem:[%s881 + $0xa8] sm:$0xf] %vm1700, %v1601
  %v1784 = vld [vmem:[%s881 + $0xac] sm:$0xf]
  %v1785 = vsel %vm1703, %v1603, %v1784
  %1786 = vst [vmem:[%s881 + $0xac] sm:$0xf] %v1785
  %1787 = vst.msk [vmem:[%s881 + $0xb0] sm:$0xf] %vm1700, %v1605
  %v1788 = vld [vmem:[%s881 + $0xb4] sm:$0xf]
  %v1789 = vsel %vm1703, %v1607, %v1788
  %1790 = vst [vmem:[%s881 + $0xb4] sm:$0xf] %v1789
  %1791 = vst.msk [vmem:[%s881 + $0xb8] sm:$0xf] %vm1700, %v1609
  %v1792 = vld [vmem:[%s881 + $0xbc] sm:$0xf]
  %v1793 = vsel %vm1703, %v1611, %v1792
  %1794 = vst [vmem:[%s881 + $0xbc] sm:$0xf] %v1793
  %1795 = vst.msk [vmem:[%s881 + $0xc0] sm:$0xf] %vm1700, %v1613
  %v1796 = vld [vmem:[%s881 + $0xc4] sm:$0xf]
  %v1797 = vsel %vm1703, %v1615, %v1796
  %1798 = vst [vmem:[%s881 + $0xc4] sm:$0xf] %v1797
  %1799 = vst.msk [vmem:[%s881 + $0xc8] sm:$0xf] %vm1700, %v1617
  %v1800 = vld [vmem:[%s881 + $0xcc] sm:$0xf]
  %v1801 = vsel %vm1703, %v1619, %v1800
  %1802 = vst [vmem:[%s881 + $0xcc] sm:$0xf] %v1801
  %1803 = vst.msk [vmem:[%s881 + $0xd0] sm:$0xf] %vm1700, %v1621
  %v1804 = vld [vmem:[%s881 + $0xd4] sm:$0xf]
  %v1805 = vsel %vm1703, %v1623, %v1804
  %1806 = vst [vmem:[%s881 + $0xd4] sm:$0xf] %v1805
  %1807 = vst.msk [vmem:[%s881 + $0xd8] sm:$0xf] %vm1700, %v1625
  %v1808 = vld [vmem:[%s881 + $0xdc] sm:$0xf]
  %v1809 = vsel %vm1703, %v1627, %v1808
  %1810 = vst [vmem:[%s881 + $0xdc] sm:$0xf] %v1809
  %1811 = vst.msk [vmem:[%s881 + $0xe0] sm:$0xf] %vm1700, %v1629
  %v1812 = vld [vmem:[%s881 + $0xe4] sm:$0xf]
  %v1813 = vsel %vm1703, %v1631, %v1812
  %1814 = vst [vmem:[%s881 + $0xe4] sm:$0xf] %v1813
  %1815 = vst.msk [vmem:[%s881 + $0xe8] sm:$0xf] %vm1700, %v1633
  %v1816 = vld [vmem:[%s881 + $0xec] sm:$0xf]
  %v1817 = vsel %vm1703, %v1635, %v1816
  %1818 = vst [vmem:[%s881 + $0xec] sm:$0xf] %v1817
  %1819 = vst.msk [vmem:[%s881 + $0xf0] sm:$0xf] %vm1700, %v1637
  %v1820 = vld [vmem:[%s881 + $0xf4] sm:$0xf]
  %v1821 = vsel %vm1703, %v1639, %v1820
  %1822 = vst [vmem:[%s881 + $0xf4] sm:$0xf] %v1821
  %v1825 = vunpack.c.l.b16 %v171
  %v1826 = vunpack.c.h.b16 %v171
  %v1827 = vunpack.c.l.b16 %v187
  %v1828 = vunpack.c.h.b16 %v187
  %v1829 = vpack.c.b16 %v1825, %v1825
  %v1830 = vpack.c.b16 %v1826, %v1826
  %v1831 = vpack.c.b16 %v1827, %v1827
  %v1832 = vpack.c.b16 %v1828, %v1828
  %v1834 = vshrl.u32 %v1829, 16
  %v1836 = vrot.slane %v1834, 7
  %v1837 = vshll.u32 %v1829, 16
  %v1839 = vor.u32 %v1836, %v1837
  %v1840 = vrot.slane %v1836, 4
  %v1842 = vshrl.u32 %v1830, 16
  %v1844 = vrot.slane %v1842, 7
  %v1845 = vshll.u32 %v1830, 16
  %v1847 = vor.u32 %v1844, %v1845
  %v1848 = vsel %vm340, %v1840, %v1847
  %v1850 = vshrl.u32 %v1831, 16
  %v1852 = vrot.slane %v1850, 7
  %v1853 = vshll.u32 %v1831, 16
  %v1855 = vor.u32 %v1852, %v1853
  %v1856 = vrot.slane %v1852, 4
  %v1858 = vshrl.u32 %v1832, 16
  %v1860 = vrot.slane %v1858, 7
  %v1861 = vshll.u32 %v1832, 16
  %v1863 = vor.u32 %v1860, %v1861
  %v1864 = vsel %vm340, %v1856, %v1863
  %1865 = vrot.lane.b32.xlu0 %v347, 24
  %v1866 = vpop.permute.xlu0 %1865
  %1867 = vrot.lane.b32.xlu0 %v356, 24
  %v1868 = vpop.permute.xlu0 %1867
  %1869 = vrot.lane.b32.xlu0 %v363, 24
  %v1870 = vpop.permute.xlu0 %1869
  %1871 = vrot.lane.b32.xlu0 %v372, 24
  %v1872 = vpop.permute.xlu0 %1871
  %1873 = vrot.lane.b32.xlu0 %v379, 24
  %v1874 = vpop.permute.xlu0 %1873
  %1875 = vrot.lane.b32.xlu0 %v388, 24
  %v1876 = vpop.permute.xlu0 %1875
  %1877 = vrot.lane.b32.xlu0 %v395, 24
  %v1878 = vpop.permute.xlu0 %1877
  %1879 = vrot.lane.b32.xlu0 %v404, 24
  %v1880 = vpop.permute.xlu0 %1879
  %1881 = vrot.lane.b32.xlu0 %v411, 24
  %v1882 = vpop.permute.xlu0 %1881
  %1883 = vrot.lane.b32.xlu0 %v420, 24
  %v1884 = vpop.permute.xlu0 %1883
  %1885 = vrot.lane.b32.xlu0 %v427, 24
  %v1886 = vpop.permute.xlu0 %1885
  %1887 = vrot.lane.b32.xlu0 %v436, 24
  %v1888 = vpop.permute.xlu0 %1887
  %1889 = vrot.lane.b32.xlu0 %v443, 24
  %v1890 = vpop.permute.xlu0 %1889
  %1891 = vrot.lane.b32.xlu0 %v452, 24
  %v1892 = vpop.permute.xlu0 %1891
  %1893 = vrot.lane.b32.xlu0 %v459, 24
  %v1894 = vpop.permute.xlu0 %1893
  %1895 = vrot.lane.b32.xlu0 %v468, 24
  %v1896 = vpop.permute.xlu0 %1895
  %1897 = vrot.lane.b32.xlu0 %v475, 24
  %v1898 = vpop.permute.xlu0 %1897
  %1899 = vrot.lane.b32.xlu0 %v484, 24
  %v1900 = vpop.permute.xlu0 %1899
  %1901 = vrot.lane.b32.xlu0 %v491, 24
  %v1902 = vpop.permute.xlu0 %1901
  %1903 = vrot.lane.b32.xlu0 %v500, 24
  %v1904 = vpop.permute.xlu0 %1903
  %1905 = vrot.lane.b32.xlu0 %v507, 24
  %v1906 = vpop.permute.xlu0 %1905
  %1907 = vrot.lane.b32.xlu0 %v516, 24
  %v1908 = vpop.permute.xlu0 %1907
  %1909 = vrot.lane.b32.xlu0 %v523, 24
  %v1910 = vpop.permute.xlu0 %1909
  %1911 = vrot.lane.b32.xlu0 %v532, 24
  %v1912 = vpop.permute.xlu0 %1911
  %1913 = vrot.lane.b32.xlu0 %v539, 24
  %v1914 = vpop.permute.xlu0 %1913
  %1915 = vrot.lane.b32.xlu0 %v548, 24
  %v1916 = vpop.permute.xlu0 %1915
  %1917 = vrot.lane.b32.xlu0 %v555, 24
  %v1918 = vpop.permute.xlu0 %1917
  %1919 = vrot.lane.b32.xlu0 %v564, 24
  %v1920 = vpop.permute.xlu0 %1919
  %1921 = vrot.lane.b32.xlu0 %v571, 24
  %v1922 = vpop.permute.xlu0 %1921
  %1923 = vrot.lane.b32.xlu0 %v580, 24
  %v1924 = vpop.permute.xlu0 %1923
  %1925 = vrot.lane.b32.xlu0 %v1839, 24
  %v1926 = vpop.permute.xlu0 %1925
  %1927 = vrot.lane.b32.xlu0 %v1848, 24
  %v1928 = vpop.permute.xlu0 %1927
  %1929 = vrot.lane.b32.xlu0 %v587, 24
  %v1930 = vpop.permute.xlu0 %1929
  %1931 = vrot.lane.b32.xlu0 %v596, 24
  %v1932 = vpop.permute.xlu0 %1931
  %1933 = vrot.lane.b32.xlu0 %v603, 24
  %v1934 = vpop.permute.xlu0 %1933
  %1935 = vrot.lane.b32.xlu0 %v612, 24
  %v1936 = vpop.permute.xlu0 %1935
  %1937 = vrot.lane.b32.xlu0 %v619, 24
  %v1938 = vpop.permute.xlu0 %1937
  %1939 = vrot.lane.b32.xlu0 %v628, 24
  %v1940 = vpop.permute.xlu0 %1939
  %1941 = vrot.lane.b32.xlu0 %v635, 24
  %v1942 = vpop.permute.xlu0 %1941
  %1943 = vrot.lane.b32.xlu0 %v644, 24
  %v1944 = vpop.permute.xlu0 %1943
  %1945 = vrot.lane.b32.xlu0 %v651, 24
  %v1946 = vpop.permute.xlu0 %1945
  %1947 = vrot.lane.b32.xlu0 %v660, 24
  %v1948 = vpop.permute.xlu0 %1947
  %1949 = vrot.lane.b32.xlu0 %v667, 24
  %v1950 = vpop.permute.xlu0 %1949
  %1951 = vrot.lane.b32.xlu0 %v676, 24
  %v1952 = vpop.permute.xlu0 %1951
  %1953 = vrot.lane.b32.xlu0 %v683, 24
  %v1954 = vpop.permute.xlu0 %1953
  %1955 = vrot.lane.b32.xlu0 %v692, 24
  %v1956 = vpop.permute.xlu0 %1955
  %1957 = vrot.lane.b32.xlu0 %v699, 24
  %v1958 = vpop.permute.xlu0 %1957
  %1959 = vrot.lane.b32.xlu0 %v708, 24
  %v1960 = vpop.permute.xlu0 %1959
  %1961 = vrot.lane.b32.xlu0 %v715, 24
  %v1962 = vpop.permute.xlu0 %1961
  %1963 = vrot.lane.b32.xlu0 %v724, 24
  %v1964 = vpop.permute.xlu0 %1963
  %1965 = vrot.lane.b32.xlu0 %v731, 24
  %v1966 = vpop.permute.xlu0 %1965
  %1967 = vrot.lane.b32.xlu0 %v740, 24
  %v1968 = vpop.permute.xlu0 %1967
  %1969 = vrot.lane.b32.xlu0 %v747, 24
  %v1970 = vpop.permute.xlu0 %1969
  %1971 = vrot.lane.b32.xlu0 %v756, 24
  %v1972 = vpop.permute.xlu0 %1971
  %1973 = vrot.lane.b32.xlu0 %v763, 24
  %v1974 = vpop.permute.xlu0 %1973
  %1975 = vrot.lane.b32.xlu0 %v772, 24
  %v1976 = vpop.permute.xlu0 %1975
  %1977 = vrot.lane.b32.xlu0 %v779, 24
  %v1978 = vpop.permute.xlu0 %1977
  %1979 = vrot.lane.b32.xlu0 %v788, 24
  %v1980 = vpop.permute.xlu0 %1979
  %1981 = vrot.lane.b32.xlu0 %v795, 24
  %v1982 = vpop.permute.xlu0 %1981
  %1983 = vrot.lane.b32.xlu0 %v804, 24
  %v1984 = vpop.permute.xlu0 %1983
  %1985 = vrot.lane.b32.xlu0 %v811, 24
  %v1986 = vpop.permute.xlu0 %1985
  %1987 = vrot.lane.b32.xlu0 %v820, 24
  %v1988 = vpop.permute.xlu0 %1987
  %1989 = vrot.lane.b32.xlu0 %v1855, 24
  %v1990 = vpop.permute.xlu0 %1989
  %1991 = vrot.lane.b32.xlu0 %v1864, 24
  %v1992 = vpop.permute.xlu0 %1991
  %vm2057 = vcmask 257216
  %vm2058 = vmand %vm2057, %vm883
  %v2059 = vld [vmem:[#allocation2] sm:$0xf]
  %v2060 = vsel %vm2058, %v1866, %v2059
  %2061 = vst [vmem:[#allocation2] sm:$0xf] %v2060
  %vm2062 = vcmask 257216
  %2063 = vst.msk [vmem:[#allocation2 + $0x4] sm:$0xf] %vm2062, %v1868
  %v2064 = vld [vmem:[#allocation2 + $0x8] sm:$0xf]
  %v2065 = vsel %vm2058, %v1870, %v2064
  %2066 = vst [vmem:[#allocation2 + $0x8] sm:$0xf] %v2065
  %2067 = vst.msk [vmem:[#allocation2 + $0xc] sm:$0xf] %vm2062, %v1872
  %v2068 = vld [vmem:[#allocation2 + $0x10] sm:$0xf]
  %v2069 = vsel %vm2058, %v1874, %v2068
  %2070 = vst [vmem:[#allocation2 + $0x10] sm:$0xf] %v2069
  %2071 = vst.msk [vmem:[#allocation2 + $0x14] sm:$0xf] %vm2062, %v1876
  %v2072 = vld [vmem:[#allocation2 + $0x18] sm:$0xf]
  %v2073 = vsel %vm2058, %v1878, %v2072
  %2074 = vst [vmem:[#allocation2 + $0x18] sm:$0xf] %v2073
  %2075 = vst.msk [vmem:[#allocation2 + $0x1c] sm:$0xf] %vm2062, %v1880
  %v2076 = vld [vmem:[#allocation2 + $0x20] sm:$0xf]
  %v2077 = vsel %vm2058, %v1882, %v2076
  %2078 = vst [vmem:[#allocation2 + $0x20] sm:$0xf] %v2077
  %2079 = vst.msk [vmem:[#allocation2 + $0x24] sm:$0xf] %vm2062, %v1884
  %v2080 = vld [vmem:[#allocation2 + $0x28] sm:$0xf]
  %v2081 = vsel %vm2058, %v1886, %v2080
  %2082 = vst [vmem:[#allocation2 + $0x28] sm:$0xf] %v2081
  %2083 = vst.msk [vmem:[#allocation2 + $0x2c] sm:$0xf] %vm2062, %v1888
  %v2084 = vld [vmem:[#allocation2 + $0x30] sm:$0xf]
  %v2085 = vsel %vm2058, %v1890, %v2084
  %2086 = vst [vmem:[#allocation2 + $0x30] sm:$0xf] %v2085
  %2087 = vst.msk [vmem:[#allocation2 + $0x34] sm:$0xf] %vm2062, %v1892
  %v2088 = vld [vmem:[#allocation2 + $0x38] sm:$0xf]
  %v2089 = vsel %vm2058, %v1894, %v2088
  %2090 = vst [vmem:[#allocation2 + $0x38] sm:$0xf] %v2089
  %2091 = vst.msk [vmem:[#allocation2 + $0x3c] sm:$0xf] %vm2062, %v1896
  %v2092 = vld [vmem:[#allocation2 + $0x40] sm:$0xf]
  %v2093 = vsel %vm2058, %v1898, %v2092
  %2094 = vst [vmem:[#allocation2 + $0x40] sm:$0xf] %v2093
  %2095 = vst.msk [vmem:[#allocation2 + $0x44] sm:$0xf] %vm2062, %v1900
  %v2096 = vld [vmem:[#allocation2 + $0x48] sm:$0xf]
  %v2097 = vsel %vm2058, %v1902, %v2096
  %2098 = vst [vmem:[#allocation2 + $0x48] sm:$0xf] %v2097
  %2099 = vst.msk [vmem:[#allocation2 + $0x4c] sm:$0xf] %vm2062, %v1904
  %v2100 = vld [vmem:[#allocation2 + $0x50] sm:$0xf]
  %v2101 = vsel %vm2058, %v1906, %v2100
  %2102 = vst [vmem:[#allocation2 + $0x50] sm:$0xf] %v2101
  %2103 = vst.msk [vmem:[#allocation2 + $0x54] sm:$0xf] %vm2062, %v1908
  %v2104 = vld [vmem:[#allocation2 + $0x58] sm:$0xf]
  %v2105 = vsel %vm2058, %v1910, %v2104
  %2106 = vst [vmem:[#allocation2 + $0x58] sm:$0xf] %v2105
  %2107 = vst.msk [vmem:[#allocation2 + $0x5c] sm:$0xf] %vm2062, %v1912
  %v2108 = vld [vmem:[#allocation2 + $0x60] sm:$0xf]
  %v2109 = vsel %vm2058, %v1914, %v2108
  %2110 = vst [vmem:[#allocation2 + $0x60] sm:$0xf] %v2109
  %2111 = vst.msk [vmem:[#allocation2 + $0x64] sm:$0xf] %vm2062, %v1916
  %v2112 = vld [vmem:[#allocation2 + $0x68] sm:$0xf]
  %v2113 = vsel %vm2058, %v1918, %v2112
  %2114 = vst [vmem:[#allocation2 + $0x68] sm:$0xf] %v2113
  %2115 = vst.msk [vmem:[#allocation2 + $0x6c] sm:$0xf] %vm2062, %v1920
  %v2116 = vld [vmem:[#allocation2 + $0x70] sm:$0xf]
  %v2117 = vsel %vm2058, %v1922, %v2116
  %2118 = vst [vmem:[#allocation2 + $0x70] sm:$0xf] %v2117
  %2119 = vst.msk [vmem:[#allocation2 + $0x74] sm:$0xf] %vm2062, %v1924
  %v2120 = vld [vmem:[#allocation2 + $0x78] sm:$0xf]
  %v2121 = vsel %vm2058, %v1926, %v2120
  %2122 = vst [vmem:[#allocation2 + $0x78] sm:$0xf] %v2121
  %2123 = vst.msk [vmem:[#allocation2 + $0x7c] sm:$0xf] %vm2062, %v1928
  %v2124 = vld [vmem:[#allocation2 + $0x80] sm:$0xf]
  %v2125 = vsel %vm2058, %v1930, %v2124
  %2126 = vst [vmem:[#allocation2 + $0x80] sm:$0xf] %v2125
  %2127 = vst.msk [vmem:[#allocation2 + $0x84] sm:$0xf] %vm2062, %v1932
  %v2128 = vld [vmem:[#allocation2 + $0x88] sm:$0xf]
  %v2129 = vsel %vm2058, %v1934, %v2128
  %2130 = vst [vmem:[#allocation2 + $0x88] sm:$0xf] %v2129
  %2131 = vst.msk [vmem:[#allocation2 + $0x8c] sm:$0xf] %vm2062, %v1936
  %v2132 = vld [vmem:[#allocation2 + $0x90] sm:$0xf]
  %v2133 = vsel %vm2058, %v1938, %v2132
  %2134 = vst [vmem:[#allocation2 + $0x90] sm:$0xf] %v2133
  %2135 = vst.msk [vmem:[#allocation2 + $0x94] sm:$0xf] %vm2062, %v1940
  %v2136 = vld [vmem:[#allocation2 + $0x98] sm:$0xf]
  %v2137 = vsel %vm2058, %v1942, %v2136
  %2138 = vst [vmem:[#allocation2 + $0x98] sm:$0xf] %v2137
  %2139 = vst.msk [vmem:[#allocation2 + $0x9c] sm:$0xf] %vm2062, %v1944
  %v2140 = vld [vmem:[#allocation2 + $0xa0] sm:$0xf]
  %v2141 = vsel %vm2058, %v1946, %v2140
  %2142 = vst [vmem:[#allocation2 + $0xa0] sm:$0xf] %v2141
  %2143 = vst.msk [vmem:[#allocation2 + $0xa4] sm:$0xf] %vm2062, %v1948
  %v2144 = vld [vmem:[#allocation2 + $0xa8] sm:$0xf]
  %v2145 = vsel %vm2058, %v1950, %v2144
  %2146 = vst [vmem:[#allocation2 + $0xa8] sm:$0xf] %v2145
  %2147 = vst.msk [vmem:[#allocation2 + $0xac] sm:$0xf] %vm2062, %v1952
  %v2148 = vld [vmem:[#allocation2 + $0xb0] sm:$0xf]
  %v2149 = vsel %vm2058, %v1954, %v2148
  %2150 = vst [vmem:[#allocation2 + $0xb0] sm:$0xf] %v2149
  %2151 = vst.msk [vmem:[#allocation2 + $0xb4] sm:$0xf] %vm2062, %v1956
  %v2152 = vld [vmem:[#allocation2 + $0xb8] sm:$0xf]
  %v2153 = vsel %vm2058, %v1958, %v2152
  %2154 = vst [vmem:[#allocation2 + $0xb8] sm:$0xf] %v2153
  %2155 = vst.msk [vmem:[#allocation2 + $0xbc] sm:$0xf] %vm2062, %v1960
  %v2156 = vld [vmem:[#allocation2 + $0xc0] sm:$0xf]
  %v2157 = vsel %vm2058, %v1962, %v2156
  %2158 = vst [vmem:[#allocation2 + $0xc0] sm:$0xf] %v2157
  %2159 = vst.msk [vmem:[#allocation2 + $0xc4] sm:$0xf] %vm2062, %v1964
  %v2160 = vld [vmem:[#allocation2 + $0xc8] sm:$0xf]
  %v2161 = vsel %vm2058, %v1966, %v2160
  %2162 = vst [vmem:[#allocation2 + $0xc8] sm:$0xf] %v2161
  %2163 = vst.msk [vmem:[#allocation2 + $0xcc] sm:$0xf] %vm2062, %v1968
  %v2164 = vld [vmem:[#allocation2 + $0xd0] sm:$0xf]
  %v2165 = vsel %vm2058, %v1970, %v2164
  %2166 = vst [vmem:[#allocation2 + $0xd0] sm:$0xf] %v2165
  %2167 = vst.msk [vmem:[#allocation2 + $0xd4] sm:$0xf] %vm2062, %v1972
  %v2168 = vld [vmem:[#allocation2 + $0xd8] sm:$0xf]
  %v2169 = vsel %vm2058, %v1974, %v2168
  %2170 = vst [vmem:[#allocation2 + $0xd8] sm:$0xf] %v2169
  %2171 = vst.msk [vmem:[#allocation2 + $0xdc] sm:$0xf] %vm2062, %v1976
  %v2172 = vld [vmem:[#allocation2 + $0xe0] sm:$0xf]
  %v2173 = vsel %vm2058, %v1978, %v2172
  %2174 = vst [vmem:[#allocation2 + $0xe0] sm:$0xf] %v2173
  %2175 = vst.msk [vmem:[#allocation2 + $0xe4] sm:$0xf] %vm2062, %v1980
  %v2176 = vld [vmem:[#allocation2 + $0xe8] sm:$0xf]
  %v2177 = vsel %vm2058, %v1982, %v2176
  %2178 = vst [vmem:[#allocation2 + $0xe8] sm:$0xf] %v2177
  %2179 = vst.msk [vmem:[#allocation2 + $0xec] sm:$0xf] %vm2062, %v1984
  %v2180 = vld [vmem:[#allocation2 + $0xf0] sm:$0xf]
  %v2181 = vsel %vm2058, %v1986, %v2180
  %2182 = vst [vmem:[#allocation2 + $0xf0] sm:$0xf] %v2181
  %2183 = vst.msk [vmem:[#allocation2 + $0xf4] sm:$0xf] %vm2062, %v1988
  %v2184 = vld [vmem:[#allocation2 + $0xf8] sm:$0xf]
  %v2185 = vsel %vm2058, %v1990, %v2184
  %2186 = vst [vmem:[#allocation2 + $0xf8] sm:$0xf] %v2185
  %2187 = vst.msk [vmem:[#allocation2 + $0xfc] sm:$0xf] %vm2062, %v1992
  %2188 = vrot.lane.b32.xlu0 %v278, 32
  %v2189 = vpop.permute.xlu0 %2188
  %2190 = vrot.lane.b32.xlu0 %v279, 32
  %v2191 = vpop.permute.xlu0 %2190
  %2192 = vrot.lane.b32.xlu0 %v280, 32
  %v2193 = vpop.permute.xlu0 %2192
  %2194 = vrot.lane.b32.xlu0 %v281, 32
  %v2195 = vpop.permute.xlu0 %2194
  %2196 = vrot.lane.b32.xlu0 %v282, 32
  %v2197 = vpop.permute.xlu0 %2196
  %2198 = vrot.lane.b32.xlu0 %v283, 32
  %v2199 = vpop.permute.xlu0 %2198
  %2200 = vrot.lane.b32.xlu0 %v284, 32
  %v2201 = vpop.permute.xlu0 %2200
  %2202 = vrot.lane.b32.xlu0 %v285, 32
  %v2203 = vpop.permute.xlu0 %2202
  %2204 = vrot.lane.b32.xlu0 %v286, 32
  %v2205 = vpop.permute.xlu0 %2204
  %2206 = vrot.lane.b32.xlu0 %v287, 32
  %v2207 = vpop.permute.xlu0 %2206
  %2208 = vrot.lane.b32.xlu0 %v288, 32
  %v2209 = vpop.permute.xlu0 %2208
  %2210 = vrot.lane.b32.xlu0 %v289, 32
  %v2211 = vpop.permute.xlu0 %2210
  %2212 = vrot.lane.b32.xlu0 %v290, 32
  %v2213 = vpop.permute.xlu0 %2212
  %2214 = vrot.lane.b32.xlu0 %v291, 32
  %v2215 = vpop.permute.xlu0 %2214
  %2216 = vrot.lane.b32.xlu0 %v292, 32
  %v2217 = vpop.permute.xlu0 %2216
  %2218 = vrot.lane.b32.xlu0 %v293, 32
  %v2219 = vpop.permute.xlu0 %2218
  %2220 = vrot.lane.b32.xlu0 %v294, 32
  %v2221 = vpop.permute.xlu0 %2220
  %2222 = vrot.lane.b32.xlu0 %v295, 32
  %v2223 = vpop.permute.xlu0 %2222
  %2224 = vrot.lane.b32.xlu0 %v296, 32
  %v2225 = vpop.permute.xlu0 %2224
  %2226 = vrot.lane.b32.xlu0 %v297, 32
  %v2227 = vpop.permute.xlu0 %2226
  %2228 = vrot.lane.b32.xlu0 %v298, 32
  %v2229 = vpop.permute.xlu0 %2228
  %2230 = vrot.lane.b32.xlu0 %v299, 32
  %v2231 = vpop.permute.xlu0 %2230
  %2232 = vrot.lane.b32.xlu0 %v300, 32
  %v2233 = vpop.permute.xlu0 %2232
  %2234 = vrot.lane.b32.xlu0 %v301, 32
  %v2235 = vpop.permute.xlu0 %2234
  %2236 = vrot.lane.b32.xlu0 %v302, 32
  %v2237 = vpop.permute.xlu0 %2236
  %2238 = vrot.lane.b32.xlu0 %v303, 32
  %v2239 = vpop.permute.xlu0 %2238
  %2240 = vrot.lane.b32.xlu0 %v304, 32
  %v2241 = vpop.permute.xlu0 %2240
  %2242 = vrot.lane.b32.xlu0 %v305, 32
  %v2243 = vpop.permute.xlu0 %2242
  %2244 = vrot.lane.b32.xlu0 %v306, 32
  %v2245 = vpop.permute.xlu0 %2244
  %2246 = vrot.lane.b32.xlu0 %v307, 32
  %v2247 = vpop.permute.xlu0 %2246
  %2248 = vrot.lane.b32.xlu0 %v1829, 32
  %v2249 = vpop.permute.xlu0 %2248
  %2250 = vrot.lane.b32.xlu0 %v1830, 32
  %v2251 = vpop.permute.xlu0 %2250
  %2252 = vrot.lane.b32.xlu0 %v308, 32
  %v2253 = vpop.permute.xlu0 %2252
  %2254 = vrot.lane.b32.xlu0 %v309, 32
  %v2255 = vpop.permute.xlu0 %2254
  %2256 = vrot.lane.b32.xlu0 %v310, 32
  %v2257 = vpop.permute.xlu0 %2256
  %2258 = vrot.lane.b32.xlu0 %v311, 32
  %v2259 = vpop.permute.xlu0 %2258
  %2260 = vrot.lane.b32.xlu0 %v312, 32
  %v2261 = vpop.permute.xlu0 %2260
  %2262 = vrot.lane.b32.xlu0 %v313, 32
  %v2263 = vpop.permute.xlu0 %2262
  %2264 = vrot.lane.b32.xlu0 %v314, 32
  %v2265 = vpop.permute.xlu0 %2264
  %2266 = vrot.lane.b32.xlu0 %v315, 32
  %v2267 = vpop.permute.xlu0 %2266
  %2268 = vrot.lane.b32.xlu0 %v316, 32
  %v2269 = vpop.permute.xlu0 %2268
  %2270 = vrot.lane.b32.xlu0 %v317, 32
  %v2271 = vpop.permute.xlu0 %2270
  %2272 = vrot.lane.b32.xlu0 %v318, 32
  %v2273 = vpop.permute.xlu0 %2272
  %2274 = vrot.lane.b32.xlu0 %v319, 32
  %v2275 = vpop.permute.xlu0 %2274
  %2276 = vrot.lane.b32.xlu0 %v320, 32
  %v2277 = vpop.permute.xlu0 %2276
  %2278 = vrot.lane.b32.xlu0 %v321, 32
  %v2279 = vpop.permute.xlu0 %2278
  %2280 = vrot.lane.b32.xlu0 %v322, 32
  %v2281 = vpop.permute.xlu0 %2280
  %2282 = vrot.lane.b32.xlu0 %v323, 32
  %v2283 = vpop.permute.xlu0 %2282
  %2284 = vrot.lane.b32.xlu0 %v324, 32
  %v2285 = vpop.permute.xlu0 %2284
  %2286 = vrot.lane.b32.xlu0 %v325, 32
  %v2287 = vpop.permute.xlu0 %2286
  %2288 = vrot.lane.b32.xlu0 %v326, 32
  %v2289 = vpop.permute.xlu0 %2288
  %2290 = vrot.lane.b32.xlu0 %v327, 32
  %v2291 = vpop.permute.xlu0 %2290
  %2292 = vrot.lane.b32.xlu0 %v328, 32
  %v2293 = vpop.permute.xlu0 %2292
  %2294 = vrot.lane.b32.xlu0 %v329, 32
  %v2295 = vpop.permute.xlu0 %2294
  %2296 = vrot.lane.b32.xlu0 %v330, 32
  %v2297 = vpop.permute.xlu0 %2296
  %2298 = vrot.lane.b32.xlu0 %v331, 32
  %v2299 = vpop.permute.xlu0 %2298
  %2300 = vrot.lane.b32.xlu0 %v332, 32
  %v2301 = vpop.permute.xlu0 %2300
  %2302 = vrot.lane.b32.xlu0 %v333, 32
  %v2303 = vpop.permute.xlu0 %2302
  %2304 = vrot.lane.b32.xlu0 %v334, 32
  %v2305 = vpop.permute.xlu0 %2304
  %2306 = vrot.lane.b32.xlu0 %v335, 32
  %v2307 = vpop.permute.xlu0 %2306
  %2308 = vrot.lane.b32.xlu0 %v336, 32
  %v2309 = vpop.permute.xlu0 %2308
  %2310 = vrot.lane.b32.xlu0 %v337, 32
  %v2311 = vpop.permute.xlu0 %2310
  %2312 = vrot.lane.b32.xlu0 %v1831, 32
  %v2313 = vpop.permute.xlu0 %2312
  %2314 = vrot.lane.b32.xlu0 %v1832, 32
  %v2315 = vpop.permute.xlu0 %2314
  %vm2380 = vcmask 322816
  %2381 = vst.msk [vmem:[#allocation2] sm:$0xf] %vm2380, %v2189
  %2382 = vst.msk [vmem:[#allocation2 + $0x4] sm:$0xf] %vm2380, %v2191
  %2383 = vst.msk [vmem:[#allocation2 + $0x8] sm:$0xf] %vm2380, %v2193
  %2384 = vst.msk [vmem:[#allocation2 + $0xc] sm:$0xf] %vm2380, %v2195
  %2385 = vst.msk [vmem:[#allocation2 + $0x10] sm:$0xf] %vm2380, %v2197
  %2386 = vst.msk [vmem:[#allocation2 + $0x14] sm:$0xf] %vm2380, %v2199
  %2387 = vst.msk [vmem:[#allocation2 + $0x18] sm:$0xf] %vm2380, %v2201
  %2388 = vst.msk [vmem:[#allocation2 + $0x1c] sm:$0xf] %vm2380, %v2203
  %2389 = vst.msk [vmem:[#allocation2 + $0x20] sm:$0xf] %vm2380, %v2205
  %2390 = vst.msk [vmem:[#allocation2 + $0x24] sm:$0xf] %vm2380, %v2207
  %2391 = vst.msk [vmem:[#allocation2 + $0x28] sm:$0xf] %vm2380, %v2209
  %2392 = vst.msk [vmem:[#allocation2 + $0x2c] sm:$0xf] %vm2380, %v2211
  %2393 = vst.msk [vmem:[#allocation2 + $0x30] sm:$0xf] %vm2380, %v2213
  %2394 = vst.msk [vmem:[#allocation2 + $0x34] sm:$0xf] %vm2380, %v2215
  %2395 = vst.msk [vmem:[#allocation2 + $0x38] sm:$0xf] %vm2380, %v2217
  %2396 = vst.msk [vmem:[#allocation2 + $0x3c] sm:$0xf] %vm2380, %v2219
  %2397 = vst.msk [vmem:[#allocation2 + $0x40] sm:$0xf] %vm2380, %v2221
  %2398 = vst.msk [vmem:[#allocation2 + $0x44] sm:$0xf] %vm2380, %v2223
  %2399 = vst.msk [vmem:[#allocation2 + $0x48] sm:$0xf] %vm2380, %v2225
  %2400 = vst.msk [vmem:[#allocation2 + $0x4c] sm:$0xf] %vm2380, %v2227
  %2401 = vst.msk [vmem:[#allocation2 + $0x50] sm:$0xf] %vm2380, %v2229
  %2402 = vst.msk [vmem:[#allocation2 + $0x54] sm:$0xf] %vm2380, %v2231
  %2403 = vst.msk [vmem:[#allocation2 + $0x58] sm:$0xf] %vm2380, %v2233
  %2404 = vst.msk [vmem:[#allocation2 + $0x5c] sm:$0xf] %vm2380, %v2235
  %2405 = vst.msk [vmem:[#allocation2 + $0x60] sm:$0xf] %vm2380, %v2237
  %2406 = vst.msk [vmem:[#allocation2 + $0x64] sm:$0xf] %vm2380, %v2239
  %2407 = vst.msk [vmem:[#allocation2 + $0x68] sm:$0xf] %vm2380, %v2241
  %2408 = vst.msk [vmem:[#allocation2 + $0x6c] sm:$0xf] %vm2380, %v2243
  %2409 = vst.msk [vmem:[#allocation2 + $0x70] sm:$0xf] %vm2380, %v2245
  %2410 = vst.msk [vmem:[#allocation2 + $0x74] sm:$0xf] %vm2380, %v2247
  %2411 = vst.msk [vmem:[#allocation2 + $0x78] sm:$0xf] %vm2380, %v2249
  %2412 = vst.msk [vmem:[#allocation2 + $0x7c] sm:$0xf] %vm2380, %v2251
  %2413 = vst.msk [vmem:[#allocation2 + $0x80] sm:$0xf] %vm2380, %v2253
  %2414 = vst.msk [vmem:[#allocation2 + $0x84] sm:$0xf] %vm2380, %v2255
  %2415 = vst.msk [vmem:[#allocation2 + $0x88] sm:$0xf] %vm2380, %v2257
  %2416 = vst.msk [vmem:[#allocation2 + $0x8c] sm:$0xf] %vm2380, %v2259
  %2417 = vst.msk [vmem:[#allocation2 + $0x90] sm:$0xf] %vm2380, %v2261
  %2418 = vst.msk [vmem:[#allocation2 + $0x94] sm:$0xf] %vm2380, %v2263
  %2419 = vst.msk [vmem:[#allocation2 + $0x98] sm:$0xf] %vm2380, %v2265
  %2420 = vst.msk [vmem:[#allocation2 + $0x9c] sm:$0xf] %vm2380, %v2267
  %2421 = vst.msk [vmem:[#allocation2 + $0xa0] sm:$0xf] %vm2380, %v2269
  %2422 = vst.msk [vmem:[#allocation2 + $0xa4] sm:$0xf] %vm2380, %v2271
  %2423 = vst.msk [vmem:[#allocation2 + $0xa8] sm:$0xf] %vm2380, %v2273
  %2424 = vst.msk [vmem:[#allocation2 + $0xac] sm:$0xf] %vm2380, %v2275
  %2425 = vst.msk [vmem:[#allocation2 + $0xb0] sm:$0xf] %vm2380, %v2277
  %2426 = vst.msk [vmem:[#allocation2 + $0xb4] sm:$0xf] %vm2380, %v2279
  %2427 = vst.msk [vmem:[#allocation2 + $0xb8] sm:$0xf] %vm2380, %v2281
  %2428 = vst.msk [vmem:[#allocation2 + $0xbc] sm:$0xf] %vm2380, %v2283
  %2429 = vst.msk [vmem:[#allocation2 + $0xc0] sm:$0xf] %vm2380, %v2285
  %2430 = vst.msk [vmem:[#allocation2 + $0xc4] sm:$0xf] %vm2380, %v2287
  %2431 = vst.msk [vmem:[#allocation2 + $0xc8] sm:$0xf] %vm2380, %v2289
  %2432 = vst.msk [vmem:[#allocation2 + $0xcc] sm:$0xf] %vm2380, %v2291
  %2433 = vst.msk [vmem:[#allocation2 + $0xd0] sm:$0xf] %vm2380, %v2293
  %2434 = vst.msk [vmem:[#allocation2 + $0xd4] sm:$0xf] %vm2380, %v2295
  %2435 = vst.msk [vmem:[#allocation2 + $0xd8] sm:$0xf] %vm2380, %v2297
  %2436 = vst.msk [vmem:[#allocation2 + $0xdc] sm:$0xf] %vm2380, %v2299
  %2437 = vst.msk [vmem:[#allocation2 + $0xe0] sm:$0xf] %vm2380, %v2301
  %2438 = vst.msk [vmem:[#allocation2 + $0xe4] sm:$0xf] %vm2380, %v2303
  %2439 = vst.msk [vmem:[#allocation2 + $0xe8] sm:$0xf] %vm2380, %v2305
  %2440 = vst.msk [vmem:[#allocation2 + $0xec] sm:$0xf] %vm2380, %v2307
  %2441 = vst.msk [vmem:[#allocation2 + $0xf0] sm:$0xf] %vm2380, %v2309
  %2442 = vst.msk [vmem:[#allocation2 + $0xf4] sm:$0xf] %vm2380, %v2311
  %2443 = vst.msk [vmem:[#allocation2 + $0xf8] sm:$0xf] %vm2380, %v2313
  %2444 = vst.msk [vmem:[#allocation2 + $0xfc] sm:$0xf] %vm2380, %v2315
  %v2445 = vrot.slane %v1834, 4
  %v2446 = vrot.slane %v1837, 5
  %v2447 = vor.u32 %v2445, %v2446
  %v2448 = vrot.slane %v2447, 4
  %v2449 = vrot.slane %v1845, 5
  %v2450 = vsel %vm1249, %v2448, %v2449
  %v2451 = vrot.slane %v1842, 4
  %v2452 = vor.u32 %v2451, %v2449
  %v2453 = vrot.slane %v2452, 4
  %v2454 = vrot.slane %v1850, 4
  %v2455 = vrot.slane %v1853, 5
  %v2456 = vor.u32 %v2454, %v2455
  %v2457 = vrot.slane %v2456, 4
  %v2458 = vrot.slane %v1861, 5
  %v2459 = vsel %vm1249, %v2457, %v2458
  %v2460 = vrot.slane %v1858, 4
  %v2461 = vor.u32 %v2460, %v2458
  %v2462 = vrot.slane %v2461, 4
  %2463 = vrot.lane.b32.xlu0 %v1255, 40
  %v2464 = vpop.permute.xlu0 %2463
  %2465 = vrot.lane.b32.xlu0 %v1258, 40
  %v2466 = vpop.permute.xlu0 %2465
  %2467 = vrot.lane.b32.xlu0 %v1264, 40
  %v2468 = vpop.permute.xlu0 %2467
  %2469 = vrot.lane.b32.xlu0 %v1267, 40
  %v2470 = vpop.permute.xlu0 %2469
  %2471 = vrot.lane.b32.xlu0 %v1273, 40
  %v2472 = vpop.permute.xlu0 %2471
  %2473 = vrot.lane.b32.xlu0 %v1276, 40
  %v2474 = vpop.permute.xlu0 %2473
  %2475 = vrot.lane.b32.xlu0 %v1282, 40
  %v2476 = vpop.permute.xlu0 %2475
  %2477 = vrot.lane.b32.xlu0 %v1285, 40
  %v2478 = vpop.permute.xlu0 %2477
  %2479 = vrot.lane.b32.xlu0 %v1291, 40
  %v2480 = vpop.permute.xlu0 %2479
  %2481 = vrot.lane.b32.xlu0 %v1294, 40
  %v2482 = vpop.permute.xlu0 %2481
  %2483 = vrot.lane.b32.xlu0 %v1300, 40
  %v2484 = vpop.permute.xlu0 %2483
  %2485 = vrot.lane.b32.xlu0 %v1303, 40
  %v2486 = vpop.permute.xlu0 %2485
  %2487 = vrot.lane.b32.xlu0 %v1309, 40
  %v2488 = vpop.permute.xlu0 %2487
  %2489 = vrot.lane.b32.xlu0 %v1312, 40
  %v2490 = vpop.permute.xlu0 %2489
  %2491 = vrot.lane.b32.xlu0 %v1318, 40
  %v2492 = vpop.permute.xlu0 %2491
  %2493 = vrot.lane.b32.xlu0 %v1321, 40
  %v2494 = vpop.permute.xlu0 %2493
  %2495 = vrot.lane.b32.xlu0 %v1327, 40
  %v2496 = vpop.permute.xlu0 %2495
  %2497 = vrot.lane.b32.xlu0 %v1330, 40
  %v2498 = vpop.permute.xlu0 %2497
  %2499 = vrot.lane.b32.xlu0 %v1336, 40
  %v2500 = vpop.permute.xlu0 %2499
  %2501 = vrot.lane.b32.xlu0 %v1339, 40
  %v2502 = vpop.permute.xlu0 %2501
  %2503 = vrot.lane.b32.xlu0 %v1345, 40
  %v2504 = vpop.permute.xlu0 %2503
  %2505 = vrot.lane.b32.xlu0 %v1348, 40
  %v2506 = vpop.permute.xlu0 %2505
  %2507 = vrot.lane.b32.xlu0 %v1354, 40
  %v2508 = vpop.permute.xlu0 %2507
  %2509 = vrot.lane.b32.xlu0 %v1357, 40
  %v2510 = vpop.permute.xlu0 %2509
  %2511 = vrot.lane.b32.xlu0 %v1363, 40
  %v2512 = vpop.permute.xlu0 %2511
  %2513 = vrot.lane.b32.xlu0 %v1366, 40
  %v2514 = vpop.permute.xlu0 %2513
  %2515 = vrot.lane.b32.xlu0 %v1372, 40
  %v2516 = vpop.permute.xlu0 %2515
  %2517 = vrot.lane.b32.xlu0 %v1375, 40
  %v2518 = vpop.permute.xlu0 %2517
  %2519 = vrot.lane.b32.xlu0 %v1381, 40
  %v2520 = vpop.permute.xlu0 %2519
  %2521 = vrot.lane.b32.xlu0 %v1384, 40
  %v2522 = vpop.permute.xlu0 %2521
  %2523 = vrot.lane.b32.xlu0 %v2450, 40
  %v2524 = vpop.permute.xlu0 %2523
  %2525 = vrot.lane.b32.xlu0 %v2453, 40
  %v2526 = vpop.permute.xlu0 %2525
  %2527 = vrot.lane.b32.xlu0 %v1390, 40
  %v2528 = vpop.permute.xlu0 %2527
  %2529 = vrot.lane.b32.xlu0 %v1393, 40
  %v2530 = vpop.permute.xlu0 %2529
  %2531 = vrot.lane.b32.xlu0 %v1399, 40
  %v2532 = vpop.permute.xlu0 %2531
  %2533 = vrot.lane.b32.xlu0 %v1402, 40
  %v2534 = vpop.permute.xlu0 %2533
  %2535 = vrot.lane.b32.xlu0 %v1408, 40
  %v2536 = vpop.permute.xlu0 %2535
  %2537 = vrot.lane.b32.xlu0 %v1411, 40
  %v2538 = vpop.permute.xlu0 %2537
  %2539 = vrot.lane.b32.xlu0 %v1417, 40
  %v2540 = vpop.permute.xlu0 %2539
  %2541 = vrot.lane.b32.xlu0 %v1420, 40
  %v2542 = vpop.permute.xlu0 %2541
  %2543 = vrot.lane.b32.xlu0 %v1426, 40
  %v2544 = vpop.permute.xlu0 %2543
  %2545 = vrot.lane.b32.xlu0 %v1429, 40
  %v2546 = vpop.permute.xlu0 %2545
  %2547 = vrot.lane.b32.xlu0 %v1435, 40
  %v2548 = vpop.permute.xlu0 %2547
  %2549 = vrot.lane.b32.xlu0 %v1438, 40
  %v2550 = vpop.permute.xlu0 %2549
  %2551 = vrot.lane.b32.xlu0 %v1444, 40
  %v2552 = vpop.permute.xlu0 %2551
  %2553 = vrot.lane.b32.xlu0 %v1447, 40
  %v2554 = vpop.permute.xlu0 %2553
  %2555 = vrot.lane.b32.xlu0 %v1453, 40
  %v2556 = vpop.permute.xlu0 %2555
  %2557 = vrot.lane.b32.xlu0 %v1456, 40
  %v2558 = vpop.permute.xlu0 %2557
  %2559 = vrot.lane.b32.xlu0 %v1462, 40
  %v2560 = vpop.permute.xlu0 %2559
  %2561 = vrot.lane.b32.xlu0 %v1465, 40
  %v2562 = vpop.permute.xlu0 %2561
  %2563 = vrot.lane.b32.xlu0 %v1471, 40
  %v2564 = vpop.permute.xlu0 %2563
  %2565 = vrot.lane.b32.xlu0 %v1474, 40
  %v2566 = vpop.permute.xlu0 %2565
  %2567 = vrot.lane.b32.xlu0 %v1480, 40
  %v2568 = vpop.permute.xlu0 %2567
  %2569 = vrot.lane.b32.xlu0 %v1483, 40
  %v2570 = vpop.permute.xlu0 %2569
  %2571 = vrot.lane.b32.xlu0 %v1489, 40
  %v2572 = vpop.permute.xlu0 %2571
  %2573 = vrot.lane.b32.xlu0 %v1492, 40
  %v2574 = vpop.permute.xlu0 %2573
  %2575 = vrot.lane.b32.xlu0 %v1498, 40
  %v2576 = vpop.permute.xlu0 %2575
  %2577 = vrot.lane.b32.xlu0 %v1501, 40
  %v2578 = vpop.permute.xlu0 %2577
  %2579 = vrot.lane.b32.xlu0 %v1507, 40
  %v2580 = vpop.permute.xlu0 %2579
  %2581 = vrot.lane.b32.xlu0 %v1510, 40
  %v2582 = vpop.permute.xlu0 %2581
  %2583 = vrot.lane.b32.xlu0 %v1516, 40
  %v2584 = vpop.permute.xlu0 %2583
  %2585 = vrot.lane.b32.xlu0 %v1519, 40
  %v2586 = vpop.permute.xlu0 %2585
  %2587 = vrot.lane.b32.xlu0 %v2459, 40
  %v2588 = vpop.permute.xlu0 %2587
  %2589 = vrot.lane.b32.xlu0 %v2462, 40
  %v2590 = vpop.permute.xlu0 %2589
  %vm2655 = vcmask 388416
  %2656 = vst.msk [vmem:[#allocation2] sm:$0xf] %vm2655, %v2464
  %vm2657 = vcmask 388416
  %vm2658 = vmand %vm2657, %vm1247
  %v2659 = vld [vmem:[#allocation2 + $0x4] sm:$0xf]
  %v2660 = vsel %vm2658, %v2466, %v2659
  %2661 = vst [vmem:[#allocation2 + $0x4] sm:$0xf] %v2660
  %2662 = vst.msk [vmem:[#allocation2 + $0x8] sm:$0xf] %vm2655, %v2468
  %v2663 = vld [vmem:[#allocation2 + $0xc] sm:$0xf]
  %v2664 = vsel %vm2658, %v2470, %v2663
  %2665 = vst [vmem:[#allocation2 + $0xc] sm:$0xf] %v2664
  %2666 = vst.msk [vmem:[#allocation2 + $0x10] sm:$0xf] %vm2655, %v2472
  %v2667 = vld [vmem:[#allocation2 + $0x14] sm:$0xf]
  %v2668 = vsel %vm2658, %v2474, %v2667
  %2669 = vst [vmem:[#allocation2 + $0x14] sm:$0xf] %v2668
  %2670 = vst.msk [vmem:[#allocation2 + $0x18] sm:$0xf] %vm2655, %v2476
  %v2671 = vld [vmem:[#allocation2 + $0x1c] sm:$0xf]
  %v2672 = vsel %vm2658, %v2478, %v2671
  %2673 = vst [vmem:[#allocation2 + $0x1c] sm:$0xf] %v2672
  %2674 = vst.msk [vmem:[#allocation2 + $0x20] sm:$0xf] %vm2655, %v2480
  %v2675 = vld [vmem:[#allocation2 + $0x24] sm:$0xf]
  %v2676 = vsel %vm2658, %v2482, %v2675
  %2677 = vst [vmem:[#allocation2 + $0x24] sm:$0xf] %v2676
  %2678 = vst.msk [vmem:[#allocation2 + $0x28] sm:$0xf] %vm2655, %v2484
  %v2679 = vld [vmem:[#allocation2 + $0x2c] sm:$0xf]
  %v2680 = vsel %vm2658, %v2486, %v2679
  %2681 = vst [vmem:[#allocation2 + $0x2c] sm:$0xf] %v2680
  %2682 = vst.msk [vmem:[#allocation2 + $0x30] sm:$0xf] %vm2655, %v2488
  %v2683 = vld [vmem:[#allocation2 + $0x34] sm:$0xf]
  %v2684 = vsel %vm2658, %v2490, %v2683
  %2685 = vst [vmem:[#allocation2 + $0x34] sm:$0xf] %v2684
  %2686 = vst.msk [vmem:[#allocation2 + $0x38] sm:$0xf] %vm2655, %v2492
  %v2687 = vld [vmem:[#allocation2 + $0x3c] sm:$0xf]
  %v2688 = vsel %vm2658, %v2494, %v2687
  %2689 = vst [vmem:[#allocation2 + $0x3c] sm:$0xf] %v2688
  %2690 = vst.msk [vmem:[#allocation2 + $0x40] sm:$0xf] %vm2655, %v2496
  %v2691 = vld [vmem:[#allocation2 + $0x44] sm:$0xf]
  %v2692 = vsel %vm2658, %v2498, %v2691
  %2693 = vst [vmem:[#allocation2 + $0x44] sm:$0xf] %v2692
  %2694 = vst.msk [vmem:[#allocation2 + $0x48] sm:$0xf] %vm2655, %v2500
  %v2695 = vld [vmem:[#allocation2 + $0x4c] sm:$0xf]
  %v2696 = vsel %vm2658, %v2502, %v2695
  %2697 = vst [vmem:[#allocation2 + $0x4c] sm:$0xf] %v2696
  %2698 = vst.msk [vmem:[#allocation2 + $0x50] sm:$0xf] %vm2655, %v2504
  %v2699 = vld [vmem:[#allocation2 + $0x54] sm:$0xf]
  %v2700 = vsel %vm2658, %v2506, %v2699
  %2701 = vst [vmem:[#allocation2 + $0x54] sm:$0xf] %v2700
  %2702 = vst.msk [vmem:[#allocation2 + $0x58] sm:$0xf] %vm2655, %v2508
  %v2703 = vld [vmem:[#allocation2 + $0x5c] sm:$0xf]
  %v2704 = vsel %vm2658, %v2510, %v2703
  %2705 = vst [vmem:[#allocation2 + $0x5c] sm:$0xf] %v2704
  %2706 = vst.msk [vmem:[#allocation2 + $0x60] sm:$0xf] %vm2655, %v2512
  %v2707 = vld [vmem:[#allocation2 + $0x64] sm:$0xf]
  %v2708 = vsel %vm2658, %v2514, %v2707
  %2709 = vst [vmem:[#allocation2 + $0x64] sm:$0xf] %v2708
  %2710 = vst.msk [vmem:[#allocation2 + $0x68] sm:$0xf] %vm2655, %v2516
  %v2711 = vld [vmem:[#allocation2 + $0x6c] sm:$0xf]
  %v2712 = vsel %vm2658, %v2518, %v2711
  %2713 = vst [vmem:[#allocation2 + $0x6c] sm:$0xf] %v2712
  %2714 = vst.msk [vmem:[#allocation2 + $0x70] sm:$0xf] %vm2655, %v2520
  %v2715 = vld [vmem:[#allocation2 + $0x74] sm:$0xf]
  %v2716 = vsel %vm2658, %v2522, %v2715
  %2717 = vst [vmem:[#allocation2 + $0x74] sm:$0xf] %v2716
  %2718 = vst.msk [vmem:[#allocation2 + $0x78] sm:$0xf] %vm2655, %v2524
  %v2719 = vld [vmem:[#allocation2 + $0x7c] sm:$0xf]
  %v2720 = vsel %vm2658, %v2526, %v2719
  %2721 = vst [vmem:[#allocation2 + $0x7c] sm:$0xf] %v2720
  %2722 = vst.msk [vmem:[#allocation2 + $0x80] sm:$0xf] %vm2655, %v2528
  %v2723 = vld [vmem:[#allocation2 + $0x84] sm:$0xf]
  %v2724 = vsel %vm2658, %v2530, %v2723
  %2725 = vst [vmem:[#allocation2 + $0x84] sm:$0xf] %v2724
  %2726 = vst.msk [vmem:[#allocation2 + $0x88] sm:$0xf] %vm2655, %v2532
  %v2727 = vld [vmem:[#allocation2 + $0x8c] sm:$0xf]
  %v2728 = vsel %vm2658, %v2534, %v2727
  %2729 = vst [vmem:[#allocation2 + $0x8c] sm:$0xf] %v2728
  %2730 = vst.msk [vmem:[#allocation2 + $0x90] sm:$0xf] %vm2655, %v2536
  %v2731 = vld [vmem:[#allocation2 + $0x94] sm:$0xf]
  %v2732 = vsel %vm2658, %v2538, %v2731
  %2733 = vst [vmem:[#allocation2 + $0x94] sm:$0xf] %v2732
  %2734 = vst.msk [vmem:[#allocation2 + $0x98] sm:$0xf] %vm2655, %v2540
  %v2735 = vld [vmem:[#allocation2 + $0x9c] sm:$0xf]
  %v2736 = vsel %vm2658, %v2542, %v2735
  %2737 = vst [vmem:[#allocation2 + $0x9c] sm:$0xf] %v2736
  %2738 = vst.msk [vmem:[#allocation2 + $0xa0] sm:$0xf] %vm2655, %v2544
  %v2739 = vld [vmem:[#allocation2 + $0xa4] sm:$0xf]
  %v2740 = vsel %vm2658, %v2546, %v2739
  %2741 = vst [vmem:[#allocation2 + $0xa4] sm:$0xf] %v2740
  %2742 = vst.msk [vmem:[#allocation2 + $0xa8] sm:$0xf] %vm2655, %v2548
  %v2743 = vld [vmem:[#allocation2 + $0xac] sm:$0xf]
  %v2744 = vsel %vm2658, %v2550, %v2743
  %2745 = vst [vmem:[#allocation2 + $0xac] sm:$0xf] %v2744
  %2746 = vst.msk [vmem:[#allocation2 + $0xb0] sm:$0xf] %vm2655, %v2552
  %v2747 = vld [vmem:[#allocation2 + $0xb4] sm:$0xf]
  %v2748 = vsel %vm2658, %v2554, %v2747
  %2749 = vst [vmem:[#allocation2 + $0xb4] sm:$0xf] %v2748
  %2750 = vst.msk [vmem:[#allocation2 + $0xb8] sm:$0xf] %vm2655, %v2556
  %v2751 = vld [vmem:[#allocation2 + $0xbc] sm:$0xf]
  %v2752 = vsel %vm2658, %v2558, %v2751
  %2753 = vst [vmem:[#allocation2 + $0xbc] sm:$0xf] %v2752
  %2754 = vst.msk [vmem:[#allocation2 + $0xc0] sm:$0xf] %vm2655, %v2560
  %v2755 = vld [vmem:[#allocation2 + $0xc4] sm:$0xf]
  %v2756 = vsel %vm2658, %v2562, %v2755
  %2757 = vst [vmem:[#allocation2 + $0xc4] sm:$0xf] %v2756
  %2758 = vst.msk [vmem:[#allocation2 + $0xc8] sm:$0xf] %vm2655, %v2564
  %v2759 = vld [vmem:[#allocation2 + $0xcc] sm:$0xf]
  %v2760 = vsel %vm2658, %v2566, %v2759
  %2761 = vst [vmem:[#allocation2 + $0xcc] sm:$0xf] %v2760
  %2762 = vst.msk [vmem:[#allocation2 + $0xd0] sm:$0xf] %vm2655, %v2568
  %v2763 = vld [vmem:[#allocation2 + $0xd4] sm:$0xf]
  %v2764 = vsel %vm2658, %v2570, %v2763
  %2765 = vst [vmem:[#allocation2 + $0xd4] sm:$0xf] %v2764
  %2766 = vst.msk [vmem:[#allocation2 + $0xd8] sm:$0xf] %vm2655, %v2572
  %v2767 = vld [vmem:[#allocation2 + $0xdc] sm:$0xf]
  %v2768 = vsel %vm2658, %v2574, %v2767
  %2769 = vst [vmem:[#allocation2 + $0xdc] sm:$0xf] %v2768
  %2770 = vst.msk [vmem:[#allocation2 + $0xe0] sm:$0xf] %vm2655, %v2576
  %v2771 = vld [vmem:[#allocation2 + $0xe4] sm:$0xf]
  %v2772 = vsel %vm2658, %v2578, %v2771
  %2773 = vst [vmem:[#allocation2 + $0xe4] sm:$0xf] %v2772
  %2774 = vst.msk [vmem:[#allocation2 + $0xe8] sm:$0xf] %vm2655, %v2580
  %v2775 = vld [vmem:[#allocation2 + $0xec] sm:$0xf]
  %v2776 = vsel %vm2658, %v2582, %v2775
  %2777 = vst [vmem:[#allocation2 + $0xec] sm:$0xf] %v2776
  %2778 = vst.msk [vmem:[#allocation2 + $0xf0] sm:$0xf] %vm2655, %v2584
  %v2779 = vld [vmem:[#allocation2 + $0xf4] sm:$0xf]
  %v2780 = vsel %vm2658, %v2586, %v2779
  %2781 = vst [vmem:[#allocation2 + $0xf4] sm:$0xf] %v2780
  %2782 = vst.msk [vmem:[#allocation2 + $0xf8] sm:$0xf] %vm2655, %v2588
  %v2783 = vld [vmem:[#allocation2 + $0xfc] sm:$0xf]
  %v2784 = vsel %vm2658, %v2590, %v2783
  %2785 = vst [vmem:[#allocation2 + $0xfc] sm:$0xf] %v2784
  %2786 = vrot.lane.b32.xlu0 %v363, 48
  %v2787 = vpop.permute.xlu0 %2786
  %2788 = vrot.lane.b32.xlu0 %v372, 48
  %v2789 = vpop.permute.xlu0 %2788
  %2790 = vrot.lane.b32.xlu0 %v379, 48
  %v2791 = vpop.permute.xlu0 %2790
  %2792 = vrot.lane.b32.xlu0 %v388, 48
  %v2793 = vpop.permute.xlu0 %2792
  %2794 = vrot.lane.b32.xlu0 %v395, 48
  %v2795 = vpop.permute.xlu0 %2794
  %2796 = vrot.lane.b32.xlu0 %v404, 48
  %v2797 = vpop.permute.xlu0 %2796
  %2798 = vrot.lane.b32.xlu0 %v411, 48
  %v2799 = vpop.permute.xlu0 %2798
  %2800 = vrot.lane.b32.xlu0 %v420, 48
  %v2801 = vpop.permute.xlu0 %2800
  %2802 = vrot.lane.b32.xlu0 %v427, 48
  %v2803 = vpop.permute.xlu0 %2802
  %2804 = vrot.lane.b32.xlu0 %v436, 48
  %v2805 = vpop.permute.xlu0 %2804
  %2806 = vrot.lane.b32.xlu0 %v443, 48
  %v2807 = vpop.permute.xlu0 %2806
  %2808 = vrot.lane.b32.xlu0 %v452, 48
  %v2809 = vpop.permute.xlu0 %2808
  %2810 = vrot.lane.b32.xlu0 %v459, 48
  %v2811 = vpop.permute.xlu0 %2810
  %2812 = vrot.lane.b32.xlu0 %v468, 48
  %v2813 = vpop.permute.xlu0 %2812
  %2814 = vrot.lane.b32.xlu0 %v475, 48
  %v2815 = vpop.permute.xlu0 %2814
  %2816 = vrot.lane.b32.xlu0 %v484, 48
  %v2817 = vpop.permute.xlu0 %2816
  %2818 = vrot.lane.b32.xlu0 %v491, 48
  %v2819 = vpop.permute.xlu0 %2818
  %2820 = vrot.lane.b32.xlu0 %v500, 48
  %v2821 = vpop.permute.xlu0 %2820
  %2822 = vrot.lane.b32.xlu0 %v507, 48
  %v2823 = vpop.permute.xlu0 %2822
  %2824 = vrot.lane.b32.xlu0 %v516, 48
  %v2825 = vpop.permute.xlu0 %2824
  %2826 = vrot.lane.b32.xlu0 %v523, 48
  %v2827 = vpop.permute.xlu0 %2826
  %2828 = vrot.lane.b32.xlu0 %v532, 48
  %v2829 = vpop.permute.xlu0 %2828
  %2830 = vrot.lane.b32.xlu0 %v539, 48
  %v2831 = vpop.permute.xlu0 %2830
  %2832 = vrot.lane.b32.xlu0 %v548, 48
  %v2833 = vpop.permute.xlu0 %2832
  %2834 = vrot.lane.b32.xlu0 %v555, 48
  %v2835 = vpop.permute.xlu0 %2834
  %2836 = vrot.lane.b32.xlu0 %v564, 48
  %v2837 = vpop.permute.xlu0 %2836
  %2838 = vrot.lane.b32.xlu0 %v571, 48
  %v2839 = vpop.permute.xlu0 %2838
  %2840 = vrot.lane.b32.xlu0 %v580, 48
  %v2841 = vpop.permute.xlu0 %2840
  %2842 = vrot.lane.b32.xlu0 %v1839, 48
  %v2843 = vpop.permute.xlu0 %2842
  %2844 = vrot.lane.b32.xlu0 %v1848, 48
  %v2845 = vpop.permute.xlu0 %2844
  %2846 = vrot.lane.b32.xlu0 %v603, 48
  %v2847 = vpop.permute.xlu0 %2846
  %2848 = vrot.lane.b32.xlu0 %v612, 48
  %v2849 = vpop.permute.xlu0 %2848
  %2850 = vrot.lane.b32.xlu0 %v619, 48
  %v2851 = vpop.permute.xlu0 %2850
  %2852 = vrot.lane.b32.xlu0 %v628, 48
  %v2853 = vpop.permute.xlu0 %2852
  %2854 = vrot.lane.b32.xlu0 %v635, 48
  %v2855 = vpop.permute.xlu0 %2854
  %2856 = vrot.lane.b32.xlu0 %v644, 48
  %v2857 = vpop.permute.xlu0 %2856
  %2858 = vrot.lane.b32.xlu0 %v651, 48
  %v2859 = vpop.permute.xlu0 %2858
  %2860 = vrot.lane.b32.xlu0 %v660, 48
  %v2861 = vpop.permute.xlu0 %2860
  %2862 = vrot.lane.b32.xlu0 %v667, 48
  %v2863 = vpop.permute.xlu0 %2862
  %2864 = vrot.lane.b32.xlu0 %v676, 48
  %v2865 = vpop.permute.xlu0 %2864
  %2866 = vrot.lane.b32.xlu0 %v683, 48
  %v2867 = vpop.permute.xlu0 %2866
  %2868 = vrot.lane.b32.xlu0 %v692, 48
  %v2869 = vpop.permute.xlu0 %2868
  %2870 = vrot.lane.b32.xlu0 %v699, 48
  %v2871 = vpop.permute.xlu0 %2870
  %2872 = vrot.lane.b32.xlu0 %v708, 48
  %v2873 = vpop.permute.xlu0 %2872
  %2874 = vrot.lane.b32.xlu0 %v715, 48
  %v2875 = vpop.permute.xlu0 %2874
  %2876 = vrot.lane.b32.xlu0 %v724, 48
  %v2877 = vpop.permute.xlu0 %2876
  %2878 = vrot.lane.b32.xlu0 %v731, 48
  %v2879 = vpop.permute.xlu0 %2878
  %2880 = vrot.lane.b32.xlu0 %v740, 48
  %v2881 = vpop.permute.xlu0 %2880
  %2882 = vrot.lane.b32.xlu0 %v747, 48
  %v2883 = vpop.permute.xlu0 %2882
  %2884 = vrot.lane.b32.xlu0 %v756, 48
  %v2885 = vpop.permute.xlu0 %2884
  %2886 = vrot.lane.b32.xlu0 %v763, 48
  %v2887 = vpop.permute.xlu0 %2886
  %2888 = vrot.lane.b32.xlu0 %v772, 48
  %v2889 = vpop.permute.xlu0 %2888
  %2890 = vrot.lane.b32.xlu0 %v779, 48
  %v2891 = vpop.permute.xlu0 %2890
  %2892 = vrot.lane.b32.xlu0 %v788, 48
  %v2893 = vpop.permute.xlu0 %2892
  %2894 = vrot.lane.b32.xlu0 %v795, 48
  %v2895 = vpop.permute.xlu0 %2894
  %2896 = vrot.lane.b32.xlu0 %v804, 48
  %v2897 = vpop.permute.xlu0 %2896
  %2898 = vrot.lane.b32.xlu0 %v811, 48
  %v2899 = vpop.permute.xlu0 %2898
  %2900 = vrot.lane.b32.xlu0 %v820, 48
  %v2901 = vpop.permute.xlu0 %2900
  %2902 = vrot.lane.b32.xlu0 %v1855, 48
  %v2903 = vpop.permute.xlu0 %2902
  %2904 = vrot.lane.b32.xlu0 %v1864, 48
  %v2905 = vpop.permute.xlu0 %2904
  %vm2966 = vcmask 454016
  %vm2967 = vmand %vm2966, %vm883
  %v2968 = vld [vmem:[#allocation2] sm:$0xf]
  %v2969 = vsel %vm2967, %v2787, %v2968
  %2970 = vst [vmem:[#allocation2] sm:$0xf] %v2969
  %vm2971 = vcmask 454016
  %2972 = vst.msk [vmem:[#allocation2 + $0x4] sm:$0xf] %vm2971, %v2789
  %v2973 = vld [vmem:[#allocation2 + $0x8] sm:$0xf]
  %v2974 = vsel %vm2967, %v2791, %v2973
  %2975 = vst [vmem:[#allocation2 + $0x8] sm:$0xf] %v2974
  %2976 = vst.msk [vmem:[#allocation2 + $0xc] sm:$0xf] %vm2971, %v2793
  %v2977 = vld [vmem:[#allocation2 + $0x10] sm:$0xf]
  %v2978 = vsel %vm2967, %v2795, %v2977
  %2979 = vst [vmem:[#allocation2 + $0x10] sm:$0xf] %v2978
  %2980 = vst.msk [vmem:[#allocation2 + $0x14] sm:$0xf] %vm2971, %v2797
  %v2981 = vld [vmem:[#allocation2 + $0x18] sm:$0xf]
  %v2982 = vsel %vm2967, %v2799, %v2981
  %2983 = vst [vmem:[#allocation2 + $0x18] sm:$0xf] %v2982
  %2984 = vst.msk [vmem:[#allocation2 + $0x1c] sm:$0xf] %vm2971, %v2801
  %v2985 = vld [vmem:[#allocation2 + $0x20] sm:$0xf]
  %v2986 = vsel %vm2967, %v2803, %v2985
  %2987 = vst [vmem:[#allocation2 + $0x20] sm:$0xf] %v2986
  %2988 = vst.msk [vmem:[#allocation2 + $0x24] sm:$0xf] %vm2971, %v2805
  %v2989 = vld [vmem:[#allocation2 + $0x28] sm:$0xf]
  %v2990 = vsel %vm2967, %v2807, %v2989
  %2991 = vst [vmem:[#allocation2 + $0x28] sm:$0xf] %v2990
  %2992 = vst.msk [vmem:[#allocation2 + $0x2c] sm:$0xf] %vm2971, %v2809
  %v2993 = vld [vmem:[#allocation2 + $0x30] sm:$0xf]
  %v2994 = vsel %vm2967, %v2811, %v2993
  %2995 = vst [vmem:[#allocation2 + $0x30] sm:$0xf] %v2994
  %2996 = vst.msk [vmem:[#allocation2 + $0x34] sm:$0xf] %vm2971, %v2813
  %v2997 = vld [vmem:[#allocation2 + $0x38] sm:$0xf]
  %v2998 = vsel %vm2967, %v2815, %v2997
  %2999 = vst [vmem:[#allocation2 + $0x38] sm:$0xf] %v2998
  %3000 = vst.msk [vmem:[#allocation2 + $0x3c] sm:$0xf] %vm2971, %v2817
  %v3001 = vld [vmem:[#allocation2 + $0x40] sm:$0xf]
  %v3002 = vsel %vm2967, %v2819, %v3001
  %3003 = vst [vmem:[#allocation2 + $0x40] sm:$0xf] %v3002
  %3004 = vst.msk [vmem:[#allocation2 + $0x44] sm:$0xf] %vm2971, %v2821
  %v3005 = vld [vmem:[#allocation2 + $0x48] sm:$0xf]
  %v3006 = vsel %vm2967, %v2823, %v3005
  %3007 = vst [vmem:[#allocation2 + $0x48] sm:$0xf] %v3006
  %3008 = vst.msk [vmem:[#allocation2 + $0x4c] sm:$0xf] %vm2971, %v2825
  %v3009 = vld [vmem:[#allocation2 + $0x50] sm:$0xf]
  %v3010 = vsel %vm2967, %v2827, %v3009
  %3011 = vst [vmem:[#allocation2 + $0x50] sm:$0xf] %v3010
  %3012 = vst.msk [vmem:[#allocation2 + $0x54] sm:$0xf] %vm2971, %v2829
  %v3013 = vld [vmem:[#allocation2 + $0x58] sm:$0xf]
  %v3014 = vsel %vm2967, %v2831, %v3013
  %3015 = vst [vmem:[#allocation2 + $0x58] sm:$0xf] %v3014
  %3016 = vst.msk [vmem:[#allocation2 + $0x5c] sm:$0xf] %vm2971, %v2833
  %v3017 = vld [vmem:[#allocation2 + $0x60] sm:$0xf]
  %v3018 = vsel %vm2967, %v2835, %v3017
  %3019 = vst [vmem:[#allocation2 + $0x60] sm:$0xf] %v3018
  %3020 = vst.msk [vmem:[#allocation2 + $0x64] sm:$0xf] %vm2971, %v2837
  %v3021 = vld [vmem:[#allocation2 + $0x68] sm:$0xf]
  %v3022 = vsel %vm2967, %v2839, %v3021
  %3023 = vst [vmem:[#allocation2 + $0x68] sm:$0xf] %v3022
  %3024 = vst.msk [vmem:[#allocation2 + $0x6c] sm:$0xf] %vm2971, %v2841
  %v3025 = vld [vmem:[#allocation2 + $0x70] sm:$0xf]
  %v3026 = vsel %vm2967, %v2843, %v3025
  %3027 = vst [vmem:[#allocation2 + $0x70] sm:$0xf] %v3026
  %3028 = vst.msk [vmem:[#allocation2 + $0x74] sm:$0xf] %vm2971, %v2845
  %v3029 = vld [vmem:[#allocation2 + $0x80] sm:$0xf]
  %v3030 = vsel %vm2967, %v2847, %v3029
  %3031 = vst [vmem:[#allocation2 + $0x80] sm:$0xf] %v3030
  %3032 = vst.msk [vmem:[#allocation2 + $0x84] sm:$0xf] %vm2971, %v2849
  %v3033 = vld [vmem:[#allocation2 + $0x88] sm:$0xf]
  %v3034 = vsel %vm2967, %v2851, %v3033
  %3035 = vst [vmem:[#allocation2 + $0x88] sm:$0xf] %v3034
  %3036 = vst.msk [vmem:[#allocation2 + $0x8c] sm:$0xf] %vm2971, %v2853
  %v3037 = vld [vmem:[#allocation2 + $0x90] sm:$0xf]
  %v3038 = vsel %vm2967, %v2855, %v3037
  %3039 = vst [vmem:[#allocation2 + $0x90] sm:$0xf] %v3038
  %3040 = vst.msk [vmem:[#allocation2 + $0x94] sm:$0xf] %vm2971, %v2857
  %v3041 = vld [vmem:[#allocation2 + $0x98] sm:$0xf]
  %v3042 = vsel %vm2967, %v2859, %v3041
  %3043 = vst [vmem:[#allocation2 + $0x98] sm:$0xf] %v3042
  %3044 = vst.msk [vmem:[#allocation2 + $0x9c] sm:$0xf] %vm2971, %v2861
  %v3045 = vld [vmem:[#allocation2 + $0xa0] sm:$0xf]
  %v3046 = vsel %vm2967, %v2863, %v3045
  %3047 = vst [vmem:[#allocation2 + $0xa0] sm:$0xf] %v3046
  %3048 = vst.msk [vmem:[#allocation2 + $0xa4] sm:$0xf] %vm2971, %v2865
  %v3049 = vld [vmem:[#allocation2 + $0xa8] sm:$0xf]
  %v3050 = vsel %vm2967, %v2867, %v3049
  %3051 = vst [vmem:[#allocation2 + $0xa8] sm:$0xf] %v3050
  %3052 = vst.msk [vmem:[#allocation2 + $0xac] sm:$0xf] %vm2971, %v2869
  %v3053 = vld [vmem:[#allocation2 + $0xb0] sm:$0xf]
  %v3054 = vsel %vm2967, %v2871, %v3053
  %3055 = vst [vmem:[#allocation2 + $0xb0] sm:$0xf] %v3054
  %3056 = vst.msk [vmem:[#allocation2 + $0xb4] sm:$0xf] %vm2971, %v2873
  %v3057 = vld [vmem:[#allocation2 + $0xb8] sm:$0xf]
  %v3058 = vsel %vm2967, %v2875, %v3057
  %3059 = vst [vmem:[#allocation2 + $0xb8] sm:$0xf] %v3058
  %3060 = vst.msk [vmem:[#allocation2 + $0xbc] sm:$0xf] %vm2971, %v2877
  %v3061 = vld [vmem:[#allocation2 + $0xc0] sm:$0xf]
  %v3062 = vsel %vm2967, %v2879, %v3061
  %3063 = vst [vmem:[#allocation2 + $0xc0] sm:$0xf] %v3062
  %3064 = vst.msk [vmem:[#allocation2 + $0xc4] sm:$0xf] %vm2971, %v2881
  %v3065 = vld [vmem:[#allocation2 + $0xc8] sm:$0xf]
  %v3066 = vsel %vm2967, %v2883, %v3065
  %3067 = vst [vmem:[#allocation2 + $0xc8] sm:$0xf] %v3066
  %3068 = vst.msk [vmem:[#allocation2 + $0xcc] sm:$0xf] %vm2971, %v2885
  %v3069 = vld [vmem:[#allocation2 + $0xd0] sm:$0xf]
  %v3070 = vsel %vm2967, %v2887, %v3069
  %3071 = vst [vmem:[#allocation2 + $0xd0] sm:$0xf] %v3070
  %3072 = vst.msk [vmem:[#allocation2 + $0xd4] sm:$0xf] %vm2971, %v2889
  %v3073 = vld [vmem:[#allocation2 + $0xd8] sm:$0xf]
  %v3074 = vsel %vm2967, %v2891, %v3073
  %3075 = vst [vmem:[#allocation2 + $0xd8] sm:$0xf] %v3074
  %3076 = vst.msk [vmem:[#allocation2 + $0xdc] sm:$0xf] %vm2971, %v2893
  %v3077 = vld [vmem:[#allocation2 + $0xe0] sm:$0xf]
  %v3078 = vsel %vm2967, %v2895, %v3077
  %3079 = vst [vmem:[#allocation2 + $0xe0] sm:$0xf] %v3078
  %3080 = vst.msk [vmem:[#allocation2 + $0xe4] sm:$0xf] %vm2971, %v2897
  %v3081 = vld [vmem:[#allocation2 + $0xe8] sm:$0xf]
  %v3082 = vsel %vm2967, %v2899, %v3081
  %3083 = vst [vmem:[#allocation2 + $0xe8] sm:$0xf] %v3082
  %3084 = vst.msk [vmem:[#allocation2 + $0xec] sm:$0xf] %vm2971, %v2901
  %v3085 = vld [vmem:[#allocation2 + $0xf0] sm:$0xf]
  %v3086 = vsel %vm2967, %v2903, %v3085
  %3087 = vst [vmem:[#allocation2 + $0xf0] sm:$0xf] %v3086
  %3088 = vst.msk [vmem:[#allocation2 + $0xf4] sm:$0xf] %vm2971, %v2905
  %3089 = vrot.lane.b32.xlu0 %v280, 56
  %v3090 = vpop.permute.xlu0 %3089
  %3091 = vrot.lane.b32.xlu0 %v281, 56
  %v3092 = vpop.permute.xlu0 %3091
  %3093 = vrot.lane.b32.xlu0 %v282, 56
  %v3094 = vpop.permute.xlu0 %3093
  %3095 = vrot.lane.b32.xlu0 %v283, 56
  %v3096 = vpop.permute.xlu0 %3095
  %3097 = vrot.lane.b32.xlu0 %v284, 56
  %v3098 = vpop.permute.xlu0 %3097
  %3099 = vrot.lane.b32.xlu0 %v285, 56
  %v3100 = vpop.permute.xlu0 %3099
  %3101 = vrot.lane.b32.xlu0 %v286, 56
  %v3102 = vpop.permute.xlu0 %3101
  %3103 = vrot.lane.b32.xlu0 %v287, 56
  %v3104 = vpop.permute.xlu0 %3103
  %3105 = vrot.lane.b32.xlu0 %v288, 56
  %v3106 = vpop.permute.xlu0 %3105
  %3107 = vrot.lane.b32.xlu0 %v289, 56
  %v3108 = vpop.permute.xlu0 %3107
  %3109 = vrot.lane.b32.xlu0 %v290, 56
  %v3110 = vpop.permute.xlu0 %3109
  %3111 = vrot.lane.b32.xlu0 %v291, 56
  %v3112 = vpop.permute.xlu0 %3111
  %3113 = vrot.lane.b32.xlu0 %v292, 56
  %v3114 = vpop.permute.xlu0 %3113
  %3115 = vrot.lane.b32.xlu0 %v293, 56
  %v3116 = vpop.permute.xlu0 %3115
  %3117 = vrot.lane.b32.xlu0 %v294, 56
  %v3118 = vpop.permute.xlu0 %3117
  %3119 = vrot.lane.b32.xlu0 %v295, 56
  %v3120 = vpop.permute.xlu0 %3119
  %3121 = vrot.lane.b32.xlu0 %v296, 56
  %v3122 = vpop.permute.xlu0 %3121
  %3123 = vrot.lane.b32.xlu0 %v297, 56
  %v3124 = vpop.permute.xlu0 %3123
  %3125 = vrot.lane.b32.xlu0 %v298, 56
  %v3126 = vpop.permute.xlu0 %3125
  %3127 = vrot.lane.b32.xlu0 %v299, 56
  %v3128 = vpop.permute.xlu0 %3127
  %3129 = vrot.lane.b32.xlu0 %v300, 56
  %v3130 = vpop.permute.xlu0 %3129
  %3131 = vrot.lane.b32.xlu0 %v301, 56
  %v3132 = vpop.permute.xlu0 %3131
  %3133 = vrot.lane.b32.xlu0 %v302, 56
  %v3134 = vpop.permute.xlu0 %3133
  %3135 = vrot.lane.b32.xlu0 %v303, 56
  %v3136 = vpop.permute.xlu0 %3135
  %3137 = vrot.lane.b32.xlu0 %v304, 56
  %v3138 = vpop.permute.xlu0 %3137
  %3139 = vrot.lane.b32.xlu0 %v305, 56
  %v3140 = vpop.permute.xlu0 %3139
  %3141 = vrot.lane.b32.xlu0 %v306, 56
  %v3142 = vpop.permute.xlu0 %3141
  %3143 = vrot.lane.b32.xlu0 %v307, 56
  %v3144 = vpop.permute.xlu0 %3143
  %3145 = vrot.lane.b32.xlu0 %v1829, 56
  %v3146 = vpop.permute.xlu0 %3145
  %3147 = vrot.lane.b32.xlu0 %v1830, 56
  %v3148 = vpop.permute.xlu0 %3147
  %3149 = vrot.lane.b32.xlu0 %v310, 56
  %v3150 = vpop.permute.xlu0 %3149
  %3151 = vrot.lane.b32.xlu0 %v311, 56
  %v3152 = vpop.permute.xlu0 %3151
  %3153 = vrot.lane.b32.xlu0 %v312, 56
  %v3154 = vpop.permute.xlu0 %3153
  %3155 = vrot.lane.b32.xlu0 %v313, 56
  %v3156 = vpop.permute.xlu0 %3155
  %3157 = vrot.lane.b32.xlu0 %v314, 56
  %v3158 = vpop.permute.xlu0 %3157
  %3159 = vrot.lane.b32.xlu0 %v315, 56
  %v3160 = vpop.permute.xlu0 %3159
  %3161 = vrot.lane.b32.xlu0 %v316, 56
  %v3162 = vpop.permute.xlu0 %3161
  %3163 = vrot.lane.b32.xlu0 %v317, 56
  %v3164 = vpop.permute.xlu0 %3163
  %3165 = vrot.lane.b32.xlu0 %v318, 56
  %v3166 = vpop.permute.xlu0 %3165
  %3167 = vrot.lane.b32.xlu0 %v319, 56
  %v3168 = vpop.permute.xlu0 %3167
  %3169 = vrot.lane.b32.xlu0 %v320, 56
  %v3170 = vpop.permute.xlu0 %3169
  %3171 = vrot.lane.b32.xlu0 %v321, 56
  %v3172 = vpop.permute.xlu0 %3171
  %3173 = vrot.lane.b32.xlu0 %v322, 56
  %v3174 = vpop.permute.xlu0 %3173
  %3175 = vrot.lane.b32.xlu0 %v323, 56
  %v3176 = vpop.permute.xlu0 %3175
  %3177 = vrot.lane.b32.xlu0 %v324, 56
  %v3178 = vpop.permute.xlu0 %3177
  %3179 = vrot.lane.b32.xlu0 %v325, 56
  %v3180 = vpop.permute.xlu0 %3179
  %3181 = vrot.lane.b32.xlu0 %v326, 56
  %v3182 = vpop.permute.xlu0 %3181
  %3183 = vrot.lane.b32.xlu0 %v327, 56
  %v3184 = vpop.permute.xlu0 %3183
  %3185 = vrot.lane.b32.xlu0 %v328, 56
  %v3186 = vpop.permute.xlu0 %3185
  %3187 = vrot.lane.b32.xlu0 %v329, 56
  %v3188 = vpop.permute.xlu0 %3187
  %3189 = vrot.lane.b32.xlu0 %v330, 56
  %v3190 = vpop.permute.xlu0 %3189
  %3191 = vrot.lane.b32.xlu0 %v331, 56
  %v3192 = vpop.permute.xlu0 %3191
  %3193 = vrot.lane.b32.xlu0 %v332, 56
  %v3194 = vpop.permute.xlu0 %3193
  %3195 = vrot.lane.b32.xlu0 %v333, 56
  %v3196 = vpop.permute.xlu0 %3195
  %3197 = vrot.lane.b32.xlu0 %v334, 56
  %v3198 = vpop.permute.xlu0 %3197
  %3199 = vrot.lane.b32.xlu0 %v335, 56
  %v3200 = vpop.permute.xlu0 %3199
  %3201 = vrot.lane.b32.xlu0 %v336, 56
  %v3202 = vpop.permute.xlu0 %3201
  %3203 = vrot.lane.b32.xlu0 %v337, 56
  %v3204 = vpop.permute.xlu0 %3203
  %3205 = vrot.lane.b32.xlu0 %v1831, 56
  %v3206 = vpop.permute.xlu0 %3205
  %3207 = vrot.lane.b32.xlu0 %v1832, 56
  %v3208 = vpop.permute.xlu0 %3207
  %vm3269 = vcmask 519616
  %3270 = vst.msk [vmem:[#allocation2] sm:$0xf] %vm3269, %v3090
  %3271 = vst.msk [vmem:[#allocation2 + $0x4] sm:$0xf] %vm3269, %v3092
  %3272 = vst.msk [vmem:[#allocation2 + $0x8] sm:$0xf] %vm3269, %v3094
  %3273 = vst.msk [vmem:[#allocation2 + $0xc] sm:$0xf] %vm3269, %v3096
  %3274 = vst.msk [vmem:[#allocation2 + $0x10] sm:$0xf] %vm3269, %v3098
  %3275 = vst.msk [vmem:[#allocation2 + $0x14] sm:$0xf] %vm3269, %v3100
  %3276 = vst.msk [vmem:[#allocation2 + $0x18] sm:$0xf] %vm3269, %v3102
  %3277 = vst.msk [vmem:[#allocation2 + $0x1c] sm:$0xf] %vm3269, %v3104
  %3278 = vst.msk [vmem:[#allocation2 + $0x20] sm:$0xf] %vm3269, %v3106
  %3279 = vst.msk [vmem:[#allocation2 + $0x24] sm:$0xf] %vm3269, %v3108
  %3280 = vst.msk [vmem:[#allocation2 + $0x28] sm:$0xf] %vm3269, %v3110
  %3281 = vst.msk [vmem:[#allocation2 + $0x2c] sm:$0xf] %vm3269, %v3112
  %3282 = vst.msk [vmem:[#allocation2 + $0x30] sm:$0xf] %vm3269, %v3114
  %3283 = vst.msk [vmem:[#allocation2 + $0x34] sm:$0xf] %vm3269, %v3116
  %3284 = vst.msk [vmem:[#allocation2 + $0x38] sm:$0xf] %vm3269, %v3118
  %3285 = vst.msk [vmem:[#allocation2 + $0x3c] sm:$0xf] %vm3269, %v3120
  %3286 = vst.msk [vmem:[#allocation2 + $0x40] sm:$0xf] %vm3269, %v3122
  %3287 = vst.msk [vmem:[#allocation2 + $0x44] sm:$0xf] %vm3269, %v3124
  %3288 = vst.msk [vmem:[#allocation2 + $0x48] sm:$0xf] %vm3269, %v3126
  %3289 = vst.msk [vmem:[#allocation2 + $0x4c] sm:$0xf] %vm3269, %v3128
  %3290 = vst.msk [vmem:[#allocation2 + $0x50] sm:$0xf] %vm3269, %v3130
  %3291 = vst.msk [vmem:[#allocation2 + $0x54] sm:$0xf] %vm3269, %v3132
  %3292 = vst.msk [vmem:[#allocation2 + $0x58] sm:$0xf] %vm3269, %v3134
  %3293 = vst.msk [vmem:[#allocation2 + $0x5c] sm:$0xf] %vm3269, %v3136
  %3294 = vst.msk [vmem:[#allocation2 + $0x60] sm:$0xf] %vm3269, %v3138
  %3295 = vst.msk [vmem:[#allocation2 + $0x64] sm:$0xf] %vm3269, %v3140
  %3296 = vst.msk [vmem:[#allocation2 + $0x68] sm:$0xf] %vm3269, %v3142
  %3297 = vst.msk [vmem:[#allocation2 + $0x6c] sm:$0xf] %vm3269, %v3144
  %3298 = vst.msk [vmem:[#allocation2 + $0x70] sm:$0xf] %vm3269, %v3146
  %3299 = vst.msk [vmem:[#allocation2 + $0x74] sm:$0xf] %vm3269, %v3148
  %3300 = vst.msk [vmem:[#allocation2 + $0x80] sm:$0xf] %vm3269, %v3150
  %3301 = vst.msk [vmem:[#allocation2 + $0x84] sm:$0xf] %vm3269, %v3152
  %3302 = vst.msk [vmem:[#allocation2 + $0x88] sm:$0xf] %vm3269, %v3154
  %3303 = vst.msk [vmem:[#allocation2 + $0x8c] sm:$0xf] %vm3269, %v3156
  %3304 = vst.msk [vmem:[#allocation2 + $0x90] sm:$0xf] %vm3269, %v3158
  %3305 = vst.msk [vmem:[#allocation2 + $0x94] sm:$0xf] %vm3269, %v3160
  %3306 = vst.msk [vmem:[#allocation2 + $0x98] sm:$0xf] %vm3269, %v3162
  %3307 = vst.msk [vmem:[#allocation2 + $0x9c] sm:$0xf] %vm3269, %v3164
  %3308 = vst.msk [vmem:[#allocation2 + $0xa0] sm:$0xf] %vm3269, %v3166
  %3309 = vst.msk [vmem:[#allocation2 + $0xa4] sm:$0xf] %vm3269, %v3168
  %3310 = vst.msk [vmem:[#allocation2 + $0xa8] sm:$0xf] %vm3269, %v3170
  %3311 = vst.msk [vmem:[#allocation2 + $0xac] sm:$0xf] %vm3269, %v3172
  %3312 = vst.msk [vmem:[#allocation2 + $0xb0] sm:$0xf] %vm3269, %v3174
  %3313 = vst.msk [vmem:[#allocation2 + $0xb4] sm:$0xf] %vm3269, %v3176
  %3314 = vst.msk [vmem:[#allocation2 + $0xb8] sm:$0xf] %vm3269, %v3178
  %3315 = vst.msk [vmem:[#allocation2 + $0xbc] sm:$0xf] %vm3269, %v3180
  %3316 = vst.msk [vmem:[#allocation2 + $0xc0] sm:$0xf] %vm3269, %v3182
  %3317 = vst.msk [vmem:[#allocation2 + $0xc4] sm:$0xf] %vm3269, %v3184
  %3318 = vst.msk [vmem:[#allocation2 + $0xc8] sm:$0xf] %vm3269, %v3186
  %3319 = vst.msk [vmem:[#allocation2 + $0xcc] sm:$0xf] %vm3269, %v3188
  %3320 = vst.msk [vmem:[#allocation2 + $0xd0] sm:$0xf] %vm3269, %v3190
  %3321 = vst.msk [vmem:[#allocation2 + $0xd4] sm:$0xf] %vm3269, %v3192
  %3322 = vst.msk [vmem:[#allocation2 + $0xd8] sm:$0xf] %vm3269, %v3194
  %3323 = vst.msk [vmem:[#allocation2 + $0xdc] sm:$0xf] %vm3269, %v3196
  %3324 = vst.msk [vmem:[#allocation2 + $0xe0] sm:$0xf] %vm3269, %v3198
  %3325 = vst.msk [vmem:[#allocation2 + $0xe4] sm:$0xf] %vm3269, %v3200
  %3326 = vst.msk [vmem:[#allocation2 + $0xe8] sm:$0xf] %vm3269, %v3202
  %3327 = vst.msk [vmem:[#allocation2 + $0xec] sm:$0xf] %vm3269, %v3204
  %3328 = vst.msk [vmem:[#allocation2 + $0xf0] sm:$0xf] %vm3269, %v3206
  %3329 = vst.msk [vmem:[#allocation2 + $0xf4] sm:$0xf] %vm3269, %v3208
  %3330 = vrot.lane.b32.xlu0 %v1264, 64
  %v3331 = vpop.permute.xlu0 %3330
  %3332 = vrot.lane.b32.xlu0 %v1267, 64
  %v3333 = vpop.permute.xlu0 %3332
  %3334 = vrot.lane.b32.xlu0 %v1273, 64
  %v3335 = vpop.permute.xlu0 %3334
  %3336 = vrot.lane.b32.xlu0 %v1276, 64
  %v3337 = vpop.permute.xlu0 %3336
  %3338 = vrot.lane.b32.xlu0 %v1282, 64
  %v3339 = vpop.permute.xlu0 %3338
  %3340 = vrot.lane.b32.xlu0 %v1285, 64
  %v3341 = vpop.permute.xlu0 %3340
  %3342 = vrot.lane.b32.xlu0 %v1291, 64
  %v3343 = vpop.permute.xlu0 %3342
  %3344 = vrot.lane.b32.xlu0 %v1294, 64
  %v3345 = vpop.permute.xlu0 %3344
  %3346 = vrot.lane.b32.xlu0 %v1300, 64
  %v3347 = vpop.permute.xlu0 %3346
  %3348 = vrot.lane.b32.xlu0 %v1303, 64
  %v3349 = vpop.permute.xlu0 %3348
  %3350 = vrot.lane.b32.xlu0 %v1309, 64
  %v3351 = vpop.permute.xlu0 %3350
  %3352 = vrot.lane.b32.xlu0 %v1312, 64
  %v3353 = vpop.permute.xlu0 %3352
  %3354 = vrot.lane.b32.xlu0 %v1318, 64
  %v3355 = vpop.permute.xlu0 %3354
  %3356 = vrot.lane.b32.xlu0 %v1321, 64
  %v3357 = vpop.permute.xlu0 %3356
  %3358 = vrot.lane.b32.xlu0 %v1327, 64
  %v3359 = vpop.permute.xlu0 %3358
  %3360 = vrot.lane.b32.xlu0 %v1330, 64
  %v3361 = vpop.permute.xlu0 %3360
  %3362 = vrot.lane.b32.xlu0 %v1336, 64
  %v3363 = vpop.permute.xlu0 %3362
  %3364 = vrot.lane.b32.xlu0 %v1339, 64
  %v3365 = vpop.permute.xlu0 %3364
  %3366 = vrot.lane.b32.xlu0 %v1345, 64
  %v3367 = vpop.permute.xlu0 %3366
  %3368 = vrot.lane.b32.xlu0 %v1348, 64
  %v3369 = vpop.permute.xlu0 %3368
  %3370 = vrot.lane.b32.xlu0 %v1354, 64
  %v3371 = vpop.permute.xlu0 %3370
  %3372 = vrot.lane.b32.xlu0 %v1357, 64
  %v3373 = vpop.permute.xlu0 %3372
  %3374 = vrot.lane.b32.xlu0 %v1363, 64
  %v3375 = vpop.permute.xlu0 %3374
  %3376 = vrot.lane.b32.xlu0 %v1366, 64
  %v3377 = vpop.permute.xlu0 %3376
  %3378 = vrot.lane.b32.xlu0 %v1372, 64
  %v3379 = vpop.permute.xlu0 %3378
  %3380 = vrot.lane.b32.xlu0 %v1375, 64
  %v3381 = vpop.permute.xlu0 %3380
  %3382 = vrot.lane.b32.xlu0 %v1381, 64
  %v3383 = vpop.permute.xlu0 %3382
  %3384 = vrot.lane.b32.xlu0 %v1384, 64
  %v3385 = vpop.permute.xlu0 %3384
  %3386 = vrot.lane.b32.xlu0 %v2450, 64
  %v3387 = vpop.permute.xlu0 %3386
  %3388 = vrot.lane.b32.xlu0 %v2453, 64
  %v3389 = vpop.permute.xlu0 %3388
  %3390 = vrot.lane.b32.xlu0 %v1399, 64
  %v3391 = vpop.permute.xlu0 %3390
  %3392 = vrot.lane.b32.xlu0 %v1402, 64
  %v3393 = vpop.permute.xlu0 %3392
  %3394 = vrot.lane.b32.xlu0 %v1408, 64
  %v3395 = vpop.permute.xlu0 %3394
  %3396 = vrot.lane.b32.xlu0 %v1411, 64
  %v3397 = vpop.permute.xlu0 %3396
  %3398 = vrot.lane.b32.xlu0 %v1417, 64
  %v3399 = vpop.permute.xlu0 %3398
  %3400 = vrot.lane.b32.xlu0 %v1420, 64
  %v3401 = vpop.permute.xlu0 %3400
  %3402 = vrot.lane.b32.xlu0 %v1426, 64
  %v3403 = vpop.permute.xlu0 %3402
  %3404 = vrot.lane.b32.xlu0 %v1429, 64
  %v3405 = vpop.permute.xlu0 %3404
  %3406 = vrot.lane.b32.xlu0 %v1435, 64
  %v3407 = vpop.permute.xlu0 %3406
  %3408 = vrot.lane.b32.xlu0 %v1438, 64
  %v3409 = vpop.permute.xlu0 %3408
  %3410 = vrot.lane.b32.xlu0 %v1444, 64
  %v3411 = vpop.permute.xlu0 %3410
  %3412 = vrot.lane.b32.xlu0 %v1447, 64
  %v3413 = vpop.permute.xlu0 %3412
  %3414 = vrot.lane.b32.xlu0 %v1453, 64
  %v3415 = vpop.permute.xlu0 %3414
  %3416 = vrot.lane.b32.xlu0 %v1456, 64
  %v3417 = vpop.permute.xlu0 %3416
  %3418 = vrot.lane.b32.xlu0 %v1462, 64
  %v3419 = vpop.permute.xlu0 %3418
  %3420 = vrot.lane.b32.xlu0 %v1465, 64
  %v3421 = vpop.permute.xlu0 %3420
  %3422 = vrot.lane.b32.xlu0 %v1471, 64
  %v3423 = vpop.permute.xlu0 %3422
  %3424 = vrot.lane.b32.xlu0 %v1474, 64
  %v3425 = vpop.permute.xlu0 %3424
  %3426 = vrot.lane.b32.xlu0 %v1480, 64
  %v3427 = vpop.permute.xlu0 %3426
  %3428 = vrot.lane.b32.xlu0 %v1483, 64
  %v3429 = vpop.permute.xlu0 %3428
  %3430 = vrot.lane.b32.xlu0 %v1489, 64
  %v3431 = vpop.permute.xlu0 %3430
  %3432 = vrot.lane.b32.xlu0 %v1492, 64
  %v3433 = vpop.permute.xlu0 %3432
  %3434 = vrot.lane.b32.xlu0 %v1498, 64
  %v3435 = vpop.permute.xlu0 %3434
  %3436 = vrot.lane.b32.xlu0 %v1501, 64
  %v3437 = vpop.permute.xlu0 %3436
  %3438 = vrot.lane.b32.xlu0 %v1507, 64
  %v3439 = vpop.permute.xlu0 %3438
  %3440 = vrot.lane.b32.xlu0 %v1510, 64
  %v3441 = vpop.permute.xlu0 %3440
  %3442 = vrot.lane.b32.xlu0 %v1516, 64
  %v3443 = vpop.permute.xlu0 %3442
  %3444 = vrot.lane.b32.xlu0 %v1519, 64
  %v3445 = vpop.permute.xlu0 %3444
  %3446 = vrot.lane.b32.xlu0 %v2459, 64
  %v3447 = vpop.permute.xlu0 %3446
  %3448 = vrot.lane.b32.xlu0 %v2462, 64
  %v3449 = vpop.permute.xlu0 %3448
  %vm3510 = vcmask 585216
  %3511 = vst.msk [vmem:[#allocation2] sm:$0xf] %vm3510, %v3331
  %vm3512 = vcmask 585216
  %vm3513 = vmand %vm3512, %vm1247
  %v3514 = vld [vmem:[#allocation2 + $0x4] sm:$0xf]
  %v3515 = vsel %vm3513, %v3333, %v3514
  %3516 = vst [vmem:[#allocation2 + $0x4] sm:$0xf] %v3515
  %3517 = vst.msk [vmem:[#allocation2 + $0x8] sm:$0xf] %vm3510, %v3335
  %v3518 = vld [vmem:[#allocation2 + $0xc] sm:$0xf]
  %v3519 = vsel %vm3513, %v3337, %v3518
  %3520 = vst [vmem:[#allocation2 + $0xc] sm:$0xf] %v3519
  %3521 = vst.msk [vmem:[#allocation2 + $0x10] sm:$0xf] %vm3510, %v3339
  %v3522 = vld [vmem:[#allocation2 + $0x14] sm:$0xf]
  %v3523 = vsel %vm3513, %v3341, %v3522
  %3524 = vst [vmem:[#allocation2 + $0x14] sm:$0xf] %v3523
  %3525 = vst.msk [vmem:[#allocation2 + $0x18] sm:$0xf] %vm3510, %v3343
  %v3526 = vld [vmem:[#allocation2 + $0x1c] sm:$0xf]
  %v3527 = vsel %vm3513, %v3345, %v3526
  %3528 = vst [vmem:[#allocation2 + $0x1c] sm:$0xf] %v3527
  %3529 = vst.msk [vmem:[#allocation2 + $0x20] sm:$0xf] %vm3510, %v3347
  %v3530 = vld [vmem:[#allocation2 + $0x24] sm:$0xf]
  %v3531 = vsel %vm3513, %v3349, %v3530
  %3532 = vst [vmem:[#allocation2 + $0x24] sm:$0xf] %v3531
  %3533 = vst.msk [vmem:[#allocation2 + $0x28] sm:$0xf] %vm3510, %v3351
  %v3534 = vld [vmem:[#allocation2 + $0x2c] sm:$0xf]
  %v3535 = vsel %vm3513, %v3353, %v3534
  %3536 = vst [vmem:[#allocation2 + $0x2c] sm:$0xf] %v3535
  %3537 = vst.msk [vmem:[#allocation2 + $0x30] sm:$0xf] %vm3510, %v3355
  %v3538 = vld [vmem:[#allocation2 + $0x34] sm:$0xf]
  %v3539 = vsel %vm3513, %v3357, %v3538
  %3540 = vst [vmem:[#allocation2 + $0x34] sm:$0xf] %v3539
  %3541 = vst.msk [vmem:[#allocation2 + $0x38] sm:$0xf] %vm3510, %v3359
  %v3542 = vld [vmem:[#allocation2 + $0x3c] sm:$0xf]
  %v3543 = vsel %vm3513, %v3361, %v3542
  %3544 = vst [vmem:[#allocation2 + $0x3c] sm:$0xf] %v3543
  %3545 = vst.msk [vmem:[#allocation2 + $0x40] sm:$0xf] %vm3510, %v3363
  %v3546 = vld [vmem:[#allocation2 + $0x44] sm:$0xf]
  %v3547 = vsel %vm3513, %v3365, %v3546
  %3548 = vst [vmem:[#allocation2 + $0x44] sm:$0xf] %v3547
  %3549 = vst.msk [vmem:[#allocation2 + $0x48] sm:$0xf] %vm3510, %v3367
  %v3550 = vld [vmem:[#allocation2 + $0x4c] sm:$0xf]
  %v3551 = vsel %vm3513, %v3369, %v3550
  %3552 = vst [vmem:[#allocation2 + $0x4c] sm:$0xf] %v3551
  %3553 = vst.msk [vmem:[#allocation2 + $0x50] sm:$0xf] %vm3510, %v3371
  %v3554 = vld [vmem:[#allocation2 + $0x54] sm:$0xf]
  %v3555 = vsel %vm3513, %v3373, %v3554
  %3556 = vst [vmem:[#allocation2 + $0x54] sm:$0xf] %v3555
  %3557 = vst.msk [vmem:[#allocation2 + $0x58] sm:$0xf] %vm3510, %v3375
  %v3558 = vld [vmem:[#allocation2 + $0x5c] sm:$0xf]
  %v3559 = vsel %vm3513, %v3377, %v3558
  %3560 = vst [vmem:[#allocation2 + $0x5c] sm:$0xf] %v3559
  %3561 = vst.msk [vmem:[#allocation2 + $0x60] sm:$0xf] %vm3510, %v3379
  %v3562 = vld [vmem:[#allocation2 + $0x64] sm:$0xf]
  %v3563 = vsel %vm3513, %v3381, %v3562
  %3564 = vst [vmem:[#allocation2 + $0x64] sm:$0xf] %v3563
  %3565 = vst.msk [vmem:[#allocation2 + $0x68] sm:$0xf] %vm3510, %v3383
  %v3566 = vld [vmem:[#allocation2 + $0x6c] sm:$0xf]
  %v3567 = vsel %vm3513, %v3385, %v3566
  %3568 = vst [vmem:[#allocation2 + $0x6c] sm:$0xf] %v3567
  %3569 = vst.msk [vmem:[#allocation2 + $0x70] sm:$0xf] %vm3510, %v3387
  %v3570 = vld [vmem:[#allocation2 + $0x74] sm:$0xf]
  %v3571 = vsel %vm3513, %v3389, %v3570
  %3572 = vst [vmem:[#allocation2 + $0x74] sm:$0xf] %v3571
  %3573 = vst.msk [vmem:[#allocation2 + $0x80] sm:$0xf] %vm3510, %v3391
  %v3574 = vld [vmem:[#allocation2 + $0x84] sm:$0xf]
  %v3575 = vsel %vm3513, %v3393, %v3574
  %3576 = vst [vmem:[#allocation2 + $0x84] sm:$0xf] %v3575
  %3577 = vst.msk [vmem:[#allocation2 + $0x88] sm:$0xf] %vm3510, %v3395
  %v3578 = vld [vmem:[#allocation2 + $0x8c] sm:$0xf]
  %v3579 = vsel %vm3513, %v3397, %v3578
  %3580 = vst [vmem:[#allocation2 + $0x8c] sm:$0xf] %v3579
  %3581 = vst.msk [vmem:[#allocation2 + $0x90] sm:$0xf] %vm3510, %v3399
  %v3582 = vld [vmem:[#allocation2 + $0x94] sm:$0xf]
  %v3583 = vsel %vm3513, %v3401, %v3582
  %3584 = vst [vmem:[#allocation2 + $0x94] sm:$0xf] %v3583
  %3585 = vst.msk [vmem:[#allocation2 + $0x98] sm:$0xf] %vm3510, %v3403
  %v3586 = vld [vmem:[#allocation2 + $0x9c] sm:$0xf]
  %v3587 = vsel %vm3513, %v3405, %v3586
  %3588 = vst [vmem:[#allocation2 + $0x9c] sm:$0xf] %v3587
  %3589 = vst.msk [vmem:[#allocation2 + $0xa0] sm:$0xf] %vm3510, %v3407
  %v3590 = vld [vmem:[#allocation2 + $0xa4] sm:$0xf]
  %v3591 = vsel %vm3513, %v3409, %v3590
  %3592 = vst [vmem:[#allocation2 + $0xa4] sm:$0xf] %v3591
  %3593 = vst.msk [vmem:[#allocation2 + $0xa8] sm:$0xf] %vm3510, %v3411
  %v3594 = vld [vmem:[#allocation2 + $0xac] sm:$0xf]
  %v3595 = vsel %vm3513, %v3413, %v3594
  %3596 = vst [vmem:[#allocation2 + $0xac] sm:$0xf] %v3595
  %3597 = vst.msk [vmem:[#allocation2 + $0xb0] sm:$0xf] %vm3510, %v3415
  %v3598 = vld [vmem:[#allocation2 + $0xb4] sm:$0xf]
  %v3599 = vsel %vm3513, %v3417, %v3598
  %3600 = vst [vmem:[#allocation2 + $0xb4] sm:$0xf] %v3599
  %3601 = vst.msk [vmem:[#allocation2 + $0xb8] sm:$0xf] %vm3510, %v3419
  %v3602 = vld [vmem:[#allocation2 + $0xbc] sm:$0xf]
  %v3603 = vsel %vm3513, %v3421, %v3602
  %3604 = vst [vmem:[#allocation2 + $0xbc] sm:$0xf] %v3603
  %3605 = vst.msk [vmem:[#allocation2 + $0xc0] sm:$0xf] %vm3510, %v3423
  %v3606 = vld [vmem:[#allocation2 + $0xc4] sm:$0xf]
  %v3607 = vsel %vm3513, %v3425, %v3606
  %3608 = vst [vmem:[#allocation2 + $0xc4] sm:$0xf] %v3607
  %3609 = vst.msk [vmem:[#allocation2 + $0xc8] sm:$0xf] %vm3510, %v3427
  %v3610 = vld [vmem:[#allocation2 + $0xcc] sm:$0xf]
  %v3611 = vsel %vm3513, %v3429, %v3610
  %3612 = vst [vmem:[#allocation2 + $0xcc] sm:$0xf] %v3611
  %3613 = vst.msk [vmem:[#allocation2 + $0xd0] sm:$0xf] %vm3510, %v3431
  %v3614 = vld [vmem:[#allocation2 + $0xd4] sm:$0xf]
  %v3615 = vsel %vm3513, %v3433, %v3614
  %3616 = vst [vmem:[#allocation2 + $0xd4] sm:$0xf] %v3615
  %3617 = vst.msk [vmem:[#allocation2 + $0xd8] sm:$0xf] %vm3510, %v3435
  %v3618 = vld [vmem:[#allocation2 + $0xdc] sm:$0xf]
  %v3619 = vsel %vm3513, %v3437, %v3618
  %3620 = vst [vmem:[#allocation2 + $0xdc] sm:$0xf] %v3619
  %3621 = vst.msk [vmem:[#allocation2 + $0xe0] sm:$0xf] %vm3510, %v3439
  %v3622 = vld [vmem:[#allocation2 + $0xe4] sm:$0xf]
  %v3623 = vsel %vm3513, %v3441, %v3622
  %3624 = vst [vmem:[#allocation2 + $0xe4] sm:$0xf] %v3623
  %3625 = vst.msk [vmem:[#allocation2 + $0xe8] sm:$0xf] %vm3510, %v3443
  %v3626 = vld [vmem:[#allocation2 + $0xec] sm:$0xf]
  %v3627 = vsel %vm3513, %v3445, %v3626
  %3628 = vst [vmem:[#allocation2 + $0xec] sm:$0xf] %v3627
  %3629 = vst.msk [vmem:[#allocation2 + $0xf0] sm:$0xf] %vm3510, %v3447
  %v3630 = vld [vmem:[#allocation2 + $0xf4] sm:$0xf]
  %v3631 = vsel %vm3513, %v3449, %v3630
  %3632 = vst [vmem:[#allocation2 + $0xf4] sm:$0xf] %v3631
  %v3633 = vld [vmem:[#allocation2] sm:$0xf]
  %v3634 = vld [vmem:[#allocation2 + $0x4] sm:$0xf]
  %v3635 = vld [vmem:[#allocation2 + $0x8] sm:$0xf]
  %v3636 = vld [vmem:[#allocation2 + $0xc] sm:$0xf]
  %v3637 = vld [vmem:[#allocation2 + $0x10] sm:$0xf]
  %v3638 = vld [vmem:[#allocation2 + $0x14] sm:$0xf]
  %v3639 = vld [vmem:[#allocation2 + $0x18] sm:$0xf]
  %v3640 = vld [vmem:[#allocation2 + $0x1c] sm:$0xf]
  %v3641 = vld [vmem:[#allocation2 + $0x20] sm:$0xf]
  %v3642 = vld [vmem:[#allocation2 + $0x24] sm:$0xf]
  %v3643 = vld [vmem:[#allocation2 + $0x28] sm:$0xf]
  %v3644 = vld [vmem:[#allocation2 + $0x2c] sm:$0xf]
  %v3645 = vld [vmem:[#allocation2 + $0x30] sm:$0xf]
  %v3646 = vld [vmem:[#allocation2 + $0x34] sm:$0xf]
  %v3647 = vld [vmem:[#allocation2 + $0x38] sm:$0xf]
  %v3648 = vld [vmem:[#allocation2 + $0x3c] sm:$0xf]
  %v3649 = vld [vmem:[#allocation2 + $0x40] sm:$0xf]
  %v3650 = vld [vmem:[#allocation2 + $0x44] sm:$0xf]
  %v3651 = vld [vmem:[#allocation2 + $0x48] sm:$0xf]
  %v3652 = vld [vmem:[#allocation2 + $0x4c] sm:$0xf]
  %v3653 = vld [vmem:[#allocation2 + $0x50] sm:$0xf]
  %v3654 = vld [vmem:[#allocation2 + $0x54] sm:$0xf]
  %v3655 = vld [vmem:[#allocation2 + $0x58] sm:$0xf]
  %v3656 = vld [vmem:[#allocation2 + $0x5c] sm:$0xf]
  %v3657 = vld [vmem:[#allocation2 + $0x60] sm:$0xf]
  %v3658 = vld [vmem:[#allocation2 + $0x64] sm:$0xf]
  %v3659 = vld [vmem:[#allocation2 + $0x68] sm:$0xf]
  %v3660 = vld [vmem:[#allocation2 + $0x6c] sm:$0xf]
  %v3661 = vld [vmem:[#allocation2 + $0x70] sm:$0xf]
  %v3662 = vld [vmem:[#allocation2 + $0x74] sm:$0xf]
  %v3663 = vld [vmem:[#allocation2 + $0x78] sm:$0xf]
  %v3664 = vld [vmem:[#allocation2 + $0x7c] sm:$0xf]
  %v3665 = vld [vmem:[#allocation2 + $0x80] sm:$0xf]
  %v3666 = vld [vmem:[#allocation2 + $0x84] sm:$0xf]
  %v3667 = vld [vmem:[#allocation2 + $0x88] sm:$0xf]
  %v3668 = vld [vmem:[#allocation2 + $0x8c] sm:$0xf]
  %v3669 = vld [vmem:[#allocation2 + $0x90] sm:$0xf]
  %v3670 = vld [vmem:[#allocation2 + $0x94] sm:$0xf]
  %v3671 = vld [vmem:[#allocation2 + $0x98] sm:$0xf]
  %v3672 = vld [vmem:[#allocation2 + $0x9c] sm:$0xf]
  %v3673 = vld [vmem:[#allocation2 + $0xa0] sm:$0xf]
  %v3674 = vld [vmem:[#allocation2 + $0xa4] sm:$0xf]
  %v3675 = vld [vmem:[#allocation2 + $0xa8] sm:$0xf]
  %v3676 = vld [vmem:[#allocation2 + $0xac] sm:$0xf]
  %v3677 = vld [vmem:[#allocation2 + $0xb0] sm:$0xf]
  %v3678 = vld [vmem:[#allocation2 + $0xb4] sm:$0xf]
  %v3679 = vld [vmem:[#allocation2 + $0xb8] sm:$0xf]
  %v3680 = vld [vmem:[#allocation2 + $0xbc] sm:$0xf]
  %v3681 = vld [vmem:[#allocation2 + $0xc0] sm:$0xf]
  %v3682 = vld [vmem:[#allocation2 + $0xc4] sm:$0xf]
  %v3683 = vld [vmem:[#allocation2 + $0xc8] sm:$0xf]
  %v3684 = vld [vmem:[#allocation2 + $0xcc] sm:$0xf]
  %v3685 = vld [vmem:[#allocation2 + $0xd0] sm:$0xf]
  %v3686 = vld [vmem:[#allocation2 + $0xd4] sm:$0xf]
  %v3687 = vld [vmem:[#allocation2 + $0xd8] sm:$0xf]
  %v3688 = vld [vmem:[#allocation2 + $0xdc] sm:$0xf]
  %v3689 = vld [vmem:[#allocation2 + $0xe0] sm:$0xf]
  %v3690 = vld [vmem:[#allocation2 + $0xe4] sm:$0xf]
  %v3691 = vld [vmem:[#allocation2 + $0xe8] sm:$0xf]
  %v3692 = vld [vmem:[#allocation2 + $0xec] sm:$0xf]
  %v3693 = vld [vmem:[#allocation2 + $0xf0] sm:$0xf]
  %v3694 = vld [vmem:[#allocation2 + $0xf4] sm:$0xf]
  %v3695 = vld [vmem:[#allocation2 + $0xf8] sm:$0xf]
  %v3696 = vld [vmem:[#allocation2 + $0xfc] sm:$0xf]
  %v3697 = vld [vmem:[%s1] sm:$0xf]
  %v3698 = vld [vmem:[%s1 + $0x4] sm:$0xf]
  %v3699 = vld [vmem:[%s1 + $0x8] sm:$0xf]
  %v3700 = vld [vmem:[%s1 + $0xc] sm:$0xf]
  %v3701 = vld [vmem:[%s1 + $0x10] sm:$0xf]
  %v3702 = vld [vmem:[%s1 + $0x14] sm:$0xf]
  %v3703 = vld [vmem:[%s1 + $0x18] sm:$0xf]
  %v3704 = vld [vmem:[%s1 + $0x1c] sm:$0xf]
  %v3705 = vld [vmem:[%s1 + $0x20] sm:$0xf]
  %v3770 = vunpack.c.l.b16 %v3633
  %v3771 = vunpack.c.l.b16 %v3634
  %v3772 = vunpack.c.l.b16 %v3635
  %v3773 = vunpack.c.l.b16 %v3636
  %v3774 = vunpack.c.l.b16 %v3637
  %v3775 = vunpack.c.l.b16 %v3638
  %v3776 = vunpack.c.l.b16 %v3639
  %v3777 = vunpack.c.l.b16 %v3640
  %v3778 = vunpack.c.l.b16 %v3641
  %v3779 = vunpack.c.l.b16 %v3642
  %v3780 = vunpack.c.l.b16 %v3643
  %v3781 = vunpack.c.l.b16 %v3644
  %v3782 = vunpack.c.l.b16 %v3645
  %v3783 = vunpack.c.l.b16 %v3646
  %v3784 = vunpack.c.l.b16 %v3647
  %v3785 = vunpack.c.l.b16 %v3648
  %v3786 = vunpack.c.l.b16 %v3649
  %v3787 = vunpack.c.l.b16 %v3650
  %v3788 = vunpack.c.l.b16 %v3651
  %v3789 = vunpack.c.l.b16 %v3652
  %v3790 = vunpack.c.l.b16 %v3653
  %v3791 = vunpack.c.l.b16 %v3654
  %v3792 = vunpack.c.l.b16 %v3655
  %v3793 = vunpack.c.l.b16 %v3656
  %v3794 = vunpack.c.l.b16 %v3657
  %v3795 = vunpack.c.l.b16 %v3658
  %v3796 = vunpack.c.l.b16 %v3659
  %v3797 = vunpack.c.l.b16 %v3660
  %v3798 = vunpack.c.l.b16 %v3661
  %v3799 = vunpack.c.l.b16 %v3662
  %v3800 = vunpack.c.l.b16 %v3663
  %v3801 = vunpack.c.l.b16 %v3664
  %v3802 = vunpack.c.l.b16 %v3665
  %v3803 = vunpack.c.l.b16 %v3666
  %v3804 = vunpack.c.l.b16 %v3667
  %v3805 = vunpack.c.l.b16 %v3668
  %v3806 = vunpack.c.l.b16 %v3669
  %v3807 = vunpack.c.l.b16 %v3670
  %v3808 = vunpack.c.l.b16 %v3671
  %v3809 = vunpack.c.l.b16 %v3672
  %v3810 = vunpack.c.l.b16 %v3673
  %v3811 = vunpack.c.l.b16 %v3674
  %v3812 = vunpack.c.l.b16 %v3675
  %v3813 = vunpack.c.l.b16 %v3676
  %v3814 = vunpack.c.l.b16 %v3677
  %v3815 = vunpack.c.l.b16 %v3678
  %v3816 = vunpack.c.l.b16 %v3679
  %v3817 = vunpack.c.l.b16 %v3680
  %v3818 = vunpack.c.l.b16 %v3681
  %v3819 = vunpack.c.l.b16 %v3682
  %v3820 = vunpack.c.l.b16 %v3683
  %v3821 = vunpack.c.l.b16 %v3684
  %v3822 = vunpack.c.l.b16 %v3685
  %v3823 = vunpack.c.l.b16 %v3686
  %v3824 = vunpack.c.l.b16 %v3687
  %v3825 = vunpack.c.l.b16 %v3688
  %v3826 = vunpack.c.l.b16 %v3689
  %v3827 = vunpack.c.l.b16 %v3690
  %v3828 = vunpack.c.l.b16 %v3691
  %v3829 = vunpack.c.l.b16 %v3692
  %v3830 = vunpack.c.l.b16 %v3693
  %v3831 = vunpack.c.l.b16 %v3694
  %v3832 = vunpack.c.l.b16 %v3695
  %v3833 = vunpack.c.l.b16 %v3696
  %v3834 = vpack.c.b16 %v3771, %v3770
  %v3835 = vpack.c.b16 %v3773, %v3772
  %v3836 = vpack.c.b16 %v3775, %v3774
  %v3837 = vpack.c.b16 %v3777, %v3776
  %v3838 = vpack.c.b16 %v3779, %v3778
  %v3839 = vpack.c.b16 %v3781, %v3780
  %v3840 = vpack.c.b16 %v3783, %v3782
  %v3841 = vpack.c.b16 %v3785, %v3784
  %v3842 = vpack.c.b16 %v3787, %v3786
  %v3843 = vpack.c.b16 %v3789, %v3788
  %v3844 = vpack.c.b16 %v3791, %v3790
  %v3845 = vpack.c.b16 %v3793, %v3792
  %v3846 = vpack.c.b16 %v3795, %v3794
  %v3847 = vpack.c.b16 %v3797, %v3796
  %v3848 = vpack.c.b16 %v3799, %v3798
  %v3849 = vpack.c.b16 %v3801, %v3800
  %v3850 = vpack.c.b16 %v3803, %v3802
  %v3851 = vpack.c.b16 %v3805, %v3804
  %v3852 = vpack.c.b16 %v3807, %v3806
  %v3853 = vpack.c.b16 %v3809, %v3808
  %v3854 = vpack.c.b16 %v3811, %v3810
  %v3855 = vpack.c.b16 %v3813, %v3812
  %v3856 = vpack.c.b16 %v3815, %v3814
  %v3857 = vpack.c.b16 %v3817, %v3816
  %v3858 = vpack.c.b16 %v3819, %v3818
  %v3859 = vpack.c.b16 %v3821, %v3820
  %v3860 = vpack.c.b16 %v3823, %v3822
  %v3861 = vpack.c.b16 %v3825, %v3824
  %v3862 = vpack.c.b16 %v3827, %v3826
  %v3863 = vpack.c.b16 %v3829, %v3828
  %v3864 = vpack.c.b16 %v3831, %v3830
  %v3865 = vpack.c.b16 %v3833, %v3832
  %v3875 = vunpack.c.l.b16 %v3697
  %v3876 = vunpack.c.l.b16 %v3698
  %v3877 = vunpack.c.l.b16 %v3699
  %v3878 = vunpack.c.l.b16 %v3700
  %v3879 = vunpack.c.l.b16 %v3701
  %v3880 = vunpack.c.l.b16 %v3702
  %v3881 = vunpack.c.l.b16 %v3703
  %v3882 = vunpack.c.l.b16 %v3704
  %v3883 = vunpack.c.l.b16 %v3705
  %v3884 = vpack.c.b16 %v3876, %v3875
  %v3885 = vpack.c.b16 %v3878, %v3877
  %v3886 = vpack.c.b16 %v3880, %v3879
  %v3887 = vpack.c.b16 %v3882, %v3881
  %v3888 = vpack.c.b16 %v3883, %v3883
  %vm3893 = vcmask 588800
  %v3895 = vsel %vm3893, %v3834, 0
  %v3898 = vsel %vm3893, %v3835, 0
  %v3901 = vsel %vm3893, %v3836, 0
  %v3904 = vsel %vm3893, %v3837, 0
  %v3907 = vsel %vm3893, %v3838, 0
  %v3910 = vsel %vm3893, %v3839, 0
  %v3913 = vsel %vm3893, %v3840, 0
  %v3916 = vsel %vm3893, %v3841, 0
  %v3919 = vsel %vm3893, %v3842, 0
  %v3922 = vsel %vm3893, %v3843, 0
  %v3925 = vsel %vm3893, %v3844, 0
  %v3928 = vsel %vm3893, %v3845, 0
  %v3931 = vsel %vm3893, %v3846, 0
  %v3934 = vsel %vm3893, %v3847, 0
  %v3937 = vsel %vm3893, %v3848, 0
  %v3940 = vsel %vm3893, %v3849, 0
  %v3943 = vsel %vm3893, %v3850, 0
  %v3946 = vsel %vm3893, %v3851, 0
  %v3949 = vsel %vm3893, %v3852, 0
  %v3952 = vsel %vm3893, %v3853, 0
  %v3955 = vsel %vm3893, %v3854, 0
  %v3958 = vsel %vm3893, %v3855, 0
  %v3961 = vsel %vm3893, %v3856, 0
  %v3964 = vsel %vm3893, %v3857, 0
  %v3967 = vsel %vm3893, %v3858, 0
  %v3970 = vsel %vm3893, %v3859, 0
  %v3973 = vsel %vm3893, %v3860, 0
  %v3976 = vsel %vm3893, %v3861, 0
  %v3979 = vsel %vm3893, %v3862, 0
  %v3982 = vsel %vm3893, %v3863, 0
  %v3985 = vsel %vm3893, %v3864, 0
  %v3988 = vsel %vm3893, %v3865, 0
  %vm3990 = vcmask 1043456
  %v3992 = vsel %vm3990, %v3888, 0
  %3994 = vmatprep.subr.bf16.mxu0 0
  %3995 = vmatpush1.bf16.msra.mxu0 0
  %3996 = vmatprep.subr.bf16.mxu0 0
  %3997 = vmatpush1.bf16.msra.mxu0 0
  %3998 = vmatprep.subr.bf16.mxu0 0
  %3999 = vmatpush1.bf16.msra.mxu0 0
  %4000 = vmatprep.subr.bf16.mxu0 0
  %4001 = vmatpush1.bf16.msra.mxu0 %v3992
  %4002 = vmatprep.subr.bf16.mxu0 0
  %4003 = vmatpush1.bf16.msra.mxu0 %v3887
  %4004 = vmatprep.subr.bf16.mxu0 0
  %4005 = vmatpush1.bf16.msra.mxu0 %v3886
  %4006 = vmatprep.subr.bf16.mxu0 0
  %4007 = vmatpush1.bf16.msra.mxu0 %v3885
  %4008 = vmatprep.subr.bf16.mxu0 0
  %4009 = vmatpush1.bf16.msra.mxu0 %v3884
  %4010 = vmatprep.subr.bf16.mxu0 0
  %4011 = vmatpush2.bf16.msra.mxu0 0
  %4012 = vmatprep.subr.bf16.mxu0 0
  %4013 = vmatpush2.bf16.msra.mxu0 0
  %4014 = vmatprep.subr.bf16.mxu0 0
  %4015 = vmatpush2.bf16.msra.mxu0 0
  %4016 = vmatprep.subr.bf16.mxu0 0
  %4017 = vmatpush2.bf16.msra.mxu0 0
  %4018 = vmatprep.subr.bf16.mxu0 0
  %4019 = vmatpush2.bf16.msra.mxu0 0
  %4020 = vmatprep.subr.bf16.mxu0 0
  %4021 = vmatpush2.bf16.msra.mxu0 0
  %4022 = vmatprep.subr.bf16.mxu0 0
  %4023 = vmatpush2.bf16.msra.mxu0 0
  %4024 = vmatprep.subr.bf16.mxu0 0
  %4025 = vmatpush2.bf16.msra.mxu0 0
  %4026 = vmatprep.mubr.bf16.mxu0 0
  %4027 = vmatmul.mubr.bf16.gmra.mxu0 %v3895
  %v4028 = vpop.f32.mrf.mxu0
  %v4029 = vadd.f32 0.0, %v4028
  %v4030 = vpop.f32.mrf.mxu0
  %v4031 = vpop.f32.mrf.mxu0
  %v4032 = vadd.f32 0.0, %v4031
  %v4033 = vpop.f32.mrf.mxu0
  %4034 = vmatprep.mubr.bf16.mxu0 0
  %4035 = vmatmul.mubr.bf16.gmra.mxu0 %v3898
  %v4036 = vpop.f32.mrf.mxu0
  %v4037 = vadd.f32 0.0, %v4036
  %v4038 = vpop.f32.mrf.mxu0
  %v4039 = vpop.f32.mrf.mxu0
  %v4040 = vadd.f32 0.0, %v4039
  %v4041 = vpop.f32.mrf.mxu0
  %4042 = vmatprep.mubr.bf16.mxu0 0
  %4043 = vmatmul.mubr.bf16.gmra.mxu0 %v3901
  %v4044 = vpop.f32.mrf.mxu0
  %v4045 = vadd.f32 0.0, %v4044
  %v4046 = vpop.f32.mrf.mxu0
  %v4047 = vpop.f32.mrf.mxu0
  %v4048 = vadd.f32 0.0, %v4047
  %v4049 = vpop.f32.mrf.mxu0
  %4050 = vmatprep.mubr.bf16.mxu0 0
  %4051 = vmatmul.mubr.bf16.gmra.mxu0 %v3904
  %v4052 = vpop.f32.mrf.mxu0
  %v4053 = vadd.f32 0.0, %v4052
  %v4054 = vpop.f32.mrf.mxu0
  %v4055 = vpop.f32.mrf.mxu0
  %v4056 = vadd.f32 0.0, %v4055
  %v4057 = vpop.f32.mrf.mxu0
  %4058 = vmatprep.mubr.bf16.mxu0 0
  %4059 = vmatmul.mubr.bf16.gmra.mxu0 %v3907
  %v4060 = vpop.f32.mrf.mxu0
  %v4061 = vadd.f32 0.0, %v4060
  %v4062 = vpop.f32.mrf.mxu0
  %v4063 = vpop.f32.mrf.mxu0
  %v4064 = vadd.f32 0.0, %v4063
  %v4065 = vpop.f32.mrf.mxu0
  %4066 = vmatprep.mubr.bf16.mxu0 0
  %4067 = vmatmul.mubr.bf16.gmra.mxu0 %v3910
  %v4068 = vpop.f32.mrf.mxu0
  %v4069 = vadd.f32 0.0, %v4068
  %v4070 = vpop.f32.mrf.mxu0
  %v4071 = vpop.f32.mrf.mxu0
  %v4072 = vadd.f32 0.0, %v4071
  %v4073 = vpop.f32.mrf.mxu0
  %4074 = vmatprep.mubr.bf16.mxu0 0
  %4075 = vmatmul.mubr.bf16.gmra.mxu0 %v3913
  %v4076 = vpop.f32.mrf.mxu0
  %v4077 = vadd.f32 0.0, %v4076
  %v4078 = vpop.f32.mrf.mxu0
  %v4079 = vpop.f32.mrf.mxu0
  %v4080 = vadd.f32 0.0, %v4079
  %v4081 = vpop.f32.mrf.mxu0
  %4082 = vmatprep.mubr.bf16.mxu0 0
  %4083 = vmatmul.mubr.bf16.gmra.mxu0 %v3916
  %v4084 = vpop.f32.mrf.mxu0
  %v4085 = vadd.f32 0.0, %v4084
  %v4086 = vpop.f32.mrf.mxu0
  %v4087 = vpop.f32.mrf.mxu0
  %v4088 = vadd.f32 0.0, %v4087
  %v4089 = vpop.f32.mrf.mxu0
  %4090 = vmatprep.mubr.bf16.mxu0 0
  %4091 = vmatmul.mubr.bf16.gmra.mxu0 %v3919
  %v4092 = vpop.f32.mrf.mxu0
  %v4093 = vadd.f32 0.0, %v4092
  %v4094 = vpop.f32.mrf.mxu0
  %v4095 = vpop.f32.mrf.mxu0
  %v4096 = vadd.f32 0.0, %v4095
  %v4097 = vpop.f32.mrf.mxu0
  %4098 = vmatprep.mubr.bf16.mxu0 0
  %4099 = vmatmul.mubr.bf16.gmra.mxu0 %v3922
  %v4100 = vpop.f32.mrf.mxu0
  %v4101 = vadd.f32 0.0, %v4100
  %v4102 = vpop.f32.mrf.mxu0
  %v4103 = vpop.f32.mrf.mxu0
  %v4104 = vadd.f32 0.0, %v4103
  %v4105 = vpop.f32.mrf.mxu0
  %4106 = vmatprep.mubr.bf16.mxu0 0
  %4107 = vmatmul.mubr.bf16.gmra.mxu0 %v3925
  %v4108 = vpop.f32.mrf.mxu0
  %v4109 = vadd.f32 0.0, %v4108
  %v4110 = vpop.f32.mrf.mxu0
  %v4111 = vpop.f32.mrf.mxu0
  %v4112 = vadd.f32 0.0, %v4111
  %v4113 = vpop.f32.mrf.mxu0
  %4114 = vmatprep.mubr.bf16.mxu0 0
  %4115 = vmatmul.mubr.bf16.gmra.mxu0 %v3928
  %v4116 = vpop.f32.mrf.mxu0
  %v4117 = vadd.f32 0.0, %v4116
  %v4118 = vpop.f32.mrf.mxu0
  %v4119 = vpop.f32.mrf.mxu0
  %v4120 = vadd.f32 0.0, %v4119
  %v4121 = vpop.f32.mrf.mxu0
  %4122 = vmatprep.mubr.bf16.mxu0 0
  %4123 = vmatmul.mubr.bf16.gmra.mxu0 %v3931
  %v4124 = vpop.f32.mrf.mxu0
  %v4125 = vadd.f32 0.0, %v4124
  %v4126 = vpop.f32.mrf.mxu0
  %v4127 = vpop.f32.mrf.mxu0
  %v4128 = vadd.f32 0.0, %v4127
  %v4129 = vpop.f32.mrf.mxu0
  %4130 = vmatprep.mubr.bf16.mxu0 0
  %4131 = vmatmul.mubr.bf16.gmra.mxu0 %v3934
  %v4132 = vpop.f32.mrf.mxu0
  %v4133 = vadd.f32 0.0, %v4132
  %v4134 = vpop.f32.mrf.mxu0
  %v4135 = vpop.f32.mrf.mxu0
  %v4136 = vadd.f32 0.0, %v4135
  %v4137 = vpop.f32.mrf.mxu0
  %4138 = vmatprep.mubr.bf16.mxu0 0
  %4139 = vmatmul.mubr.bf16.gmra.mxu0 %v3937
  %v4140 = vpop.f32.mrf.mxu0
  %v4141 = vadd.f32 0.0, %v4140
  %v4142 = vpop.f32.mrf.mxu0
  %v4143 = vpop.f32.mrf.mxu0
  %v4144 = vadd.f32 0.0, %v4143
  %v4145 = vpop.f32.mrf.mxu0
  %4146 = vmatprep.mubr.bf16.mxu0 0
  %4147 = vmatmul.mubr.bf16.gmra.mxu0 %v3940
  %v4148 = vpop.f32.mrf.mxu0
  %v4149 = vadd.f32 0.0, %v4148
  %v4150 = vpop.f32.mrf.mxu0
  %v4151 = vpop.f32.mrf.mxu0
  %v4152 = vadd.f32 0.0, %v4151
  %v4153 = vpop.f32.mrf.mxu0
  %4154 = vmatprep.mubr.bf16.mxu0 0
  %4155 = vmatmul.mubr.bf16.gmra.mxu0 %v3943
  %v4156 = vpop.f32.mrf.mxu0
  %v4157 = vadd.f32 0.0, %v4156
  %v4158 = vpop.f32.mrf.mxu0
  %v4159 = vpop.f32.mrf.mxu0
  %v4160 = vadd.f32 0.0, %v4159
  %v4161 = vpop.f32.mrf.mxu0
  %4162 = vmatprep.mubr.bf16.mxu0 0
  %4163 = vmatmul.mubr.bf16.gmra.mxu0 %v3946
  %v4164 = vpop.f32.mrf.mxu0
  %v4165 = vadd.f32 0.0, %v4164
  %v4166 = vpop.f32.mrf.mxu0
  %v4167 = vpop.f32.mrf.mxu0
  %v4168 = vadd.f32 0.0, %v4167
  %v4169 = vpop.f32.mrf.mxu0
  %4170 = vmatprep.mubr.bf16.mxu0 0
  %4171 = vmatmul.mubr.bf16.gmra.mxu0 %v3949
  %v4172 = vpop.f32.mrf.mxu0
  %v4173 = vadd.f32 0.0, %v4172
  %v4174 = vpop.f32.mrf.mxu0
  %v4175 = vpop.f32.mrf.mxu0
  %v4176 = vadd.f32 0.0, %v4175
  %v4177 = vpop.f32.mrf.mxu0
  %4178 = vmatprep.mubr.bf16.mxu0 0
  %4179 = vmatmul.mubr.bf16.gmra.mxu0 %v3952
  %v4180 = vpop.f32.mrf.mxu0
  %v4181 = vadd.f32 0.0, %v4180
  %v4182 = vpop.f32.mrf.mxu0
  %v4183 = vpop.f32.mrf.mxu0
  %v4184 = vadd.f32 0.0, %v4183
  %v4185 = vpop.f32.mrf.mxu0
  %4186 = vmatprep.mubr.bf16.mxu0 0
  %4187 = vmatmul.mubr.bf16.gmra.mxu0 %v3955
  %v4188 = vpop.f32.mrf.mxu0
  %v4189 = vadd.f32 0.0, %v4188
  %v4190 = vpop.f32.mrf.mxu0
  %v4191 = vpop.f32.mrf.mxu0
  %v4192 = vadd.f32 0.0, %v4191
  %v4193 = vpop.f32.mrf.mxu0
  %4194 = vmatprep.mubr.bf16.mxu0 0
  %4195 = vmatmul.mubr.bf16.gmra.mxu0 %v3958
  %v4196 = vpop.f32.mrf.mxu0
  %v4197 = vadd.f32 0.0, %v4196
  %v4198 = vpop.f32.mrf.mxu0
  %v4199 = vpop.f32.mrf.mxu0
  %v4200 = vadd.f32 0.0, %v4199
  %v4201 = vpop.f32.mrf.mxu0
  %4202 = vmatprep.mubr.bf16.mxu0 0
  %4203 = vmatmul.mubr.bf16.gmra.mxu0 %v3961
  %v4204 = vpop.f32.mrf.mxu0
  %v4205 = vadd.f32 0.0, %v4204
  %v4206 = vpop.f32.mrf.mxu0
  %v4207 = vpop.f32.mrf.mxu0
  %v4208 = vadd.f32 0.0, %v4207
  %v4209 = vpop.f32.mrf.mxu0
  %4210 = vmatprep.mubr.bf16.mxu0 0
  %4211 = vmatmul.mubr.bf16.gmra.mxu0 %v3964
  %v4212 = vpop.f32.mrf.mxu0
  %v4213 = vadd.f32 0.0, %v4212
  %v4214 = vpop.f32.mrf.mxu0
  %v4215 = vpop.f32.mrf.mxu0
  %v4216 = vadd.f32 0.0, %v4215
  %v4217 = vpop.f32.mrf.mxu0
  %4218 = vmatprep.mubr.bf16.mxu0 0
  %4219 = vmatmul.mubr.bf16.gmra.mxu0 %v3967
  %v4220 = vpop.f32.mrf.mxu0
  %v4221 = vadd.f32 0.0, %v4220
  %v4222 = vpop.f32.mrf.mxu0
  %v4223 = vpop.f32.mrf.mxu0
  %v4224 = vadd.f32 0.0, %v4223
  %v4225 = vpop.f32.mrf.mxu0
  %4226 = vmatprep.mubr.bf16.mxu0 0
  %4227 = vmatmul.mubr.bf16.gmra.mxu0 %v3970
  %v4228 = vpop.f32.mrf.mxu0
  %v4229 = vadd.f32 0.0, %v4228
  %v4230 = vpop.f32.mrf.mxu0
  %v4231 = vpop.f32.mrf.mxu0
  %v4232 = vadd.f32 0.0, %v4231
  %v4233 = vpop.f32.mrf.mxu0
  %4234 = vmatprep.mubr.bf16.mxu0 0
  %4235 = vmatmul.mubr.bf16.gmra.mxu0 %v3973
  %v4236 = vpop.f32.mrf.mxu0
  %v4237 = vadd.f32 0.0, %v4236
  %v4238 = vpop.f32.mrf.mxu0
  %v4239 = vpop.f32.mrf.mxu0
  %v4240 = vadd.f32 0.0, %v4239
  %v4241 = vpop.f32.mrf.mxu0
  %4242 = vmatprep.mubr.bf16.mxu0 0
  %4243 = vmatmul.mubr.bf16.gmra.mxu0 %v3976
  %v4244 = vpop.f32.mrf.mxu0
  %v4245 = vadd.f32 0.0, %v4244
  %v4246 = vpop.f32.mrf.mxu0
  %v4247 = vpop.f32.mrf.mxu0
  %v4248 = vadd.f32 0.0, %v4247
  %v4249 = vpop.f32.mrf.mxu0
  %4250 = vmatprep.mubr.bf16.mxu0 0
  %4251 = vmatmul.mubr.bf16.gmra.mxu0 %v3979
  %v4252 = vpop.f32.mrf.mxu0
  %v4253 = vadd.f32 0.0, %v4252
  %v4254 = vpop.f32.mrf.mxu0
  %v4255 = vpop.f32.mrf.mxu0
  %v4256 = vadd.f32 0.0, %v4255
  %v4257 = vpop.f32.mrf.mxu0
  %4258 = vmatprep.mubr.bf16.mxu0 0
  %4259 = vmatmul.mubr.bf16.gmra.mxu0 %v3982
  %v4260 = vpop.f32.mrf.mxu0
  %v4261 = vadd.f32 0.0, %v4260
  %v4262 = vpop.f32.mrf.mxu0
  %v4263 = vpop.f32.mrf.mxu0
  %v4264 = vadd.f32 0.0, %v4263
  %v4265 = vpop.f32.mrf.mxu0
  %4266 = vmatprep.mubr.bf16.mxu0 0
  %4267 = vmatmul.mubr.bf16.gmra.mxu0 %v3985
  %v4268 = vpop.f32.mrf.mxu0
  %v4269 = vadd.f32 0.0, %v4268
  %v4270 = vpop.f32.mrf.mxu0
  %v4271 = vpop.f32.mrf.mxu0
  %v4272 = vadd.f32 0.0, %v4271
  %v4273 = vpop.f32.mrf.mxu0
  %4274 = vmatprep.mubr.bf16.mxu0 0
  %4275 = vmatmul.mubr.bf16.gmra.mxu0 %v3988
  %v4276 = vpop.f32.mrf.mxu0
  %v4277 = vadd.f32 0.0, %v4276
  %v4278 = vpop.f32.mrf.mxu0
  %v4279 = vpop.f32.mrf.mxu0
  %v4280 = vadd.f32 0.0, %v4279
  %v4281 = vpop.f32.mrf.mxu0
  %4282 = vdwg.mxu0
  %vm4283 = vcmask 64512
  %v4284 = vsel %vm4283, %v4029, 0.0
  %v4285 = vsel %vm4283, %v4032, 0.0
  %v4286 = vadd.f32 %v4284, %v4285
  %v4287 = vsel %vm4283, %v4037, 0.0
  %v4288 = vadd.f32 %v4286, %v4287
  %v4289 = vsel %vm4283, %v4040, 0.0
  %v4290 = vadd.f32 %v4288, %v4289
  %v4291 = vsel %vm4283, %v4045, 0.0
  %v4292 = vadd.f32 %v4290, %v4291
  %v4293 = vsel %vm4283, %v4048, 0.0
  %v4294 = vadd.f32 %v4292, %v4293
  %v4295 = vsel %vm4283, %v4053, 0.0
  %v4296 = vadd.f32 %v4294, %v4295
  %v4297 = vsel %vm4283, %v4056, 0.0
  %v4298 = vadd.f32 %v4296, %v4297
  %v4299 = vsel %vm4283, %v4061, 0.0
  %v4300 = vadd.f32 %v4298, %v4299
  %v4301 = vsel %vm4283, %v4064, 0.0
  %v4302 = vadd.f32 %v4300, %v4301
  %v4303 = vsel %vm4283, %v4069, 0.0
  %v4304 = vadd.f32 %v4302, %v4303
  %v4305 = vsel %vm4283, %v4072, 0.0
  %v4306 = vadd.f32 %v4304, %v4305
  %v4307 = vsel %vm4283, %v4077, 0.0
  %v4308 = vadd.f32 %v4306, %v4307
  %v4309 = vsel %vm4283, %v4080, 0.0
  %v4310 = vadd.f32 %v4308, %v4309
  %v4311 = vsel %vm4283, %v4085, 0.0
  %v4312 = vadd.f32 %v4310, %v4311
  %v4313 = vsel %vm4283, %v4088, 0.0
  %v4314 = vadd.f32 %v4312, %v4313
  %v4315 = vsel %vm4283, %v4093, 0.0
  %v4316 = vadd.f32 %v4314, %v4315
  %v4317 = vsel %vm4283, %v4096, 0.0
  %v4318 = vadd.f32 %v4316, %v4317
  %v4319 = vsel %vm4283, %v4101, 0.0
  %v4320 = vadd.f32 %v4318, %v4319
  %v4321 = vsel %vm4283, %v4104, 0.0
  %v4322 = vadd.f32 %v4320, %v4321
  %v4323 = vsel %vm4283, %v4109, 0.0
  %v4324 = vadd.f32 %v4322, %v4323
  %v4325 = vsel %vm4283, %v4112, 0.0
  %v4326 = vadd.f32 %v4324, %v4325
  %v4327 = vsel %vm4283, %v4117, 0.0
  %v4328 = vadd.f32 %v4326, %v4327
  %v4329 = vsel %vm4283, %v4120, 0.0
  %v4330 = vadd.f32 %v4328, %v4329
  %v4331 = vsel %vm4283, %v4125, 0.0
  %v4332 = vadd.f32 %v4330, %v4331
  %v4333 = vsel %vm4283, %v4128, 0.0
  %v4334 = vadd.f32 %v4332, %v4333
  %v4335 = vsel %vm4283, %v4133, 0.0
  %v4336 = vadd.f32 %v4334, %v4335
  %v4337 = vsel %vm4283, %v4136, 0.0
  %v4338 = vadd.f32 %v4336, %v4337
  %v4339 = vsel %vm4283, %v4141, 0.0
  %v4340 = vadd.f32 %v4338, %v4339
  %v4341 = vsel %vm4283, %v4144, 0.0
  %v4342 = vadd.f32 %v4340, %v4341
  %v4343 = vsel %vm4283, %v4149, 0.0
  %v4344 = vadd.f32 %v4342, %v4343
  %v4345 = vsel %vm4283, %v4152, 0.0
  %v4346 = vadd.f32 %v4344, %v4345
  %v4347 = vsel %vm4283, %v4157, 0.0
  %v4348 = vadd.f32 %v4346, %v4347
  %v4349 = vsel %vm4283, %v4160, 0.0
  %v4350 = vadd.f32 %v4348, %v4349
  %v4351 = vsel %vm4283, %v4165, 0.0
  %v4352 = vadd.f32 %v4350, %v4351
  %v4353 = vsel %vm4283, %v4168, 0.0
  %v4354 = vadd.f32 %v4352, %v4353
  %v4355 = vsel %vm4283, %v4173, 0.0
  %v4356 = vadd.f32 %v4354, %v4355
  %v4357 = vsel %vm4283, %v4176, 0.0
  %v4358 = vadd.f32 %v4356, %v4357
  %v4359 = vsel %vm4283, %v4181, 0.0
  %v4360 = vadd.f32 %v4358, %v4359
  %v4361 = vsel %vm4283, %v4184, 0.0
  %v4362 = vadd.f32 %v4360, %v4361
  %v4363 = vsel %vm4283, %v4189, 0.0
  %v4364 = vadd.f32 %v4362, %v4363
  %v4365 = vsel %vm4283, %v4192, 0.0
  %v4366 = vadd.f32 %v4364, %v4365
  %v4367 = vsel %vm4283, %v4197, 0.0
  %v4368 = vadd.f32 %v4366, %v4367
  %v4369 = vsel %vm4283, %v4200, 0.0
  %v4370 = vadd.f32 %v4368, %v4369
  %v4371 = vsel %vm4283, %v4205, 0.0
  %v4372 = vadd.f32 %v4370, %v4371
  %v4373 = vsel %vm4283, %v4208, 0.0
  %v4374 = vadd.f32 %v4372, %v4373
  %v4375 = vsel %vm4283, %v4213, 0.0
  %v4376 = vadd.f32 %v4374, %v4375
  %v4377 = vsel %vm4283, %v4216, 0.0
  %v4378 = vadd.f32 %v4376, %v4377
  %v4379 = vsel %vm4283, %v4221, 0.0
  %v4380 = vadd.f32 %v4378, %v4379
  %v4381 = vsel %vm4283, %v4224, 0.0
  %v4382 = vadd.f32 %v4380, %v4381
  %v4383 = vsel %vm4283, %v4229, 0.0
  %v4384 = vadd.f32 %v4382, %v4383
  %v4385 = vsel %vm4283, %v4232, 0.0
  %v4386 = vadd.f32 %v4384, %v4385
  %v4387 = vsel %vm4283, %v4237, 0.0
  %v4388 = vadd.f32 %v4386, %v4387
  %v4389 = vsel %vm4283, %v4240, 0.0
  %v4390 = vadd.f32 %v4388, %v4389
  %v4391 = vsel %vm4283, %v4245, 0.0
  %v4392 = vadd.f32 %v4390, %v4391
  %v4393 = vsel %vm4283, %v4248, 0.0
  %v4394 = vadd.f32 %v4392, %v4393
  %v4395 = vsel %vm4283, %v4253, 0.0
  %v4396 = vadd.f32 %v4394, %v4395
  %v4397 = vsel %vm4283, %v4256, 0.0
  %v4398 = vadd.f32 %v4396, %v4397
  %v4399 = vsel %vm4283, %v4261, 0.0
  %v4400 = vadd.f32 %v4398, %v4399
  %v4401 = vsel %vm4283, %v4264, 0.0
  %v4402 = vadd.f32 %v4400, %v4401
  %v4403 = vsel %vm4283, %v4269, 0.0
  %v4404 = vadd.f32 %v4402, %v4403
  %v4405 = vsel %vm4283, %v4272, 0.0
  %v4406 = vadd.f32 %v4404, %v4405
  %v4407 = vsel %vm4283, %v4277, 0.0
  %v4408 = vadd.f32 %v4406, %v4407
  %v4409 = vsel %vm4283, %v4280, 0.0
  %v4410 = vadd.f32 %v4408, %v4409
  %v4411 = vrot.slane %v4410, 4
  %v4412 = vadd.f32 %v4410, %v4411
  %v4413 = vrot.slane %v4412, 2
  %v4414 = vadd.f32 %v4412, %v4413
  %v4415 = vrot.slane %v4414, 1
  %v4416 = vadd.f32 %v4414, %v4415
  %v4417 = vmul.f32 %v4029, %v4029
  %v4418 = vmul.f32 %v4032, %v4032
  %v4419 = vmul.f32 %v4037, %v4037
  %v4420 = vmul.f32 %v4040, %v4040
  %v4421 = vmul.f32 %v4045, %v4045
  %v4422 = vmul.f32 %v4048, %v4048
  %v4423 = vmul.f32 %v4053, %v4053
  %v4424 = vmul.f32 %v4056, %v4056
  %v4425 = vmul.f32 %v4061, %v4061
  %v4426 = vmul.f32 %v4064, %v4064
  %v4427 = vmul.f32 %v4069, %v4069
  %v4428 = vmul.f32 %v4072, %v4072
  %v4429 = vmul.f32 %v4077, %v4077
  %v4430 = vmul.f32 %v4080, %v4080
  %v4431 = vmul.f32 %v4085, %v4085
  %v4432 = vmul.f32 %v4088, %v4088
  %v4433 = vmul.f32 %v4093, %v4093
  %v4434 = vmul.f32 %v4096, %v4096
  %v4435 = vmul.f32 %v4101, %v4101
  %v4436 = vmul.f32 %v4104, %v4104
  %v4437 = vmul.f32 %v4109, %v4109
  %v4438 = vmul.f32 %v4112, %v4112
  %v4439 = vmul.f32 %v4117, %v4117
  %v4440 = vmul.f32 %v4120, %v4120
  %v4441 = vmul.f32 %v4125, %v4125
  %v4442 = vmul.f32 %v4128, %v4128
  %v4443 = vmul.f32 %v4133, %v4133
  %v4444 = vmul.f32 %v4136, %v4136
  %v4445 = vmul.f32 %v4141, %v4141
  %v4446 = vmul.f32 %v4144, %v4144
  %v4447 = vmul.f32 %v4149, %v4149
  %v4448 = vmul.f32 %v4152, %v4152
  %v4449 = vmul.f32 %v4157, %v4157
  %v4450 = vmul.f32 %v4160, %v4160
  %v4451 = vmul.f32 %v4165, %v4165
  %v4452 = vmul.f32 %v4168, %v4168
  %v4453 = vmul.f32 %v4173, %v4173
  %v4454 = vmul.f32 %v4176, %v4176
  %v4455 = vmul.f32 %v4181, %v4181
  %v4456 = vmul.f32 %v4184, %v4184
  %v4457 = vmul.f32 %v4189, %v4189
  %v4458 = vmul.f32 %v4192, %v4192
  %v4459 = vmul.f32 %v4197, %v4197
  %v4460 = vmul.f32 %v4200, %v4200
  %v4461 = vmul.f32 %v4205, %v4205
  %v4462 = vmul.f32 %v4208, %v4208
  %v4463 = vmul.f32 %v4213, %v4213
  %v4464 = vmul.f32 %v4216, %v4216
  %v4465 = vmul.f32 %v4221, %v4221
  %v4466 = vmul.f32 %v4224, %v4224
  %v4467 = vmul.f32 %v4229, %v4229
  %v4468 = vmul.f32 %v4232, %v4232
  %v4469 = vmul.f32 %v4237, %v4237
  %v4470 = vmul.f32 %v4240, %v4240
  %v4471 = vmul.f32 %v4245, %v4245
  %v4472 = vmul.f32 %v4248, %v4248
  %v4473 = vmul.f32 %v4253, %v4253
  %v4474 = vmul.f32 %v4256, %v4256
  %v4475 = vmul.f32 %v4261, %v4261
  %v4476 = vmul.f32 %v4264, %v4264
  %v4477 = vmul.f32 %v4269, %v4269
  %v4478 = vmul.f32 %v4272, %v4272
  %v4479 = vmul.f32 %v4277, %v4277
  %v4480 = vmul.f32 %v4280, %v4280
  %v4481 = vsel %vm4283, %v4417, 0.0
  %v4482 = vsel %vm4283, %v4418, 0.0
  %v4483 = vadd.f32 %v4481, %v4482
  %v4484 = vsel %vm4283, %v4419, 0.0
  %v4485 = vadd.f32 %v4483, %v4484
  %v4486 = vsel %vm4283, %v4420, 0.0
  %v4487 = vadd.f32 %v4485, %v4486
  %v4488 = vsel %vm4283, %v4421, 0.0
  %v4489 = vadd.f32 %v4487, %v4488
  %v4490 = vsel %vm4283, %v4422, 0.0
  %v4491 = vadd.f32 %v4489, %v4490
  %v4492 = vsel %vm4283, %v4423, 0.0
  %v4493 = vadd.f32 %v4491, %v4492
  %v4494 = vsel %vm4283, %v4424, 0.0
  %v4495 = vadd.f32 %v4493, %v4494
  %v4496 = vsel %vm4283, %v4425, 0.0
  %v4497 = vadd.f32 %v4495, %v4496
  %v4498 = vsel %vm4283, %v4426, 0.0
  %v4499 = vadd.f32 %v4497, %v4498
  %v4500 = vsel %vm4283, %v4427, 0.0
  %v4501 = vadd.f32 %v4499, %v4500
  %v4502 = vsel %vm4283, %v4428, 0.0
  %v4503 = vadd.f32 %v4501, %v4502
  %v4504 = vsel %vm4283, %v4429, 0.0
  %v4505 = vadd.f32 %v4503, %v4504
  %v4506 = vsel %vm4283, %v4430, 0.0
  %v4507 = vadd.f32 %v4505, %v4506
  %v4508 = vsel %vm4283, %v4431, 0.0
  %v4509 = vadd.f32 %v4507, %v4508
  %v4510 = vsel %vm4283, %v4432, 0.0
  %v4511 = vadd.f32 %v4509, %v4510
  %v4512 = vsel %vm4283, %v4433, 0.0
  %v4513 = vadd.f32 %v4511, %v4512
  %v4514 = vsel %vm4283, %v4434, 0.0
  %v4515 = vadd.f32 %v4513, %v4514
  %v4516 = vsel %vm4283, %v4435, 0.0
  %v4517 = vadd.f32 %v4515, %v4516
  %v4518 = vsel %vm4283, %v4436, 0.0
  %v4519 = vadd.f32 %v4517, %v4518
  %v4520 = vsel %vm4283, %v4437, 0.0
  %v4521 = vadd.f32 %v4519, %v4520
  %v4522 = vsel %vm4283, %v4438, 0.0
  %v4523 = vadd.f32 %v4521, %v4522
  %v4524 = vsel %vm4283, %v4439, 0.0
  %v4525 = vadd.f32 %v4523, %v4524
  %v4526 = vsel %vm4283, %v4440, 0.0
  %v4527 = vadd.f32 %v4525, %v4526
  %v4528 = vsel %vm4283, %v4441, 0.0
  %v4529 = vadd.f32 %v4527, %v4528
  %v4530 = vsel %vm4283, %v4442, 0.0
  %v4531 = vadd.f32 %v4529, %v4530
  %v4532 = vsel %vm4283, %v4443, 0.0
  %v4533 = vadd.f32 %v4531, %v4532
  %v4534 = vsel %vm4283, %v4444, 0.0
  %v4535 = vadd.f32 %v4533, %v4534
  %v4536 = vsel %vm4283, %v4445, 0.0
  %v4537 = vadd.f32 %v4535, %v4536
  %v4538 = vsel %vm4283, %v4446, 0.0
  %v4539 = vadd.f32 %v4537, %v4538
  %v4540 = vsel %vm4283, %v4447, 0.0
  %v4541 = vadd.f32 %v4539, %v4540
  %v4542 = vsel %vm4283, %v4448, 0.0
  %v4543 = vadd.f32 %v4541, %v4542
  %v4544 = vsel %vm4283, %v4449, 0.0
  %v4545 = vadd.f32 %v4543, %v4544
  %v4546 = vsel %vm4283, %v4450, 0.0
  %v4547 = vadd.f32 %v4545, %v4546
  %v4548 = vsel %vm4283, %v4451, 0.0
  %v4549 = vadd.f32 %v4547, %v4548
  %v4550 = vsel %vm4283, %v4452, 0.0
  %v4551 = vadd.f32 %v4549, %v4550
  %v4552 = vsel %vm4283, %v4453, 0.0
  %v4553 = vadd.f32 %v4551, %v4552
  %v4554 = vsel %vm4283, %v4454, 0.0
  %v4555 = vadd.f32 %v4553, %v4554
  %v4556 = vsel %vm4283, %v4455, 0.0
  %v4557 = vadd.f32 %v4555, %v4556
  %v4558 = vsel %vm4283, %v4456, 0.0
  %v4559 = vadd.f32 %v4557, %v4558
  %v4560 = vsel %vm4283, %v4457, 0.0
  %v4561 = vadd.f32 %v4559, %v4560
  %v4562 = vsel %vm4283, %v4458, 0.0
  %v4563 = vadd.f32 %v4561, %v4562
  %v4564 = vsel %vm4283, %v4459, 0.0
  %v4565 = vadd.f32 %v4563, %v4564
  %v4566 = vsel %vm4283, %v4460, 0.0
  %v4567 = vadd.f32 %v4565, %v4566
  %v4568 = vsel %vm4283, %v4461, 0.0
  %v4569 = vadd.f32 %v4567, %v4568
  %v4570 = vsel %vm4283, %v4462, 0.0
  %v4571 = vadd.f32 %v4569, %v4570
  %v4572 = vsel %vm4283, %v4463, 0.0
  %v4573 = vadd.f32 %v4571, %v4572
  %v4574 = vsel %vm4283, %v4464, 0.0
  %v4575 = vadd.f32 %v4573, %v4574
  %v4576 = vsel %vm4283, %v4465, 0.0
  %v4577 = vadd.f32 %v4575, %v4576
  %v4578 = vsel %vm4283, %v4466, 0.0
  %v4579 = vadd.f32 %v4577, %v4578
  %v4580 = vsel %vm4283, %v4467, 0.0
  %v4581 = vadd.f32 %v4579, %v4580
  %v4582 = vsel %vm4283, %v4468, 0.0
  %v4583 = vadd.f32 %v4581, %v4582
  %v4584 = vsel %vm4283, %v4469, 0.0
  %v4585 = vadd.f32 %v4583, %v4584
  %v4586 = vsel %vm4283, %v4470, 0.0
  %v4587 = vadd.f32 %v4585, %v4586
  %v4588 = vsel %vm4283, %v4471, 0.0
  %v4589 = vadd.f32 %v4587, %v4588
  %v4590 = vsel %vm4283, %v4472, 0.0
  %v4591 = vadd.f32 %v4589, %v4590
  %v4592 = vsel %vm4283, %v4473, 0.0
  %v4593 = vadd.f32 %v4591, %v4592
  %v4594 = vsel %vm4283, %v4474, 0.0
  %v4595 = vadd.f32 %v4593, %v4594
  %v4596 = vsel %vm4283, %v4475, 0.0
  %v4597 = vadd.f32 %v4595, %v4596
  %v4598 = vsel %vm4283, %v4476, 0.0
  %v4599 = vadd.f32 %v4597, %v4598
  %v4600 = vsel %vm4283, %v4477, 0.0
  %v4601 = vadd.f32 %v4599, %v4600
  %v4602 = vsel %vm4283, %v4478, 0.0
  %v4603 = vadd.f32 %v4601, %v4602
  %v4604 = vsel %vm4283, %v4479, 0.0
  %v4605 = vadd.f32 %v4603, %v4604
  %v4606 = vsel %vm4283, %v4480, 0.0
  %v4607 = vadd.f32 %v4605, %v4606
  %v4608 = vrot.slane %v4607, 4
  %v4609 = vadd.f32 %v4607, %v4608
  %v4610 = vrot.slane %v4609, 2
  %v4611 = vadd.f32 %v4609, %v4610
  %v4612 = vrot.slane %v4611, 1
  %v4613 = vadd.f32 %v4611, %v4612
  %v4614 = vmul.f32 %v4416, 0.001953125
  %v4615 = vmul.f32 %v4613, 0.001953125
  %v4616 = vmul.f32 %v4614, %v4614
  %v4617 = vsub.f32 %v4615, %v4616
  %v4618 = vmax.f32 %v4617, 0.0
  %v4619 = vadd.f32 %v4618, 1e-05
  %v4620 = vrsqrt.pop %v4619
  %v4621 = vld [vmem:[%s3] sm:$0x1]
  %v4622 = vmul.f32 %v4620, %v4621
  %v4623 = vld [vmem:[%s4] sm:$0x1]
  %v4624 = vmul.f32 %v4614, %v4622
  %v4625 = vsub.f32 %v4623, %v4624
  %v4626 = vlaneseq
  %v4627 = vshrl.u32 %v4626, 7
  %v4628 = vsub.s32 0, %v4627
  %v4629 = vrot.slane %v4622, %v4628
  %v4630 = vmul.f32 %v4029, %v4629
  %v4631 = vmul.f32 %v4032, %v4629
  %v4632 = vmul.f32 %v4037, %v4629
  %v4633 = vmul.f32 %v4040, %v4629
  %v4634 = vmul.f32 %v4045, %v4629
  %v4635 = vmul.f32 %v4048, %v4629
  %v4636 = vmul.f32 %v4053, %v4629
  %v4637 = vmul.f32 %v4056, %v4629
  %v4638 = vmul.f32 %v4061, %v4629
  %v4639 = vmul.f32 %v4064, %v4629
  %v4640 = vmul.f32 %v4069, %v4629
  %v4641 = vmul.f32 %v4072, %v4629
  %v4642 = vmul.f32 %v4077, %v4629
  %v4643 = vmul.f32 %v4080, %v4629
  %v4644 = vmul.f32 %v4085, %v4629
  %v4645 = vmul.f32 %v4088, %v4629
  %v4646 = vmul.f32 %v4093, %v4629
  %v4647 = vmul.f32 %v4096, %v4629
  %v4648 = vmul.f32 %v4101, %v4629
  %v4649 = vmul.f32 %v4104, %v4629
  %v4650 = vmul.f32 %v4109, %v4629
  %v4651 = vmul.f32 %v4112, %v4629
  %v4652 = vmul.f32 %v4117, %v4629
  %v4653 = vmul.f32 %v4120, %v4629
  %v4654 = vmul.f32 %v4125, %v4629
  %v4655 = vmul.f32 %v4128, %v4629
  %v4656 = vmul.f32 %v4133, %v4629
  %v4657 = vmul.f32 %v4136, %v4629
  %v4658 = vmul.f32 %v4141, %v4629
  %v4659 = vmul.f32 %v4144, %v4629
  %v4660 = vmul.f32 %v4149, %v4629
  %v4661 = vmul.f32 %v4152, %v4629
  %v4662 = vmul.f32 %v4157, %v4629
  %v4663 = vmul.f32 %v4160, %v4629
  %v4664 = vmul.f32 %v4165, %v4629
  %v4665 = vmul.f32 %v4168, %v4629
  %v4666 = vmul.f32 %v4173, %v4629
  %v4667 = vmul.f32 %v4176, %v4629
  %v4668 = vmul.f32 %v4181, %v4629
  %v4669 = vmul.f32 %v4184, %v4629
  %v4670 = vmul.f32 %v4189, %v4629
  %v4671 = vmul.f32 %v4192, %v4629
  %v4672 = vmul.f32 %v4197, %v4629
  %v4673 = vmul.f32 %v4200, %v4629
  %v4674 = vmul.f32 %v4205, %v4629
  %v4675 = vmul.f32 %v4208, %v4629
  %v4676 = vmul.f32 %v4213, %v4629
  %v4677 = vmul.f32 %v4216, %v4629
  %v4678 = vmul.f32 %v4221, %v4629
  %v4679 = vmul.f32 %v4224, %v4629
  %v4680 = vmul.f32 %v4229, %v4629
  %v4681 = vmul.f32 %v4232, %v4629
  %v4682 = vmul.f32 %v4237, %v4629
  %v4683 = vmul.f32 %v4240, %v4629
  %v4684 = vmul.f32 %v4245, %v4629
  %v4685 = vmul.f32 %v4248, %v4629
  %v4686 = vmul.f32 %v4253, %v4629
  %v4687 = vmul.f32 %v4256, %v4629
  %v4688 = vmul.f32 %v4261, %v4629
  %v4689 = vmul.f32 %v4264, %v4629
  %v4690 = vmul.f32 %v4269, %v4629
  %v4691 = vmul.f32 %v4272, %v4629
  %v4692 = vmul.f32 %v4277, %v4629
  %v4693 = vmul.f32 %v4280, %v4629
  %v4695 = vlaneseq
  %v4696 = vshrl.u32 %v4695, 7
  %v4697 = vsub.s32 0, %v4696
  %v4698 = vrot.slane %v4625, %v4697
  %v4700 = vadd.f32 %v4630, %v4698
  %v4701 = vadd.f32 %v4631, %v4698
  %v4702 = vadd.f32 %v4632, %v4698
  %v4703 = vadd.f32 %v4633, %v4698
  %v4704 = vadd.f32 %v4634, %v4698
  %v4705 = vadd.f32 %v4635, %v4698
  %v4706 = vadd.f32 %v4636, %v4698
  %v4707 = vadd.f32 %v4637, %v4698
  %v4708 = vadd.f32 %v4638, %v4698
  %v4709 = vadd.f32 %v4639, %v4698
  %v4710 = vadd.f32 %v4640, %v4698
  %v4711 = vadd.f32 %v4641, %v4698
  %v4712 = vadd.f32 %v4642, %v4698
  %v4713 = vadd.f32 %v4643, %v4698
  %v4714 = vadd.f32 %v4644, %v4698
  %v4715 = vadd.f32 %v4645, %v4698
  %v4716 = vadd.f32 %v4646, %v4698
  %v4717 = vadd.f32 %v4647, %v4698
  %v4718 = vadd.f32 %v4648, %v4698
  %v4719 = vadd.f32 %v4649, %v4698
  %v4720 = vadd.f32 %v4650, %v4698
  %v4721 = vadd.f32 %v4651, %v4698
  %v4722 = vadd.f32 %v4652, %v4698
  %v4723 = vadd.f32 %v4653, %v4698
  %v4724 = vadd.f32 %v4654, %v4698
  %v4725 = vadd.f32 %v4655, %v4698
  %v4726 = vadd.f32 %v4656, %v4698
  %v4727 = vadd.f32 %v4657, %v4698
  %v4728 = vadd.f32 %v4658, %v4698
  %v4729 = vadd.f32 %v4659, %v4698
  %v4730 = vadd.f32 %v4660, %v4698
  %v4731 = vadd.f32 %v4661, %v4698
  %v4732 = vadd.f32 %v4662, %v4698
  %v4733 = vadd.f32 %v4663, %v4698
  %v4734 = vadd.f32 %v4664, %v4698
  %v4735 = vadd.f32 %v4665, %v4698
  %v4736 = vadd.f32 %v4666, %v4698
  %v4737 = vadd.f32 %v4667, %v4698
  %v4738 = vadd.f32 %v4668, %v4698
  %v4739 = vadd.f32 %v4669, %v4698
  %v4740 = vadd.f32 %v4670, %v4698
  %v4741 = vadd.f32 %v4671, %v4698
  %v4742 = vadd.f32 %v4672, %v4698
  %v4743 = vadd.f32 %v4673, %v4698
  %v4744 = vadd.f32 %v4674, %v4698
  %v4745 = vadd.f32 %v4675, %v4698
  %v4746 = vadd.f32 %v4676, %v4698
  %v4747 = vadd.f32 %v4677, %v4698
  %v4748 = vadd.f32 %v4678, %v4698
  %v4749 = vadd.f32 %v4679, %v4698
  %v4750 = vadd.f32 %v4680, %v4698
  %v4751 = vadd.f32 %v4681, %v4698
  %v4752 = vadd.f32 %v4682, %v4698
  %v4753 = vadd.f32 %v4683, %v4698
  %v4754 = vadd.f32 %v4684, %v4698
  %v4755 = vadd.f32 %v4685, %v4698
  %v4756 = vadd.f32 %v4686, %v4698
  %v4757 = vadd.f32 %v4687, %v4698
  %v4758 = vadd.f32 %v4688, %v4698
  %v4759 = vadd.f32 %v4689, %v4698
  %v4760 = vadd.f32 %v4690, %v4698
  %v4761 = vadd.f32 %v4691, %v4698
  %v4762 = vadd.f32 %v4692, %v4698
  %v4763 = vadd.f32 %v4693, %v4698
  %v4764 = vmax.f32 %v4700, 0.0
  %v4765 = vmax.f32 %v4701, 0.0
  %v4766 = vmax.f32 %v4702, 0.0
  %v4767 = vmax.f32 %v4703, 0.0
  %v4768 = vmax.f32 %v4704, 0.0
  %v4769 = vmax.f32 %v4705, 0.0
  %v4770 = vmax.f32 %v4706, 0.0
  %v4771 = vmax.f32 %v4707, 0.0
  %v4772 = vmax.f32 %v4708, 0.0
  %v4773 = vmax.f32 %v4709, 0.0
  %v4774 = vmax.f32 %v4710, 0.0
  %v4775 = vmax.f32 %v4711, 0.0
  %v4776 = vmax.f32 %v4712, 0.0
  %v4777 = vmax.f32 %v4713, 0.0
  %v4778 = vmax.f32 %v4714, 0.0
  %v4779 = vmax.f32 %v4715, 0.0
  %v4780 = vmax.f32 %v4716, 0.0
  %v4781 = vmax.f32 %v4717, 0.0
  %v4782 = vmax.f32 %v4718, 0.0
  %v4783 = vmax.f32 %v4719, 0.0
  %v4784 = vmax.f32 %v4720, 0.0
  %v4785 = vmax.f32 %v4721, 0.0
  %v4786 = vmax.f32 %v4722, 0.0
  %v4787 = vmax.f32 %v4723, 0.0
  %v4788 = vmax.f32 %v4724, 0.0
  %v4789 = vmax.f32 %v4725, 0.0
  %v4790 = vmax.f32 %v4726, 0.0
  %v4791 = vmax.f32 %v4727, 0.0
  %v4792 = vmax.f32 %v4728, 0.0
  %v4793 = vmax.f32 %v4729, 0.0
  %v4794 = vmax.f32 %v4730, 0.0
  %v4795 = vmax.f32 %v4731, 0.0
  %v4796 = vmax.f32 %v4732, 0.0
  %v4797 = vmax.f32 %v4733, 0.0
  %v4798 = vmax.f32 %v4734, 0.0
  %v4799 = vmax.f32 %v4735, 0.0
  %v4800 = vmax.f32 %v4736, 0.0
  %v4801 = vmax.f32 %v4737, 0.0
  %v4802 = vmax.f32 %v4738, 0.0
  %v4803 = vmax.f32 %v4739, 0.0
  %v4804 = vmax.f32 %v4740, 0.0
  %v4805 = vmax.f32 %v4741, 0.0
  %v4806 = vmax.f32 %v4742, 0.0
  %v4807 = vmax.f32 %v4743, 0.0
  %v4808 = vmax.f32 %v4744, 0.0
  %v4809 = vmax.f32 %v4745, 0.0
  %v4810 = vmax.f32 %v4746, 0.0
  %v4811 = vmax.f32 %v4747, 0.0
  %v4812 = vmax.f32 %v4748, 0.0
  %v4813 = vmax.f32 %v4749, 0.0
  %v4814 = vmax.f32 %v4750, 0.0
  %v4815 = vmax.f32 %v4751, 0.0
  %v4816 = vmax.f32 %v4752, 0.0
  %v4817 = vmax.f32 %v4753, 0.0
  %v4818 = vmax.f32 %v4754, 0.0
  %v4819 = vmax.f32 %v4755, 0.0
  %v4820 = vmax.f32 %v4756, 0.0
  %v4821 = vmax.f32 %v4757, 0.0
  %v4822 = vmax.f32 %v4758, 0.0
  %v4823 = vmax.f32 %v4759, 0.0
  %v4824 = vmax.f32 %v4760, 0.0
  %v4825 = vmax.f32 %v4761, 0.0
  %v4826 = vmax.f32 %v4762, 0.0
  %v4827 = vmax.f32 %v4763, 0.0
  %v4828 = vpack.c.bf16 %v4765, %v4764
  %v4829 = vpack.c.bf16 %v4767, %v4766
  %v4830 = vpack.c.bf16 %v4769, %v4768
  %v4831 = vpack.c.bf16 %v4771, %v4770
  %v4832 = vpack.c.bf16 %v4773, %v4772
  %v4833 = vpack.c.bf16 %v4775, %v4774
  %v4834 = vpack.c.bf16 %v4777, %v4776
  %v4835 = vpack.c.bf16 %v4779, %v4778
  %v4836 = vpack.c.bf16 %v4781, %v4780
  %v4837 = vpack.c.bf16 %v4783, %v4782
  %v4838 = vpack.c.bf16 %v4785, %v4784
  %v4839 = vpack.c.bf16 %v4787, %v4786
  %v4840 = vpack.c.bf16 %v4789, %v4788
  %v4841 = vpack.c.bf16 %v4791, %v4790
  %v4842 = vpack.c.bf16 %v4793, %v4792
  %v4843 = vpack.c.bf16 %v4795, %v4794
  %v4844 = vpack.c.bf16 %v4797, %v4796
  %v4845 = vpack.c.bf16 %v4799, %v4798
  %v4846 = vpack.c.bf16 %v4801, %v4800
  %v4847 = vpack.c.bf16 %v4803, %v4802
  %v4848 = vpack.c.bf16 %v4805, %v4804
  %v4849 = vpack.c.bf16 %v4807, %v4806
  %v4850 = vpack.c.bf16 %v4809, %v4808
  %v4851 = vpack.c.bf16 %v4811, %v4810
  %v4852 = vpack.c.bf16 %v4813, %v4812
  %v4853 = vpack.c.bf16 %v4815, %v4814
  %v4854 = vpack.c.bf16 %v4817, %v4816
  %v4855 = vpack.c.bf16 %v4819, %v4818
  %v4856 = vpack.c.bf16 %v4821, %v4820
  %v4857 = vpack.c.bf16 %v4823, %v4822
  %v4858 = vpack.c.bf16 %v4825, %v4824
  %v4859 = vpack.c.bf16 %v4827, %v4826
  %v4890 = vunpack.c.l.b16 %v4828
  %v4891 = vunpack.c.h.b16 %v4828
  %v4892 = vunpack.c.l.b16 %v4829
  %v4893 = vunpack.c.h.b16 %v4829
  %v4894 = vunpack.c.l.b16 %v4830
  %v4895 = vunpack.c.h.b16 %v4830
  %v4896 = vunpack.c.l.b16 %v4831
  %v4897 = vunpack.c.h.b16 %v4831
  %v4898 = vunpack.c.l.b16 %v4832
  %v4899 = vunpack.c.h.b16 %v4832
  %v4900 = vunpack.c.l.b16 %v4833
  %v4901 = vunpack.c.h.b16 %v4833
  %v4902 = vunpack.c.l.b16 %v4834
  %v4903 = vunpack.c.h.b16 %v4834
  %v4904 = vunpack.c.l.b16 %v4835
  %v4905 = vunpack.c.h.b16 %v4835
  %v4906 = vunpack.c.l.b16 %v4836
  %v4907 = vunpack.c.h.b16 %v4836
  %v4908 = vunpack.c.l.b16 %v4837
  %v4909 = vunpack.c.h.b16 %v4837
  %v4910 = vunpack.c.l.b16 %v4838
  %v4911 = vunpack.c.h.b16 %v4838
  %v4912 = vunpack.c.l.b16 %v4839
  %v4913 = vunpack.c.h.b16 %v4839
  %v4914 = vunpack.c.l.b16 %v4840
  %v4915 = vunpack.c.h.b16 %v4840
  %v4916 = vunpack.c.l.b16 %v4841
  %v4917 = vunpack.c.h.b16 %v4841
  %v4918 = vunpack.c.l.b16 %v4842
  %v4919 = vunpack.c.h.b16 %v4842
  %v4920 = vunpack.c.l.b16 %v4844
  %v4921 = vunpack.c.h.b16 %v4844
  %v4922 = vunpack.c.l.b16 %v4845
  %v4923 = vunpack.c.h.b16 %v4845
  %v4924 = vunpack.c.l.b16 %v4846
  %v4925 = vunpack.c.h.b16 %v4846
  %v4926 = vunpack.c.l.b16 %v4847
  %v4927 = vunpack.c.h.b16 %v4847
  %v4928 = vunpack.c.l.b16 %v4848
  %v4929 = vunpack.c.h.b16 %v4848
  %v4930 = vunpack.c.l.b16 %v4849
  %v4931 = vunpack.c.h.b16 %v4849
  %v4932 = vunpack.c.l.b16 %v4850
  %v4933 = vunpack.c.h.b16 %v4850
  %v4934 = vunpack.c.l.b16 %v4851
  %v4935 = vunpack.c.h.b16 %v4851
  %v4936 = vunpack.c.l.b16 %v4852
  %v4937 = vunpack.c.h.b16 %v4852
  %v4938 = vunpack.c.l.b16 %v4853
  %v4939 = vunpack.c.h.b16 %v4853
  %v4940 = vunpack.c.l.b16 %v4854
  %v4941 = vunpack.c.h.b16 %v4854
  %v4942 = vunpack.c.l.b16 %v4855
  %v4943 = vunpack.c.h.b16 %v4855
  %v4944 = vunpack.c.l.b16 %v4856
  %v4945 = vunpack.c.h.b16 %v4856
  %v4946 = vunpack.c.l.b16 %v4857
  %v4947 = vunpack.c.h.b16 %v4857
  %v4948 = vunpack.c.l.b16 %v4858
  %v4949 = vunpack.c.h.b16 %v4858
  %v4950 = vpack.c.b16 %v4890, %v4890
  %v4951 = vpack.c.b16 %v4891, %v4891
  %v4952 = vpack.c.b16 %v4892, %v4892
  %v4953 = vpack.c.b16 %v4893, %v4893
  %v4954 = vpack.c.b16 %v4894, %v4894
  %v4955 = vpack.c.b16 %v4895, %v4895
  %v4956 = vpack.c.b16 %v4896, %v4896
  %v4957 = vpack.c.b16 %v4897, %v4897
  %v4958 = vpack.c.b16 %v4898, %v4898
  %v4959 = vpack.c.b16 %v4899, %v4899
  %v4960 = vpack.c.b16 %v4900, %v4900
  %v4961 = vpack.c.b16 %v4901, %v4901
  %v4962 = vpack.c.b16 %v4902, %v4902
  %v4963 = vpack.c.b16 %v4903, %v4903
  %v4964 = vpack.c.b16 %v4904, %v4904
  %v4965 = vpack.c.b16 %v4905, %v4905
  %v4966 = vpack.c.b16 %v4906, %v4906
  %v4967 = vpack.c.b16 %v4907, %v4907
  %v4968 = vpack.c.b16 %v4908, %v4908
  %v4969 = vpack.c.b16 %v4909, %v4909
  %v4970 = vpack.c.b16 %v4910, %v4910
  %v4971 = vpack.c.b16 %v4911, %v4911
  %v4972 = vpack.c.b16 %v4912, %v4912
  %v4973 = vpack.c.b16 %v4913, %v4913
  %v4974 = vpack.c.b16 %v4914, %v4914
  %v4975 = vpack.c.b16 %v4915, %v4915
  %v4976 = vpack.c.b16 %v4916, %v4916
  %v4977 = vpack.c.b16 %v4917, %v4917
  %v4978 = vpack.c.b16 %v4918, %v4918
  %v4979 = vpack.c.b16 %v4919, %v4919
  %v4980 = vpack.c.b16 %v4920, %v4920
  %v4981 = vpack.c.b16 %v4921, %v4921
  %v4982 = vpack.c.b16 %v4922, %v4922
  %v4983 = vpack.c.b16 %v4923, %v4923
  %v4984 = vpack.c.b16 %v4924, %v4924
  %v4985 = vpack.c.b16 %v4925, %v4925
  %v4986 = vpack.c.b16 %v4926, %v4926
  %v4987 = vpack.c.b16 %v4927, %v4927
  %v4988 = vpack.c.b16 %v4928, %v4928
  %v4989 = vpack.c.b16 %v4929, %v4929
  %v4990 = vpack.c.b16 %v4930, %v4930
  %v4991 = vpack.c.b16 %v4931, %v4931
  %v4992 = vpack.c.b16 %v4932, %v4932
  %v4993 = vpack.c.b16 %v4933, %v4933
  %v4994 = vpack.c.b16 %v4934, %v4934
  %v4995 = vpack.c.b16 %v4935, %v4935
  %v4996 = vpack.c.b16 %v4936, %v4936
  %v4997 = vpack.c.b16 %v4937, %v4937
  %v4998 = vpack.c.b16 %v4938, %v4938
  %v4999 = vpack.c.b16 %v4939, %v4939
  %v5000 = vpack.c.b16 %v4940, %v4940
  %v5001 = vpack.c.b16 %v4941, %v4941
  %v5002 = vpack.c.b16 %v4942, %v4942
  %v5003 = vpack.c.b16 %v4943, %v4943
  %v5004 = vpack.c.b16 %v4944, %v4944
  %v5005 = vpack.c.b16 %v4945, %v4945
  %v5006 = vpack.c.b16 %v4946, %v4946
  %v5007 = vpack.c.b16 %v4947, %v4947
  %v5008 = vpack.c.b16 %v4948, %v4948
  %v5009 = vpack.c.b16 %v4949, %v4949
  %v5011 = vshrl.u32 %v4950, 16
  %v5013 = vrot.slane %v5011, 7
  %v5014 = vshll.u32 %v4950, 16
  %v5016 = vor.u32 %v5013, %v5014
  %v5017 = vrot.slane %v5013, 4
  %v5019 = vshrl.u32 %v4951, 16
  %v5021 = vrot.slane %v5019, 7
  %v5022 = vshll.u32 %v4951, 16
  %v5024 = vor.u32 %v5021, %v5022
  %v5025 = vsel %vm340, %v5017, %v5024
  %v5027 = vshrl.u32 %v4952, 16
  %v5029 = vrot.slane %v5027, 7
  %v5030 = vshll.u32 %v4952, 16
  %v5032 = vor.u32 %v5029, %v5030
  %v5033 = vrot.slane %v5029, 4
  %v5035 = vshrl.u32 %v4953, 16
  %v5037 = vrot.slane %v5035, 7
  %v5038 = vshll.u32 %v4953, 16
  %v5040 = vor.u32 %v5037, %v5038
  %v5041 = vsel %vm340, %v5033, %v5040
  %v5043 = vshrl.u32 %v4954, 16
  %v5045 = vrot.slane %v5043, 7
  %v5046 = vshll.u32 %v4954, 16
  %v5048 = vor.u32 %v5045, %v5046
  %v5049 = vrot.slane %v5045, 4
  %v5051 = vshrl.u32 %v4955, 16
  %v5053 = vrot.slane %v5051, 7
  %v5054 = vshll.u32 %v4955, 16
  %v5056 = vor.u32 %v5053, %v5054
  %v5057 = vsel %vm340, %v5049, %v5056
  %v5059 = vshrl.u32 %v4956, 16
  %v5061 = vrot.slane %v5059, 7
  %v5062 = vshll.u32 %v4956, 16
  %v5064 = vor.u32 %v5061, %v5062
  %v5065 = vrot.slane %v5061, 4
  %v5067 = vshrl.u32 %v4957, 16
  %v5069 = vrot.slane %v5067, 7
  %v5070 = vshll.u32 %v4957, 16
  %v5072 = vor.u32 %v5069, %v5070
  %v5073 = vsel %vm340, %v5065, %v5072
  %v5075 = vshrl.u32 %v4958, 16
  %v5077 = vrot.slane %v5075, 7
  %v5078 = vshll.u32 %v4958, 16
  %v5080 = vor.u32 %v5077, %v5078
  %v5081 = vrot.slane %v5077, 4
  %v5083 = vshrl.u32 %v4959, 16
  %v5085 = vrot.slane %v5083, 7
  %v5086 = vshll.u32 %v4959, 16
  %v5088 = vor.u32 %v5085, %v5086
  %v5089 = vsel %vm340, %v5081, %v5088
  %v5091 = vshrl.u32 %v4960, 16
  %v5093 = vrot.slane %v5091, 7
  %v5094 = vshll.u32 %v4960, 16
  %v5096 = vor.u32 %v5093, %v5094
  %v5097 = vrot.slane %v5093, 4
  %v5099 = vshrl.u32 %v4961, 16
  %v5101 = vrot.slane %v5099, 7
  %v5102 = vshll.u32 %v4961, 16
  %v5104 = vor.u32 %v5101, %v5102
  %v5105 = vsel %vm340, %v5097, %v5104
  %v5107 = vshrl.u32 %v4962, 16
  %v5109 = vrot.slane %v5107, 7
  %v5110 = vshll.u32 %v4962, 16
  %v5112 = vor.u32 %v5109, %v5110
  %v5113 = vrot.slane %v5109, 4
  %v5115 = vshrl.u32 %v4963, 16
  %v5117 = vrot.slane %v5115, 7
  %v5118 = vshll.u32 %v4963, 16
  %v5120 = vor.u32 %v5117, %v5118
  %v5121 = vsel %vm340, %v5113, %v5120
  %v5123 = vshrl.u32 %v4964, 16
  %v5125 = vrot.slane %v5123, 7
  %v5126 = vshll.u32 %v4964, 16
  %v5128 = vor.u32 %v5125, %v5126
  %v5129 = vrot.slane %v5125, 4
  %v5131 = vshrl.u32 %v4965, 16
  %v5133 = vrot.slane %v5131, 7
  %v5134 = vshll.u32 %v4965, 16
  %v5136 = vor.u32 %v5133, %v5134
  %v5137 = vsel %vm340, %v5129, %v5136
  %v5139 = vshrl.u32 %v4966, 16
  %v5141 = vrot.slane %v5139, 7
  %v5142 = vshll.u32 %v4966, 16
  %v5144 = vor.u32 %v5141, %v5142
  %v5145 = vrot.slane %v5141, 4
  %v5147 = vshrl.u32 %v4967, 16
  %v5149 = vrot.slane %v5147, 7
  %v5150 = vshll.u32 %v4967, 16
  %v5152 = vor.u32 %v5149, %v5150
  %v5153 = vsel %vm340, %v5145, %v5152
  %v5155 = vshrl.u32 %v4968, 16
  %v5157 = vrot.slane %v5155, 7
  %v5158 = vshll.u32 %v4968, 16
  %v5160 = vor.u32 %v5157, %v5158
  %v5161 = vrot.slane %v5157, 4
  %v5163 = vshrl.u32 %v4969, 16
  %v5165 = vrot.slane %v5163, 7
  %v5166 = vshll.u32 %v4969, 16
  %v5168 = vor.u32 %v5165, %v5166
  %v5169 = vsel %vm340, %v5161, %v5168
  %v5171 = vshrl.u32 %v4970, 16
  %v5173 = vrot.slane %v5171, 7
  %v5174 = vshll.u32 %v4970, 16
  %v5176 = vor.u32 %v5173, %v5174
  %v5177 = vrot.slane %v5173, 4
  %v5179 = vshrl.u32 %v4971, 16
  %v5181 = vrot.slane %v5179, 7
  %v5182 = vshll.u32 %v4971, 16
  %v5184 = vor.u32 %v5181, %v5182
  %v5185 = vsel %vm340, %v5177, %v5184
  %v5187 = vshrl.u32 %v4972, 16
  %v5189 = vrot.slane %v5187, 7
  %v5190 = vshll.u32 %v4972, 16
  %v5192 = vor.u32 %v5189, %v5190
  %v5193 = vrot.slane %v5189, 4
  %v5195 = vshrl.u32 %v4973, 16
  %v5197 = vrot.slane %v5195, 7
  %v5198 = vshll.u32 %v4973, 16
  %v5200 = vor.u32 %v5197, %v5198
  %v5201 = vsel %vm340, %v5193, %v5200
  %v5203 = vshrl.u32 %v4974, 16
  %v5205 = vrot.slane %v5203, 7
  %v5206 = vshll.u32 %v4974, 16
  %v5208 = vor.u32 %v5205, %v5206
  %v5209 = vrot.slane %v5205, 4
  %v5211 = vshrl.u32 %v4975, 16
  %v5213 = vrot.slane %v5211, 7
  %v5214 = vshll.u32 %v4975, 16
  %v5216 = vor.u32 %v5213, %v5214
  %v5217 = vsel %vm340, %v5209, %v5216
  %v5219 = vshrl.u32 %v4976, 16
  %v5221 = vrot.slane %v5219, 7
  %v5222 = vshll.u32 %v4976, 16
  %v5224 = vor.u32 %v5221, %v5222
  %v5225 = vrot.slane %v5221, 4
  %v5227 = vshrl.u32 %v4977, 16
  %v5229 = vrot.slane %v5227, 7
  %v5230 = vshll.u32 %v4977, 16
  %v5232 = vor.u32 %v5229, %v5230
  %v5233 = vsel %vm340, %v5225, %v5232
  %v5235 = vshrl.u32 %v4978, 16
  %v5237 = vrot.slane %v5235, 7
  %v5238 = vshll.u32 %v4978, 16
  %v5240 = vor.u32 %v5237, %v5238
  %v5241 = vrot.slane %v5237, 4
  %v5243 = vshrl.u32 %v4979, 16
  %v5245 = vrot.slane %v5243, 7
  %v5246 = vshll.u32 %v4979, 16
  %v5248 = vor.u32 %v5245, %v5246
  %v5249 = vsel %vm340, %v5241, %v5248
  %v5251 = vshrl.u32 %v4980, 16
  %v5253 = vrot.slane %v5251, 7
  %v5254 = vshll.u32 %v4980, 16
  %v5256 = vor.u32 %v5253, %v5254
  %v5257 = vrot.slane %v5253, 4
  %v5259 = vshrl.u32 %v4981, 16
  %v5261 = vrot.slane %v5259, 7
  %v5262 = vshll.u32 %v4981, 16
  %v5264 = vor.u32 %v5261, %v5262
  %v5265 = vsel %vm340, %v5257, %v5264
  %v5267 = vshrl.u32 %v4982, 16
  %v5269 = vrot.slane %v5267, 7
  %v5270 = vshll.u32 %v4982, 16
  %v5272 = vor.u32 %v5269, %v5270
  %v5273 = vrot.slane %v5269, 4
  %v5275 = vshrl.u32 %v4983, 16
  %v5277 = vrot.slane %v5275, 7
  %v5278 = vshll.u32 %v4983, 16
  %v5280 = vor.u32 %v5277, %v5278
  %v5281 = vsel %vm340, %v5273, %v5280
  %v5283 = vshrl.u32 %v4984, 16
  %v5285 = vrot.slane %v5283, 7
  %v5286 = vshll.u32 %v4984, 16
  %v5288 = vor.u32 %v5285, %v5286
  %v5289 = vrot.slane %v5285, 4
  %v5291 = vshrl.u32 %v4985, 16
  %v5293 = vrot.slane %v5291, 7
  %v5294 = vshll.u32 %v4985, 16
  %v5296 = vor.u32 %v5293, %v5294
  %v5297 = vsel %vm340, %v5289, %v5296
  %v5299 = vshrl.u32 %v4986, 16
  %v5301 = vrot.slane %v5299, 7
  %v5302 = vshll.u32 %v4986, 16
  %v5304 = vor.u32 %v5301, %v5302
  %v5305 = vrot.slane %v5301, 4
  %v5307 = vshrl.u32 %v4987, 16
  %v5309 = vrot.slane %v5307, 7
  %v5310 = vshll.u32 %v4987, 16
  %v5312 = vor.u32 %v5309, %v5310
  %v5313 = vsel %vm340, %v5305, %v5312
  %v5315 = vshrl.u32 %v4988, 16
  %v5317 = vrot.slane %v5315, 7
  %v5318 = vshll.u32 %v4988, 16
  %v5320 = vor.u32 %v5317, %v5318
  %v5321 = vrot.slane %v5317, 4
  %v5323 = vshrl.u32 %v4989, 16
  %v5325 = vrot.slane %v5323, 7
  %v5326 = vshll.u32 %v4989, 16
  %v5328 = vor.u32 %v5325, %v5326
  %v5329 = vsel %vm340, %v5321, %v5328
  %v5331 = vshrl.u32 %v4990, 16
  %v5333 = vrot.slane %v5331, 7
  %v5334 = vshll.u32 %v4990, 16
  %v5336 = vor.u32 %v5333, %v5334
  %v5337 = vrot.slane %v5333, 4
  %v5339 = vshrl.u32 %v4991, 16
  %v5341 = vrot.slane %v5339, 7
  %v5342 = vshll.u32 %v4991, 16
  %v5344 = vor.u32 %v5341, %v5342
  %v5345 = vsel %vm340, %v5337, %v5344
  %v5347 = vshrl.u32 %v4992, 16
  %v5349 = vrot.slane %v5347, 7
  %v5350 = vshll.u32 %v4992, 16
  %v5352 = vor.u32 %v5349, %v5350
  %v5353 = vrot.slane %v5349, 4
  %v5355 = vshrl.u32 %v4993, 16
  %v5357 = vrot.slane %v5355, 7
  %v5358 = vshll.u32 %v4993, 16
  %v5360 = vor.u32 %v5357, %v5358
  %v5361 = vsel %vm340, %v5353, %v5360
  %v5363 = vshrl.u32 %v4994, 16
  %v5365 = vrot.slane %v5363, 7
  %v5366 = vshll.u32 %v4994, 16
  %v5368 = vor.u32 %v5365, %v5366
  %v5369 = vrot.slane %v5365, 4
  %v5371 = vshrl.u32 %v4995, 16
  %v5373 = vrot.slane %v5371, 7
  %v5374 = vshll.u32 %v4995, 16
  %v5376 = vor.u32 %v5373, %v5374
  %v5377 = vsel %vm340, %v5369, %v5376
  %v5379 = vshrl.u32 %v4996, 16
  %v5381 = vrot.slane %v5379, 7
  %v5382 = vshll.u32 %v4996, 16
  %v5384 = vor.u32 %v5381, %v5382
  %v5385 = vrot.slane %v5381, 4
  %v5387 = vshrl.u32 %v4997, 16
  %v5389 = vrot.slane %v5387, 7
  %v5390 = vshll.u32 %v4997, 16
  %v5392 = vor.u32 %v5389, %v5390
  %v5393 = vsel %vm340, %v5385, %v5392
  %v5395 = vshrl.u32 %v4998, 16
  %v5397 = vrot.slane %v5395, 7
  %v5398 = vshll.u32 %v4998, 16
  %v5400 = vor.u32 %v5397, %v5398
  %v5401 = vrot.slane %v5397, 4
  %v5403 = vshrl.u32 %v4999, 16
  %v5405 = vrot.slane %v5403, 7
  %v5406 = vshll.u32 %v4999, 16
  %v5408 = vor.u32 %v5405, %v5406
  %v5409 = vsel %vm340, %v5401, %v5408
  %v5411 = vshrl.u32 %v5000, 16
  %v5413 = vrot.slane %v5411, 7
  %v5414 = vshll.u32 %v5000, 16
  %v5416 = vor.u32 %v5413, %v5414
  %v5417 = vrot.slane %v5413, 4
  %v5419 = vshrl.u32 %v5001, 16
  %v5421 = vrot.slane %v5419, 7
  %v5422 = vshll.u32 %v5001, 16
  %v5424 = vor.u32 %v5421, %v5422
  %v5425 = vsel %vm340, %v5417, %v5424
  %v5427 = vshrl.u32 %v5002, 16
  %v5429 = vrot.slane %v5427, 7
  %v5430 = vshll.u32 %v5002, 16
  %v5432 = vor.u32 %v5429, %v5430
  %v5433 = vrot.slane %v5429, 4
  %v5435 = vshrl.u32 %v5003, 16
  %v5437 = vrot.slane %v5435, 7
  %v5438 = vshll.u32 %v5003, 16
  %v5440 = vor.u32 %v5437, %v5438
  %v5441 = vsel %vm340, %v5433, %v5440
  %v5443 = vshrl.u32 %v5004, 16
  %v5445 = vrot.slane %v5443, 7
  %v5446 = vshll.u32 %v5004, 16
  %v5448 = vor.u32 %v5445, %v5446
  %v5449 = vrot.slane %v5445, 4
  %v5451 = vshrl.u32 %v5005, 16
  %v5453 = vrot.slane %v5451, 7
  %v5454 = vshll.u32 %v5005, 16
  %v5456 = vor.u32 %v5453, %v5454
  %v5457 = vsel %vm340, %v5449, %v5456
  %v5459 = vshrl.u32 %v5006, 16
  %v5461 = vrot.slane %v5459, 7
  %v5462 = vshll.u32 %v5006, 16
  %v5464 = vor.u32 %v5461, %v5462
  %v5465 = vrot.slane %v5461, 4
  %v5467 = vshrl.u32 %v5007, 16
  %v5469 = vrot.slane %v5467, 7
  %v5470 = vshll.u32 %v5007, 16
  %v5472 = vor.u32 %v5469, %v5470
  %v5473 = vsel %vm340, %v5465, %v5472
  %v5475 = vshrl.u32 %v5008, 16
  %v5477 = vrot.slane %v5475, 7
  %v5478 = vshll.u32 %v5008, 16
  %v5480 = vor.u32 %v5477, %v5478
  %v5481 = vrot.slane %v5477, 4
  %v5483 = vshrl.u32 %v5009, 16
  %v5485 = vrot.slane %v5483, 7
  %v5486 = vshll.u32 %v5009, 16
  %v5488 = vor.u32 %v5485, %v5486
  %v5489 = vsel %vm340, %v5481, %v5488
  %v5550 = vld [vmem:[%s881] sm:$0xf]
  %v5551 = vsel %vm884, %v5016, %v5550
  %5552 = vst [vmem:[%s881] sm:$0xf] %v5551
  %5553 = vst.msk [vmem:[%s881 + $0x4] sm:$0xf] %vm888, %v5025
  %v5554 = vld [vmem:[%s881 + $0x8] sm:$0xf]
  %v5555 = vsel %vm884, %v5032, %v5554
  %5556 = vst [vmem:[%s881 + $0x8] sm:$0xf] %v5555
  %5557 = vst.msk [vmem:[%s881 + $0xc] sm:$0xf] %vm888, %v5041
  %v5558 = vld [vmem:[%s881 + $0x10] sm:$0xf]
  %v5559 = vsel %vm884, %v5048, %v5558
  %5560 = vst [vmem:[%s881 + $0x10] sm:$0xf] %v5559
  %5561 = vst.msk [vmem:[%s881 + $0x14] sm:$0xf] %vm888, %v5057
  %v5562 = vld [vmem:[%s881 + $0x18] sm:$0xf]
  %v5563 = vsel %vm884, %v5064, %v5562
  %5564 = vst [vmem:[%s881 + $0x18] sm:$0xf] %v5563
  %5565 = vst.msk [vmem:[%s881 + $0x1c] sm:$0xf] %vm888, %v5073
  %v5566 = vld [vmem:[%s881 + $0x20] sm:$0xf]
  %v5567 = vsel %vm884, %v5080, %v5566
  %5568 = vst [vmem:[%s881 + $0x20] sm:$0xf] %v5567
  %5569 = vst.msk [vmem:[%s881 + $0x24] sm:$0xf] %vm888, %v5089
  %v5570 = vld [vmem:[%s881 + $0x28] sm:$0xf]
  %v5571 = vsel %vm884, %v5096, %v5570
  %5572 = vst [vmem:[%s881 + $0x28] sm:$0xf] %v5571
  %5573 = vst.msk [vmem:[%s881 + $0x2c] sm:$0xf] %vm888, %v5105
  %v5574 = vld [vmem:[%s881 + $0x30] sm:$0xf]
  %v5575 = vsel %vm884, %v5112, %v5574
  %5576 = vst [vmem:[%s881 + $0x30] sm:$0xf] %v5575
  %5577 = vst.msk [vmem:[%s881 + $0x34] sm:$0xf] %vm888, %v5121
  %v5578 = vld [vmem:[%s881 + $0x38] sm:$0xf]
  %v5579 = vsel %vm884, %v5128, %v5578
  %5580 = vst [vmem:[%s881 + $0x38] sm:$0xf] %v5579
  %5581 = vst.msk [vmem:[%s881 + $0x3c] sm:$0xf] %vm888, %v5137
  %v5582 = vld [vmem:[%s881 + $0x40] sm:$0xf]
  %v5583 = vsel %vm884, %v5144, %v5582
  %5584 = vst [vmem:[%s881 + $0x40] sm:$0xf] %v5583
  %5585 = vst.msk [vmem:[%s881 + $0x44] sm:$0xf] %vm888, %v5153
  %v5586 = vld [vmem:[%s881 + $0x48] sm:$0xf]
  %v5587 = vsel %vm884, %v5160, %v5586
  %5588 = vst [vmem:[%s881 + $0x48] sm:$0xf] %v5587
  %5589 = vst.msk [vmem:[%s881 + $0x4c] sm:$0xf] %vm888, %v5169
  %v5590 = vld [vmem:[%s881 + $0x50] sm:$0xf]
  %v5591 = vsel %vm884, %v5176, %v5590
  %5592 = vst [vmem:[%s881 + $0x50] sm:$0xf] %v5591
  %5593 = vst.msk [vmem:[%s881 + $0x54] sm:$0xf] %vm888, %v5185
  %v5594 = vld [vmem:[%s881 + $0x58] sm:$0xf]
  %v5595 = vsel %vm884, %v5192, %v5594
  %5596 = vst [vmem:[%s881 + $0x58] sm:$0xf] %v5595
  %5597 = vst.msk [vmem:[%s881 + $0x5c] sm:$0xf] %vm888, %v5201
  %v5598 = vld [vmem:[%s881 + $0x60] sm:$0xf]
  %v5599 = vsel %vm884, %v5208, %v5598
  %5600 = vst [vmem:[%s881 + $0x60] sm:$0xf] %v5599
  %5601 = vst.msk [vmem:[%s881 + $0x64] sm:$0xf] %vm888, %v5217
  %v5602 = vld [vmem:[%s881 + $0x68] sm:$0xf]
  %v5603 = vsel %vm884, %v5224, %v5602
  %5604 = vst [vmem:[%s881 + $0x68] sm:$0xf] %v5603
  %5605 = vst.msk [vmem:[%s881 + $0x6c] sm:$0xf] %vm888, %v5233
  %v5606 = vld [vmem:[%s881 + $0x70] sm:$0xf]
  %v5607 = vsel %vm884, %v5240, %v5606
  %5608 = vst [vmem:[%s881 + $0x70] sm:$0xf] %v5607
  %5609 = vst.msk [vmem:[%s881 + $0x74] sm:$0xf] %vm888, %v5249
  %v5610 = vld [vmem:[%s881 + $0x80] sm:$0xf]
  %v5611 = vsel %vm884, %v5256, %v5610
  %5612 = vst [vmem:[%s881 + $0x80] sm:$0xf] %v5611
  %5613 = vst.msk [vmem:[%s881 + $0x84] sm:$0xf] %vm888, %v5265
  %v5614 = vld [vmem:[%s881 + $0x88] sm:$0xf]
  %v5615 = vsel %vm884, %v5272, %v5614
  %5616 = vst [vmem:[%s881 + $0x88] sm:$0xf] %v5615
  %5617 = vst.msk [vmem:[%s881 + $0x8c] sm:$0xf] %vm888, %v5281
  %v5618 = vld [vmem:[%s881 + $0x90] sm:$0xf]
  %v5619 = vsel %vm884, %v5288, %v5618
  %5620 = vst [vmem:[%s881 + $0x90] sm:$0xf] %v5619
  %5621 = vst.msk [vmem:[%s881 + $0x94] sm:$0xf] %vm888, %v5297
  %v5622 = vld [vmem:[%s881 + $0x98] sm:$0xf]
  %v5623 = vsel %vm884, %v5304, %v5622
  %5624 = vst [vmem:[%s881 + $0x98] sm:$0xf] %v5623
  %5625 = vst.msk [vmem:[%s881 + $0x9c] sm:$0xf] %vm888, %v5313
  %v5626 = vld [vmem:[%s881 + $0xa0] sm:$0xf]
  %v5627 = vsel %vm884, %v5320, %v5626
  %5628 = vst [vmem:[%s881 + $0xa0] sm:$0xf] %v5627
  %5629 = vst.msk [vmem:[%s881 + $0xa4] sm:$0xf] %vm888, %v5329
  %v5630 = vld [vmem:[%s881 + $0xa8] sm:$0xf]
  %v5631 = vsel %vm884, %v5336, %v5630
  %5632 = vst [vmem:[%s881 + $0xa8] sm:$0xf] %v5631
  %5633 = vst.msk [vmem:[%s881 + $0xac] sm:$0xf] %vm888, %v5345
  %v5634 = vld [vmem:[%s881 + $0xb0] sm:$0xf]
  %v5635 = vsel %vm884, %v5352, %v5634
  %5636 = vst [vmem:[%s881 + $0xb0] sm:$0xf] %v5635
  %5637 = vst.msk [vmem:[%s881 + $0xb4] sm:$0xf] %vm888, %v5361
  %v5638 = vld [vmem:[%s881 + $0xb8] sm:$0xf]
  %v5639 = vsel %vm884, %v5368, %v5638
  %5640 = vst [vmem:[%s881 + $0xb8] sm:$0xf] %v5639
  %5641 = vst.msk [vmem:[%s881 + $0xbc] sm:$0xf] %vm888, %v5377
  %v5642 = vld [vmem:[%s881 + $0xc0] sm:$0xf]
  %v5643 = vsel %vm884, %v5384, %v5642
  %5644 = vst [vmem:[%s881 + $0xc0] sm:$0xf] %v5643
  %5645 = vst.msk [vmem:[%s881 + $0xc4] sm:$0xf] %vm888, %v5393
  %v5646 = vld [vmem:[%s881 + $0xc8] sm:$0xf]
  %v5647 = vsel %vm884, %v5400, %v5646
  %5648 = vst [vmem:[%s881 + $0xc8] sm:$0xf] %v5647
  %5649 = vst.msk [vmem:[%s881 + $0xcc] sm:$0xf] %vm888, %v5409
  %v5650 = vld [vmem:[%s881 + $0xd0] sm:$0xf]
  %v5651 = vsel %vm884, %v5416, %v5650
  %5652 = vst [vmem:[%s881 + $0xd0] sm:$0xf] %v5651
  %5653 = vst.msk [vmem:[%s881 + $0xd4] sm:$0xf] %vm888, %v5425
  %v5654 = vld [vmem:[%s881 + $0xd8] sm:$0xf]
  %v5655 = vsel %vm884, %v5432, %v5654
  %5656 = vst [vmem:[%s881 + $0xd8] sm:$0xf] %v5655
  %5657 = vst.msk [vmem:[%s881 + $0xdc] sm:$0xf] %vm888, %v5441
  %v5658 = vld [vmem:[%s881 + $0xe0] sm:$0xf]
  %v5659 = vsel %vm884, %v5448, %v5658
  %5660 = vst [vmem:[%s881 + $0xe0] sm:$0xf] %v5659
  %5661 = vst.msk [vmem:[%s881 + $0xe4] sm:$0xf] %vm888, %v5457
  %v5662 = vld [vmem:[%s881 + $0xe8] sm:$0xf]
  %v5663 = vsel %vm884, %v5464, %v5662
  %5664 = vst [vmem:[%s881 + $0xe8] sm:$0xf] %v5663
  %5665 = vst.msk [vmem:[%s881 + $0xec] sm:$0xf] %vm888, %v5473
  %v5666 = vld [vmem:[%s881 + $0xf0] sm:$0xf]
  %v5667 = vsel %vm884, %v5480, %v5666
  %5668 = vst [vmem:[%s881 + $0xf0] sm:$0xf] %v5667
  %5669 = vst.msk [vmem:[%s881 + $0xf4] sm:$0xf] %vm888, %v5489
  %5670 = vrot.lane.b32.xlu0 %v4950, 8
  %v5671 = vpop.permute.xlu0 %5670
  %5672 = vrot.lane.b32.xlu0 %v4951, 8
  %v5673 = vpop.permute.xlu0 %5672
  %5674 = vrot.lane.b32.xlu0 %v4952, 8
  %v5675 = vpop.permute.xlu0 %5674
  %5676 = vrot.lane.b32.xlu0 %v4953, 8
  %v5677 = vpop.permute.xlu0 %5676
  %5678 = vrot.lane.b32.xlu0 %v4954, 8
  %v5679 = vpop.permute.xlu0 %5678
  %5680 = vrot.lane.b32.xlu0 %v4955, 8
  %v5681 = vpop.permute.xlu0 %5680
  %5682 = vrot.lane.b32.xlu0 %v4956, 8
  %v5683 = vpop.permute.xlu0 %5682
  %5684 = vrot.lane.b32.xlu0 %v4957, 8
  %v5685 = vpop.permute.xlu0 %5684
  %5686 = vrot.lane.b32.xlu0 %v4958, 8
  %v5687 = vpop.permute.xlu0 %5686
  %5688 = vrot.lane.b32.xlu0 %v4959, 8
  %v5689 = vpop.permute.xlu0 %5688
  %5690 = vrot.lane.b32.xlu0 %v4960, 8
  %v5691 = vpop.permute.xlu0 %5690
  %5692 = vrot.lane.b32.xlu0 %v4961, 8
  %v5693 = vpop.permute.xlu0 %5692
  %5694 = vrot.lane.b32.xlu0 %v4962, 8
  %v5695 = vpop.permute.xlu0 %5694
  %5696 = vrot.lane.b32.xlu0 %v4963, 8
  %v5697 = vpop.permute.xlu0 %5696
  %5698 = vrot.lane.b32.xlu0 %v4964, 8
  %v5699 = vpop.permute.xlu0 %5698
  %5700 = vrot.lane.b32.xlu0 %v4965, 8
  %v5701 = vpop.permute.xlu0 %5700
  %5702 = vrot.lane.b32.xlu0 %v4966, 8
  %v5703 = vpop.permute.xlu0 %5702
  %5704 = vrot.lane.b32.xlu0 %v4967, 8
  %v5705 = vpop.permute.xlu0 %5704
  %5706 = vrot.lane.b32.xlu0 %v4968, 8
  %v5707 = vpop.permute.xlu0 %5706
  %5708 = vrot.lane.b32.xlu0 %v4969, 8
  %v5709 = vpop.permute.xlu0 %5708
  %5710 = vrot.lane.b32.xlu0 %v4970, 8
  %v5711 = vpop.permute.xlu0 %5710
  %5712 = vrot.lane.b32.xlu0 %v4971, 8
  %v5713 = vpop.permute.xlu0 %5712
  %5714 = vrot.lane.b32.xlu0 %v4972, 8
  %v5715 = vpop.permute.xlu0 %5714
  %5716 = vrot.lane.b32.xlu0 %v4973, 8
  %v5717 = vpop.permute.xlu0 %5716
  %5718 = vrot.lane.b32.xlu0 %v4974, 8
  %v5719 = vpop.permute.xlu0 %5718
  %5720 = vrot.lane.b32.xlu0 %v4975, 8
  %v5721 = vpop.permute.xlu0 %5720
  %5722 = vrot.lane.b32.xlu0 %v4976, 8
  %v5723 = vpop.permute.xlu0 %5722
  %5724 = vrot.lane.b32.xlu0 %v4977, 8
  %v5725 = vpop.permute.xlu0 %5724
  %5726 = vrot.lane.b32.xlu0 %v4978, 8
  %v5727 = vpop.permute.xlu0 %5726
  %5728 = vrot.lane.b32.xlu0 %v4979, 8
  %v5729 = vpop.permute.xlu0 %5728
  %5730 = vrot.lane.b32.xlu0 %v4980, 8
  %v5731 = vpop.permute.xlu0 %5730
  %5732 = vrot.lane.b32.xlu0 %v4981, 8
  %v5733 = vpop.permute.xlu0 %5732
  %5734 = vrot.lane.b32.xlu0 %v4982, 8
  %v5735 = vpop.permute.xlu0 %5734
  %5736 = vrot.lane.b32.xlu0 %v4983, 8
  %v5737 = vpop.permute.xlu0 %5736
  %5738 = vrot.lane.b32.xlu0 %v4984, 8
  %v5739 = vpop.permute.xlu0 %5738
  %5740 = vrot.lane.b32.xlu0 %v4985, 8
  %v5741 = vpop.permute.xlu0 %5740
  %5742 = vrot.lane.b32.xlu0 %v4986, 8
  %v5743 = vpop.permute.xlu0 %5742
  %5744 = vrot.lane.b32.xlu0 %v4987, 8
  %v5745 = vpop.permute.xlu0 %5744
  %5746 = vrot.lane.b32.xlu0 %v4988, 8
  %v5747 = vpop.permute.xlu0 %5746
  %5748 = vrot.lane.b32.xlu0 %v4989, 8
  %v5749 = vpop.permute.xlu0 %5748
  %5750 = vrot.lane.b32.xlu0 %v4990, 8
  %v5751 = vpop.permute.xlu0 %5750
  %5752 = vrot.lane.b32.xlu0 %v4991, 8
  %v5753 = vpop.permute.xlu0 %5752
  %5754 = vrot.lane.b32.xlu0 %v4992, 8
  %v5755 = vpop.permute.xlu0 %5754
  %5756 = vrot.lane.b32.xlu0 %v4993, 8
  %v5757 = vpop.permute.xlu0 %5756
  %5758 = vrot.lane.b32.xlu0 %v4994, 8
  %v5759 = vpop.permute.xlu0 %5758
  %5760 = vrot.lane.b32.xlu0 %v4995, 8
  %v5761 = vpop.permute.xlu0 %5760
  %5762 = vrot.lane.b32.xlu0 %v4996, 8
  %v5763 = vpop.permute.xlu0 %5762
  %5764 = vrot.lane.b32.xlu0 %v4997, 8
  %v5765 = vpop.permute.xlu0 %5764
  %5766 = vrot.lane.b32.xlu0 %v4998, 8
  %v5767 = vpop.permute.xlu0 %5766
  %5768 = vrot.lane.b32.xlu0 %v4999, 8
  %v5769 = vpop.permute.xlu0 %5768
  %5770 = vrot.lane.b32.xlu0 %v5000, 8
  %v5771 = vpop.permute.xlu0 %5770
  %5772 = vrot.lane.b32.xlu0 %v5001, 8
  %v5773 = vpop.permute.xlu0 %5772
  %5774 = vrot.lane.b32.xlu0 %v5002, 8
  %v5775 = vpop.permute.xlu0 %5774
  %5776 = vrot.lane.b32.xlu0 %v5003, 8
  %v5777 = vpop.permute.xlu0 %5776
  %5778 = vrot.lane.b32.xlu0 %v5004, 8
  %v5779 = vpop.permute.xlu0 %5778
  %5780 = vrot.lane.b32.xlu0 %v5005, 8
  %v5781 = vpop.permute.xlu0 %5780
  %5782 = vrot.lane.b32.xlu0 %v5006, 8
  %v5783 = vpop.permute.xlu0 %5782
  %5784 = vrot.lane.b32.xlu0 %v5007, 8
  %v5785 = vpop.permute.xlu0 %5784
  %5786 = vrot.lane.b32.xlu0 %v5008, 8
  %v5787 = vpop.permute.xlu0 %5786
  %5788 = vrot.lane.b32.xlu0 %v5009, 8
  %v5789 = vpop.permute.xlu0 %5788
  %5850 = vst.msk [vmem:[%s881] sm:$0xf] %vm1186, %v5671
  %5851 = vst.msk [vmem:[%s881 + $0x4] sm:$0xf] %vm1186, %v5673
  %5852 = vst.msk [vmem:[%s881 + $0x8] sm:$0xf] %vm1186, %v5675
  %5853 = vst.msk [vmem:[%s881 + $0xc] sm:$0xf] %vm1186, %v5677
  %5854 = vst.msk [vmem:[%s881 + $0x10] sm:$0xf] %vm1186, %v5679
  %5855 = vst.msk [vmem:[%s881 + $0x14] sm:$0xf] %vm1186, %v5681
  %5856 = vst.msk [vmem:[%s881 + $0x18] sm:$0xf] %vm1186, %v5683
  %5857 = vst.msk [vmem:[%s881 + $0x1c] sm:$0xf] %vm1186, %v5685
  %5858 = vst.msk [vmem:[%s881 + $0x20] sm:$0xf] %vm1186, %v5687
  %5859 = vst.msk [vmem:[%s881 + $0x24] sm:$0xf] %vm1186, %v5689
  %5860 = vst.msk [vmem:[%s881 + $0x28] sm:$0xf] %vm1186, %v5691
  %5861 = vst.msk [vmem:[%s881 + $0x2c] sm:$0xf] %vm1186, %v5693
  %5862 = vst.msk [vmem:[%s881 + $0x30] sm:$0xf] %vm1186, %v5695
  %5863 = vst.msk [vmem:[%s881 + $0x34] sm:$0xf] %vm1186, %v5697
  %5864 = vst.msk [vmem:[%s881 + $0x38] sm:$0xf] %vm1186, %v5699
  %5865 = vst.msk [vmem:[%s881 + $0x3c] sm:$0xf] %vm1186, %v5701
  %5866 = vst.msk [vmem:[%s881 + $0x40] sm:$0xf] %vm1186, %v5703
  %5867 = vst.msk [vmem:[%s881 + $0x44] sm:$0xf] %vm1186, %v5705
  %5868 = vst.msk [vmem:[%s881 + $0x48] sm:$0xf] %vm1186, %v5707
  %5869 = vst.msk [vmem:[%s881 + $0x4c] sm:$0xf] %vm1186, %v5709
  %5870 = vst.msk [vmem:[%s881 + $0x50] sm:$0xf] %vm1186, %v5711
  %5871 = vst.msk [vmem:[%s881 + $0x54] sm:$0xf] %vm1186, %v5713
  %5872 = vst.msk [vmem:[%s881 + $0x58] sm:$0xf] %vm1186, %v5715
  %5873 = vst.msk [vmem:[%s881 + $0x5c] sm:$0xf] %vm1186, %v5717
  %5874 = vst.msk [vmem:[%s881 + $0x60] sm:$0xf] %vm1186, %v5719
  %5875 = vst.msk [vmem:[%s881 + $0x64] sm:$0xf] %vm1186, %v5721
  %5876 = vst.msk [vmem:[%s881 + $0x68] sm:$0xf] %vm1186, %v5723
  %5877 = vst.msk [vmem:[%s881 + $0x6c] sm:$0xf] %vm1186, %v5725
  %5878 = vst.msk [vmem:[%s881 + $0x70] sm:$0xf] %vm1186, %v5727
  %5879 = vst.msk [vmem:[%s881 + $0x74] sm:$0xf] %vm1186, %v5729
  %5880 = vst.msk [vmem:[%s881 + $0x80] sm:$0xf] %vm1186, %v5731
  %5881 = vst.msk [vmem:[%s881 + $0x84] sm:$0xf] %vm1186, %v5733
  %5882 = vst.msk [vmem:[%s881 + $0x88] sm:$0xf] %vm1186, %v5735
  %5883 = vst.msk [vmem:[%s881 + $0x8c] sm:$0xf] %vm1186, %v5737
  %5884 = vst.msk [vmem:[%s881 + $0x90] sm:$0xf] %vm1186, %v5739
  %5885 = vst.msk [vmem:[%s881 + $0x94] sm:$0xf] %vm1186, %v5741
  %5886 = vst.msk [vmem:[%s881 + $0x98] sm:$0xf] %vm1186, %v5743
  %5887 = vst.msk [vmem:[%s881 + $0x9c] sm:$0xf] %vm1186, %v5745
  %5888 = vst.msk [vmem:[%s881 + $0xa0] sm:$0xf] %vm1186, %v5747
  %5889 = vst.msk [vmem:[%s881 + $0xa4] sm:$0xf] %vm1186, %v5749
  %5890 = vst.msk [vmem:[%s881 + $0xa8] sm:$0xf] %vm1186, %v5751
  %5891 = vst.msk [vmem:[%s881 + $0xac] sm:$0xf] %vm1186, %v5753
  %5892 = vst.msk [vmem:[%s881 + $0xb0] sm:$0xf] %vm1186, %v5755
  %5893 = vst.msk [vmem:[%s881 + $0xb4] sm:$0xf] %vm1186, %v5757
  %5894 = vst.msk [vmem:[%s881 + $0xb8] sm:$0xf] %vm1186, %v5759
  %5895 = vst.msk [vmem:[%s881 + $0xbc] sm:$0xf] %vm1186, %v5761
  %5896 = vst.msk [vmem:[%s881 + $0xc0] sm:$0xf] %vm1186, %v5763
  %5897 = vst.msk [vmem:[%s881 + $0xc4] sm:$0xf] %vm1186, %v5765
  %5898 = vst.msk [vmem:[%s881 + $0xc8] sm:$0xf] %vm1186, %v5767
  %5899 = vst.msk [vmem:[%s881 + $0xcc] sm:$0xf] %vm1186, %v5769
  %5900 = vst.msk [vmem:[%s881 + $0xd0] sm:$0xf] %vm1186, %v5771
  %5901 = vst.msk [vmem:[%s881 + $0xd4] sm:$0xf] %vm1186, %v5773
  %5902 = vst.msk [vmem:[%s881 + $0xd8] sm:$0xf] %vm1186, %v5775
  %5903 = vst.msk [vmem:[%s881 + $0xdc] sm:$0xf] %vm1186, %v5777
  %5904 = vst.msk [vmem:[%s881 + $0xe0] sm:$0xf] %vm1186, %v5779
  %5905 = vst.msk [vmem:[%s881 + $0xe4] sm:$0xf] %vm1186, %v5781
  %5906 = vst.msk [vmem:[%s881 + $0xe8] sm:$0xf] %vm1186, %v5783
  %5907 = vst.msk [vmem:[%s881 + $0xec] sm:$0xf] %vm1186, %v5785
  %5908 = vst.msk [vmem:[%s881 + $0xf0] sm:$0xf] %vm1186, %v5787
  %5909 = vst.msk [vmem:[%s881 + $0xf4] sm:$0xf] %vm1186, %v5789
  %v5910 = vrot.slane %v5011, 4
  %v5911 = vrot.slane %v5014, 5
  %v5912 = vor.u32 %v5910, %v5911
  %v5913 = vrot.slane %v5912, 4
  %v5914 = vrot.slane %v5022, 5
  %v5915 = vsel %vm1249, %v5913, %v5914
  %v5916 = vrot.slane %v5019, 4
  %v5917 = vor.u32 %v5916, %v5914
  %v5918 = vrot.slane %v5917, 4
  %v5919 = vrot.slane %v5027, 4
  %v5920 = vrot.slane %v5030, 5
  %v5921 = vor.u32 %v5919, %v5920
  %v5922 = vrot.slane %v5921, 4
  %v5923 = vrot.slane %v5038, 5
  %v5924 = vsel %vm1249, %v5922, %v5923
  %v5925 = vrot.slane %v5035, 4
  %v5926 = vor.u32 %v5925, %v5923
  %v5927 = vrot.slane %v5926, 4
  %v5928 = vrot.slane %v5043, 4
  %v5929 = vrot.slane %v5046, 5
  %v5930 = vor.u32 %v5928, %v5929
  %v5931 = vrot.slane %v5930, 4
  %v5932 = vrot.slane %v5054, 5
  %v5933 = vsel %vm1249, %v5931, %v5932
  %v5934 = vrot.slane %v5051, 4
  %v5935 = vor.u32 %v5934, %v5932
  %v5936 = vrot.slane %v5935, 4
  %v5937 = vrot.slane %v5059, 4
  %v5938 = vrot.slane %v5062, 5
  %v5939 = vor.u32 %v5937, %v5938
  %v5940 = vrot.slane %v5939, 4
  %v5941 = vrot.slane %v5070, 5
  %v5942 = vsel %vm1249, %v5940, %v5941
  %v5943 = vrot.slane %v5067, 4
  %v5944 = vor.u32 %v5943, %v5941
  %v5945 = vrot.slane %v5944, 4
  %v5946 = vrot.slane %v5075, 4
  %v5947 = vrot.slane %v5078, 5
  %v5948 = vor.u32 %v5946, %v5947
  %v5949 = vrot.slane %v5948, 4
  %v5950 = vrot.slane %v5086, 5
  %v5951 = vsel %vm1249, %v5949, %v5950
  %v5952 = vrot.slane %v5083, 4
  %v5953 = vor.u32 %v5952, %v5950
  %v5954 = vrot.slane %v5953, 4
  %v5955 = vrot.slane %v5091, 4
  %v5956 = vrot.slane %v5094, 5
  %v5957 = vor.u32 %v5955, %v5956
  %v5958 = vrot.slane %v5957, 4
  %v5959 = vrot.slane %v5102, 5
  %v5960 = vsel %vm1249, %v5958, %v5959
  %v5961 = vrot.slane %v5099, 4
  %v5962 = vor.u32 %v5961, %v5959
  %v5963 = vrot.slane %v5962, 4
  %v5964 = vrot.slane %v5107, 4
  %v5965 = vrot.slane %v5110, 5
  %v5966 = vor.u32 %v5964, %v5965
  %v5967 = vrot.slane %v5966, 4
  %v5968 = vrot.slane %v5118, 5
  %v5969 = vsel %vm1249, %v5967, %v5968
  %v5970 = vrot.slane %v5115, 4
  %v5971 = vor.u32 %v5970, %v5968
  %v5972 = vrot.slane %v5971, 4
  %v5973 = vrot.slane %v5123, 4
  %v5974 = vrot.slane %v5126, 5
  %v5975 = vor.u32 %v5973, %v5974
  %v5976 = vrot.slane %v5975, 4
  %v5977 = vrot.slane %v5134, 5
  %v5978 = vsel %vm1249, %v5976, %v5977
  %v5979 = vrot.slane %v5131, 4
  %v5980 = vor.u32 %v5979, %v5977
  %v5981 = vrot.slane %v5980, 4
  %v5982 = vrot.slane %v5139, 4
  %v5983 = vrot.slane %v5142, 5
  %v5984 = vor.u32 %v5982, %v5983
  %v5985 = vrot.slane %v5984, 4
  %v5986 = vrot.slane %v5150, 5
  %v5987 = vsel %vm1249, %v5985, %v5986
  %v5988 = vrot.slane %v5147, 4
  %v5989 = vor.u32 %v5988, %v5986
  %v5990 = vrot.slane %v5989, 4
  %v5991 = vrot.slane %v5155, 4
  %v5992 = vrot.slane %v5158, 5
  %v5993 = vor.u32 %v5991, %v5992
  %v5994 = vrot.slane %v5993, 4
  %v5995 = vrot.slane %v5166, 5
  %v5996 = vsel %vm1249, %v5994, %v5995
  %v5997 = vrot.slane %v5163, 4
  %v5998 = vor.u32 %v5997, %v5995
  %v5999 = vrot.slane %v5998, 4
  %v6000 = vrot.slane %v5171, 4
  %v6001 = vrot.slane %v5174, 5
  %v6002 = vor.u32 %v6000, %v6001
  %v6003 = vrot.slane %v6002, 4
  %v6004 = vrot.slane %v5182, 5
  %v6005 = vsel %vm1249, %v6003, %v6004
  %v6006 = vrot.slane %v5179, 4
  %v6007 = vor.u32 %v6006, %v6004
  %v6008 = vrot.slane %v6007, 4
  %v6009 = vrot.slane %v5187, 4
  %v6010 = vrot.slane %v5190, 5
  %v6011 = vor.u32 %v6009, %v6010
  %v6012 = vrot.slane %v6011, 4
  %v6013 = vrot.slane %v5198, 5
  %v6014 = vsel %vm1249, %v6012, %v6013
  %v6015 = vrot.slane %v5195, 4
  %v6016 = vor.u32 %v6015, %v6013
  %v6017 = vrot.slane %v6016, 4
  %v6018 = vrot.slane %v5203, 4
  %v6019 = vrot.slane %v5206, 5
  %v6020 = vor.u32 %v6018, %v6019
  %v6021 = vrot.slane %v6020, 4
  %v6022 = vrot.slane %v5214, 5
  %v6023 = vsel %vm1249, %v6021, %v6022
  %v6024 = vrot.slane %v5211, 4
  %v6025 = vor.u32 %v6024, %v6022
  %v6026 = vrot.slane %v6025, 4
  %v6027 = vrot.slane %v5219, 4
  %v6028 = vrot.slane %v5222, 5
  %v6029 = vor.u32 %v6027, %v6028
  %v6030 = vrot.slane %v6029, 4
  %v6031 = vrot.slane %v5230, 5
  %v6032 = vsel %vm1249, %v6030, %v6031
  %v6033 = vrot.slane %v5227, 4
  %v6034 = vor.u32 %v6033, %v6031
  %v6035 = vrot.slane %v6034, 4
  %v6036 = vrot.slane %v5235, 4
  %v6037 = vrot.slane %v5238, 5
  %v6038 = vor.u32 %v6036, %v6037
  %v6039 = vrot.slane %v6038, 4
  %v6040 = vrot.slane %v5246, 5
  %v6041 = vsel %vm1249, %v6039, %v6040
  %v6042 = vrot.slane %v5243, 4
  %v6043 = vor.u32 %v6042, %v6040
  %v6044 = vrot.slane %v6043, 4
  %v6045 = vrot.slane %v5251, 4
  %v6046 = vrot.slane %v5254, 5
  %v6047 = vor.u32 %v6045, %v6046
  %v6048 = vrot.slane %v6047, 4
  %v6049 = vrot.slane %v5262, 5
  %v6050 = vsel %vm1249, %v6048, %v6049
  %v6051 = vrot.slane %v5259, 4
  %v6052 = vor.u32 %v6051, %v6049
  %v6053 = vrot.slane %v6052, 4
  %v6054 = vrot.slane %v5267, 4
  %v6055 = vrot.slane %v5270, 5
  %v6056 = vor.u32 %v6054, %v6055
  %v6057 = vrot.slane %v6056, 4
  %v6058 = vrot.slane %v5278, 5
  %v6059 = vsel %vm1249, %v6057, %v6058
  %v6060 = vrot.slane %v5275, 4
  %v6061 = vor.u32 %v6060, %v6058
  %v6062 = vrot.slane %v6061, 4
  %v6063 = vrot.slane %v5283, 4
  %v6064 = vrot.slane %v5286, 5
  %v6065 = vor.u32 %v6063, %v6064
  %v6066 = vrot.slane %v6065, 4
  %v6067 = vrot.slane %v5294, 5
  %v6068 = vsel %vm1249, %v6066, %v6067
  %v6069 = vrot.slane %v5291, 4
  %v6070 = vor.u32 %v6069, %v6067
  %v6071 = vrot.slane %v6070, 4
  %v6072 = vrot.slane %v5299, 4
  %v6073 = vrot.slane %v5302, 5
  %v6074 = vor.u32 %v6072, %v6073
  %v6075 = vrot.slane %v6074, 4
  %v6076 = vrot.slane %v5310, 5
  %v6077 = vsel %vm1249, %v6075, %v6076
  %v6078 = vrot.slane %v5307, 4
  %v6079 = vor.u32 %v6078, %v6076
  %v6080 = vrot.slane %v6079, 4
  %v6081 = vrot.slane %v5315, 4
  %v6082 = vrot.slane %v5318, 5
  %v6083 = vor.u32 %v6081, %v6082
  %v6084 = vrot.slane %v6083, 4
  %v6085 = vrot.slane %v5326, 5
  %v6086 = vsel %vm1249, %v6084, %v6085
  %v6087 = vrot.slane %v5323, 4
  %v6088 = vor.u32 %v6087, %v6085
  %v6089 = vrot.slane %v6088, 4
  %v6090 = vrot.slane %v5331, 4
  %v6091 = vrot.slane %v5334, 5
  %v6092 = vor.u32 %v6090, %v6091
  %v6093 = vrot.slane %v6092, 4
  %v6094 = vrot.slane %v5342, 5
  %v6095 = vsel %vm1249, %v6093, %v6094
  %v6096 = vrot.slane %v5339, 4
  %v6097 = vor.u32 %v6096, %v6094
  %v6098 = vrot.slane %v6097, 4
  %v6099 = vrot.slane %v5347, 4
  %v6100 = vrot.slane %v5350, 5
  %v6101 = vor.u32 %v6099, %v6100
  %v6102 = vrot.slane %v6101, 4
  %v6103 = vrot.slane %v5358, 5
  %v6104 = vsel %vm1249, %v6102, %v6103
  %v6105 = vrot.slane %v5355, 4
  %v6106 = vor.u32 %v6105, %v6103
  %v6107 = vrot.slane %v6106, 4
  %v6108 = vrot.slane %v5363, 4
  %v6109 = vrot.slane %v5366, 5
  %v6110 = vor.u32 %v6108, %v6109
  %v6111 = vrot.slane %v6110, 4
  %v6112 = vrot.slane %v5374, 5
  %v6113 = vsel %vm1249, %v6111, %v6112
  %v6114 = vrot.slane %v5371, 4
  %v6115 = vor.u32 %v6114, %v6112
  %v6116 = vrot.slane %v6115, 4
  %v6117 = vrot.slane %v5379, 4
  %v6118 = vrot.slane %v5382, 5
  %v6119 = vor.u32 %v6117, %v6118
  %v6120 = vrot.slane %v6119, 4
  %v6121 = vrot.slane %v5390, 5
  %v6122 = vsel %vm1249, %v6120, %v6121
  %v6123 = vrot.slane %v5387, 4
  %v6124 = vor.u32 %v6123, %v6121
  %v6125 = vrot.slane %v6124, 4
  %v6126 = vrot.slane %v5395, 4
  %v6127 = vrot.slane %v5398, 5
  %v6128 = vor.u32 %v6126, %v6127
  %v6129 = vrot.slane %v6128, 4
  %v6130 = vrot.slane %v5406, 5
  %v6131 = vsel %vm1249, %v6129, %v6130
  %v6132 = vrot.slane %v5403, 4
  %v6133 = vor.u32 %v6132, %v6130
  %v6134 = vrot.slane %v6133, 4
  %v6135 = vrot.slane %v5411, 4
  %v6136 = vrot.slane %v5414, 5
  %v6137 = vor.u32 %v6135, %v6136
  %v6138 = vrot.slane %v6137, 4
  %v6139 = vrot.slane %v5422, 5
  %v6140 = vsel %vm1249, %v6138, %v6139
  %v6141 = vrot.slane %v5419, 4
  %v6142 = vor.u32 %v6141, %v6139
  %v6143 = vrot.slane %v6142, 4
  %v6144 = vrot.slane %v5427, 4
  %v6145 = vrot.slane %v5430, 5
  %v6146 = vor.u32 %v6144, %v6145
  %v6147 = vrot.slane %v6146, 4
  %v6148 = vrot.slane %v5438, 5
  %v6149 = vsel %vm1249, %v6147, %v6148
  %v6150 = vrot.slane %v5435, 4
  %v6151 = vor.u32 %v6150, %v6148
  %v6152 = vrot.slane %v6151, 4
  %v6153 = vrot.slane %v5443, 4
  %v6154 = vrot.slane %v5446, 5
  %v6155 = vor.u32 %v6153, %v6154
  %v6156 = vrot.slane %v6155, 4
  %v6157 = vrot.slane %v5454, 5
  %v6158 = vsel %vm1249, %v6156, %v6157
  %v6159 = vrot.slane %v5451, 4
  %v6160 = vor.u32 %v6159, %v6157
  %v6161 = vrot.slane %v6160, 4
  %v6162 = vrot.slane %v5459, 4
  %v6163 = vrot.slane %v5462, 5
  %v6164 = vor.u32 %v6162, %v6163
  %v6165 = vrot.slane %v6164, 4
  %v6166 = vrot.slane %v5470, 5
  %v6167 = vsel %vm1249, %v6165, %v6166
  %v6168 = vrot.slane %v5467, 4
  %v6169 = vor.u32 %v6168, %v6166
  %v6170 = vrot.slane %v6169, 4
  %v6171 = vrot.slane %v5475, 4
  %v6172 = vrot.slane %v5478, 5
  %v6173 = vor.u32 %v6171, %v6172
  %v6174 = vrot.slane %v6173, 4
  %v6175 = vrot.slane %v5486, 5
  %v6176 = vsel %vm1249, %v6174, %v6175
  %v6177 = vrot.slane %v5483, 4
  %v6178 = vor.u32 %v6177, %v6175
  %v6179 = vrot.slane %v6178, 4
  %6180 = vrot.lane.b32.xlu0 %v5915, 16
  %v6181 = vpop.permute.xlu0 %6180
  %6182 = vrot.lane.b32.xlu0 %v5918, 16
  %v6183 = vpop.permute.xlu0 %6182
  %6184 = vrot.lane.b32.xlu0 %v5924, 16
  %v6185 = vpop.permute.xlu0 %6184
  %6186 = vrot.lane.b32.xlu0 %v5927, 16
  %v6187 = vpop.permute.xlu0 %6186
  %6188 = vrot.lane.b32.xlu0 %v5933, 16
  %v6189 = vpop.permute.xlu0 %6188
  %6190 = vrot.lane.b32.xlu0 %v5936, 16
  %v6191 = vpop.permute.xlu0 %6190
  %6192 = vrot.lane.b32.xlu0 %v5942, 16
  %v6193 = vpop.permute.xlu0 %6192
  %6194 = vrot.lane.b32.xlu0 %v5945, 16
  %v6195 = vpop.permute.xlu0 %6194
  %6196 = vrot.lane.b32.xlu0 %v5951, 16
  %v6197 = vpop.permute.xlu0 %6196
  %6198 = vrot.lane.b32.xlu0 %v5954, 16
  %v6199 = vpop.permute.xlu0 %6198
  %6200 = vrot.lane.b32.xlu0 %v5960, 16
  %v6201 = vpop.permute.xlu0 %6200
  %6202 = vrot.lane.b32.xlu0 %v5963, 16
  %v6203 = vpop.permute.xlu0 %6202
  %6204 = vrot.lane.b32.xlu0 %v5969, 16
  %v6205 = vpop.permute.xlu0 %6204
  %6206 = vrot.lane.b32.xlu0 %v5972, 16
  %v6207 = vpop.permute.xlu0 %6206
  %6208 = vrot.lane.b32.xlu0 %v5978, 16
  %v6209 = vpop.permute.xlu0 %6208
  %6210 = vrot.lane.b32.xlu0 %v5981, 16
  %v6211 = vpop.permute.xlu0 %6210
  %6212 = vrot.lane.b32.xlu0 %v5987, 16
  %v6213 = vpop.permute.xlu0 %6212
  %6214 = vrot.lane.b32.xlu0 %v5990, 16
  %v6215 = vpop.permute.xlu0 %6214
  %6216 = vrot.lane.b32.xlu0 %v5996, 16
  %v6217 = vpop.permute.xlu0 %6216
  %6218 = vrot.lane.b32.xlu0 %v5999, 16
  %v6219 = vpop.permute.xlu0 %6218
  %6220 = vrot.lane.b32.xlu0 %v6005, 16
  %v6221 = vpop.permute.xlu0 %6220
  %6222 = vrot.lane.b32.xlu0 %v6008, 16
  %v6223 = vpop.permute.xlu0 %6222
  %6224 = vrot.lane.b32.xlu0 %v6014, 16
  %v6225 = vpop.permute.xlu0 %6224
  %6226 = vrot.lane.b32.xlu0 %v6017, 16
  %v6227 = vpop.permute.xlu0 %6226
  %6228 = vrot.lane.b32.xlu0 %v6023, 16
  %v6229 = vpop.permute.xlu0 %6228
  %6230 = vrot.lane.b32.xlu0 %v6026, 16
  %v6231 = vpop.permute.xlu0 %6230
  %6232 = vrot.lane.b32.xlu0 %v6032, 16
  %v6233 = vpop.permute.xlu0 %6232
  %6234 = vrot.lane.b32.xlu0 %v6035, 16
  %v6235 = vpop.permute.xlu0 %6234
  %6236 = vrot.lane.b32.xlu0 %v6041, 16
  %v6237 = vpop.permute.xlu0 %6236
  %6238 = vrot.lane.b32.xlu0 %v6044, 16
  %v6239 = vpop.permute.xlu0 %6238
  %6240 = vrot.lane.b32.xlu0 %v6050, 16
  %v6241 = vpop.permute.xlu0 %6240
  %6242 = vrot.lane.b32.xlu0 %v6053, 16
  %v6243 = vpop.permute.xlu0 %6242
  %6244 = vrot.lane.b32.xlu0 %v6059, 16
  %v6245 = vpop.permute.xlu0 %6244
  %6246 = vrot.lane.b32.xlu0 %v6062, 16
  %v6247 = vpop.permute.xlu0 %6246
  %6248 = vrot.lane.b32.xlu0 %v6068, 16
  %v6249 = vpop.permute.xlu0 %6248
  %6250 = vrot.lane.b32.xlu0 %v6071, 16
  %v6251 = vpop.permute.xlu0 %6250
  %6252 = vrot.lane.b32.xlu0 %v6077, 16
  %v6253 = vpop.permute.xlu0 %6252
  %6254 = vrot.lane.b32.xlu0 %v6080, 16
  %v6255 = vpop.permute.xlu0 %6254
  %6256 = vrot.lane.b32.xlu0 %v6086, 16
  %v6257 = vpop.permute.xlu0 %6256
  %6258 = vrot.lane.b32.xlu0 %v6089, 16
  %v6259 = vpop.permute.xlu0 %6258
  %6260 = vrot.lane.b32.xlu0 %v6095, 16
  %v6261 = vpop.permute.xlu0 %6260
  %6262 = vrot.lane.b32.xlu0 %v6098, 16
  %v6263 = vpop.permute.xlu0 %6262
  %6264 = vrot.lane.b32.xlu0 %v6104, 16
  %v6265 = vpop.permute.xlu0 %6264
  %6266 = vrot.lane.b32.xlu0 %v6107, 16
  %v6267 = vpop.permute.xlu0 %6266
  %6268 = vrot.lane.b32.xlu0 %v6113, 16
  %v6269 = vpop.permute.xlu0 %6268
  %6270 = vrot.lane.b32.xlu0 %v6116, 16
  %v6271 = vpop.permute.xlu0 %6270
  %6272 = vrot.lane.b32.xlu0 %v6122, 16
  %v6273 = vpop.permute.xlu0 %6272
  %6274 = vrot.lane.b32.xlu0 %v6125, 16
  %v6275 = vpop.permute.xlu0 %6274
  %6276 = vrot.lane.b32.xlu0 %v6131, 16
  %v6277 = vpop.permute.xlu0 %6276
  %6278 = vrot.lane.b32.xlu0 %v6134, 16
  %v6279 = vpop.permute.xlu0 %6278
  %6280 = vrot.lane.b32.xlu0 %v6140, 16
  %v6281 = vpop.permute.xlu0 %6280
  %6282 = vrot.lane.b32.xlu0 %v6143, 16
  %v6283 = vpop.permute.xlu0 %6282
  %6284 = vrot.lane.b32.xlu0 %v6149, 16
  %v6285 = vpop.permute.xlu0 %6284
  %6286 = vrot.lane.b32.xlu0 %v6152, 16
  %v6287 = vpop.permute.xlu0 %6286
  %6288 = vrot.lane.b32.xlu0 %v6158, 16
  %v6289 = vpop.permute.xlu0 %6288
  %6290 = vrot.lane.b32.xlu0 %v6161, 16
  %v6291 = vpop.permute.xlu0 %6290
  %6292 = vrot.lane.b32.xlu0 %v6167, 16
  %v6293 = vpop.permute.xlu0 %6292
  %6294 = vrot.lane.b32.xlu0 %v6170, 16
  %v6295 = vpop.permute.xlu0 %6294
  %6296 = vrot.lane.b32.xlu0 %v6176, 16
  %v6297 = vpop.permute.xlu0 %6296
  %6298 = vrot.lane.b32.xlu0 %v6179, 16
  %v6299 = vpop.permute.xlu0 %6298
  %6360 = vst.msk [vmem:[%s881] sm:$0xf] %vm1700, %v6181
  %v6361 = vld [vmem:[%s881 + $0x4] sm:$0xf]
  %v6362 = vsel %vm1703, %v6183, %v6361
  %6363 = vst [vmem:[%s881 + $0x4] sm:$0xf] %v6362
  %6364 = vst.msk [vmem:[%s881 + $0x8] sm:$0xf] %vm1700, %v6185
  %v6365 = vld [vmem:[%s881 + $0xc] sm:$0xf]
  %v6366 = vsel %vm1703, %v6187, %v6365
  %6367 = vst [vmem:[%s881 + $0xc] sm:$0xf] %v6366
  %6368 = vst.msk [vmem:[%s881 + $0x10] sm:$0xf] %vm1700, %v6189
  %v6369 = vld [vmem:[%s881 + $0x14] sm:$0xf]
  %v6370 = vsel %vm1703, %v6191, %v6369
  %6371 = vst [vmem:[%s881 + $0x14] sm:$0xf] %v6370
  %6372 = vst.msk [vmem:[%s881 + $0x18] sm:$0xf] %vm1700, %v6193
  %v6373 = vld [vmem:[%s881 + $0x1c] sm:$0xf]
  %v6374 = vsel %vm1703, %v6195, %v6373
  %6375 = vst [vmem:[%s881 + $0x1c] sm:$0xf] %v6374
  %6376 = vst.msk [vmem:[%s881 + $0x20] sm:$0xf] %vm1700, %v6197
  %v6377 = vld [vmem:[%s881 + $0x24] sm:$0xf]
  %v6378 = vsel %vm1703, %v6199, %v6377
  %6379 = vst [vmem:[%s881 + $0x24] sm:$0xf] %v6378
  %6380 = vst.msk [vmem:[%s881 + $0x28] sm:$0xf] %vm1700, %v6201
  %v6381 = vld [vmem:[%s881 + $0x2c] sm:$0xf]
  %v6382 = vsel %vm1703, %v6203, %v6381
  %6383 = vst [vmem:[%s881 + $0x2c] sm:$0xf] %v6382
  %6384 = vst.msk [vmem:[%s881 + $0x30] sm:$0xf] %vm1700, %v6205
  %v6385 = vld [vmem:[%s881 + $0x34] sm:$0xf]
  %v6386 = vsel %vm1703, %v6207, %v6385
  %6387 = vst [vmem:[%s881 + $0x34] sm:$0xf] %v6386
  %6388 = vst.msk [vmem:[%s881 + $0x38] sm:$0xf] %vm1700, %v6209
  %v6389 = vld [vmem:[%s881 + $0x3c] sm:$0xf]
  %v6390 = vsel %vm1703, %v6211, %v6389
  %6391 = vst [vmem:[%s881 + $0x3c] sm:$0xf] %v6390
  %6392 = vst.msk [vmem:[%s881 + $0x40] sm:$0xf] %vm1700, %v6213
  %v6393 = vld [vmem:[%s881 + $0x44] sm:$0xf]
  %v6394 = vsel %vm1703, %v6215, %v6393
  %6395 = vst [vmem:[%s881 + $0x44] sm:$0xf] %v6394
  %6396 = vst.msk [vmem:[%s881 + $0x48] sm:$0xf] %vm1700, %v6217
  %v6397 = vld [vmem:[%s881 + $0x4c] sm:$0xf]
  %v6398 = vsel %vm1703, %v6219, %v6397
  %6399 = vst [vmem:[%s881 + $0x4c] sm:$0xf] %v6398
  %6400 = vst.msk [vmem:[%s881 + $0x50] sm:$0xf] %vm1700, %v6221
  %v6401 = vld [vmem:[%s881 + $0x54] sm:$0xf]
  %v6402 = vsel %vm1703, %v6223, %v6401
  %6403 = vst [vmem:[%s881 + $0x54] sm:$0xf] %v6402
  %6404 = vst.msk [vmem:[%s881 + $0x58] sm:$0xf] %vm1700, %v6225
  %v6405 = vld [vmem:[%s881 + $0x5c] sm:$0xf]
  %v6406 = vsel %vm1703, %v6227, %v6405
  %6407 = vst [vmem:[%s881 + $0x5c] sm:$0xf] %v6406
  %6408 = vst.msk [vmem:[%s881 + $0x60] sm:$0xf] %vm1700, %v6229
  %v6409 = vld [vmem:[%s881 + $0x64] sm:$0xf]
  %v6410 = vsel %vm1703, %v6231, %v6409
  %6411 = vst [vmem:[%s881 + $0x64] sm:$0xf] %v6410
  %6412 = vst.msk [vmem:[%s881 + $0x68] sm:$0xf] %vm1700, %v6233
  %v6413 = vld [vmem:[%s881 + $0x6c] sm:$0xf]
  %v6414 = vsel %vm1703, %v6235, %v6413
  %6415 = vst [vmem:[%s881 + $0x6c] sm:$0xf] %v6414
  %6416 = vst.msk [vmem:[%s881 + $0x70] sm:$0xf] %vm1700, %v6237
  %v6417 = vld [vmem:[%s881 + $0x74] sm:$0xf]
  %v6418 = vsel %vm1703, %v6239, %v6417
  %6419 = vst [vmem:[%s881 + $0x74] sm:$0xf] %v6418
  %6420 = vst.msk [vmem:[%s881 + $0x80] sm:$0xf] %vm1700, %v6241
  %v6421 = vld [vmem:[%s881 + $0x84] sm:$0xf]
  %v6422 = vsel %vm1703, %v6243, %v6421
  %6423 = vst [vmem:[%s881 + $0x84] sm:$0xf] %v6422
  %6424 = vst.msk [vmem:[%s881 + $0x88] sm:$0xf] %vm1700, %v6245
  %v6425 = vld [vmem:[%s881 + $0x8c] sm:$0xf]
  %v6426 = vsel %vm1703, %v6247, %v6425
  %6427 = vst [vmem:[%s881 + $0x8c] sm:$0xf] %v6426
  %6428 = vst.msk [vmem:[%s881 + $0x90] sm:$0xf] %vm1700, %v6249
  %v6429 = vld [vmem:[%s881 + $0x94] sm:$0xf]
  %v6430 = vsel %vm1703, %v6251, %v6429
  %6431 = vst [vmem:[%s881 + $0x94] sm:$0xf] %v6430
  %6432 = vst.msk [vmem:[%s881 + $0x98] sm:$0xf] %vm1700, %v6253
  %v6433 = vld [vmem:[%s881 + $0x9c] sm:$0xf]
  %v6434 = vsel %vm1703, %v6255, %v6433
  %6435 = vst [vmem:[%s881 + $0x9c] sm:$0xf] %v6434
  %6436 = vst.msk [vmem:[%s881 + $0xa0] sm:$0xf] %vm1700, %v6257
  %v6437 = vld [vmem:[%s881 + $0xa4] sm:$0xf]
  %v6438 = vsel %vm1703, %v6259, %v6437
  %6439 = vst [vmem:[%s881 + $0xa4] sm:$0xf] %v6438
  %6440 = vst.msk [vmem:[%s881 + $0xa8] sm:$0xf] %vm1700, %v6261
  %v6441 = vld [vmem:[%s881 + $0xac] sm:$0xf]
  %v6442 = vsel %vm1703, %v6263, %v6441
  %6443 = vst [vmem:[%s881 + $0xac] sm:$0xf] %v6442
  %6444 = vst.msk [vmem:[%s881 + $0xb0] sm:$0xf] %vm1700, %v6265
  %v6445 = vld [vmem:[%s881 + $0xb4] sm:$0xf]
  %v6446 = vsel %vm1703, %v6267, %v6445
  %6447 = vst [vmem:[%s881 + $0xb4] sm:$0xf] %v6446
  %6448 = vst.msk [vmem:[%s881 + $0xb8] sm:$0xf] %vm1700, %v6269
  %v6449 = vld [vmem:[%s881 + $0xbc] sm:$0xf]
  %v6450 = vsel %vm1703, %v6271, %v6449
  %6451 = vst [vmem:[%s881 + $0xbc] sm:$0xf] %v6450
  %6452 = vst.msk [vmem:[%s881 + $0xc0] sm:$0xf] %vm1700, %v6273
  %v6453 = vld [vmem:[%s881 + $0xc4] sm:$0xf]
  %v6454 = vsel %vm1703, %v6275, %v6453
  %6455 = vst [vmem:[%s881 + $0xc4] sm:$0xf] %v6454
  %6456 = vst.msk [vmem:[%s881 + $0xc8] sm:$0xf] %vm1700, %v6277
  %v6457 = vld [vmem:[%s881 + $0xcc] sm:$0xf]
  %v6458 = vsel %vm1703, %v6279, %v6457
  %6459 = vst [vmem:[%s881 + $0xcc] sm:$0xf] %v6458
  %6460 = vst.msk [vmem:[%s881 + $0xd0] sm:$0xf] %vm1700, %v6281
  %v6461 = vld [vmem:[%s881 + $0xd4] sm:$0xf]
  %v6462 = vsel %vm1703, %v6283, %v6461
  %6463 = vst [vmem:[%s881 + $0xd4] sm:$0xf] %v6462
  %6464 = vst.msk [vmem:[%s881 + $0xd8] sm:$0xf] %vm1700, %v6285
  %v6465 = vld [vmem:[%s881 + $0xdc] sm:$0xf]
  %v6466 = vsel %vm1703, %v6287, %v6465
  %6467 = vst [vmem:[%s881 + $0xdc] sm:$0xf] %v6466
  %6468 = vst.msk [vmem:[%s881 + $0xe0] sm:$0xf] %vm1700, %v6289
  %v6469 = vld [vmem:[%s881 + $0xe4] sm:$0xf]
  %v6470 = vsel %vm1703, %v6291, %v6469
  %6471 = vst [vmem:[%s881 + $0xe4] sm:$0xf] %v6470
  %6472 = vst.msk [vmem:[%s881 + $0xe8] sm:$0xf] %vm1700, %v6293
  %v6473 = vld [vmem:[%s881 + $0xec] sm:$0xf]
  %v6474 = vsel %vm1703, %v6295, %v6473
  %6475 = vst [vmem:[%s881 + $0xec] sm:$0xf] %v6474
  %6476 = vst.msk [vmem:[%s881 + $0xf0] sm:$0xf] %vm1700, %v6297
  %v6477 = vld [vmem:[%s881 + $0xf4] sm:$0xf]
  %v6478 = vsel %vm1703, %v6299, %v6477
  %6479 = vst [vmem:[%s881 + $0xf4] sm:$0xf] %v6478
  %v6482 = vunpack.c.l.b16 %v4843
  %v6483 = vunpack.c.h.b16 %v4843
  %v6484 = vunpack.c.l.b16 %v4859
  %v6485 = vunpack.c.h.b16 %v4859
  %v6486 = vpack.c.b16 %v6482, %v6482
  %v6487 = vpack.c.b16 %v6483, %v6483
  %v6488 = vpack.c.b16 %v6484, %v6484
  %v6489 = vpack.c.b16 %v6485, %v6485
  %v6491 = vshrl.u32 %v6486, 16
  %v6493 = vrot.slane %v6491, 7
  %v6494 = vshll.u32 %v6486, 16
  %v6496 = vor.u32 %v6493, %v6494
  %v6497 = vrot.slane %v6493, 4
  %v6499 = vshrl.u32 %v6487, 16
  %v6501 = vrot.slane %v6499, 7
  %v6502 = vshll.u32 %v6487, 16
  %v6504 = vor.u32 %v6501, %v6502
  %v6505 = vsel %vm340, %v6497, %v6504
  %v6507 = vshrl.u32 %v6488, 16
  %v6509 = vrot.slane %v6507, 7
  %v6510 = vshll.u32 %v6488, 16
  %v6512 = vor.u32 %v6509, %v6510
  %v6513 = vrot.slane %v6509, 4
  %v6515 = vshrl.u32 %v6489, 16
  %v6517 = vrot.slane %v6515, 7
  %v6518 = vshll.u32 %v6489, 16
  %v6520 = vor.u32 %v6517, %v6518
  %v6521 = vsel %vm340, %v6513, %v6520
  %6522 = vrot.lane.b32.xlu0 %v5016, 24
  %v6523 = vpop.permute.xlu0 %6522
  %6524 = vrot.lane.b32.xlu0 %v5025, 24
  %v6525 = vpop.permute.xlu0 %6524
  %6526 = vrot.lane.b32.xlu0 %v5032, 24
  %v6527 = vpop.permute.xlu0 %6526
  %6528 = vrot.lane.b32.xlu0 %v5041, 24
  %v6529 = vpop.permute.xlu0 %6528
  %6530 = vrot.lane.b32.xlu0 %v5048, 24
  %v6531 = vpop.permute.xlu0 %6530
  %6532 = vrot.lane.b32.xlu0 %v5057, 24
  %v6533 = vpop.permute.xlu0 %6532
  %6534 = vrot.lane.b32.xlu0 %v5064, 24
  %v6535 = vpop.permute.xlu0 %6534
  %6536 = vrot.lane.b32.xlu0 %v5073, 24
  %v6537 = vpop.permute.xlu0 %6536
  %6538 = vrot.lane.b32.xlu0 %v5080, 24
  %v6539 = vpop.permute.xlu0 %6538
  %6540 = vrot.lane.b32.xlu0 %v5089, 24
  %v6541 = vpop.permute.xlu0 %6540
  %6542 = vrot.lane.b32.xlu0 %v5096, 24
  %v6543 = vpop.permute.xlu0 %6542
  %6544 = vrot.lane.b32.xlu0 %v5105, 24
  %v6545 = vpop.permute.xlu0 %6544
  %6546 = vrot.lane.b32.xlu0 %v5112, 24
  %v6547 = vpop.permute.xlu0 %6546
  %6548 = vrot.lane.b32.xlu0 %v5121, 24
  %v6549 = vpop.permute.xlu0 %6548
  %6550 = vrot.lane.b32.xlu0 %v5128, 24
  %v6551 = vpop.permute.xlu0 %6550
  %6552 = vrot.lane.b32.xlu0 %v5137, 24
  %v6553 = vpop.permute.xlu0 %6552
  %6554 = vrot.lane.b32.xlu0 %v5144, 24
  %v6555 = vpop.permute.xlu0 %6554
  %6556 = vrot.lane.b32.xlu0 %v5153, 24
  %v6557 = vpop.permute.xlu0 %6556
  %6558 = vrot.lane.b32.xlu0 %v5160, 24
  %v6559 = vpop.permute.xlu0 %6558
  %6560 = vrot.lane.b32.xlu0 %v5169, 24
  %v6561 = vpop.permute.xlu0 %6560
  %6562 = vrot.lane.b32.xlu0 %v5176, 24
  %v6563 = vpop.permute.xlu0 %6562
  %6564 = vrot.lane.b32.xlu0 %v5185, 24
  %v6565 = vpop.permute.xlu0 %6564
  %6566 = vrot.lane.b32.xlu0 %v5192, 24
  %v6567 = vpop.permute.xlu0 %6566
  %6568 = vrot.lane.b32.xlu0 %v5201, 24
  %v6569 = vpop.permute.xlu0 %6568
  %6570 = vrot.lane.b32.xlu0 %v5208, 24
  %v6571 = vpop.permute.xlu0 %6570
  %6572 = vrot.lane.b32.xlu0 %v5217, 24
  %v6573 = vpop.permute.xlu0 %6572
  %6574 = vrot.lane.b32.xlu0 %v5224, 24
  %v6575 = vpop.permute.xlu0 %6574
  %6576 = vrot.lane.b32.xlu0 %v5233, 24
  %v6577 = vpop.permute.xlu0 %6576
  %6578 = vrot.lane.b32.xlu0 %v5240, 24
  %v6579 = vpop.permute.xlu0 %6578
  %6580 = vrot.lane.b32.xlu0 %v5249, 24
  %v6581 = vpop.permute.xlu0 %6580
  %6582 = vrot.lane.b32.xlu0 %v6496, 24
  %v6583 = vpop.permute.xlu0 %6582
  %6584 = vrot.lane.b32.xlu0 %v6505, 24
  %v6585 = vpop.permute.xlu0 %6584
  %6586 = vrot.lane.b32.xlu0 %v5256, 24
  %v6587 = vpop.permute.xlu0 %6586
  %6588 = vrot.lane.b32.xlu0 %v5265, 24
  %v6589 = vpop.permute.xlu0 %6588
  %6590 = vrot.lane.b32.xlu0 %v5272, 24
  %v6591 = vpop.permute.xlu0 %6590
  %6592 = vrot.lane.b32.xlu0 %v5281, 24
  %v6593 = vpop.permute.xlu0 %6592
  %6594 = vrot.lane.b32.xlu0 %v5288, 24
  %v6595 = vpop.permute.xlu0 %6594
  %6596 = vrot.lane.b32.xlu0 %v5297, 24
  %v6597 = vpop.permute.xlu0 %6596
  %6598 = vrot.lane.b32.xlu0 %v5304, 24
  %v6599 = vpop.permute.xlu0 %6598
  %6600 = vrot.lane.b32.xlu0 %v5313, 24
  %v6601 = vpop.permute.xlu0 %6600
  %6602 = vrot.lane.b32.xlu0 %v5320, 24
  %v6603 = vpop.permute.xlu0 %6602
  %6604 = vrot.lane.b32.xlu0 %v5329, 24
  %v6605 = vpop.permute.xlu0 %6604
  %6606 = vrot.lane.b32.xlu0 %v5336, 24
  %v6607 = vpop.permute.xlu0 %6606
  %6608 = vrot.lane.b32.xlu0 %v5345, 24
  %v6609 = vpop.permute.xlu0 %6608
  %6610 = vrot.lane.b32.xlu0 %v5352, 24
  %v6611 = vpop.permute.xlu0 %6610
  %6612 = vrot.lane.b32.xlu0 %v5361, 24
  %v6613 = vpop.permute.xlu0 %6612
  %6614 = vrot.lane.b32.xlu0 %v5368, 24
  %v6615 = vpop.permute.xlu0 %6614
  %6616 = vrot.lane.b32.xlu0 %v5377, 24
  %v6617 = vpop.permute.xlu0 %6616
  %6618 = vrot.lane.b32.xlu0 %v5384, 24
  %v6619 = vpop.permute.xlu0 %6618
  %6620 = vrot.lane.b32.xlu0 %v5393, 24
  %v6621 = vpop.permute.xlu0 %6620
  %6622 = vrot.lane.b32.xlu0 %v5400, 24
  %v6623 = vpop.permute.xlu0 %6622
  %6624 = vrot.lane.b32.xlu0 %v5409, 24
  %v6625 = vpop.permute.xlu0 %6624
  %6626 = vrot.lane.b32.xlu0 %v5416, 24
  %v6627 = vpop.permute.xlu0 %6626
  %6628 = vrot.lane.b32.xlu0 %v5425, 24
  %v6629 = vpop.permute.xlu0 %6628
  %6630 = vrot.lane.b32.xlu0 %v5432, 24
  %v6631 = vpop.permute.xlu0 %6630
  %6632 = vrot.lane.b32.xlu0 %v5441, 24
  %v6633 = vpop.permute.xlu0 %6632
  %6634 = vrot.lane.b32.xlu0 %v5448, 24
  %v6635 = vpop.permute.xlu0 %6634
  %6636 = vrot.lane.b32.xlu0 %v5457, 24
  %v6637 = vpop.permute.xlu0 %6636
  %6638 = vrot.lane.b32.xlu0 %v5464, 24
  %v6639 = vpop.permute.xlu0 %6638
  %6640 = vrot.lane.b32.xlu0 %v5473, 24
  %v6641 = vpop.permute.xlu0 %6640
  %6642 = vrot.lane.b32.xlu0 %v5480, 24
  %v6643 = vpop.permute.xlu0 %6642
  %6644 = vrot.lane.b32.xlu0 %v5489, 24
  %v6645 = vpop.permute.xlu0 %6644
  %6646 = vrot.lane.b32.xlu0 %v6512, 24
  %v6647 = vpop.permute.xlu0 %6646
  %6648 = vrot.lane.b32.xlu0 %v6521, 24
  %v6649 = vpop.permute.xlu0 %6648
  %v6714 = vld [vmem:[#allocation2] sm:$0xf]
  %v6715 = vsel %vm2058, %v6523, %v6714
  %6716 = vst [vmem:[#allocation2] sm:$0xf] %v6715
  %6717 = vst.msk [vmem:[#allocation2 + $0x4] sm:$0xf] %vm2062, %v6525
  %v6718 = vld [vmem:[#allocation2 + $0x8] sm:$0xf]
  %v6719 = vsel %vm2058, %v6527, %v6718
  %6720 = vst [vmem:[#allocation2 + $0x8] sm:$0xf] %v6719
  %6721 = vst.msk [vmem:[#allocation2 + $0xc] sm:$0xf] %vm2062, %v6529
  %v6722 = vld [vmem:[#allocation2 + $0x10] sm:$0xf]
  %v6723 = vsel %vm2058, %v6531, %v6722
  %6724 = vst [vmem:[#allocation2 + $0x10] sm:$0xf] %v6723
  %6725 = vst.msk [vmem:[#allocation2 + $0x14] sm:$0xf] %vm2062, %v6533
  %v6726 = vld [vmem:[#allocation2 + $0x18] sm:$0xf]
  %v6727 = vsel %vm2058, %v6535, %v6726
  %6728 = vst [vmem:[#allocation2 + $0x18] sm:$0xf] %v6727
  %6729 = vst.msk [vmem:[#allocation2 + $0x1c] sm:$0xf] %vm2062, %v6537
  %v6730 = vld [vmem:[#allocation2 + $0x20] sm:$0xf]
  %v6731 = vsel %vm2058, %v6539, %v6730
  %6732 = vst [vmem:[#allocation2 + $0x20] sm:$0xf] %v6731
  %6733 = vst.msk [vmem:[#allocation2 + $0x24] sm:$0xf] %vm2062, %v6541
  %v6734 = vld [vmem:[#allocation2 + $0x28] sm:$0xf]
  %v6735 = vsel %vm2058, %v6543, %v6734
  %6736 = vst [vmem:[#allocation2 + $0x28] sm:$0xf] %v6735
  %6737 = vst.msk [vmem:[#allocation2 + $0x2c] sm:$0xf] %vm2062, %v6545
  %v6738 = vld [vmem:[#allocation2 + $0x30] sm:$0xf]
  %v6739 = vsel %vm2058, %v6547, %v6738
  %6740 = vst [vmem:[#allocation2 + $0x30] sm:$0xf] %v6739
  %6741 = vst.msk [vmem:[#allocation2 + $0x34] sm:$0xf] %vm2062, %v6549
  %v6742 = vld [vmem:[#allocation2 + $0x38] sm:$0xf]
  %v6743 = vsel %vm2058, %v6551, %v6742
  %6744 = vst [vmem:[#allocation2 + $0x38] sm:$0xf] %v6743
  %6745 = vst.msk [vmem:[#allocation2 + $0x3c] sm:$0xf] %vm2062, %v6553
  %v6746 = vld [vmem:[#allocation2 + $0x40] sm:$0xf]
  %v6747 = vsel %vm2058, %v6555, %v6746
  %6748 = vst [vmem:[#allocation2 + $0x40] sm:$0xf] %v6747
  %6749 = vst.msk [vmem:[#allocation2 + $0x44] sm:$0xf] %vm2062, %v6557
  %v6750 = vld [vmem:[#allocation2 + $0x48] sm:$0xf]
  %v6751 = vsel %vm2058, %v6559, %v6750
  %6752 = vst [vmem:[#allocation2 + $0x48] sm:$0xf] %v6751
  %6753 = vst.msk [vmem:[#allocation2 + $0x4c] sm:$0xf] %vm2062, %v6561
  %v6754 = vld [vmem:[#allocation2 + $0x50] sm:$0xf]
  %v6755 = vsel %vm2058, %v6563, %v6754
  %6756 = vst [vmem:[#allocation2 + $0x50] sm:$0xf] %v6755
  %6757 = vst.msk [vmem:[#allocation2 + $0x54] sm:$0xf] %vm2062, %v6565
  %v6758 = vld [vmem:[#allocation2 + $0x58] sm:$0xf]
  %v6759 = vsel %vm2058, %v6567, %v6758
  %6760 = vst [vmem:[#allocation2 + $0x58] sm:$0xf] %v6759
  %6761 = vst.msk [vmem:[#allocation2 + $0x5c] sm:$0xf] %vm2062, %v6569
  %v6762 = vld [vmem:[#allocation2 + $0x60] sm:$0xf]
  %v6763 = vsel %vm2058, %v6571, %v6762
  %6764 = vst [vmem:[#allocation2 + $0x60] sm:$0xf] %v6763
  %6765 = vst.msk [vmem:[#allocation2 + $0x64] sm:$0xf] %vm2062, %v6573
  %v6766 = vld [vmem:[#allocation2 + $0x68] sm:$0xf]
  %v6767 = vsel %vm2058, %v6575, %v6766
  %6768 = vst [vmem:[#allocation2 + $0x68] sm:$0xf] %v6767
  %6769 = vst.msk [vmem:[#allocation2 + $0x6c] sm:$0xf] %vm2062, %v6577
  %v6770 = vld [vmem:[#allocation2 + $0x70] sm:$0xf]
  %v6771 = vsel %vm2058, %v6579, %v6770
  %6772 = vst [vmem:[#allocation2 + $0x70] sm:$0xf] %v6771
  %6773 = vst.msk [vmem:[#allocation2 + $0x74] sm:$0xf] %vm2062, %v6581
  %v6774 = vld [vmem:[#allocation2 + $0x78] sm:$0xf]
  %v6775 = vsel %vm2058, %v6583, %v6774
  %6776 = vst [vmem:[#allocation2 + $0x78] sm:$0xf] %v6775
  %6777 = vst.msk [vmem:[#allocation2 + $0x7c] sm:$0xf] %vm2062, %v6585
  %v6778 = vld [vmem:[#allocation2 + $0x80] sm:$0xf]
  %v6779 = vsel %vm2058, %v6587, %v6778
  %6780 = vst [vmem:[#allocation2 + $0x80] sm:$0xf] %v6779
  %6781 = vst.msk [vmem:[#allocation2 + $0x84] sm:$0xf] %vm2062, %v6589
  %v6782 = vld [vmem:[#allocation2 + $0x88] sm:$0xf]
  %v6783 = vsel %vm2058, %v6591, %v6782
  %6784 = vst [vmem:[#allocation2 + $0x88] sm:$0xf] %v6783
  %6785 = vst.msk [vmem:[#allocation2 + $0x8c] sm:$0xf] %vm2062, %v6593
  %v6786 = vld [vmem:[#allocation2 + $0x90] sm:$0xf]
  %v6787 = vsel %vm2058, %v6595, %v6786
  %6788 = vst [vmem:[#allocation2 + $0x90] sm:$0xf] %v6787
  %6789 = vst.msk [vmem:[#allocation2 + $0x94] sm:$0xf] %vm2062, %v6597
  %v6790 = vld [vmem:[#allocation2 + $0x98] sm:$0xf]
  %v6791 = vsel %vm2058, %v6599, %v6790
  %6792 = vst [vmem:[#allocation2 + $0x98] sm:$0xf] %v6791
  %6793 = vst.msk [vmem:[#allocation2 + $0x9c] sm:$0xf] %vm2062, %v6601
  %v6794 = vld [vmem:[#allocation2 + $0xa0] sm:$0xf]
  %v6795 = vsel %vm2058, %v6603, %v6794
  %6796 = vst [vmem:[#allocation2 + $0xa0] sm:$0xf] %v6795
  %6797 = vst.msk [vmem:[#allocation2 + $0xa4] sm:$0xf] %vm2062, %v6605
  %v6798 = vld [vmem:[#allocation2 + $0xa8] sm:$0xf]
  %v6799 = vsel %vm2058, %v6607, %v6798
  %6800 = vst [vmem:[#allocation2 + $0xa8] sm:$0xf] %v6799
  %6801 = vst.msk [vmem:[#allocation2 + $0xac] sm:$0xf] %vm2062, %v6609
  %v6802 = vld [vmem:[#allocation2 + $0xb0] sm:$0xf]
  %v6803 = vsel %vm2058, %v6611, %v6802
  %6804 = vst [vmem:[#allocation2 + $0xb0] sm:$0xf] %v6803
  %6805 = vst.msk [vmem:[#allocation2 + $0xb4] sm:$0xf] %vm2062, %v6613
  %v6806 = vld [vmem:[#allocation2 + $0xb8] sm:$0xf]
  %v6807 = vsel %vm2058, %v6615, %v6806
  %6808 = vst [vmem:[#allocation2 + $0xb8] sm:$0xf] %v6807
  %6809 = vst.msk [vmem:[#allocation2 + $0xbc] sm:$0xf] %vm2062, %v6617
  %v6810 = vld [vmem:[#allocation2 + $0xc0] sm:$0xf]
  %v6811 = vsel %vm2058, %v6619, %v6810
  %6812 = vst [vmem:[#allocation2 + $0xc0] sm:$0xf] %v6811
  %6813 = vst.msk [vmem:[#allocation2 + $0xc4] sm:$0xf] %vm2062, %v6621
  %v6814 = vld [vmem:[#allocation2 + $0xc8] sm:$0xf]
  %v6815 = vsel %vm2058, %v6623, %v6814
  %6816 = vst [vmem:[#allocation2 + $0xc8] sm:$0xf] %v6815
  %6817 = vst.msk [vmem:[#allocation2 + $0xcc] sm:$0xf] %vm2062, %v6625
  %v6818 = vld [vmem:[#allocation2 + $0xd0] sm:$0xf]
  %v6819 = vsel %vm2058, %v6627, %v6818
  %6820 = vst [vmem:[#allocation2 + $0xd0] sm:$0xf] %v6819
  %6821 = vst.msk [vmem:[#allocation2 + $0xd4] sm:$0xf] %vm2062, %v6629
  %v6822 = vld [vmem:[#allocation2 + $0xd8] sm:$0xf]
  %v6823 = vsel %vm2058, %v6631, %v6822
  %6824 = vst [vmem:[#allocation2 + $0xd8] sm:$0xf] %v6823
  %6825 = vst.msk [vmem:[#allocation2 + $0xdc] sm:$0xf] %vm2062, %v6633
  %v6826 = vld [vmem:[#allocation2 + $0xe0] sm:$0xf]
  %v6827 = vsel %vm2058, %v6635, %v6826
  %6828 = vst [vmem:[#allocation2 + $0xe0] sm:$0xf] %v6827
  %6829 = vst.msk [vmem:[#allocation2 + $0xe4] sm:$0xf] %vm2062, %v6637
  %v6830 = vld [vmem:[#allocation2 + $0xe8] sm:$0xf]
  %v6831 = vsel %vm2058, %v6639, %v6830
  %6832 = vst [vmem:[#allocation2 + $0xe8] sm:$0xf] %v6831
  %6833 = vst.msk [vmem:[#allocation2 + $0xec] sm:$0xf] %vm2062, %v6641
  %v6834 = vld [vmem:[#allocation2 + $0xf0] sm:$0xf]
  %v6835 = vsel %vm2058, %v6643, %v6834
  %6836 = vst [vmem:[#allocation2 + $0xf0] sm:$0xf] %v6835
  %6837 = vst.msk [vmem:[#allocation2 + $0xf4] sm:$0xf] %vm2062, %v6645
  %v6838 = vld [vmem:[#allocation2 + $0xf8] sm:$0xf]
  %v6839 = vsel %vm2058, %v6647, %v6838
  %6840 = vst [vmem:[#allocation2 + $0xf8] sm:$0xf] %v6839
  %6841 = vst.msk [vmem:[#allocation2 + $0xfc] sm:$0xf] %vm2062, %v6649
  %6842 = vrot.lane.b32.xlu0 %v4950, 32
  %v6843 = vpop.permute.xlu0 %6842
  %6844 = vrot.lane.b32.xlu0 %v4951, 32
  %v6845 = vpop.permute.xlu0 %6844
  %6846 = vrot.lane.b32.xlu0 %v4952, 32
  %v6847 = vpop.permute.xlu0 %6846
  %6848 = vrot.lane.b32.xlu0 %v4953, 32
  %v6849 = vpop.permute.xlu0 %6848
  %6850 = vrot.lane.b32.xlu0 %v4954, 32
  %v6851 = vpop.permute.xlu0 %6850
  %6852 = vrot.lane.b32.xlu0 %v4955, 32
  %v6853 = vpop.permute.xlu0 %6852
  %6854 = vrot.lane.b32.xlu0 %v4956, 32
  %v6855 = vpop.permute.xlu0 %6854
  %6856 = vrot.lane.b32.xlu0 %v4957, 32
  %v6857 = vpop.permute.xlu0 %6856
  %6858 = vrot.lane.b32.xlu0 %v4958, 32
  %v6859 = vpop.permute.xlu0 %6858
  %6860 = vrot.lane.b32.xlu0 %v4959, 32
  %v6861 = vpop.permute.xlu0 %6860
  %6862 = vrot.lane.b32.xlu0 %v4960, 32
  %v6863 = vpop.permute.xlu0 %6862
  %6864 = vrot.lane.b32.xlu0 %v4961, 32
  %v6865 = vpop.permute.xlu0 %6864
  %6866 = vrot.lane.b32.xlu0 %v4962, 32
  %v6867 = vpop.permute.xlu0 %6866
  %6868 = vrot.lane.b32.xlu0 %v4963, 32
  %v6869 = vpop.permute.xlu0 %6868
  %6870 = vrot.lane.b32.xlu0 %v4964, 32
  %v6871 = vpop.permute.xlu0 %6870
  %6872 = vrot.lane.b32.xlu0 %v4965, 32
  %v6873 = vpop.permute.xlu0 %6872
  %6874 = vrot.lane.b32.xlu0 %v4966, 32
  %v6875 = vpop.permute.xlu0 %6874
  %6876 = vrot.lane.b32.xlu0 %v4967, 32
  %v6877 = vpop.permute.xlu0 %6876
  %6878 = vrot.lane.b32.xlu0 %v4968, 32
  %v6879 = vpop.permute.xlu0 %6878
  %6880 = vrot.lane.b32.xlu0 %v4969, 32
  %v6881 = vpop.permute.xlu0 %6880
  %6882 = vrot.lane.b32.xlu0 %v4970, 32
  %v6883 = vpop.permute.xlu0 %6882
  %6884 = vrot.lane.b32.xlu0 %v4971, 32
  %v6885 = vpop.permute.xlu0 %6884
  %6886 = vrot.lane.b32.xlu0 %v4972, 32
  %v6887 = vpop.permute.xlu0 %6886
  %6888 = vrot.lane.b32.xlu0 %v4973, 32
  %v6889 = vpop.permute.xlu0 %6888
  %6890 = vrot.lane.b32.xlu0 %v4974, 32
  %v6891 = vpop.permute.xlu0 %6890
  %6892 = vrot.lane.b32.xlu0 %v4975, 32
  %v6893 = vpop.permute.xlu0 %6892
  %6894 = vrot.lane.b32.xlu0 %v4976, 32
  %v6895 = vpop.permute.xlu0 %6894
  %6896 = vrot.lane.b32.xlu0 %v4977, 32
  %v6897 = vpop.permute.xlu0 %6896
  %6898 = vrot.lane.b32.xlu0 %v4978, 32
  %v6899 = vpop.permute.xlu0 %6898
  %6900 = vrot.lane.b32.xlu0 %v4979, 32
  %v6901 = vpop.permute.xlu0 %6900
  %6902 = vrot.lane.b32.xlu0 %v6486, 32
  %v6903 = vpop.permute.xlu0 %6902
  %6904 = vrot.lane.b32.xlu0 %v6487, 32
  %v6905 = vpop.permute.xlu0 %6904
  %6906 = vrot.lane.b32.xlu0 %v4980, 32
  %v6907 = vpop.permute.xlu0 %6906
  %6908 = vrot.lane.b32.xlu0 %v4981, 32
  %v6909 = vpop.permute.xlu0 %6908
  %6910 = vrot.lane.b32.xlu0 %v4982, 32
  %v6911 = vpop.permute.xlu0 %6910
  %6912 = vrot.lane.b32.xlu0 %v4983, 32
  %v6913 = vpop.permute.xlu0 %6912
  %6914 = vrot.lane.b32.xlu0 %v4984, 32
  %v6915 = vpop.permute.xlu0 %6914
  %6916 = vrot.lane.b32.xlu0 %v4985, 32
  %v6917 = vpop.permute.xlu0 %6916
  %6918 = vrot.lane.b32.xlu0 %v4986, 32
  %v6919 = vpop.permute.xlu0 %6918
  %6920 = vrot.lane.b32.xlu0 %v4987, 32
  %v6921 = vpop.permute.xlu0 %6920
  %6922 = vrot.lane.b32.xlu0 %v4988, 32
  %v6923 = vpop.permute.xlu0 %6922
  %6924 = vrot.lane.b32.xlu0 %v4989, 32
  %v6925 = vpop.permute.xlu0 %6924
  %6926 = vrot.lane.b32.xlu0 %v4990, 32
  %v6927 = vpop.permute.xlu0 %6926
  %6928 = vrot.lane.b32.xlu0 %v4991, 32
  %v6929 = vpop.permute.xlu0 %6928
  %6930 = vrot.lane.b32.xlu0 %v4992, 32
  %v6931 = vpop.permute.xlu0 %6930
  %6932 = vrot.lane.b32.xlu0 %v4993, 32
  %v6933 = vpop.permute.xlu0 %6932
  %6934 = vrot.lane.b32.xlu0 %v4994, 32
  %v6935 = vpop.permute.xlu0 %6934
  %6936 = vrot.lane.b32.xlu0 %v4995, 32
  %v6937 = vpop.permute.xlu0 %6936
  %6938 = vrot.lane.b32.xlu0 %v4996, 32
  %v6939 = vpop.permute.xlu0 %6938
  %6940 = vrot.lane.b32.xlu0 %v4997, 32
  %v6941 = vpop.permute.xlu0 %6940
  %6942 = vrot.lane.b32.xlu0 %v4998, 32
  %v6943 = vpop.permute.xlu0 %6942
  %6944 = vrot.lane.b32.xlu0 %v4999, 32
  %v6945 = vpop.permute.xlu0 %6944
  %6946 = vrot.lane.b32.xlu0 %v5000, 32
  %v6947 = vpop.permute.xlu0 %6946
  %6948 = vrot.lane.b32.xlu0 %v5001, 32
  %v6949 = vpop.permute.xlu0 %6948
  %6950 = vrot.lane.b32.xlu0 %v5002, 32
  %v6951 = vpop.permute.xlu0 %6950
  %6952 = vrot.lane.b32.xlu0 %v5003, 32
  %v6953 = vpop.permute.xlu0 %6952
  %6954 = vrot.lane.b32.xlu0 %v5004, 32
  %v6955 = vpop.permute.xlu0 %6954
  %6956 = vrot.lane.b32.xlu0 %v5005, 32
  %v6957 = vpop.permute.xlu0 %6956
  %6958 = vrot.lane.b32.xlu0 %v5006, 32
  %v6959 = vpop.permute.xlu0 %6958
  %6960 = vrot.lane.b32.xlu0 %v5007, 32
  %v6961 = vpop.permute.xlu0 %6960
  %6962 = vrot.lane.b32.xlu0 %v5008, 32
  %v6963 = vpop.permute.xlu0 %6962
  %6964 = vrot.lane.b32.xlu0 %v5009, 32
  %v6965 = vpop.permute.xlu0 %6964
  %6966 = vrot.lane.b32.xlu0 %v6488, 32
  %v6967 = vpop.permute.xlu0 %6966
  %6968 = vrot.lane.b32.xlu0 %v6489, 32
  %v6969 = vpop.permute.xlu0 %6968
  %7034 = vst.msk [vmem:[#allocation2] sm:$0xf] %vm2380, %v6843
  %7035 = vst.msk [vmem:[#allocation2 + $0x4] sm:$0xf] %vm2380, %v6845
  %7036 = vst.msk [vmem:[#allocation2 + $0x8] sm:$0xf] %vm2380, %v6847
  %7037 = vst.msk [vmem:[#allocation2 + $0xc] sm:$0xf] %vm2380, %v6849
  %7038 = vst.msk [vmem:[#allocation2 + $0x10] sm:$0xf] %vm2380, %v6851
  %7039 = vst.msk [vmem:[#allocation2 + $0x14] sm:$0xf] %vm2380, %v6853
  %7040 = vst.msk [vmem:[#allocation2 + $0x18] sm:$0xf] %vm2380, %v6855
  %7041 = vst.msk [vmem:[#allocation2 + $0x1c] sm:$0xf] %vm2380, %v6857
  %7042 = vst.msk [vmem:[#allocation2 + $0x20] sm:$0xf] %vm2380, %v6859
  %7043 = vst.msk [vmem:[#allocation2 + $0x24] sm:$0xf] %vm2380, %v6861
  %7044 = vst.msk [vmem:[#allocation2 + $0x28] sm:$0xf] %vm2380, %v6863
  %7045 = vst.msk [vmem:[#allocation2 + $0x2c] sm:$0xf] %vm2380, %v6865
  %7046 = vst.msk [vmem:[#allocation2 + $0x30] sm:$0xf] %vm2380, %v6867
  %7047 = vst.msk [vmem:[#allocation2 + $0x34] sm:$0xf] %vm2380, %v6869
  %7048 = vst.msk [vmem:[#allocation2 + $0x38] sm:$0xf] %vm2380, %v6871
  %7049 = vst.msk [vmem:[#allocation2 + $0x3c] sm:$0xf] %vm2380, %v6873
  %7050 = vst.msk [vmem:[#allocation2 + $0x40] sm:$0xf] %vm2380, %v6875
  %7051 = vst.msk [vmem:[#allocation2 + $0x44] sm:$0xf] %vm2380, %v6877
  %7052 = vst.msk [vmem:[#allocation2 + $0x48] sm:$0xf] %vm2380, %v6879
  %7053 = vst.msk [vmem:[#allocation2 + $0x4c] sm:$0xf] %vm2380, %v6881
  %7054 = vst.msk [vmem:[#allocation2 + $0x50] sm:$0xf] %vm2380, %v6883
  %7055 = vst.msk [vmem:[#allocation2 + $0x54] sm:$0xf] %vm2380, %v6885
  %7056 = vst.msk [vmem:[#allocation2 + $0x58] sm:$0xf] %vm2380, %v6887
  %7057 = vst.msk [vmem:[#allocation2 + $0x5c] sm:$0xf] %vm2380, %v6889
  %7058 = vst.msk [vmem:[#allocation2 + $0x60] sm:$0xf] %vm2380, %v6891
  %7059 = vst.msk [vmem:[#allocation2 + $0x64] sm:$0xf] %vm2380, %v6893
  %7060 = vst.msk [vmem:[#allocation2 + $0x68] sm:$0xf] %vm2380, %v6895
  %7061 = vst.msk [vmem:[#allocation2 + $0x6c] sm:$0xf] %vm2380, %v6897
  %7062 = vst.msk [vmem:[#allocation2 + $0x70] sm:$0xf] %vm2380, %v6899
  %7063 = vst.msk [vmem:[#allocation2 + $0x74] sm:$0xf] %vm2380, %v6901
  %7064 = vst.msk [vmem:[#allocation2 + $0x78] sm:$0xf] %vm2380, %v6903
  %7065 = vst.msk [vmem:[#allocation2 + $0x7c] sm:$0xf] %vm2380, %v6905
  %7066 = vst.msk [vmem:[#allocation2 + $0x80] sm:$0xf] %vm2380, %v6907
  %7067 = vst.msk [vmem:[#allocation2 + $0x84] sm:$0xf] %vm2380, %v6909
  %7068 = vst.msk [vmem:[#allocation2 + $0x88] sm:$0xf] %vm2380, %v6911
  %7069 = vst.msk [vmem:[#allocation2 + $0x8c] sm:$0xf] %vm2380, %v6913
  %7070 = vst.msk [vmem:[#allocation2 + $0x90] sm:$0xf] %vm2380, %v6915
  %7071 = vst.msk [vmem:[#allocation2 + $0x94] sm:$0xf] %vm2380, %v6917
  %7072 = vst.msk [vmem:[#allocation2 + $0x98] sm:$0xf] %vm2380, %v6919
  %7073 = vst.msk [vmem:[#allocation2 + $0x9c] sm:$0xf] %vm2380, %v6921
  %7074 = vst.msk [vmem:[#allocation2 + $0xa0] sm:$0xf] %vm2380, %v6923
  %7075 = vst.msk [vmem:[#allocation2 + $0xa4] sm:$0xf] %vm2380, %v6925
  %7076 = vst.msk [vmem:[#allocation2 + $0xa8] sm:$0xf] %vm2380, %v6927
  %7077 = vst.msk [vmem:[#allocation2 + $0xac] sm:$0xf] %vm2380, %v6929
  %7078 = vst.msk [vmem:[#allocation2 + $0xb0] sm:$0xf] %vm2380, %v6931
  %7079 = vst.msk [vmem:[#allocation2 + $0xb4] sm:$0xf] %vm2380, %v6933
  %7080 = vst.msk [vmem:[#allocation2 + $0xb8] sm:$0xf] %vm2380, %v6935
  %7081 = vst.msk [vmem:[#allocation2 + $0xbc] sm:$0xf] %vm2380, %v6937
  %7082 = vst.msk [vmem:[#allocation2 + $0xc0] sm:$0xf] %vm2380, %v6939
  %7083 = vst.msk [vmem:[#allocation2 + $0xc4] sm:$0xf] %vm2380, %v6941
  %7084 = vst.msk [vmem:[#allocation2 + $0xc8] sm:$0xf] %vm2380, %v6943
  %7085 = vst.msk [vmem:[#allocation2 + $0xcc] sm:$0xf] %vm2380, %v6945
  %7086 = vst.msk [vmem:[#allocation2 + $0xd0] sm:$0xf] %vm2380, %v6947
  %7087 = vst.msk [vmem:[#allocation2 + $0xd4] sm:$0xf] %vm2380, %v6949
  %7088 = vst.msk [vmem:[#allocation2 + $0xd8] sm:$0xf] %vm2380, %v6951
  %7089 = vst.msk [vmem:[#allocation2 + $0xdc] sm:$0xf] %vm2380, %v6953
  %7090 = vst.msk [vmem:[#allocation2 + $0xe0] sm:$0xf] %vm2380, %v6955
  %7091 = vst.msk [vmem:[#allocation2 + $0xe4] sm:$0xf] %vm2380, %v6957
  %7092 = vst.msk [vmem:[#allocation2 + $0xe8] sm:$0xf] %vm2380, %v6959
  %7093 = vst.msk [vmem:[#allocation2 + $0xec] sm:$0xf] %vm2380, %v6961
  %7094 = vst.msk [vmem:[#allocation2 + $0xf0] sm:$0xf] %vm2380, %v6963
  %7095 = vst.msk [vmem:[#allocation2 + $0xf4] sm:$0xf] %vm2380, %v6965
  %7096 = vst.msk [vmem:[#allocation2 + $0xf8] sm:$0xf] %vm2380, %v6967
  %7097 = vst.msk [vmem:[#allocation2 + $0xfc] sm:$0xf] %vm2380, %v6969
  %v7098 = vrot.slane %v6491, 4
  %v7099 = vrot.slane %v6494, 5
  %v7100 = vor.u32 %v7098, %v7099
  %v7101 = vrot.slane %v7100, 4
  %v7102 = vrot.slane %v6502, 5
  %v7103 = vsel %vm1249, %v7101, %v7102
  %v7104 = vrot.slane %v6499, 4
  %v7105 = vor.u32 %v7104, %v7102
  %v7106 = vrot.slane %v7105, 4
  %v7107 = vrot.slane %v6507, 4
  %v7108 = vrot.slane %v6510, 5
  %v7109 = vor.u32 %v7107, %v7108
  %v7110 = vrot.slane %v7109, 4
  %v7111 = vrot.slane %v6518, 5
  %v7112 = vsel %vm1249, %v7110, %v7111
  %v7113 = vrot.slane %v6515, 4
  %v7114 = vor.u32 %v7113, %v7111
  %v7115 = vrot.slane %v7114, 4
  %7116 = vrot.lane.b32.xlu0 %v5915, 40
  %v7117 = vpop.permute.xlu0 %7116
  %7118 = vrot.lane.b32.xlu0 %v5918, 40
  %v7119 = vpop.permute.xlu0 %7118
  %7120 = vrot.lane.b32.xlu0 %v5924, 40
  %v7121 = vpop.permute.xlu0 %7120
  %7122 = vrot.lane.b32.xlu0 %v5927, 40
  %v7123 = vpop.permute.xlu0 %7122
  %7124 = vrot.lane.b32.xlu0 %v5933, 40
  %v7125 = vpop.permute.xlu0 %7124
  %7126 = vrot.lane.b32.xlu0 %v5936, 40
  %v7127 = vpop.permute.xlu0 %7126
  %7128 = vrot.lane.b32.xlu0 %v5942, 40
  %v7129 = vpop.permute.xlu0 %7128
  %7130 = vrot.lane.b32.xlu0 %v5945, 40
  %v7131 = vpop.permute.xlu0 %7130
  %7132 = vrot.lane.b32.xlu0 %v5951, 40
  %v7133 = vpop.permute.xlu0 %7132
  %7134 = vrot.lane.b32.xlu0 %v5954, 40
  %v7135 = vpop.permute.xlu0 %7134
  %7136 = vrot.lane.b32.xlu0 %v5960, 40
  %v7137 = vpop.permute.xlu0 %7136
  %7138 = vrot.lane.b32.xlu0 %v5963, 40
  %v7139 = vpop.permute.xlu0 %7138
  %7140 = vrot.lane.b32.xlu0 %v5969, 40
  %v7141 = vpop.permute.xlu0 %7140
  %7142 = vrot.lane.b32.xlu0 %v5972, 40
  %v7143 = vpop.permute.xlu0 %7142
  %7144 = vrot.lane.b32.xlu0 %v5978, 40
  %v7145 = vpop.permute.xlu0 %7144
  %7146 = vrot.lane.b32.xlu0 %v5981, 40
  %v7147 = vpop.permute.xlu0 %7146
  %7148 = vrot.lane.b32.xlu0 %v5987, 40
  %v7149 = vpop.permute.xlu0 %7148
  %7150 = vrot.lane.b32.xlu0 %v5990, 40
  %v7151 = vpop.permute.xlu0 %7150
  %7152 = vrot.lane.b32.xlu0 %v5996, 40
  %v7153 = vpop.permute.xlu0 %7152
  %7154 = vrot.lane.b32.xlu0 %v5999, 40
  %v7155 = vpop.permute.xlu0 %7154
  %7156 = vrot.lane.b32.xlu0 %v6005, 40
  %v7157 = vpop.permute.xlu0 %7156
  %7158 = vrot.lane.b32.xlu0 %v6008, 40
  %v7159 = vpop.permute.xlu0 %7158
  %7160 = vrot.lane.b32.xlu0 %v6014, 40
  %v7161 = vpop.permute.xlu0 %7160
  %7162 = vrot.lane.b32.xlu0 %v6017, 40
  %v7163 = vpop.permute.xlu0 %7162
  %7164 = vrot.lane.b32.xlu0 %v6023, 40
  %v7165 = vpop.permute.xlu0 %7164
  %7166 = vrot.lane.b32.xlu0 %v6026, 40
  %v7167 = vpop.permute.xlu0 %7166
  %7168 = vrot.lane.b32.xlu0 %v6032, 40
  %v7169 = vpop.permute.xlu0 %7168
  %7170 = vrot.lane.b32.xlu0 %v6035, 40
  %v7171 = vpop.permute.xlu0 %7170
  %7172 = vrot.lane.b32.xlu0 %v6041, 40
  %v7173 = vpop.permute.xlu0 %7172
  %7174 = vrot.lane.b32.xlu0 %v6044, 40
  %v7175 = vpop.permute.xlu0 %7174
  %7176 = vrot.lane.b32.xlu0 %v7103, 40
  %v7177 = vpop.permute.xlu0 %7176
  %7178 = vrot.lane.b32.xlu0 %v7106, 40
  %v7179 = vpop.permute.xlu0 %7178
  %7180 = vrot.lane.b32.xlu0 %v6050, 40
  %v7181 = vpop.permute.xlu0 %7180
  %7182 = vrot.lane.b32.xlu0 %v6053, 40
  %v7183 = vpop.permute.xlu0 %7182
  %7184 = vrot.lane.b32.xlu0 %v6059, 40
  %v7185 = vpop.permute.xlu0 %7184
  %7186 = vrot.lane.b32.xlu0 %v6062, 40
  %v7187 = vpop.permute.xlu0 %7186
  %7188 = vrot.lane.b32.xlu0 %v6068, 40
  %v7189 = vpop.permute.xlu0 %7188
  %7190 = vrot.lane.b32.xlu0 %v6071, 40
  %v7191 = vpop.permute.xlu0 %7190
  %7192 = vrot.lane.b32.xlu0 %v6077, 40
  %v7193 = vpop.permute.xlu0 %7192
  %7194 = vrot.lane.b32.xlu0 %v6080, 40
  %v7195 = vpop.permute.xlu0 %7194
  %7196 = vrot.lane.b32.xlu0 %v6086, 40
  %v7197 = vpop.permute.xlu0 %7196
  %7198 = vrot.lane.b32.xlu0 %v6089, 40
  %v7199 = vpop.permute.xlu0 %7198
  %7200 = vrot.lane.b32.xlu0 %v6095, 40
  %v7201 = vpop.permute.xlu0 %7200
  %7202 = vrot.lane.b32.xlu0 %v6098, 40
  %v7203 = vpop.permute.xlu0 %7202
  %7204 = vrot.lane.b32.xlu0 %v6104, 40
  %v7205 = vpop.permute.xlu0 %7204
  %7206 = vrot.lane.b32.xlu0 %v6107, 40
  %v7207 = vpop.permute.xlu0 %7206
  %7208 = vrot.lane.b32.xlu0 %v6113, 40
  %v7209 = vpop.permute.xlu0 %7208
  %7210 = vrot.lane.b32.xlu0 %v6116, 40
  %v7211 = vpop.permute.xlu0 %7210
  %7212 = vrot.lane.b32.xlu0 %v6122, 40
  %v7213 = vpop.permute.xlu0 %7212
  %7214 = vrot.lane.b32.xlu0 %v6125, 40
  %v7215 = vpop.permute.xlu0 %7214
  %7216 = vrot.lane.b32.xlu0 %v6131, 40
  %v7217 = vpop.permute.xlu0 %7216
  %7218 = vrot.lane.b32.xlu0 %v6134, 40
  %v7219 = vpop.permute.xlu0 %7218
  %7220 = vrot.lane.b32.xlu0 %v6140, 40
  %v7221 = vpop.permute.xlu0 %7220
  %7222 = vrot.lane.b32.xlu0 %v6143, 40
  %v7223 = vpop.permute.xlu0 %7222
  %7224 = vrot.lane.b32.xlu0 %v6149, 40
  %v7225 = vpop.permute.xlu0 %7224
  %7226 = vrot.lane.b32.xlu0 %v6152, 40
  %v7227 = vpop.permute.xlu0 %7226
  %7228 = vrot.lane.b32.xlu0 %v6158, 40
  %v7229 = vpop.permute.xlu0 %7228
  %7230 = vrot.lane.b32.xlu0 %v6161, 40
  %v7231 = vpop.permute.xlu0 %7230
  %7232 = vrot.lane.b32.xlu0 %v6167, 40
  %v7233 = vpop.permute.xlu0 %7232
  %7234 = vrot.lane.b32.xlu0 %v6170, 40
  %v7235 = vpop.permute.xlu0 %7234
  %7236 = vrot.lane.b32.xlu0 %v6176, 40
  %v7237 = vpop.permute.xlu0 %7236
  %7238 = vrot.lane.b32.xlu0 %v6179, 40
  %v7239 = vpop.permute.xlu0 %7238
  %7240 = vrot.lane.b32.xlu0 %v7112, 40
  %v7241 = vpop.permute.xlu0 %7240
  %7242 = vrot.lane.b32.xlu0 %v7115, 40
  %v7243 = vpop.permute.xlu0 %7242
  %7308 = vst.msk [vmem:[#allocation2] sm:$0xf] %vm2655, %v7117
  %v7309 = vld [vmem:[#allocation2 + $0x4] sm:$0xf]
  %v7310 = vsel %vm2658, %v7119, %v7309
  %7311 = vst [vmem:[#allocation2 + $0x4] sm:$0xf] %v7310
  %7312 = vst.msk [vmem:[#allocation2 + $0x8] sm:$0xf] %vm2655, %v7121
  %v7313 = vld [vmem:[#allocation2 + $0xc] sm:$0xf]
  %v7314 = vsel %vm2658, %v7123, %v7313
  %7315 = vst [vmem:[#allocation2 + $0xc] sm:$0xf] %v7314
  %7316 = vst.msk [vmem:[#allocation2 + $0x10] sm:$0xf] %vm2655, %v7125
  %v7317 = vld [vmem:[#allocation2 + $0x14] sm:$0xf]
  %v7318 = vsel %vm2658, %v7127, %v7317
  %7319 = vst [vmem:[#allocation2 + $0x14] sm:$0xf] %v7318
  %7320 = vst.msk [vmem:[#allocation2 + $0x18] sm:$0xf] %vm2655, %v7129
  %v7321 = vld [vmem:[#allocation2 + $0x1c] sm:$0xf]
  %v7322 = vsel %vm2658, %v7131, %v7321
  %7323 = vst [vmem:[#allocation2 + $0x1c] sm:$0xf] %v7322
  %7324 = vst.msk [vmem:[#allocation2 + $0x20] sm:$0xf] %vm2655, %v7133
  %v7325 = vld [vmem:[#allocation2 + $0x24] sm:$0xf]
  %v7326 = vsel %vm2658, %v7135, %v7325
  %7327 = vst [vmem:[#allocation2 + $0x24] sm:$0xf] %v7326
  %7328 = vst.msk [vmem:[#allocation2 + $0x28] sm:$0xf] %vm2655, %v7137
  %v7329 = vld [vmem:[#allocation2 + $0x2c] sm:$0xf]
  %v7330 = vsel %vm2658, %v7139, %v7329
  %7331 = vst [vmem:[#allocation2 + $0x2c] sm:$0xf] %v7330
  %7332 = vst.msk [vmem:[#allocation2 + $0x30] sm:$0xf] %vm2655, %v7141
  %v7333 = vld [vmem:[#allocation2 + $0x34] sm:$0xf]
  %v7334 = vsel %vm2658, %v7143, %v7333
  %7335 = vst [vmem:[#allocation2 + $0x34] sm:$0xf] %v7334
  %7336 = vst.msk [vmem:[#allocation2 + $0x38] sm:$0xf] %vm2655, %v7145
  %v7337 = vld [vmem:[#allocation2 + $0x3c] sm:$0xf]
  %v7338 = vsel %vm2658, %v7147, %v7337
  %7339 = vst [vmem:[#allocation2 + $0x3c] sm:$0xf] %v7338
  %7340 = vst.msk [vmem:[#allocation2 + $0x40] sm:$0xf] %vm2655, %v7149
  %v7341 = vld [vmem:[#allocation2 + $0x44] sm:$0xf]
  %v7342 = vsel %vm2658, %v7151, %v7341
  %7343 = vst [vmem:[#allocation2 + $0x44] sm:$0xf] %v7342
  %7344 = vst.msk [vmem:[#allocation2 + $0x48] sm:$0xf] %vm2655, %v7153
  %v7345 = vld [vmem:[#allocation2 + $0x4c] sm:$0xf]
  %v7346 = vsel %vm2658, %v7155, %v7345
  %7347 = vst [vmem:[#allocation2 + $0x4c] sm:$0xf] %v7346
  %7348 = vst.msk [vmem:[#allocation2 + $0x50] sm:$0xf] %vm2655, %v7157
  %v7349 = vld [vmem:[#allocation2 + $0x54] sm:$0xf]
  %v7350 = vsel %vm2658, %v7159, %v7349
  %7351 = vst [vmem:[#allocation2 + $0x54] sm:$0xf] %v7350
  %7352 = vst.msk [vmem:[#allocation2 + $0x58] sm:$0xf] %vm2655, %v7161
  %v7353 = vld [vmem:[#allocation2 + $0x5c] sm:$0xf]
  %v7354 = vsel %vm2658, %v7163, %v7353
  %7355 = vst [vmem:[#allocation2 + $0x5c] sm:$0xf] %v7354
  %7356 = vst.msk [vmem:[#allocation2 + $0x60] sm:$0xf] %vm2655, %v7165
  %v7357 = vld [vmem:[#allocation2 + $0x64] sm:$0xf]
  %v7358 = vsel %vm2658, %v7167, %v7357
  %7359 = vst [vmem:[#allocation2 + $0x64] sm:$0xf] %v7358
  %7360 = vst.msk [vmem:[#allocation2 + $0x68] sm:$0xf] %vm2655, %v7169
  %v7361 = vld [vmem:[#allocation2 + $0x6c] sm:$0xf]
  %v7362 = vsel %vm2658, %v7171, %v7361
  %7363 = vst [vmem:[#allocation2 + $0x6c] sm:$0xf] %v7362
  %7364 = vst.msk [vmem:[#allocation2 + $0x70] sm:$0xf] %vm2655, %v7173
  %v7365 = vld [vmem:[#allocation2 + $0x74] sm:$0xf]
  %v7366 = vsel %vm2658, %v7175, %v7365
  %7367 = vst [vmem:[#allocation2 + $0x74] sm:$0xf] %v7366
  %7368 = vst.msk [vmem:[#allocation2 + $0x78] sm:$0xf] %vm2655, %v7177
  %v7369 = vld [vmem:[#allocation2 + $0x7c] sm:$0xf]
  %v7370 = vsel %vm2658, %v7179, %v7369
  %7371 = vst [vmem:[#allocation2 + $0x7c] sm:$0xf] %v7370
  %7372 = vst.msk [vmem:[#allocation2 + $0x80] sm:$0xf] %vm2655, %v7181
  %v7373 = vld [vmem:[#allocation2 + $0x84] sm:$0xf]
  %v7374 = vsel %vm2658, %v7183, %v7373
  %7375 = vst [vmem:[#allocation2 + $0x84] sm:$0xf] %v7374
  %7376 = vst.msk [vmem:[#allocation2 + $0x88] sm:$0xf] %vm2655, %v7185
  %v7377 = vld [vmem:[#allocation2 + $0x8c] sm:$0xf]
  %v7378 = vsel %vm2658, %v7187, %v7377
  %7379 = vst [vmem:[#allocation2 + $0x8c] sm:$0xf] %v7378
  %7380 = vst.msk [vmem:[#allocation2 + $0x90] sm:$0xf] %vm2655, %v7189
  %v7381 = vld [vmem:[#allocation2 + $0x94] sm:$0xf]
  %v7382 = vsel %vm2658, %v7191, %v7381
  %7383 = vst [vmem:[#allocation2 + $0x94] sm:$0xf] %v7382
  %7384 = vst.msk [vmem:[#allocation2 + $0x98] sm:$0xf] %vm2655, %v7193
  %v7385 = vld [vmem:[#allocation2 + $0x9c] sm:$0xf]
  %v7386 = vsel %vm2658, %v7195, %v7385
  %7387 = vst [vmem:[#allocation2 + $0x9c] sm:$0xf] %v7386
  %7388 = vst.msk [vmem:[#allocation2 + $0xa0] sm:$0xf] %vm2655, %v7197
  %v7389 = vld [vmem:[#allocation2 + $0xa4] sm:$0xf]
  %v7390 = vsel %vm2658, %v7199, %v7389
  %7391 = vst [vmem:[#allocation2 + $0xa4] sm:$0xf] %v7390
  %7392 = vst.msk [vmem:[#allocation2 + $0xa8] sm:$0xf] %vm2655, %v7201
  %v7393 = vld [vmem:[#allocation2 + $0xac] sm:$0xf]
  %v7394 = vsel %vm2658, %v7203, %v7393
  %7395 = vst [vmem:[#allocation2 + $0xac] sm:$0xf] %v7394
  %7396 = vst.msk [vmem:[#allocation2 + $0xb0] sm:$0xf] %vm2655, %v7205
  %v7397 = vld [vmem:[#allocation2 + $0xb4] sm:$0xf]
  %v7398 = vsel %vm2658, %v7207, %v7397
  %7399 = vst [vmem:[#allocation2 + $0xb4] sm:$0xf] %v7398
  %7400 = vst.msk [vmem:[#allocation2 + $0xb8] sm:$0xf] %vm2655, %v7209
  %v7401 = vld [vmem:[#allocation2 + $0xbc] sm:$0xf]
  %v7402 = vsel %vm2658, %v7211, %v7401
  %7403 = vst [vmem:[#allocation2 + $0xbc] sm:$0xf] %v7402
  %7404 = vst.msk [vmem:[#allocation2 + $0xc0] sm:$0xf] %vm2655, %v7213
  %v7405 = vld [vmem:[#allocation2 + $0xc4] sm:$0xf]
  %v7406 = vsel %vm2658, %v7215, %v7405
  %7407 = vst [vmem:[#allocation2 + $0xc4] sm:$0xf] %v7406
  %7408 = vst.msk [vmem:[#allocation2 + $0xc8] sm:$0xf] %vm2655, %v7217
  %v7409 = vld [vmem:[#allocation2 + $0xcc] sm:$0xf]
  %v7410 = vsel %vm2658, %v7219, %v7409
  %7411 = vst [vmem:[#allocation2 + $0xcc] sm:$0xf] %v7410
  %7412 = vst.msk [vmem:[#allocation2 + $0xd0] sm:$0xf] %vm2655, %v7221
  %v7413 = vld [vmem:[#allocation2 + $0xd4] sm:$0xf]
  %v7414 = vsel %vm2658, %v7223, %v7413
  %7415 = vst [vmem:[#allocation2 + $0xd4] sm:$0xf] %v7414
  %7416 = vst.msk [vmem:[#allocation2 + $0xd8] sm:$0xf] %vm2655, %v7225
  %v7417 = vld [vmem:[#allocation2 + $0xdc] sm:$0xf]
  %v7418 = vsel %vm2658, %v7227, %v7417
  %7419 = vst [vmem:[#allocation2 + $0xdc] sm:$0xf] %v7418
  %7420 = vst.msk [vmem:[#allocation2 + $0xe0] sm:$0xf] %vm2655, %v7229
  %v7421 = vld [vmem:[#allocation2 + $0xe4] sm:$0xf]
  %v7422 = vsel %vm2658, %v7231, %v7421
  %7423 = vst [vmem:[#allocation2 + $0xe4] sm:$0xf] %v7422
  %7424 = vst.msk [vmem:[#allocation2 + $0xe8] sm:$0xf] %vm2655, %v7233
  %v7425 = vld [vmem:[#allocation2 + $0xec] sm:$0xf]
  %v7426 = vsel %vm2658, %v7235, %v7425
  %7427 = vst [vmem:[#allocation2 + $0xec] sm:$0xf] %v7426
  %7428 = vst.msk [vmem:[#allocation2 + $0xf0] sm:$0xf] %vm2655, %v7237
  %v7429 = vld [vmem:[#allocation2 + $0xf4] sm:$0xf]
  %v7430 = vsel %vm2658, %v7239, %v7429
  %7431 = vst [vmem:[#allocation2 + $0xf4] sm:$0xf] %v7430
  %7432 = vst.msk [vmem:[#allocation2 + $0xf8] sm:$0xf] %vm2655, %v7241
  %v7433 = vld [vmem:[#allocation2 + $0xfc] sm:$0xf]
  %v7434 = vsel %vm2658, %v7243, %v7433
  %7435 = vst [vmem:[#allocation2 + $0xfc] sm:$0xf] %v7434
  %7436 = vrot.lane.b32.xlu0 %v5032, 48
  %v7437 = vpop.permute.xlu0 %7436
  %7438 = vrot.lane.b32.xlu0 %v5041, 48
  %v7439 = vpop.permute.xlu0 %7438
  %7440 = vrot.lane.b32.xlu0 %v5048, 48
  %v7441 = vpop.permute.xlu0 %7440
  %7442 = vrot.lane.b32.xlu0 %v5057, 48
  %v7443 = vpop.permute.xlu0 %7442
  %7444 = vrot.lane.b32.xlu0 %v5064, 48
  %v7445 = vpop.permute.xlu0 %7444
  %7446 = vrot.lane.b32.xlu0 %v5073, 48
  %v7447 = vpop.permute.xlu0 %7446
  %7448 = vrot.lane.b32.xlu0 %v5080, 48
  %v7449 = vpop.permute.xlu0 %7448
  %7450 = vrot.lane.b32.xlu0 %v5089, 48
  %v7451 = vpop.permute.xlu0 %7450
  %7452 = vrot.lane.b32.xlu0 %v5096, 48
  %v7453 = vpop.permute.xlu0 %7452
  %7454 = vrot.lane.b32.xlu0 %v5105, 48
  %v7455 = vpop.permute.xlu0 %7454
  %7456 = vrot.lane.b32.xlu0 %v5112, 48
  %v7457 = vpop.permute.xlu0 %7456
  %7458 = vrot.lane.b32.xlu0 %v5121, 48
  %v7459 = vpop.permute.xlu0 %7458
  %7460 = vrot.lane.b32.xlu0 %v5128, 48
  %v7461 = vpop.permute.xlu0 %7460
  %7462 = vrot.lane.b32.xlu0 %v5137, 48
  %v7463 = vpop.permute.xlu0 %7462
  %7464 = vrot.lane.b32.xlu0 %v5144, 48
  %v7465 = vpop.permute.xlu0 %7464
  %7466 = vrot.lane.b32.xlu0 %v5153, 48
  %v7467 = vpop.permute.xlu0 %7466
  %7468 = vrot.lane.b32.xlu0 %v5160, 48
  %v7469 = vpop.permute.xlu0 %7468
  %7470 = vrot.lane.b32.xlu0 %v5169, 48
  %v7471 = vpop.permute.xlu0 %7470
  %7472 = vrot.lane.b32.xlu0 %v5176, 48
  %v7473 = vpop.permute.xlu0 %7472
  %7474 = vrot.lane.b32.xlu0 %v5185, 48
  %v7475 = vpop.permute.xlu0 %7474
  %7476 = vrot.lane.b32.xlu0 %v5192, 48
  %v7477 = vpop.permute.xlu0 %7476
  %7478 = vrot.lane.b32.xlu0 %v5201, 48
  %v7479 = vpop.permute.xlu0 %7478
  %7480 = vrot.lane.b32.xlu0 %v5208, 48
  %v7481 = vpop.permute.xlu0 %7480
  %7482 = vrot.lane.b32.xlu0 %v5217, 48
  %v7483 = vpop.permute.xlu0 %7482
  %7484 = vrot.lane.b32.xlu0 %v5224, 48
  %v7485 = vpop.permute.xlu0 %7484
  %7486 = vrot.lane.b32.xlu0 %v5233, 48
  %v7487 = vpop.permute.xlu0 %7486
  %7488 = vrot.lane.b32.xlu0 %v5240, 48
  %v7489 = vpop.permute.xlu0 %7488
  %7490 = vrot.lane.b32.xlu0 %v5249, 48
  %v7491 = vpop.permute.xlu0 %7490
  %7492 = vrot.lane.b32.xlu0 %v6496, 48
  %v7493 = vpop.permute.xlu0 %7492
  %7494 = vrot.lane.b32.xlu0 %v6505, 48
  %v7495 = vpop.permute.xlu0 %7494
  %7496 = vrot.lane.b32.xlu0 %v5272, 48
  %v7497 = vpop.permute.xlu0 %7496
  %7498 = vrot.lane.b32.xlu0 %v5281, 48
  %v7499 = vpop.permute.xlu0 %7498
  %7500 = vrot.lane.b32.xlu0 %v5288, 48
  %v7501 = vpop.permute.xlu0 %7500
  %7502 = vrot.lane.b32.xlu0 %v5297, 48
  %v7503 = vpop.permute.xlu0 %7502
  %7504 = vrot.lane.b32.xlu0 %v5304, 48
  %v7505 = vpop.permute.xlu0 %7504
  %7506 = vrot.lane.b32.xlu0 %v5313, 48
  %v7507 = vpop.permute.xlu0 %7506
  %7508 = vrot.lane.b32.xlu0 %v5320, 48
  %v7509 = vpop.permute.xlu0 %7508
  %7510 = vrot.lane.b32.xlu0 %v5329, 48
  %v7511 = vpop.permute.xlu0 %7510
  %7512 = vrot.lane.b32.xlu0 %v5336, 48
  %v7513 = vpop.permute.xlu0 %7512
  %7514 = vrot.lane.b32.xlu0 %v5345, 48
  %v7515 = vpop.permute.xlu0 %7514
  %7516 = vrot.lane.b32.xlu0 %v5352, 48
  %v7517 = vpop.permute.xlu0 %7516
  %7518 = vrot.lane.b32.xlu0 %v5361, 48
  %v7519 = vpop.permute.xlu0 %7518
  %7520 = vrot.lane.b32.xlu0 %v5368, 48
  %v7521 = vpop.permute.xlu0 %7520
  %7522 = vrot.lane.b32.xlu0 %v5377, 48
  %v7523 = vpop.permute.xlu0 %7522
  %7524 = vrot.lane.b32.xlu0 %v5384, 48
  %v7525 = vpop.permute.xlu0 %7524
  %7526 = vrot.lane.b32.xlu0 %v5393, 48
  %v7527 = vpop.permute.xlu0 %7526
  %7528 = vrot.lane.b32.xlu0 %v5400, 48
  %v7529 = vpop.permute.xlu0 %7528
  %7530 = vrot.lane.b32.xlu0 %v5409, 48
  %v7531 = vpop.permute.xlu0 %7530
  %7532 = vrot.lane.b32.xlu0 %v5416, 48
  %v7533 = vpop.permute.xlu0 %7532
  %7534 = vrot.lane.b32.xlu0 %v5425, 48
  %v7535 = vpop.permute.xlu0 %7534
  %7536 = vrot.lane.b32.xlu0 %v5432, 48
  %v7537 = vpop.permute.xlu0 %7536
  %7538 = vrot.lane.b32.xlu0 %v5441, 48
  %v7539 = vpop.permute.xlu0 %7538
  %7540 = vrot.lane.b32.xlu0 %v5448, 48
  %v7541 = vpop.permute.xlu0 %7540
  %7542 = vrot.lane.b32.xlu0 %v5457, 48
  %v7543 = vpop.permute.xlu0 %7542
  %7544 = vrot.lane.b32.xlu0 %v5464, 48
  %v7545 = vpop.permute.xlu0 %7544
  %7546 = vrot.lane.b32.xlu0 %v5473, 48
  %v7547 = vpop.permute.xlu0 %7546
  %7548 = vrot.lane.b32.xlu0 %v5480, 48
  %v7549 = vpop.permute.xlu0 %7548
  %7550 = vrot.lane.b32.xlu0 %v5489, 48
  %v7551 = vpop.permute.xlu0 %7550
  %7552 = vrot.lane.b32.xlu0 %v6512, 48
  %v7553 = vpop.permute.xlu0 %7552
  %7554 = vrot.lane.b32.xlu0 %v6521, 48
  %v7555 = vpop.permute.xlu0 %7554
  %v7616 = vld [vmem:[#allocation2] sm:$0xf]
  %v7617 = vsel %vm2967, %v7437, %v7616
  %7618 = vst [vmem:[#allocation2] sm:$0xf] %v7617
  %7619 = vst.msk [vmem:[#allocation2 + $0x4] sm:$0xf] %vm2971, %v7439
  %v7620 = vld [vmem:[#allocation2 + $0x8] sm:$0xf]
  %v7621 = vsel %vm2967, %v7441, %v7620
  %7622 = vst [vmem:[#allocation2 + $0x8] sm:$0xf] %v7621
  %7623 = vst.msk [vmem:[#allocation2 + $0xc] sm:$0xf] %vm2971, %v7443
  %v7624 = vld [vmem:[#allocation2 + $0x10] sm:$0xf]
  %v7625 = vsel %vm2967, %v7445, %v7624
  %7626 = vst [vmem:[#allocation2 + $0x10] sm:$0xf] %v7625
  %7627 = vst.msk [vmem:[#allocation2 + $0x14] sm:$0xf] %vm2971, %v7447
  %v7628 = vld [vmem:[#allocation2 + $0x18] sm:$0xf]
  %v7629 = vsel %vm2967, %v7449, %v7628
  %7630 = vst [vmem:[#allocation2 + $0x18] sm:$0xf] %v7629
  %7631 = vst.msk [vmem:[#allocation2 + $0x1c] sm:$0xf] %vm2971, %v7451
  %v7632 = vld [vmem:[#allocation2 + $0x20] sm:$0xf]
  %v7633 = vsel %vm2967, %v7453, %v7632
  %7634 = vst [vmem:[#allocation2 + $0x20] sm:$0xf] %v7633
  %7635 = vst.msk [vmem:[#allocation2 + $0x24] sm:$0xf] %vm2971, %v7455
  %v7636 = vld [vmem:[#allocation2 + $0x28] sm:$0xf]
  %v7637 = vsel %vm2967, %v7457, %v7636
  %7638 = vst [vmem:[#allocation2 + $0x28] sm:$0xf] %v7637
  %7639 = vst.msk [vmem:[#allocation2 + $0x2c] sm:$0xf] %vm2971, %v7459
  %v7640 = vld [vmem:[#allocation2 + $0x30] sm:$0xf]
  %v7641 = vsel %vm2967, %v7461, %v7640
  %7642 = vst [vmem:[#allocation2 + $0x30] sm:$0xf] %v7641
  %7643 = vst.msk [vmem:[#allocation2 + $0x34] sm:$0xf] %vm2971, %v7463
  %v7644 = vld [vmem:[#allocation2 + $0x38] sm:$0xf]
  %v7645 = vsel %vm2967, %v7465, %v7644
  %7646 = vst [vmem:[#allocation2 + $0x38] sm:$0xf] %v7645
  %7647 = vst.msk [vmem:[#allocation2 + $0x3c] sm:$0xf] %vm2971, %v7467
  %v7648 = vld [vmem:[#allocation2 + $0x40] sm:$0xf]
  %v7649 = vsel %vm2967, %v7469, %v7648
  %7650 = vst [vmem:[#allocation2 + $0x40] sm:$0xf] %v7649
  %7651 = vst.msk [vmem:[#allocation2 + $0x44] sm:$0xf] %vm2971, %v7471
  %v7652 = vld [vmem:[#allocation2 + $0x48] sm:$0xf]
  %v7653 = vsel %vm2967, %v7473, %v7652
  %7654 = vst [vmem:[#allocation2 + $0x48] sm:$0xf] %v7653
  %7655 = vst.msk [vmem:[#allocation2 + $0x4c] sm:$0xf] %vm2971, %v7475
  %v7656 = vld [vmem:[#allocation2 + $0x50] sm:$0xf]
  %v7657 = vsel %vm2967, %v7477, %v7656
  %7658 = vst [vmem:[#allocation2 + $0x50] sm:$0xf] %v7657
  %7659 = vst.msk [vmem:[#allocation2 + $0x54] sm:$0xf] %vm2971, %v7479
  %v7660 = vld [vmem:[#allocation2 + $0x58] sm:$0xf]
  %v7661 = vsel %vm2967, %v7481, %v7660
  %7662 = vst [vmem:[#allocation2 + $0x58] sm:$0xf] %v7661
  %7663 = vst.msk [vmem:[#allocation2 + $0x5c] sm:$0xf] %vm2971, %v7483
  %v7664 = vld [vmem:[#allocation2 + $0x60] sm:$0xf]
  %v7665 = vsel %vm2967, %v7485, %v7664
  %7666 = vst [vmem:[#allocation2 + $0x60] sm:$0xf] %v7665
  %7667 = vst.msk [vmem:[#allocation2 + $0x64] sm:$0xf] %vm2971, %v7487
  %v7668 = vld [vmem:[#allocation2 + $0x68] sm:$0xf]
  %v7669 = vsel %vm2967, %v7489, %v7668
  %7670 = vst [vmem:[#allocation2 + $0x68] sm:$0xf] %v7669
  %7671 = vst.msk [vmem:[#allocation2 + $0x6c] sm:$0xf] %vm2971, %v7491
  %v7672 = vld [vmem:[#allocation2 + $0x70] sm:$0xf]
  %v7673 = vsel %vm2967, %v7493, %v7672
  %7674 = vst [vmem:[#allocation2 + $0x70] sm:$0xf] %v7673
  %7675 = vst.msk [vmem:[#allocation2 + $0x74] sm:$0xf] %vm2971, %v7495
  %v7676 = vld [vmem:[#allocation2 + $0x80] sm:$0xf]
  %v7677 = vsel %vm2967, %v7497, %v7676
  %7678 = vst [vmem:[#allocation2 + $0x80] sm:$0xf] %v7677
  %7679 = vst.msk [vmem:[#allocation2 + $0x84] sm:$0xf] %vm2971, %v7499
  %v7680 = vld [vmem:[#allocation2 + $0x88] sm:$0xf]
  %v7681 = vsel %vm2967, %v7501, %v7680
  %7682 = vst [vmem:[#allocation2 + $0x88] sm:$0xf] %v7681
  %7683 = vst.msk [vmem:[#allocation2 + $0x8c] sm:$0xf] %vm2971, %v7503
  %v7684 = vld [vmem:[#allocation2 + $0x90] sm:$0xf]
  %v7685 = vsel %vm2967, %v7505, %v7684
  %7686 = vst [vmem:[#allocation2 + $0x90] sm:$0xf] %v7685
  %7687 = vst.msk [vmem:[#allocation2 + $0x94] sm:$0xf] %vm2971, %v7507
  %v7688 = vld [vmem:[#allocation2 + $0x98] sm:$0xf]
  %v7689 = vsel %vm2967, %v7509, %v7688
  %7690 = vst [vmem:[#allocation2 + $0x98] sm:$0xf] %v7689
  %7691 = vst.msk [vmem:[#allocation2 + $0x9c] sm:$0xf] %vm2971, %v7511
  %v7692 = vld [vmem:[#allocation2 + $0xa0] sm:$0xf]
  %v7693 = vsel %vm2967, %v7513, %v7692
  %7694 = vst [vmem:[#allocation2 + $0xa0] sm:$0xf] %v7693
  %7695 = vst.msk [vmem:[#allocation2 + $0xa4] sm:$0xf] %vm2971, %v7515
  %v7696 = vld [vmem:[#allocation2 + $0xa8] sm:$0xf]
  %v7697 = vsel %vm2967, %v7517, %v7696
  %7698 = vst [vmem:[#allocation2 + $0xa8] sm:$0xf] %v7697
  %7699 = vst.msk [vmem:[#allocation2 + $0xac] sm:$0xf] %vm2971, %v7519
  %v7700 = vld [vmem:[#allocation2 + $0xb0] sm:$0xf]
  %v7701 = vsel %vm2967, %v7521, %v7700
  %7702 = vst [vmem:[#allocation2 + $0xb0] sm:$0xf] %v7701
  %7703 = vst.msk [vmem:[#allocation2 + $0xb4] sm:$0xf] %vm2971, %v7523
  %v7704 = vld [vmem:[#allocation2 + $0xb8] sm:$0xf]
  %v7705 = vsel %vm2967, %v7525, %v7704
  %7706 = vst [vmem:[#allocation2 + $0xb8] sm:$0xf] %v7705
  %7707 = vst.msk [vmem:[#allocation2 + $0xbc] sm:$0xf] %vm2971, %v7527
  %v7708 = vld [vmem:[#allocation2 + $0xc0] sm:$0xf]
  %v7709 = vsel %vm2967, %v7529, %v7708
  %7710 = vst [vmem:[#allocation2 + $0xc0] sm:$0xf] %v7709
  %7711 = vst.msk [vmem:[#allocation2 + $0xc4] sm:$0xf] %vm2971, %v7531
  %v7712 = vld [vmem:[#allocation2 + $0xc8] sm:$0xf]
  %v7713 = vsel %vm2967, %v7533, %v7712
  %7714 = vst [vmem:[#allocation2 + $0xc8] sm:$0xf] %v7713
  %7715 = vst.msk [vmem:[#allocation2 + $0xcc] sm:$0xf] %vm2971, %v7535
  %v7716 = vld [vmem:[#allocation2 + $0xd0] sm:$0xf]
  %v7717 = vsel %vm2967, %v7537, %v7716
  %7718 = vst [vmem:[#allocation2 + $0xd0] sm:$0xf] %v7717
  %7719 = vst.msk [vmem:[#allocation2 + $0xd4] sm:$0xf] %vm2971, %v7539
  %v7720 = vld [vmem:[#allocation2 + $0xd8] sm:$0xf]
  %v7721 = vsel %vm2967, %v7541, %v7720
  %7722 = vst [vmem:[#allocation2 + $0xd8] sm:$0xf] %v7721
  %7723 = vst.msk [vmem:[#allocation2 + $0xdc] sm:$0xf] %vm2971, %v7543
  %v7724 = vld [vmem:[#allocation2 + $0xe0] sm:$0xf]
  %v7725 = vsel %vm2967, %v7545, %v7724
  %7726 = vst [vmem:[#allocation2 + $0xe0] sm:$0xf] %v7725
  %7727 = vst.msk [vmem:[#allocation2 + $0xe4] sm:$0xf] %vm2971, %v7547
  %v7728 = vld [vmem:[#allocation2 + $0xe8] sm:$0xf]
  %v7729 = vsel %vm2967, %v7549, %v7728
  %7730 = vst [vmem:[#allocation2 + $0xe8] sm:$0xf] %v7729
  %7731 = vst.msk [vmem:[#allocation2 + $0xec] sm:$0xf] %vm2971, %v7551
  %v7732 = vld [vmem:[#allocation2 + $0xf0] sm:$0xf]
  %v7733 = vsel %vm2967, %v7553, %v7732
  %7734 = vst [vmem:[#allocation2 + $0xf0] sm:$0xf] %v7733
  %7735 = vst.msk [vmem:[#allocation2 + $0xf4] sm:$0xf] %vm2971, %v7555
  %7736 = vrot.lane.b32.xlu0 %v4952, 56
  %v7737 = vpop.permute.xlu0 %7736
  %7738 = vrot.lane.b32.xlu0 %v4953, 56
  %v7739 = vpop.permute.xlu0 %7738
  %7740 = vrot.lane.b32.xlu0 %v4954, 56
  %v7741 = vpop.permute.xlu0 %7740
  %7742 = vrot.lane.b32.xlu0 %v4955, 56
  %v7743 = vpop.permute.xlu0 %7742
  %7744 = vrot.lane.b32.xlu0 %v4956, 56
  %v7745 = vpop.permute.xlu0 %7744
  %7746 = vrot.lane.b32.xlu0 %v4957, 56
  %v7747 = vpop.permute.xlu0 %7746
  %7748 = vrot.lane.b32.xlu0 %v4958, 56
  %v7749 = vpop.permute.xlu0 %7748
  %7750 = vrot.lane.b32.xlu0 %v4959, 56
  %v7751 = vpop.permute.xlu0 %7750
  %7752 = vrot.lane.b32.xlu0 %v4960, 56
  %v7753 = vpop.permute.xlu0 %7752
  %7754 = vrot.lane.b32.xlu0 %v4961, 56
  %v7755 = vpop.permute.xlu0 %7754
  %7756 = vrot.lane.b32.xlu0 %v4962, 56
  %v7757 = vpop.permute.xlu0 %7756
  %7758 = vrot.lane.b32.xlu0 %v4963, 56
  %v7759 = vpop.permute.xlu0 %7758
  %7760 = vrot.lane.b32.xlu0 %v4964, 56
  %v7761 = vpop.permute.xlu0 %7760
  %7762 = vrot.lane.b32.xlu0 %v4965, 56
  %v7763 = vpop.permute.xlu0 %7762
  %7764 = vrot.lane.b32.xlu0 %v4966, 56
  %v7765 = vpop.permute.xlu0 %7764
  %7766 = vrot.lane.b32.xlu0 %v4967, 56
  %v7767 = vpop.permute.xlu0 %7766
  %7768 = vrot.lane.b32.xlu0 %v4968, 56
  %v7769 = vpop.permute.xlu0 %7768
  %7770 = vrot.lane.b32.xlu0 %v4969, 56
  %v7771 = vpop.permute.xlu0 %7770
  %7772 = vrot.lane.b32.xlu0 %v4970, 56
  %v7773 = vpop.permute.xlu0 %7772
  %7774 = vrot.lane.b32.xlu0 %v4971, 56
  %v7775 = vpop.permute.xlu0 %7774
  %7776 = vrot.lane.b32.xlu0 %v4972, 56
  %v7777 = vpop.permute.xlu0 %7776
  %7778 = vrot.lane.b32.xlu0 %v4973, 56
  %v7779 = vpop.permute.xlu0 %7778
  %7780 = vrot.lane.b32.xlu0 %v4974, 56
  %v7781 = vpop.permute.xlu0 %7780
  %7782 = vrot.lane.b32.xlu0 %v4975, 56
  %v7783 = vpop.permute.xlu0 %7782
  %7784 = vrot.lane.b32.xlu0 %v4976, 56
  %v7785 = vpop.permute.xlu0 %7784
  %7786 = vrot.lane.b32.xlu0 %v4977, 56
  %v7787 = vpop.permute.xlu0 %7786
  %7788 = vrot.lane.b32.xlu0 %v4978, 56
  %v7789 = vpop.permute.xlu0 %7788
  %7790 = vrot.lane.b32.xlu0 %v4979, 56
  %v7791 = vpop.permute.xlu0 %7790
  %7792 = vrot.lane.b32.xlu0 %v6486, 56
  %v7793 = vpop.permute.xlu0 %7792
  %7794 = vrot.lane.b32.xlu0 %v6487, 56
  %v7795 = vpop.permute.xlu0 %7794
  %7796 = vrot.lane.b32.xlu0 %v4982, 56
  %v7797 = vpop.permute.xlu0 %7796
  %7798 = vrot.lane.b32.xlu0 %v4983, 56
  %v7799 = vpop.permute.xlu0 %7798
  %7800 = vrot.lane.b32.xlu0 %v4984, 56
  %v7801 = vpop.permute.xlu0 %7800
  %7802 = vrot.lane.b32.xlu0 %v4985, 56
  %v7803 = vpop.permute.xlu0 %7802
  %7804 = vrot.lane.b32.xlu0 %v4986, 56
  %v7805 = vpop.permute.xlu0 %7804
  %7806 = vrot.lane.b32.xlu0 %v4987, 56
  %v7807 = vpop.permute.xlu0 %7806
  %7808 = vrot.lane.b32.xlu0 %v4988, 56
  %v7809 = vpop.permute.xlu0 %7808
  %7810 = vrot.lane.b32.xlu0 %v4989, 56
  %v7811 = vpop.permute.xlu0 %7810
  %7812 = vrot.lane.b32.xlu0 %v4990, 56
  %v7813 = vpop.permute.xlu0 %7812
  %7814 = vrot.lane.b32.xlu0 %v4991, 56
  %v7815 = vpop.permute.xlu0 %7814
  %7816 = vrot.lane.b32.xlu0 %v4992, 56
  %v7817 = vpop.permute.xlu0 %7816
  %7818 = vrot.lane.b32.xlu0 %v4993, 56
  %v7819 = vpop.permute.xlu0 %7818
  %7820 = vrot.lane.b32.xlu0 %v4994, 56
  %v7821 = vpop.permute.xlu0 %7820
  %7822 = vrot.lane.b32.xlu0 %v4995, 56
  %v7823 = vpop.permute.xlu0 %7822
  %7824 = vrot.lane.b32.xlu0 %v4996, 56
  %v7825 = vpop.permute.xlu0 %7824
  %7826 = vrot.lane.b32.xlu0 %v4997, 56
  %v7827 = vpop.permute.xlu0 %7826
  %7828 = vrot.lane.b32.xlu0 %v4998, 56
  %v7829 = vpop.permute.xlu0 %7828
  %7830 = vrot.lane.b32.xlu0 %v4999, 56
  %v7831 = vpop.permute.xlu0 %7830
  %7832 = vrot.lane.b32.xlu0 %v5000, 56
  %v7833 = vpop.permute.xlu0 %7832
  %7834 = vrot.lane.b32.xlu0 %v5001, 56
  %v7835 = vpop.permute.xlu0 %7834
  %7836 = vrot.lane.b32.xlu0 %v5002, 56
  %v7837 = vpop.permute.xlu0 %7836
  %7838 = vrot.lane.b32.xlu0 %v5003, 56
  %v7839 = vpop.permute.xlu0 %7838
  %7840 = vrot.lane.b32.xlu0 %v5004, 56
  %v7841 = vpop.permute.xlu0 %7840
  %7842 = vrot.lane.b32.xlu0 %v5005, 56
  %v7843 = vpop.permute.xlu0 %7842
  %7844 = vrot.lane.b32.xlu0 %v5006, 56
  %v7845 = vpop.permute.xlu0 %7844
  %7846 = vrot.lane.b32.xlu0 %v5007, 56
  %v7847 = vpop.permute.xlu0 %7846
  %7848 = vrot.lane.b32.xlu0 %v5008, 56
  %v7849 = vpop.permute.xlu0 %7848
  %7850 = vrot.lane.b32.xlu0 %v5009, 56
  %v7851 = vpop.permute.xlu0 %7850
  %7852 = vrot.lane.b32.xlu0 %v6488, 56
  %v7853 = vpop.permute.xlu0 %7852
  %7854 = vrot.lane.b32.xlu0 %v6489, 56
  %v7855 = vpop.permute.xlu0 %7854
  %7916 = vst.msk [vmem:[#allocation2] sm:$0xf] %vm3269, %v7737
  %7917 = vst.msk [vmem:[#allocation2 + $0x4] sm:$0xf] %vm3269, %v7739
  %7918 = vst.msk [vmem:[#allocation2 + $0x8] sm:$0xf] %vm3269, %v7741
  %7919 = vst.msk [vmem:[#allocation2 + $0xc] sm:$0xf] %vm3269, %v7743
  %7920 = vst.msk [vmem:[#allocation2 + $0x10] sm:$0xf] %vm3269, %v7745
  %7921 = vst.msk [vmem:[#allocation2 + $0x14] sm:$0xf] %vm3269, %v7747
  %7922 = vst.msk [vmem:[#allocation2 + $0x18] sm:$0xf] %vm3269, %v7749
  %7923 = vst.msk [vmem:[#allocation2 + $0x1c] sm:$0xf] %vm3269, %v7751
  %7924 = vst.msk [vmem:[#allocation2 + $0x20] sm:$0xf] %vm3269, %v7753
  %7925 = vst.msk [vmem:[#allocation2 + $0x24] sm:$0xf] %vm3269, %v7755
  %7926 = vst.msk [vmem:[#allocation2 + $0x28] sm:$0xf] %vm3269, %v7757
  %7927 = vst.msk [vmem:[#allocation2 + $0x2c] sm:$0xf] %vm3269, %v7759
  %7928 = vst.msk [vmem:[#allocation2 + $0x30] sm:$0xf] %vm3269, %v7761
  %7929 = vst.msk [vmem:[#allocation2 + $0x34] sm:$0xf] %vm3269, %v7763
  %7930 = vst.msk [vmem:[#allocation2 + $0x38] sm:$0xf] %vm3269, %v7765
  %7931 = vst.msk [vmem:[#allocation2 + $0x3c] sm:$0xf] %vm3269, %v7767
  %7932 = vst.msk [vmem:[#allocation2 + $0x40] sm:$0xf] %vm3269, %v7769
  %7933 = vst.msk [vmem:[#allocation2 + $0x44] sm:$0xf] %vm3269, %v7771
  %7934 = vst.msk [vmem:[#allocation2 + $0x48] sm:$0xf] %vm3269, %v7773
  %7935 = vst.msk [vmem:[#allocation2 + $0x4c] sm:$0xf] %vm3269, %v7775
  %7936 = vst.msk [vmem:[#allocation2 + $0x50] sm:$0xf] %vm3269, %v7777
  %7937 = vst.msk [vmem:[#allocation2 + $0x54] sm:$0xf] %vm3269, %v7779
  %7938 = vst.msk [vmem:[#allocation2 + $0x58] sm:$0xf] %vm3269, %v7781
  %7939 = vst.msk [vmem:[#allocation2 + $0x5c] sm:$0xf] %vm3269, %v7783
  %7940 = vst.msk [vmem:[#allocation2 + $0x60] sm:$0xf] %vm3269, %v7785
  %7941 = vst.msk [vmem:[#allocation2 + $0x64] sm:$0xf] %vm3269, %v7787
  %7942 = vst.msk [vmem:[#allocation2 + $0x68] sm:$0xf] %vm3269, %v7789
  %7943 = vst.msk [vmem:[#allocation2 + $0x6c] sm:$0xf] %vm3269, %v7791
  %7944 = vst.msk [vmem:[#allocation2 + $0x70] sm:$0xf] %vm3269, %v7793
  %7945 = vst.msk [vmem:[#allocation2 + $0x74] sm:$0xf] %vm3269, %v7795
  %7946 = vst.msk [vmem:[#allocation2 + $0x80] sm:$0xf] %vm3269, %v7797
  %7947 = vst.msk [vmem:[#allocation2 + $0x84] sm:$0xf] %vm3269, %v7799
  %7948 = vst.msk [vmem:[#allocation2 + $0x88] sm:$0xf] %vm3269, %v7801
  %7949 = vst.msk [vmem:[#allocation2 + $0x8c] sm:$0xf] %vm3269, %v7803
  %7950 = vst.msk [vmem:[#allocation2 + $0x90] sm:$0xf] %vm3269, %v7805
  %7951 = vst.msk [vmem:[#allocation2 + $0x94] sm:$0xf] %vm3269, %v7807
  %7952 = vst.msk [vmem:[#allocation2 + $0x98] sm:$0xf] %vm3269, %v7809
  %7953 = vst.msk [vmem:[#allocation2 + $0x9c] sm:$0xf] %vm3269, %v7811
  %7954 = vst.msk [vmem:[#allocation2 + $0xa0] sm:$0xf] %vm3269, %v7813
  %7955 = vst.msk [vmem:[#allocation2 + $0xa4] sm:$0xf] %vm3269, %v7815
  %7956 = vst.msk [vmem:[#allocation2 + $0xa8] sm:$0xf] %vm3269, %v7817
  %7957 = vst.msk [vmem:[#allocation2 + $0xac] sm:$0xf] %vm3269, %v7819
  %7958 = vst.msk [vmem:[#allocation2 + $0xb0] sm:$0xf] %vm3269, %v7821
  %7959 = vst.msk [vmem:[#allocation2 + $0xb4] sm:$0xf] %vm3269, %v7823
  %7960 = vst.msk [vmem:[#allocation2 + $0xb8] sm:$0xf] %vm3269, %v7825
  %7961 = vst.msk [vmem:[#allocation2 + $0xbc] sm:$0xf] %vm3269, %v7827
  %7962 = vst.msk [vmem:[#allocation2 + $0xc0] sm:$0xf] %vm3269, %v7829
  %7963 = vst.msk [vmem:[#allocation2 + $0xc4] sm:$0xf] %vm3269, %v7831
  %7964 = vst.msk [vmem:[#allocation2 + $0xc8] sm:$0xf] %vm3269, %v7833
  %7965 = vst.msk [vmem:[#allocation2 + $0xcc] sm:$0xf] %vm3269, %v7835
  %7966 = vst.msk [vmem:[#allocation2 + $0xd0] sm:$0xf] %vm3269, %v7837
  %7967 = vst.msk [vmem:[#allocation2 + $0xd4] sm:$0xf] %vm3269, %v7839
  %7968 = vst.msk [vmem:[#allocation2 + $0xd8] sm:$0xf] %vm3269, %v7841
  %7969 = vst.msk [vmem:[#allocation2 + $0xdc] sm:$0xf] %vm3269, %v7843
  %7970 = vst.msk [vmem:[#allocation2 + $0xe0] sm:$0xf] %vm3269, %v7845
  %7971 = vst.msk [vmem:[#allocation2 + $0xe4] sm:$0xf] %vm3269, %v7847
  %7972 = vst.msk [vmem:[#allocation2 + $0xe8] sm:$0xf] %vm3269, %v7849
  %7973 = vst.msk [vmem:[#allocation2 + $0xec] sm:$0xf] %vm3269, %v7851
  %7974 = vst.msk [vmem:[#allocation2 + $0xf0] sm:$0xf] %vm3269, %v7853
  %7975 = vst.msk [vmem:[#allocation2 + $0xf4] sm:$0xf] %vm3269, %v7855
  %7976 = vrot.lane.b32.xlu0 %v5924, 64
  %v7977 = vpop.permute.xlu0 %7976
  %7978 = vrot.lane.b32.xlu0 %v5927, 64
  %v7979 = vpop.permute.xlu0 %7978
  %7980 = vrot.lane.b32.xlu0 %v5933, 64
  %v7981 = vpop.permute.xlu0 %7980
  %7982 = vrot.lane.b32.xlu0 %v5936, 64
  %v7983 = vpop.permute.xlu0 %7982
  %7984 = vrot.lane.b32.xlu0 %v5942, 64
  %v7985 = vpop.permute.xlu0 %7984
  %7986 = vrot.lane.b32.xlu0 %v5945, 64
  %v7987 = vpop.permute.xlu0 %7986
  %7988 = vrot.lane.b32.xlu0 %v5951, 64
  %v7989 = vpop.permute.xlu0 %7988
  %7990 = vrot.lane.b32.xlu0 %v5954, 64
  %v7991 = vpop.permute.xlu0 %7990
  %7992 = vrot.lane.b32.xlu0 %v5960, 64
  %v7993 = vpop.permute.xlu0 %7992
  %7994 = vrot.lane.b32.xlu0 %v5963, 64
  %v7995 = vpop.permute.xlu0 %7994
  %7996 = vrot.lane.b32.xlu0 %v5969, 64
  %v7997 = vpop.permute.xlu0 %7996
  %7998 = vrot.lane.b32.xlu0 %v5972, 64
  %v7999 = vpop.permute.xlu0 %7998
  %8000 = vrot.lane.b32.xlu0 %v5978, 64
  %v8001 = vpop.permute.xlu0 %8000
  %8002 = vrot.lane.b32.xlu0 %v5981, 64
  %v8003 = vpop.permute.xlu0 %8002
  %8004 = vrot.lane.b32.xlu0 %v5987, 64
  %v8005 = vpop.permute.xlu0 %8004
  %8006 = vrot.lane.b32.xlu0 %v5990, 64
  %v8007 = vpop.permute.xlu0 %8006
  %8008 = vrot.lane.b32.xlu0 %v5996, 64
  %v8009 = vpop.permute.xlu0 %8008
  %8010 = vrot.lane.b32.xlu0 %v5999, 64
  %v8011 = vpop.permute.xlu0 %8010
  %8012 = vrot.lane.b32.xlu0 %v6005, 64
  %v8013 = vpop.permute.xlu0 %8012
  %8014 = vrot.lane.b32.xlu0 %v6008, 64
  %v8015 = vpop.permute.xlu0 %8014
  %8016 = vrot.lane.b32.xlu0 %v6014, 64
  %v8017 = vpop.permute.xlu0 %8016
  %8018 = vrot.lane.b32.xlu0 %v6017, 64
  %v8019 = vpop.permute.xlu0 %8018
  %8020 = vrot.lane.b32.xlu0 %v6023, 64
  %v8021 = vpop.permute.xlu0 %8020
  %8022 = vrot.lane.b32.xlu0 %v6026, 64
  %v8023 = vpop.permute.xlu0 %8022
  %8024 = vrot.lane.b32.xlu0 %v6032, 64
  %v8025 = vpop.permute.xlu0 %8024
  %8026 = vrot.lane.b32.xlu0 %v6035, 64
  %v8027 = vpop.permute.xlu0 %8026
  %8028 = vrot.lane.b32.xlu0 %v6041, 64
  %v8029 = vpop.permute.xlu0 %8028
  %8030 = vrot.lane.b32.xlu0 %v6044, 64
  %v8031 = vpop.permute.xlu0 %8030
  %8032 = vrot.lane.b32.xlu0 %v7103, 64
  %v8033 = vpop.permute.xlu0 %8032
  %8034 = vrot.lane.b32.xlu0 %v7106, 64
  %v8035 = vpop.permute.xlu0 %8034
  %8036 = vrot.lane.b32.xlu0 %v6059, 64
  %v8037 = vpop.permute.xlu0 %8036
  %8038 = vrot.lane.b32.xlu0 %v6062, 64
  %v8039 = vpop.permute.xlu0 %8038
  %8040 = vrot.lane.b32.xlu0 %v6068, 64
  %v8041 = vpop.permute.xlu0 %8040
  %8042 = vrot.lane.b32.xlu0 %v6071, 64
  %v8043 = vpop.permute.xlu0 %8042
  %8044 = vrot.lane.b32.xlu0 %v6077, 64
  %v8045 = vpop.permute.xlu0 %8044
  %8046 = vrot.lane.b32.xlu0 %v6080, 64
  %v8047 = vpop.permute.xlu0 %8046
  %8048 = vrot.lane.b32.xlu0 %v6086, 64
  %v8049 = vpop.permute.xlu0 %8048
  %8050 = vrot.lane.b32.xlu0 %v6089, 64
  %v8051 = vpop.permute.xlu0 %8050
  %8052 = vrot.lane.b32.xlu0 %v6095, 64
  %v8053 = vpop.permute.xlu0 %8052
  %8054 = vrot.lane.b32.xlu0 %v6098, 64
  %v8055 = vpop.permute.xlu0 %8054
  %8056 = vrot.lane.b32.xlu0 %v6104, 64
  %v8057 = vpop.permute.xlu0 %8056
  %8058 = vrot.lane.b32.xlu0 %v6107, 64
  %v8059 = vpop.permute.xlu0 %8058
  %8060 = vrot.lane.b32.xlu0 %v6113, 64
  %v8061 = vpop.permute.xlu0 %8060
  %8062 = vrot.lane.b32.xlu0 %v6116, 64
  %v8063 = vpop.permute.xlu0 %8062
  %8064 = vrot.lane.b32.xlu0 %v6122, 64
  %v8065 = vpop.permute.xlu0 %8064
  %8066 = vrot.lane.b32.xlu0 %v6125, 64
  %v8067 = vpop.permute.xlu0 %8066
  %8068 = vrot.lane.b32.xlu0 %v6131, 64
  %v8069 = vpop.permute.xlu0 %8068
  %8070 = vrot.lane.b32.xlu0 %v6134, 64
  %v8071 = vpop.permute.xlu0 %8070
  %8072 = vrot.lane.b32.xlu0 %v6140, 64
  %v8073 = vpop.permute.xlu0 %8072
  %8074 = vrot.lane.b32.xlu0 %v6143, 64
  %v8075 = vpop.permute.xlu0 %8074
  %8076 = vrot.lane.b32.xlu0 %v6149, 64
  %v8077 = vpop.permute.xlu0 %8076
  %8078 = vrot.lane.b32.xlu0 %v6152, 64
  %v8079 = vpop.permute.xlu0 %8078
  %8080 = vrot.lane.b32.xlu0 %v6158, 64
  %v8081 = vpop.permute.xlu0 %8080
  %8082 = vrot.lane.b32.xlu0 %v6161, 64
  %v8083 = vpop.permute.xlu0 %8082
  %8084 = vrot.lane.b32.xlu0 %v6167, 64
  %v8085 = vpop.permute.xlu0 %8084
  %8086 = vrot.lane.b32.xlu0 %v6170, 64
  %v8087 = vpop.permute.xlu0 %8086
  %8088 = vrot.lane.b32.xlu0 %v6176, 64
  %v8089 = vpop.permute.xlu0 %8088
  %8090 = vrot.lane.b32.xlu0 %v6179, 64
  %v8091 = vpop.permute.xlu0 %8090
  %8092 = vrot.lane.b32.xlu0 %v7112, 64
  %v8093 = vpop.permute.xlu0 %8092
  %8094 = vrot.lane.b32.xlu0 %v7115, 64
  %v8095 = vpop.permute.xlu0 %8094
  %8156 = vst.msk [vmem:[#allocation2] sm:$0xf] %vm3510, %v7977
  %v8157 = vld [vmem:[#allocation2 + $0x4] sm:$0xf]
  %v8158 = vsel %vm3513, %v7979, %v8157
  %8159 = vst [vmem:[#allocation2 + $0x4] sm:$0xf] %v8158
  %8160 = vst.msk [vmem:[#allocation2 + $0x8] sm:$0xf] %vm3510, %v7981
  %v8161 = vld [vmem:[#allocation2 + $0xc] sm:$0xf]
  %v8162 = vsel %vm3513, %v7983, %v8161
  %8163 = vst [vmem:[#allocation2 + $0xc] sm:$0xf] %v8162
  %8164 = vst.msk [vmem:[#allocation2 + $0x10] sm:$0xf] %vm3510, %v7985
  %v8165 = vld [vmem:[#allocation2 + $0x14] sm:$0xf]
  %v8166 = vsel %vm3513, %v7987, %v8165
  %8167 = vst [vmem:[#allocation2 + $0x14] sm:$0xf] %v8166
  %8168 = vst.msk [vmem:[#allocation2 + $0x18] sm:$0xf] %vm3510, %v7989
  %v8169 = vld [vmem:[#allocation2 + $0x1c] sm:$0xf]
  %v8170 = vsel %vm3513, %v7991, %v8169
  %8171 = vst [vmem:[#allocation2 + $0x1c] sm:$0xf] %v8170
  %8172 = vst.msk [vmem:[#allocation2 + $0x20] sm:$0xf] %vm3510, %v7993
  %v8173 = vld [vmem:[#allocation2 + $0x24] sm:$0xf]
  %v8174 = vsel %vm3513, %v7995, %v8173
  %8175 = vst [vmem:[#allocation2 + $0x24] sm:$0xf] %v8174
  %8176 = vst.msk [vmem:[#allocation2 + $0x28] sm:$0xf] %vm3510, %v7997
  %v8177 = vld [vmem:[#allocation2 + $0x2c] sm:$0xf]
  %v8178 = vsel %vm3513, %v7999, %v8177
  %8179 = vst [vmem:[#allocation2 + $0x2c] sm:$0xf] %v8178
  %8180 = vst.msk [vmem:[#allocation2 + $0x30] sm:$0xf] %vm3510, %v8001
  %v8181 = vld [vmem:[#allocation2 + $0x34] sm:$0xf]
  %v8182 = vsel %vm3513, %v8003, %v8181
  %8183 = vst [vmem:[#allocation2 + $0x34] sm:$0xf] %v8182
  %8184 = vst.msk [vmem:[#allocation2 + $0x38] sm:$0xf] %vm3510, %v8005
  %v8185 = vld [vmem:[#allocation2 + $0x3c] sm:$0xf]
  %v8186 = vsel %vm3513, %v8007, %v8185
  %8187 = vst [vmem:[#allocation2 + $0x3c] sm:$0xf] %v8186
  %8188 = vst.msk [vmem:[#allocation2 + $0x40] sm:$0xf] %vm3510, %v8009
  %v8189 = vld [vmem:[#allocation2 + $0x44] sm:$0xf]
  %v8190 = vsel %vm3513, %v8011, %v8189
  %8191 = vst [vmem:[#allocation2 + $0x44] sm:$0xf] %v8190
  %8192 = vst.msk [vmem:[#allocation2 + $0x48] sm:$0xf] %vm3510, %v8013
  %v8193 = vld [vmem:[#allocation2 + $0x4c] sm:$0xf]
  %v8194 = vsel %vm3513, %v8015, %v8193
  %8195 = vst [vmem:[#allocation2 + $0x4c] sm:$0xf] %v8194
  %8196 = vst.msk [vmem:[#allocation2 + $0x50] sm:$0xf] %vm3510, %v8017
  %v8197 = vld [vmem:[#allocation2 + $0x54] sm:$0xf]
  %v8198 = vsel %vm3513, %v8019, %v8197
  %8199 = vst [vmem:[#allocation2 + $0x54] sm:$0xf] %v8198
  %8200 = vst.msk [vmem:[#allocation2 + $0x58] sm:$0xf] %vm3510, %v8021
  %v8201 = vld [vmem:[#allocation2 + $0x5c] sm:$0xf]
  %v8202 = vsel %vm3513, %v8023, %v8201
  %8203 = vst [vmem:[#allocation2 + $0x5c] sm:$0xf] %v8202
  %8204 = vst.msk [vmem:[#allocation2 + $0x60] sm:$0xf] %vm3510, %v8025
  %v8205 = vld [vmem:[#allocation2 + $0x64] sm:$0xf]
  %v8206 = vsel %vm3513, %v8027, %v8205
  %8207 = vst [vmem:[#allocation2 + $0x64] sm:$0xf] %v8206
  %8208 = vst.msk [vmem:[#allocation2 + $0x68] sm:$0xf] %vm3510, %v8029
  %v8209 = vld [vmem:[#allocation2 + $0x6c] sm:$0xf]
  %v8210 = vsel %vm3513, %v8031, %v8209
  %8211 = vst [vmem:[#allocation2 + $0x6c] sm:$0xf] %v8210
  %8212 = vst.msk [vmem:[#allocation2 + $0x70] sm:$0xf] %vm3510, %v8033
  %v8213 = vld [vmem:[#allocation2 + $0x74] sm:$0xf]
  %v8214 = vsel %vm3513, %v8035, %v8213
  %8215 = vst [vmem:[#allocation2 + $0x74] sm:$0xf] %v8214
  %8216 = vst.msk [vmem:[#allocation2 + $0x80] sm:$0xf] %vm3510, %v8037
  %v8217 = vld [vmem:[#allocation2 + $0x84] sm:$0xf]
  %v8218 = vsel %vm3513, %v8039, %v8217
  %8219 = vst [vmem:[#allocation2 + $0x84] sm:$0xf] %v8218
  %8220 = vst.msk [vmem:[#allocation2 + $0x88] sm:$0xf] %vm3510, %v8041
  %v8221 = vld [vmem:[#allocation2 + $0x8c] sm:$0xf]
  %v8222 = vsel %vm3513, %v8043, %v8221
  %8223 = vst [vmem:[#allocation2 + $0x8c] sm:$0xf] %v8222
  %8224 = vst.msk [vmem:[#allocation2 + $0x90] sm:$0xf] %vm3510, %v8045
  %v8225 = vld [vmem:[#allocation2 + $0x94] sm:$0xf]
  %v8226 = vsel %vm3513, %v8047, %v8225
  %8227 = vst [vmem:[#allocation2 + $0x94] sm:$0xf] %v8226
  %8228 = vst.msk [vmem:[#allocation2 + $0x98] sm:$0xf] %vm3510, %v8049
  %v8229 = vld [vmem:[#allocation2 + $0x9c] sm:$0xf]
  %v8230 = vsel %vm3513, %v8051, %v8229
  %8231 = vst [vmem:[#allocation2 + $0x9c] sm:$0xf] %v8230
  %8232 = vst.msk [vmem:[#allocation2 + $0xa0] sm:$0xf] %vm3510, %v8053
  %v8233 = vld [vmem:[#allocation2 + $0xa4] sm:$0xf]
  %v8234 = vsel %vm3513, %v8055, %v8233
  %8235 = vst [vmem:[#allocation2 + $0xa4] sm:$0xf] %v8234
  %8236 = vst.msk [vmem:[#allocation2 + $0xa8] sm:$0xf] %vm3510, %v8057
  %v8237 = vld [vmem:[#allocation2 + $0xac] sm:$0xf]
  %v8238 = vsel %vm3513, %v8059, %v8237
  %8239 = vst [vmem:[#allocation2 + $0xac] sm:$0xf] %v8238
  %8240 = vst.msk [vmem:[#allocation2 + $0xb0] sm:$0xf] %vm3510, %v8061
  %v8241 = vld [vmem:[#allocation2 + $0xb4] sm:$0xf]
  %v8242 = vsel %vm3513, %v8063, %v8241
  %8243 = vst [vmem:[#allocation2 + $0xb4] sm:$0xf] %v8242
  %8244 = vst.msk [vmem:[#allocation2 + $0xb8] sm:$0xf] %vm3510, %v8065
  %v8245 = vld [vmem:[#allocation2 + $0xbc] sm:$0xf]
  %v8246 = vsel %vm3513, %v8067, %v8245
  %8247 = vst [vmem:[#allocation2 + $0xbc] sm:$0xf] %v8246
  %8248 = vst.msk [vmem:[#allocation2 + $0xc0] sm:$0xf] %vm3510, %v8069
  %v8249 = vld [vmem:[#allocation2 + $0xc4] sm:$0xf]
  %v8250 = vsel %vm3513, %v8071, %v8249
  %8251 = vst [vmem:[#allocation2 + $0xc4] sm:$0xf] %v8250
  %8252 = vst.msk [vmem:[#allocation2 + $0xc8] sm:$0xf] %vm3510, %v8073
  %v8253 = vld [vmem:[#allocation2 + $0xcc] sm:$0xf]
  %v8254 = vsel %vm3513, %v8075, %v8253
  %8255 = vst [vmem:[#allocation2 + $0xcc] sm:$0xf] %v8254
  %8256 = vst.msk [vmem:[#allocation2 + $0xd0] sm:$0xf] %vm3510, %v8077
  %v8257 = vld [vmem:[#allocation2 + $0xd4] sm:$0xf]
  %v8258 = vsel %vm3513, %v8079, %v8257
  %8259 = vst [vmem:[#allocation2 + $0xd4] sm:$0xf] %v8258
  %8260 = vst.msk [vmem:[#allocation2 + $0xd8] sm:$0xf] %vm3510, %v8081
  %v8261 = vld [vmem:[#allocation2 + $0xdc] sm:$0xf]
  %v8262 = vsel %vm3513, %v8083, %v8261
  %8263 = vst [vmem:[#allocation2 + $0xdc] sm:$0xf] %v8262
  %8264 = vst.msk [vmem:[#allocation2 + $0xe0] sm:$0xf] %vm3510, %v8085
  %v8265 = vld [vmem:[#allocation2 + $0xe4] sm:$0xf]
  %v8266 = vsel %vm3513, %v8087, %v8265
  %8267 = vst [vmem:[#allocation2 + $0xe4] sm:$0xf] %v8266
  %8268 = vst.msk [vmem:[#allocation2 + $0xe8] sm:$0xf] %vm3510, %v8089
  %v8269 = vld [vmem:[#allocation2 + $0xec] sm:$0xf]
  %v8270 = vsel %vm3513, %v8091, %v8269
  %8271 = vst [vmem:[#allocation2 + $0xec] sm:$0xf] %v8270
  %8272 = vst.msk [vmem:[#allocation2 + $0xf0] sm:$0xf] %vm3510, %v8093
  %v8273 = vld [vmem:[#allocation2 + $0xf4] sm:$0xf]
  %v8274 = vsel %vm3513, %v8095, %v8273
  %8275 = vst [vmem:[#allocation2 + $0xf4] sm:$0xf] %v8274
  %v8276 = vld [vmem:[#allocation2] sm:$0xf]
  %v8277 = vld [vmem:[#allocation2 + $0x4] sm:$0xf]
  %v8278 = vld [vmem:[#allocation2 + $0x8] sm:$0xf]
  %v8279 = vld [vmem:[#allocation2 + $0xc] sm:$0xf]
  %v8280 = vld [vmem:[#allocation2 + $0x10] sm:$0xf]
  %v8281 = vld [vmem:[#allocation2 + $0x14] sm:$0xf]
  %v8282 = vld [vmem:[#allocation2 + $0x18] sm:$0xf]
  %v8283 = vld [vmem:[#allocation2 + $0x1c] sm:$0xf]
  %v8284 = vld [vmem:[#allocation2 + $0x20] sm:$0xf]
  %v8285 = vld [vmem:[#allocation2 + $0x24] sm:$0xf]
  %v8286 = vld [vmem:[#allocation2 + $0x28] sm:$0xf]
  %v8287 = vld [vmem:[#allocation2 + $0x2c] sm:$0xf]
  %v8288 = vld [vmem:[#allocation2 + $0x30] sm:$0xf]
  %v8289 = vld [vmem:[#allocation2 + $0x34] sm:$0xf]
  %v8290 = vld [vmem:[#allocation2 + $0x38] sm:$0xf]
  %v8291 = vld [vmem:[#allocation2 + $0x3c] sm:$0xf]
  %v8292 = vld [vmem:[#allocation2 + $0x40] sm:$0xf]
  %v8293 = vld [vmem:[#allocation2 + $0x44] sm:$0xf]
  %v8294 = vld [vmem:[#allocation2 + $0x48] sm:$0xf]
  %v8295 = vld [vmem:[#allocation2 + $0x4c] sm:$0xf]
  %v8296 = vld [vmem:[#allocation2 + $0x50] sm:$0xf]
  %v8297 = vld [vmem:[#allocation2 + $0x54] sm:$0xf]
  %v8298 = vld [vmem:[#allocation2 + $0x58] sm:$0xf]
  %v8299 = vld [vmem:[#allocation2 + $0x5c] sm:$0xf]
  %v8300 = vld [vmem:[#allocation2 + $0x60] sm:$0xf]
  %v8301 = vld [vmem:[#allocation2 + $0x64] sm:$0xf]
  %v8302 = vld [vmem:[#allocation2 + $0x68] sm:$0xf]
  %v8303 = vld [vmem:[#allocation2 + $0x6c] sm:$0xf]
  %v8304 = vld [vmem:[#allocation2 + $0x70] sm:$0xf]
  %v8305 = vld [vmem:[#allocation2 + $0x74] sm:$0xf]
  %v8306 = vld [vmem:[#allocation2 + $0x78] sm:$0xf]
  %v8307 = vld [vmem:[#allocation2 + $0x7c] sm:$0xf]
  %v8308 = vld [vmem:[#allocation2 + $0x80] sm:$0xf]
  %v8309 = vld [vmem:[#allocation2 + $0x84] sm:$0xf]
  %v8310 = vld [vmem:[#allocation2 + $0x88] sm:$0xf]
  %v8311 = vld [vmem:[#allocation2 + $0x8c] sm:$0xf]
  %v8312 = vld [vmem:[#allocation2 + $0x90] sm:$0xf]
  %v8313 = vld [vmem:[#allocation2 + $0x94] sm:$0xf]
  %v8314 = vld [vmem:[#allocation2 + $0x98] sm:$0xf]
  %v8315 = vld [vmem:[#allocation2 + $0x9c] sm:$0xf]
  %v8316 = vld [vmem:[#allocation2 + $0xa0] sm:$0xf]
  %v8317 = vld [vmem:[#allocation2 + $0xa4] sm:$0xf]
  %v8318 = vld [vmem:[#allocation2 + $0xa8] sm:$0xf]
  %v8319 = vld [vmem:[#allocation2 + $0xac] sm:$0xf]
  %v8320 = vld [vmem:[#allocation2 + $0xb0] sm:$0xf]
  %v8321 = vld [vmem:[#allocation2 + $0xb4] sm:$0xf]
  %v8322 = vld [vmem:[#allocation2 + $0xb8] sm:$0xf]
  %v8323 = vld [vmem:[#allocation2 + $0xbc] sm:$0xf]
  %v8324 = vld [vmem:[#allocation2 + $0xc0] sm:$0xf]
  %v8325 = vld [vmem:[#allocation2 + $0xc4] sm:$0xf]
  %v8326 = vld [vmem:[#allocation2 + $0xc8] sm:$0xf]
  %v8327 = vld [vmem:[#allocation2 + $0xcc] sm:$0xf]
  %v8328 = vld [vmem:[#allocation2 + $0xd0] sm:$0xf]
  %v8329 = vld [vmem:[#allocation2 + $0xd4] sm:$0xf]
  %v8330 = vld [vmem:[#allocation2 + $0xd8] sm:$0xf]
  %v8331 = vld [vmem:[#allocation2 + $0xdc] sm:$0xf]
  %v8332 = vld [vmem:[#allocation2 + $0xe0] sm:$0xf]
  %v8333 = vld [vmem:[#allocation2 + $0xe4] sm:$0xf]
  %v8334 = vld [vmem:[#allocation2 + $0xe8] sm:$0xf]
  %v8335 = vld [vmem:[#allocation2 + $0xec] sm:$0xf]
  %v8336 = vld [vmem:[#allocation2 + $0xf0] sm:$0xf]
  %v8337 = vld [vmem:[#allocation2 + $0xf4] sm:$0xf]
  %v8338 = vld [vmem:[#allocation2 + $0xf8] sm:$0xf]
  %v8339 = vld [vmem:[#allocation2 + $0xfc] sm:$0xf]
  %v8340 = vld [vmem:[%s2] sm:$0xf]
  %v8341 = vld [vmem:[%s2 + $0x4] sm:$0xf]
  %v8342 = vld [vmem:[%s2 + $0x8] sm:$0xf]
  %v8343 = vld [vmem:[%s2 + $0xc] sm:$0xf]
  %v8344 = vld [vmem:[%s2 + $0x10] sm:$0xf]
  %v8345 = vld [vmem:[%s2 + $0x14] sm:$0xf]
  %v8346 = vld [vmem:[%s2 + $0x18] sm:$0xf]
  %v8347 = vld [vmem:[%s2 + $0x1c] sm:$0xf]
  %v8348 = vld [vmem:[%s2 + $0x20] sm:$0xf]
  %v8413 = vunpack.c.l.b16 %v8276
  %v8414 = vunpack.c.l.b16 %v8277
  %v8415 = vunpack.c.l.b16 %v8278
  %v8416 = vunpack.c.l.b16 %v8279
  %v8417 = vunpack.c.l.b16 %v8280
  %v8418 = vunpack.c.l.b16 %v8281
  %v8419 = vunpack.c.l.b16 %v8282
  %v8420 = vunpack.c.l.b16 %v8283
  %v8421 = vunpack.c.l.b16 %v8284
  %v8422 = vunpack.c.l.b16 %v8285
  %v8423 = vunpack.c.l.b16 %v8286
  %v8424 = vunpack.c.l.b16 %v8287
  %v8425 = vunpack.c.l.b16 %v8288
  %v8426 = vunpack.c.l.b16 %v8289
  %v8427 = vunpack.c.l.b16 %v8290
  %v8428 = vunpack.c.l.b16 %v8291
  %v8429 = vunpack.c.l.b16 %v8292
  %v8430 = vunpack.c.l.b16 %v8293
  %v8431 = vunpack.c.l.b16 %v8294
  %v8432 = vunpack.c.l.b16 %v8295
  %v8433 = vunpack.c.l.b16 %v8296
  %v8434 = vunpack.c.l.b16 %v8297
  %v8435 = vunpack.c.l.b16 %v8298
  %v8436 = vunpack.c.l.b16 %v8299
  %v8437 = vunpack.c.l.b16 %v8300
  %v8438 = vunpack.c.l.b16 %v8301
  %v8439 = vunpack.c.l.b16 %v8302
  %v8440 = vunpack.c.l.b16 %v8303
  %v8441 = vunpack.c.l.b16 %v8304
  %v8442 = vunpack.c.l.b16 %v8305
  %v8443 = vunpack.c.l.b16 %v8306
  %v8444 = vunpack.c.l.b16 %v8307
  %v8445 = vunpack.c.l.b16 %v8308
  %v8446 = vunpack.c.l.b16 %v8309
  %v8447 = vunpack.c.l.b16 %v8310
  %v8448 = vunpack.c.l.b16 %v8311
  %v8449 = vunpack.c.l.b16 %v8312
  %v8450 = vunpack.c.l.b16 %v8313
  %v8451 = vunpack.c.l.b16 %v8314
  %v8452 = vunpack.c.l.b16 %v8315
  %v8453 = vunpack.c.l.b16 %v8316
  %v8454 = vunpack.c.l.b16 %v8317
  %v8455 = vunpack.c.l.b16 %v8318
  %v8456 = vunpack.c.l.b16 %v8319
  %v8457 = vunpack.c.l.b16 %v8320
  %v8458 = vunpack.c.l.b16 %v8321
  %v8459 = vunpack.c.l.b16 %v8322
  %v8460 = vunpack.c.l.b16 %v8323
  %v8461 = vunpack.c.l.b16 %v8324
  %v8462 = vunpack.c.l.b16 %v8325
  %v8463 = vunpack.c.l.b16 %v8326
  %v8464 = vunpack.c.l.b16 %v8327
  %v8465 = vunpack.c.l.b16 %v8328
  %v8466 = vunpack.c.l.b16 %v8329
  %v8467 = vunpack.c.l.b16 %v8330
  %v8468 = vunpack.c.l.b16 %v8331
  %v8469 = vunpack.c.l.b16 %v8332
  %v8470 = vunpack.c.l.b16 %v8333
  %v8471 = vunpack.c.l.b16 %v8334
  %v8472 = vunpack.c.l.b16 %v8335
  %v8473 = vunpack.c.l.b16 %v8336
  %v8474 = vunpack.c.l.b16 %v8337
  %v8475 = vunpack.c.l.b16 %v8338
  %v8476 = vunpack.c.l.b16 %v8339
  %v8477 = vpack.c.b16 %v8414, %v8413
  %v8478 = vpack.c.b16 %v8416, %v8415
  %v8479 = vpack.c.b16 %v8418, %v8417
  %v8480 = vpack.c.b16 %v8420, %v8419
  %v8481 = vpack.c.b16 %v8422, %v8421
  %v8482 = vpack.c.b16 %v8424, %v8423
  %v8483 = vpack.c.b16 %v8426, %v8425
  %v8484 = vpack.c.b16 %v8428, %v8427
  %v8485 = vpack.c.b16 %v8430, %v8429
  %v8486 = vpack.c.b16 %v8432, %v8431
  %v8487 = vpack.c.b16 %v8434, %v8433
  %v8488 = vpack.c.b16 %v8436, %v8435
  %v8489 = vpack.c.b16 %v8438, %v8437
  %v8490 = vpack.c.b16 %v8440, %v8439
  %v8491 = vpack.c.b16 %v8442, %v8441
  %v8492 = vpack.c.b16 %v8444, %v8443
  %v8493 = vpack.c.b16 %v8446, %v8445
  %v8494 = vpack.c.b16 %v8448, %v8447
  %v8495 = vpack.c.b16 %v8450, %v8449
  %v8496 = vpack.c.b16 %v8452, %v8451
  %v8497 = vpack.c.b16 %v8454, %v8453
  %v8498 = vpack.c.b16 %v8456, %v8455
  %v8499 = vpack.c.b16 %v8458, %v8457
  %v8500 = vpack.c.b16 %v8460, %v8459
  %v8501 = vpack.c.b16 %v8462, %v8461
  %v8502 = vpack.c.b16 %v8464, %v8463
  %v8503 = vpack.c.b16 %v8466, %v8465
  %v8504 = vpack.c.b16 %v8468, %v8467
  %v8505 = vpack.c.b16 %v8470, %v8469
  %v8506 = vpack.c.b16 %v8472, %v8471
  %v8507 = vpack.c.b16 %v8474, %v8473
  %v8508 = vpack.c.b16 %v8476, %v8475
  %v8518 = vunpack.c.l.b16 %v8340
  %v8519 = vunpack.c.l.b16 %v8341
  %v8520 = vunpack.c.l.b16 %v8342
  %v8521 = vunpack.c.l.b16 %v8343
  %v8522 = vunpack.c.l.b16 %v8344
  %v8523 = vunpack.c.l.b16 %v8345
  %v8524 = vunpack.c.l.b16 %v8346
  %v8525 = vunpack.c.l.b16 %v8347
  %v8526 = vunpack.c.l.b16 %v8348
  %v8527 = vpack.c.b16 %v8519, %v8518
  %v8528 = vpack.c.b16 %v8521, %v8520
  %v8529 = vpack.c.b16 %v8523, %v8522
  %v8530 = vpack.c.b16 %v8525, %v8524
  %v8531 = vpack.c.b16 %v8526, %v8526
  %v8537 = vsel %vm3893, %v8477, 0
  %v8540 = vsel %vm3893, %v8478, 0
  %v8543 = vsel %vm3893, %v8479, 0
  %v8546 = vsel %vm3893, %v8480, 0
  %v8549 = vsel %vm3893, %v8481, 0
  %v8552 = vsel %vm3893, %v8482, 0
  %v8555 = vsel %vm3893, %v8483, 0
  %v8558 = vsel %vm3893, %v8484, 0
  %v8561 = vsel %vm3893, %v8485, 0
  %v8564 = vsel %vm3893, %v8486, 0
  %v8567 = vsel %vm3893, %v8487, 0
  %v8570 = vsel %vm3893, %v8488, 0
  %v8573 = vsel %vm3893, %v8489, 0
  %v8576 = vsel %vm3893, %v8490, 0
  %v8579 = vsel %vm3893, %v8491, 0
  %v8582 = vsel %vm3893, %v8492, 0
  %v8585 = vsel %vm3893, %v8493, 0
  %v8588 = vsel %vm3893, %v8494, 0
  %v8591 = vsel %vm3893, %v8495, 0
  %v8594 = vsel %vm3893, %v8496, 0
  %v8597 = vsel %vm3893, %v8497, 0
  %v8600 = vsel %vm3893, %v8498, 0
  %v8603 = vsel %vm3893, %v8499, 0
  %v8606 = vsel %vm3893, %v8500, 0
  %v8609 = vsel %vm3893, %v8501, 0
  %v8612 = vsel %vm3893, %v8502, 0
  %v8615 = vsel %vm3893, %v8503, 0
  %v8618 = vsel %vm3893, %v8504, 0
  %v8621 = vsel %vm3893, %v8505, 0
  %v8624 = vsel %vm3893, %v8506, 0
  %v8627 = vsel %vm3893, %v8507, 0
  %v8630 = vsel %vm3893, %v8508, 0
  %v8633 = vsel %vm3990, %v8531, 0
  %8635 = vmatprep.subr.bf16.mxu0 0
  %8636 = vmatpush1.bf16.msra.mxu0 0
  %8637 = vmatprep.subr.bf16.mxu0 0
  %8638 = vmatpush1.bf16.msra.mxu0 0
  %8639 = vmatprep.subr.bf16.mxu0 0
  %8640 = vmatpush1.bf16.msra.mxu0 0
  %8641 = vmatprep.subr.bf16.mxu0 0
  %8642 = vmatpush1.bf16.msra.mxu0 %v8633
  %8643 = vmatprep.subr.bf16.mxu0 0
  %8644 = vmatpush1.bf16.msra.mxu0 %v8530
  %8645 = vmatprep.subr.bf16.mxu0 0
  %8646 = vmatpush1.bf16.msra.mxu0 %v8529
  %8647 = vmatprep.subr.bf16.mxu0 0
  %8648 = vmatpush1.bf16.msra.mxu0 %v8528
  %8649 = vmatprep.subr.bf16.mxu0 0
  %8650 = vmatpush1.bf16.msra.mxu0 %v8527
  %8651 = vmatprep.subr.bf16.mxu0 0
  %8652 = vmatpush2.bf16.msra.mxu0 0
  %8653 = vmatprep.subr.bf16.mxu0 0
  %8654 = vmatpush2.bf16.msra.mxu0 0
  %8655 = vmatprep.subr.bf16.mxu0 0
  %8656 = vmatpush2.bf16.msra.mxu0 0
  %8657 = vmatprep.subr.bf16.mxu0 0
  %8658 = vmatpush2.bf16.msra.mxu0 0
  %8659 = vmatprep.subr.bf16.mxu0 0
  %8660 = vmatpush2.bf16.msra.mxu0 0
  %8661 = vmatprep.subr.bf16.mxu0 0
  %8662 = vmatpush2.bf16.msra.mxu0 0
  %8663 = vmatprep.subr.bf16.mxu0 0
  %8664 = vmatpush2.bf16.msra.mxu0 0
  %8665 = vmatprep.subr.bf16.mxu0 0
  %8666 = vmatpush2.bf16.msra.mxu0 0
  %8667 = vmatprep.mubr.bf16.mxu0 0
  %8668 = vmatmul.mubr.bf16.gmra.mxu0 %v8537
  %v8669 = vpop.f32.mrf.mxu0
  %v8670 = vadd.f32 0.0, %v8669
  %v8671 = vpop.f32.mrf.mxu0
  %v8672 = vpop.f32.mrf.mxu0
  %v8673 = vadd.f32 0.0, %v8672
  %v8674 = vpop.f32.mrf.mxu0
  %8675 = vmatprep.mubr.bf16.mxu0 0
  %8676 = vmatmul.mubr.bf16.gmra.mxu0 %v8540
  %v8677 = vpop.f32.mrf.mxu0
  %v8678 = vadd.f32 0.0, %v8677
  %v8679 = vpop.f32.mrf.mxu0
  %v8680 = vpop.f32.mrf.mxu0
  %v8681 = vadd.f32 0.0, %v8680
  %v8682 = vpop.f32.mrf.mxu0
  %8683 = vmatprep.mubr.bf16.mxu0 0
  %8684 = vmatmul.mubr.bf16.gmra.mxu0 %v8543
  %v8685 = vpop.f32.mrf.mxu0
  %v8686 = vadd.f32 0.0, %v8685
  %v8687 = vpop.f32.mrf.mxu0
  %v8688 = vpop.f32.mrf.mxu0
  %v8689 = vadd.f32 0.0, %v8688
  %v8690 = vpop.f32.mrf.mxu0
  %8691 = vmatprep.mubr.bf16.mxu0 0
  %8692 = vmatmul.mubr.bf16.gmra.mxu0 %v8546
  %v8693 = vpop.f32.mrf.mxu0
  %v8694 = vadd.f32 0.0, %v8693
  %v8695 = vpop.f32.mrf.mxu0
  %v8696 = vpop.f32.mrf.mxu0
  %v8697 = vadd.f32 0.0, %v8696
  %v8698 = vpop.f32.mrf.mxu0
  %8699 = vmatprep.mubr.bf16.mxu0 0
  %8700 = vmatmul.mubr.bf16.gmra.mxu0 %v8549
  %v8701 = vpop.f32.mrf.mxu0
  %v8702 = vadd.f32 0.0, %v8701
  %v8703 = vpop.f32.mrf.mxu0
  %v8704 = vpop.f32.mrf.mxu0
  %v8705 = vadd.f32 0.0, %v8704
  %v8706 = vpop.f32.mrf.mxu0
  %8707 = vmatprep.mubr.bf16.mxu0 0
  %8708 = vmatmul.mubr.bf16.gmra.mxu0 %v8552
  %v8709 = vpop.f32.mrf.mxu0
  %v8710 = vadd.f32 0.0, %v8709
  %v8711 = vpop.f32.mrf.mxu0
  %v8712 = vpop.f32.mrf.mxu0
  %v8713 = vadd.f32 0.0, %v8712
  %v8714 = vpop.f32.mrf.mxu0
  %8715 = vmatprep.mubr.bf16.mxu0 0
  %8716 = vmatmul.mubr.bf16.gmra.mxu0 %v8555
  %v8717 = vpop.f32.mrf.mxu0
  %v8718 = vadd.f32 0.0, %v8717
  %v8719 = vpop.f32.mrf.mxu0
  %v8720 = vpop.f32.mrf.mxu0
  %v8721 = vadd.f32 0.0, %v8720
  %v8722 = vpop.f32.mrf.mxu0
  %8723 = vmatprep.mubr.bf16.mxu0 0
  %8724 = vmatmul.mubr.bf16.gmra.mxu0 %v8558
  %v8725 = vpop.f32.mrf.mxu0
  %v8726 = vadd.f32 0.0, %v8725
  %v8727 = vpop.f32.mrf.mxu0
  %v8728 = vpop.f32.mrf.mxu0
  %v8729 = vadd.f32 0.0, %v8728
  %v8730 = vpop.f32.mrf.mxu0
  %8731 = vmatprep.mubr.bf16.mxu0 0
  %8732 = vmatmul.mubr.bf16.gmra.mxu0 %v8561
  %v8733 = vpop.f32.mrf.mxu0
  %v8734 = vadd.f32 0.0, %v8733
  %v8735 = vpop.f32.mrf.mxu0
  %v8736 = vpop.f32.mrf.mxu0
  %v8737 = vadd.f32 0.0, %v8736
  %v8738 = vpop.f32.mrf.mxu0
  %8739 = vmatprep.mubr.bf16.mxu0 0
  %8740 = vmatmul.mubr.bf16.gmra.mxu0 %v8564
  %v8741 = vpop.f32.mrf.mxu0
  %v8742 = vadd.f32 0.0, %v8741
  %v8743 = vpop.f32.mrf.mxu0
  %v8744 = vpop.f32.mrf.mxu0
  %v8745 = vadd.f32 0.0, %v8744
  %v8746 = vpop.f32.mrf.mxu0
  %8747 = vmatprep.mubr.bf16.mxu0 0
  %8748 = vmatmul.mubr.bf16.gmra.mxu0 %v8567
  %v8749 = vpop.f32.mrf.mxu0
  %v8750 = vadd.f32 0.0, %v8749
  %v8751 = vpop.f32.mrf.mxu0
  %v8752 = vpop.f32.mrf.mxu0
  %v8753 = vadd.f32 0.0, %v8752
  %v8754 = vpop.f32.mrf.mxu0
  %8755 = vmatprep.mubr.bf16.mxu0 0
  %8756 = vmatmul.mubr.bf16.gmra.mxu0 %v8570
  %v8757 = vpop.f32.mrf.mxu0
  %v8758 = vadd.f32 0.0, %v8757
  %v8759 = vpop.f32.mrf.mxu0
  %v8760 = vpop.f32.mrf.mxu0
  %v8761 = vadd.f32 0.0, %v8760
  %v8762 = vpop.f32.mrf.mxu0
  %8763 = vmatprep.mubr.bf16.mxu0 0
  %8764 = vmatmul.mubr.bf16.gmra.mxu0 %v8573
  %v8765 = vpop.f32.mrf.mxu0
  %v8766 = vadd.f32 0.0, %v8765
  %v8767 = vpop.f32.mrf.mxu0
  %v8768 = vpop.f32.mrf.mxu0
  %v8769 = vadd.f32 0.0, %v8768
  %v8770 = vpop.f32.mrf.mxu0
  %8771 = vmatprep.mubr.bf16.mxu0 0
  %8772 = vmatmul.mubr.bf16.gmra.mxu0 %v8576
  %v8773 = vpop.f32.mrf.mxu0
  %v8774 = vadd.f32 0.0, %v8773
  %v8775 = vpop.f32.mrf.mxu0
  %v8776 = vpop.f32.mrf.mxu0
  %v8777 = vadd.f32 0.0, %v8776
  %v8778 = vpop.f32.mrf.mxu0
  %8779 = vmatprep.mubr.bf16.mxu0 0
  %8780 = vmatmul.mubr.bf16.gmra.mxu0 %v8579
  %v8781 = vpop.f32.mrf.mxu0
  %v8782 = vadd.f32 0.0, %v8781
  %v8783 = vpop.f32.mrf.mxu0
  %v8784 = vpop.f32.mrf.mxu0
  %v8785 = vadd.f32 0.0, %v8784
  %v8786 = vpop.f32.mrf.mxu0
  %8787 = vmatprep.mubr.bf16.mxu0 0
  %8788 = vmatmul.mubr.bf16.gmra.mxu0 %v8582
  %v8789 = vpop.f32.mrf.mxu0
  %v8790 = vadd.f32 0.0, %v8789
  %v8791 = vpop.f32.mrf.mxu0
  %v8792 = vpop.f32.mrf.mxu0
  %v8793 = vadd.f32 0.0, %v8792
  %v8794 = vpop.f32.mrf.mxu0
  %8795 = vmatprep.mubr.bf16.mxu0 0
  %8796 = vmatmul.mubr.bf16.gmra.mxu0 %v8585
  %v8797 = vpop.f32.mrf.mxu0
  %v8798 = vadd.f32 0.0, %v8797
  %v8799 = vpop.f32.mrf.mxu0
  %v8800 = vpop.f32.mrf.mxu0
  %v8801 = vadd.f32 0.0, %v8800
  %v8802 = vpop.f32.mrf.mxu0
  %8803 = vmatprep.mubr.bf16.mxu0 0
  %8804 = vmatmul.mubr.bf16.gmra.mxu0 %v8588
  %v8805 = vpop.f32.mrf.mxu0
  %v8806 = vadd.f32 0.0, %v8805
  %v8807 = vpop.f32.mrf.mxu0
  %v8808 = vpop.f32.mrf.mxu0
  %v8809 = vadd.f32 0.0, %v8808
  %v8810 = vpop.f32.mrf.mxu0
  %8811 = vmatprep.mubr.bf16.mxu0 0
  %8812 = vmatmul.mubr.bf16.gmra.mxu0 %v8591
  %v8813 = vpop.f32.mrf.mxu0
  %v8814 = vadd.f32 0.0, %v8813
  %v8815 = vpop.f32.mrf.mxu0
  %v8816 = vpop.f32.mrf.mxu0
  %v8817 = vadd.f32 0.0, %v8816
  %v8818 = vpop.f32.mrf.mxu0
  %8819 = vmatprep.mubr.bf16.mxu0 0
  %8820 = vmatmul.mubr.bf16.gmra.mxu0 %v8594
  %v8821 = vpop.f32.mrf.mxu0
  %v8822 = vadd.f32 0.0, %v8821
  %v8823 = vpop.f32.mrf.mxu0
  %v8824 = vpop.f32.mrf.mxu0
  %v8825 = vadd.f32 0.0, %v8824
  %v8826 = vpop.f32.mrf.mxu0
  %8827 = vmatprep.mubr.bf16.mxu0 0
  %8828 = vmatmul.mubr.bf16.gmra.mxu0 %v8597
  %v8829 = vpop.f32.mrf.mxu0
  %v8830 = vadd.f32 0.0, %v8829
  %v8831 = vpop.f32.mrf.mxu0
  %v8832 = vpop.f32.mrf.mxu0
  %v8833 = vadd.f32 0.0, %v8832
  %v8834 = vpop.f32.mrf.mxu0
  %8835 = vmatprep.mubr.bf16.mxu0 0
  %8836 = vmatmul.mubr.bf16.gmra.mxu0 %v8600
  %v8837 = vpop.f32.mrf.mxu0
  %v8838 = vadd.f32 0.0, %v8837
  %v8839 = vpop.f32.mrf.mxu0
  %v8840 = vpop.f32.mrf.mxu0
  %v8841 = vadd.f32 0.0, %v8840
  %v8842 = vpop.f32.mrf.mxu0
  %8843 = vmatprep.mubr.bf16.mxu0 0
  %8844 = vmatmul.mubr.bf16.gmra.mxu0 %v8603
  %v8845 = vpop.f32.mrf.mxu0
  %v8846 = vadd.f32 0.0, %v8845
  %v8847 = vpop.f32.mrf.mxu0
  %v8848 = vpop.f32.mrf.mxu0
  %v8849 = vadd.f32 0.0, %v8848
  %v8850 = vpop.f32.mrf.mxu0
  %8851 = vmatprep.mubr.bf16.mxu0 0
  %8852 = vmatmul.mubr.bf16.gmra.mxu0 %v8606
  %v8853 = vpop.f32.mrf.mxu0
  %v8854 = vadd.f32 0.0, %v8853
  %v8855 = vpop.f32.mrf.mxu0
  %v8856 = vpop.f32.mrf.mxu0
  %v8857 = vadd.f32 0.0, %v8856
  %v8858 = vpop.f32.mrf.mxu0
  %8859 = vmatprep.mubr.bf16.mxu0 0
  %8860 = vmatmul.mubr.bf16.gmra.mxu0 %v8609
  %v8861 = vpop.f32.mrf.mxu0
  %v8862 = vadd.f32 0.0, %v8861
  %v8863 = vpop.f32.mrf.mxu0
  %v8864 = vpop.f32.mrf.mxu0
  %v8865 = vadd.f32 0.0, %v8864
  %v8866 = vpop.f32.mrf.mxu0
  %8867 = vmatprep.mubr.bf16.mxu0 0
  %8868 = vmatmul.mubr.bf16.gmra.mxu0 %v8612
  %v8869 = vpop.f32.mrf.mxu0
  %v8870 = vadd.f32 0.0, %v8869
  %v8871 = vpop.f32.mrf.mxu0
  %v8872 = vpop.f32.mrf.mxu0
  %v8873 = vadd.f32 0.0, %v8872
  %v8874 = vpop.f32.mrf.mxu0
  %8875 = vmatprep.mubr.bf16.mxu0 0
  %8876 = vmatmul.mubr.bf16.gmra.mxu0 %v8615
  %v8877 = vpop.f32.mrf.mxu0
  %v8878 = vadd.f32 0.0, %v8877
  %v8879 = vpop.f32.mrf.mxu0
  %v8880 = vpop.f32.mrf.mxu0
  %v8881 = vadd.f32 0.0, %v8880
  %v8882 = vpop.f32.mrf.mxu0
  %8883 = vmatprep.mubr.bf16.mxu0 0
  %8884 = vmatmul.mubr.bf16.gmra.mxu0 %v8618
  %v8885 = vpop.f32.mrf.mxu0
  %v8886 = vadd.f32 0.0, %v8885
  %v8887 = vpop.f32.mrf.mxu0
  %v8888 = vpop.f32.mrf.mxu0
  %v8889 = vadd.f32 0.0, %v8888
  %v8890 = vpop.f32.mrf.mxu0
  %8891 = vmatprep.mubr.bf16.mxu0 0
  %8892 = vmatmul.mubr.bf16.gmra.mxu0 %v8621
  %v8893 = vpop.f32.mrf.mxu0
  %v8894 = vadd.f32 0.0, %v8893
  %v8895 = vpop.f32.mrf.mxu0
  %v8896 = vpop.f32.mrf.mxu0
  %v8897 = vadd.f32 0.0, %v8896
  %v8898 = vpop.f32.mrf.mxu0
  %8899 = vmatprep.mubr.bf16.mxu0 0
  %8900 = vmatmul.mubr.bf16.gmra.mxu0 %v8624
  %v8901 = vpop.f32.mrf.mxu0
  %v8902 = vadd.f32 0.0, %v8901
  %v8903 = vpop.f32.mrf.mxu0
  %v8904 = vpop.f32.mrf.mxu0
  %v8905 = vadd.f32 0.0, %v8904
  %v8906 = vpop.f32.mrf.mxu0
  %8907 = vmatprep.mubr.bf16.mxu0 0
  %8908 = vmatmul.mubr.bf16.gmra.mxu0 %v8627
  %v8909 = vpop.f32.mrf.mxu0
  %v8910 = vadd.f32 0.0, %v8909
  %v8911 = vpop.f32.mrf.mxu0
  %v8912 = vpop.f32.mrf.mxu0
  %v8913 = vadd.f32 0.0, %v8912
  %v8914 = vpop.f32.mrf.mxu0
  %8915 = vmatprep.mubr.bf16.mxu0 0
  %8916 = vmatmul.mubr.bf16.gmra.mxu0 %v8630
  %v8917 = vpop.f32.mrf.mxu0
  %v8918 = vadd.f32 0.0, %v8917
  %v8919 = vpop.f32.mrf.mxu0
  %v8920 = vpop.f32.mrf.mxu0
  %v8921 = vadd.f32 0.0, %v8920
  %v8922 = vpop.f32.mrf.mxu0
  %8923 = vdwg.mxu0
  %v8924 = vsel %vm4283, %v8670, 0.0
  %v8925 = vsel %vm4283, %v8673, 0.0
  %v8926 = vadd.f32 %v8924, %v8925
  %v8927 = vsel %vm4283, %v8678, 0.0
  %v8928 = vadd.f32 %v8926, %v8927
  %v8929 = vsel %vm4283, %v8681, 0.0
  %v8930 = vadd.f32 %v8928, %v8929
  %v8931 = vsel %vm4283, %v8686, 0.0
  %v8932 = vadd.f32 %v8930, %v8931
  %v8933 = vsel %vm4283, %v8689, 0.0
  %v8934 = vadd.f32 %v8932, %v8933
  %v8935 = vsel %vm4283, %v8694, 0.0
  %v8936 = vadd.f32 %v8934, %v8935
  %v8937 = vsel %vm4283, %v8697, 0.0
  %v8938 = vadd.f32 %v8936, %v8937
  %v8939 = vsel %vm4283, %v8702, 0.0
  %v8940 = vadd.f32 %v8938, %v8939
  %v8941 = vsel %vm4283, %v8705, 0.0
  %v8942 = vadd.f32 %v8940, %v8941
  %v8943 = vsel %vm4283, %v8710, 0.0
  %v8944 = vadd.f32 %v8942, %v8943
  %v8945 = vsel %vm4283, %v8713, 0.0
  %v8946 = vadd.f32 %v8944, %v8945
  %v8947 = vsel %vm4283, %v8718, 0.0
  %v8948 = vadd.f32 %v8946, %v8947
  %v8949 = vsel %vm4283, %v8721, 0.0
  %v8950 = vadd.f32 %v8948, %v8949
  %v8951 = vsel %vm4283, %v8726, 0.0
  %v8952 = vadd.f32 %v8950, %v8951
  %v8953 = vsel %vm4283, %v8729, 0.0
  %v8954 = vadd.f32 %v8952, %v8953
  %v8955 = vsel %vm4283, %v8734, 0.0
  %v8956 = vadd.f32 %v8954, %v8955
  %v8957 = vsel %vm4283, %v8737, 0.0
  %v8958 = vadd.f32 %v8956, %v8957
  %v8959 = vsel %vm4283, %v8742, 0.0
  %v8960 = vadd.f32 %v8958, %v8959
  %v8961 = vsel %vm4283, %v8745, 0.0
  %v8962 = vadd.f32 %v8960, %v8961
  %v8963 = vsel %vm4283, %v8750, 0.0
  %v8964 = vadd.f32 %v8962, %v8963
  %v8965 = vsel %vm4283, %v8753, 0.0
  %v8966 = vadd.f32 %v8964, %v8965
  %v8967 = vsel %vm4283, %v8758, 0.0
  %v8968 = vadd.f32 %v8966, %v8967
  %v8969 = vsel %vm4283, %v8761, 0.0
  %v8970 = vadd.f32 %v8968, %v8969
  %v8971 = vsel %vm4283, %v8766, 0.0
  %v8972 = vadd.f32 %v8970, %v8971
  %v8973 = vsel %vm4283, %v8769, 0.0
  %v8974 = vadd.f32 %v8972, %v8973
  %v8975 = vsel %vm4283, %v8774, 0.0
  %v8976 = vadd.f32 %v8974, %v8975
  %v8977 = vsel %vm4283, %v8777, 0.0
  %v8978 = vadd.f32 %v8976, %v8977
  %v8979 = vsel %vm4283, %v8782, 0.0
  %v8980 = vadd.f32 %v8978, %v8979
  %v8981 = vsel %vm4283, %v8785, 0.0
  %v8982 = vadd.f32 %v8980, %v8981
  %v8983 = vsel %vm4283, %v8790, 0.0
  %v8984 = vadd.f32 %v8982, %v8983
  %v8985 = vsel %vm4283, %v8793, 0.0
  %v8986 = vadd.f32 %v8984, %v8985
  %v8987 = vsel %vm4283, %v8798, 0.0
  %v8988 = vadd.f32 %v8986, %v8987
  %v8989 = vsel %vm4283, %v8801, 0.0
  %v8990 = vadd.f32 %v8988, %v8989
  %v8991 = vsel %vm4283, %v8806, 0.0
  %v8992 = vadd.f32 %v8990, %v8991
  %v8993 = vsel %vm4283, %v8809, 0.0
  %v8994 = vadd.f32 %v8992, %v8993
  %v8995 = vsel %vm4283, %v8814, 0.0
  %v8996 = vadd.f32 %v8994, %v8995
  %v8997 = vsel %vm4283, %v8817, 0.0
  %v8998 = vadd.f32 %v8996, %v8997
  %v8999 = vsel %vm4283, %v8822, 0.0
  %v9000 = vadd.f32 %v8998, %v8999
  %v9001 = vsel %vm4283, %v8825, 0.0
  %v9002 = vadd.f32 %v9000, %v9001
  %v9003 = vsel %vm4283, %v8830, 0.0
  %v9004 = vadd.f32 %v9002, %v9003
  %v9005 = vsel %vm4283, %v8833, 0.0
  %v9006 = vadd.f32 %v9004, %v9005
  %v9007 = vsel %vm4283, %v8838, 0.0
  %v9008 = vadd.f32 %v9006, %v9007
  %v9009 = vsel %vm4283, %v8841, 0.0
  %v9010 = vadd.f32 %v9008, %v9009
  %v9011 = vsel %vm4283, %v8846, 0.0
  %v9012 = vadd.f32 %v9010, %v9011
  %v9013 = vsel %vm4283, %v8849, 0.0
  %v9014 = vadd.f32 %v9012, %v9013
  %v9015 = vsel %vm4283, %v8854, 0.0
  %v9016 = vadd.f32 %v9014, %v9015
  %v9017 = vsel %vm4283, %v8857, 0.0
  %v9018 = vadd.f32 %v9016, %v9017
  %v9019 = vsel %vm4283, %v8862, 0.0
  %v9020 = vadd.f32 %v9018, %v9019
  %v9021 = vsel %vm4283, %v8865, 0.0
  %v9022 = vadd.f32 %v9020, %v9021
  %v9023 = vsel %vm4283, %v8870, 0.0
  %v9024 = vadd.f32 %v9022, %v9023
  %v9025 = vsel %vm4283, %v8873, 0.0
  %v9026 = vadd.f32 %v9024, %v9025
  %v9027 = vsel %vm4283, %v8878, 0.0
  %v9028 = vadd.f32 %v9026, %v9027
  %v9029 = vsel %vm4283, %v8881, 0.0
  %v9030 = vadd.f32 %v9028, %v9029
  %v9031 = vsel %vm4283, %v8886, 0.0
  %v9032 = vadd.f32 %v9030, %v9031
  %v9033 = vsel %vm4283, %v8889, 0.0
  %v9034 = vadd.f32 %v9032, %v9033
  %v9035 = vsel %vm4283, %v8894, 0.0
  %v9036 = vadd.f32 %v9034, %v9035
  %v9037 = vsel %vm4283, %v8897, 0.0
  %v9038 = vadd.f32 %v9036, %v9037
  %v9039 = vsel %vm4283, %v8902, 0.0
  %v9040 = vadd.f32 %v9038, %v9039
  %v9041 = vsel %vm4283, %v8905, 0.0
  %v9042 = vadd.f32 %v9040, %v9041
  %v9043 = vsel %vm4283, %v8910, 0.0
  %v9044 = vadd.f32 %v9042, %v9043
  %v9045 = vsel %vm4283, %v8913, 0.0
  %v9046 = vadd.f32 %v9044, %v9045
  %v9047 = vsel %vm4283, %v8918, 0.0
  %v9048 = vadd.f32 %v9046, %v9047
  %v9049 = vsel %vm4283, %v8921, 0.0
  %v9050 = vadd.f32 %v9048, %v9049
  %v9051 = vrot.slane %v9050, 4
  %v9052 = vadd.f32 %v9050, %v9051
  %v9053 = vrot.slane %v9052, 2
  %v9054 = vadd.f32 %v9052, %v9053
  %v9055 = vrot.slane %v9054, 1
  %v9056 = vadd.f32 %v9054, %v9055
  %v9057 = vmul.f32 %v8670, %v8670
  %v9058 = vmul.f32 %v8673, %v8673
  %v9059 = vmul.f32 %v8678, %v8678
  %v9060 = vmul.f32 %v8681, %v8681
  %v9061 = vmul.f32 %v8686, %v8686
  %v9062 = vmul.f32 %v8689, %v8689
  %v9063 = vmul.f32 %v8694, %v8694
  %v9064 = vmul.f32 %v8697, %v8697
  %v9065 = vmul.f32 %v8702, %v8702
  %v9066 = vmul.f32 %v8705, %v8705
  %v9067 = vmul.f32 %v8710, %v8710
  %v9068 = vmul.f32 %v8713, %v8713
  %v9069 = vmul.f32 %v8718, %v8718
  %v9070 = vmul.f32 %v8721, %v8721
  %v9071 = vmul.f32 %v8726, %v8726
  %v9072 = vmul.f32 %v8729, %v8729
  %v9073 = vmul.f32 %v8734, %v8734
  %v9074 = vmul.f32 %v8737, %v8737
  %v9075 = vmul.f32 %v8742, %v8742
  %v9076 = vmul.f32 %v8745, %v8745
  %v9077 = vmul.f32 %v8750, %v8750
  %v9078 = vmul.f32 %v8753, %v8753
  %v9079 = vmul.f32 %v8758, %v8758
  %v9080 = vmul.f32 %v8761, %v8761
  %v9081 = vmul.f32 %v8766, %v8766
  %v9082 = vmul.f32 %v8769, %v8769
  %v9083 = vmul.f32 %v8774, %v8774
  %v9084 = vmul.f32 %v8777, %v8777
  %v9085 = vmul.f32 %v8782, %v8782
  %v9086 = vmul.f32 %v8785, %v8785
  %v9087 = vmul.f32 %v8790, %v8790
  %v9088 = vmul.f32 %v8793, %v8793
  %v9089 = vmul.f32 %v8798, %v8798
  %v9090 = vmul.f32 %v8801, %v8801
  %v9091 = vmul.f32 %v8806, %v8806
  %v9092 = vmul.f32 %v8809, %v8809
  %v9093 = vmul.f32 %v8814, %v8814
  %v9094 = vmul.f32 %v8817, %v8817
  %v9095 = vmul.f32 %v8822, %v8822
  %v9096 = vmul.f32 %v8825, %v8825
  %v9097 = vmul.f32 %v8830, %v8830
  %v9098 = vmul.f32 %v8833, %v8833
  %v9099 = vmul.f32 %v8838, %v8838
  %v9100 = vmul.f32 %v8841, %v8841
  %v9101 = vmul.f32 %v8846, %v8846
  %v9102 = vmul.f32 %v8849, %v8849
  %v9103 = vmul.f32 %v8854, %v8854
  %v9104 = vmul.f32 %v8857, %v8857
  %v9105 = vmul.f32 %v8862, %v8862
  %v9106 = vmul.f32 %v8865, %v8865
  %v9107 = vmul.f32 %v8870, %v8870
  %v9108 = vmul.f32 %v8873, %v8873
  %v9109 = vmul.f32 %v8878, %v8878
  %v9110 = vmul.f32 %v8881, %v8881
  %v9111 = vmul.f32 %v8886, %v8886
  %v9112 = vmul.f32 %v8889, %v8889
  %v9113 = vmul.f32 %v8894, %v8894
  %v9114 = vmul.f32 %v8897, %v8897
  %v9115 = vmul.f32 %v8902, %v8902
  %v9116 = vmul.f32 %v8905, %v8905
  %v9117 = vmul.f32 %v8910, %v8910
  %v9118 = vmul.f32 %v8913, %v8913
  %v9119 = vmul.f32 %v8918, %v8918
  %v9120 = vmul.f32 %v8921, %v8921
  %v9121 = vsel %vm4283, %v9057, 0.0
  %v9122 = vsel %vm4283, %v9058, 0.0
  %v9123 = vadd.f32 %v9121, %v9122
  %v9124 = vsel %vm4283, %v9059, 0.0
  %v9125 = vadd.f32 %v9123, %v9124
  %v9126 = vsel %vm4283, %v9060, 0.0
  %v9127 = vadd.f32 %v9125, %v9126
  %v9128 = vsel %vm4283, %v9061, 0.0
  %v9129 = vadd.f32 %v9127, %v9128
  %v9130 = vsel %vm4283, %v9062, 0.0
  %v9131 = vadd.f32 %v9129, %v9130
  %v9132 = vsel %vm4283, %v9063, 0.0
  %v9133 = vadd.f32 %v9131, %v9132
  %v9134 = vsel %vm4283, %v9064, 0.0
  %v9135 = vadd.f32 %v9133, %v9134
  %v9136 = vsel %vm4283, %v9065, 0.0
  %v9137 = vadd.f32 %v9135, %v9136
  %v9138 = vsel %vm4283, %v9066, 0.0
  %v9139 = vadd.f32 %v9137, %v9138
  %v9140 = vsel %vm4283, %v9067, 0.0
  %v9141 = vadd.f32 %v9139, %v9140
  %v9142 = vsel %vm4283, %v9068, 0.0
  %v9143 = vadd.f32 %v9141, %v9142
  %v9144 = vsel %vm4283, %v9069, 0.0
  %v9145 = vadd.f32 %v9143, %v9144
  %v9146 = vsel %vm4283, %v9070, 0.0
  %v9147 = vadd.f32 %v9145, %v9146
  %v9148 = vsel %vm4283, %v9071, 0.0
  %v9149 = vadd.f32 %v9147, %v9148
  %v9150 = vsel %vm4283, %v9072, 0.0
  %v9151 = vadd.f32 %v9149, %v9150
  %v9152 = vsel %vm4283, %v9073, 0.0
  %v9153 = vadd.f32 %v9151, %v9152
  %v9154 = vsel %vm4283, %v9074, 0.0
  %v9155 = vadd.f32 %v9153, %v9154
  %v9156 = vsel %vm4283, %v9075, 0.0
  %v9157 = vadd.f32 %v9155, %v9156
  %v9158 = vsel %vm4283, %v9076, 0.0
  %v9159 = vadd.f32 %v9157, %v9158
  %v9160 = vsel %vm4283, %v9077, 0.0
  %v9161 = vadd.f32 %v9159, %v9160
  %v9162 = vsel %vm4283, %v9078, 0.0
  %v9163 = vadd.f32 %v9161, %v9162
  %v9164 = vsel %vm4283, %v9079, 0.0
  %v9165 = vadd.f32 %v9163, %v9164
  %v9166 = vsel %vm4283, %v9080, 0.0
  %v9167 = vadd.f32 %v9165, %v9166
  %v9168 = vsel %vm4283, %v9081, 0.0
  %v9169 = vadd.f32 %v9167, %v9168
  %v9170 = vsel %vm4283, %v9082, 0.0
  %v9171 = vadd.f32 %v9169, %v9170
  %v9172 = vsel %vm4283, %v9083, 0.0
  %v9173 = vadd.f32 %v9171, %v9172
  %v9174 = vsel %vm4283, %v9084, 0.0
  %v9175 = vadd.f32 %v9173, %v9174
  %v9176 = vsel %vm4283, %v9085, 0.0
  %v9177 = vadd.f32 %v9175, %v9176
  %v9178 = vsel %vm4283, %v9086, 0.0
  %v9179 = vadd.f32 %v9177, %v9178
  %v9180 = vsel %vm4283, %v9087, 0.0
  %v9181 = vadd.f32 %v9179, %v9180
  %v9182 = vsel %vm4283, %v9088, 0.0
  %v9183 = vadd.f32 %v9181, %v9182
  %v9184 = vsel %vm4283, %v9089, 0.0
  %v9185 = vadd.f32 %v9183, %v9184
  %v9186 = vsel %vm4283, %v9090, 0.0
  %v9187 = vadd.f32 %v9185, %v9186
  %v9188 = vsel %vm4283, %v9091, 0.0
  %v9189 = vadd.f32 %v9187, %v9188
  %v9190 = vsel %vm4283, %v9092, 0.0
  %v9191 = vadd.f32 %v9189, %v9190
  %v9192 = vsel %vm4283, %v9093, 0.0
  %v9193 = vadd.f32 %v9191, %v9192
  %v9194 = vsel %vm4283, %v9094, 0.0
  %v9195 = vadd.f32 %v9193, %v9194
  %v9196 = vsel %vm4283, %v9095, 0.0
  %v9197 = vadd.f32 %v9195, %v9196
  %v9198 = vsel %vm4283, %v9096, 0.0
  %v9199 = vadd.f32 %v9197, %v9198
  %v9200 = vsel %vm4283, %v9097, 0.0
  %v9201 = vadd.f32 %v9199, %v9200
  %v9202 = vsel %vm4283, %v9098, 0.0
  %v9203 = vadd.f32 %v9201, %v9202
  %v9204 = vsel %vm4283, %v9099, 0.0
  %v9205 = vadd.f32 %v9203, %v9204
  %v9206 = vsel %vm4283, %v9100, 0.0
  %v9207 = vadd.f32 %v9205, %v9206
  %v9208 = vsel %vm4283, %v9101, 0.0
  %v9209 = vadd.f32 %v9207, %v9208
  %v9210 = vsel %vm4283, %v9102, 0.0
  %v9211 = vadd.f32 %v9209, %v9210
  %v9212 = vsel %vm4283, %v9103, 0.0
  %v9213 = vadd.f32 %v9211, %v9212
  %v9214 = vsel %vm4283, %v9104, 0.0
  %v9215 = vadd.f32 %v9213, %v9214
  %v9216 = vsel %vm4283, %v9105, 0.0
  %v9217 = vadd.f32 %v9215, %v9216
  %v9218 = vsel %vm4283, %v9106, 0.0
  %v9219 = vadd.f32 %v9217, %v9218
  %v9220 = vsel %vm4283, %v9107, 0.0
  %v9221 = vadd.f32 %v9219, %v9220
  %v9222 = vsel %vm4283, %v9108, 0.0
  %v9223 = vadd.f32 %v9221, %v9222
  %v9224 = vsel %vm4283, %v9109, 0.0
  %v9225 = vadd.f32 %v9223, %v9224
  %v9226 = vsel %vm4283, %v9110, 0.0
  %v9227 = vadd.f32 %v9225, %v9226
  %v9228 = vsel %vm4283, %v9111, 0.0
  %v9229 = vadd.f32 %v9227, %v9228
  %v9230 = vsel %vm4283, %v9112, 0.0
  %v9231 = vadd.f32 %v9229, %v9230
  %v9232 = vsel %vm4283, %v9113, 0.0
  %v9233 = vadd.f32 %v9231, %v9232
  %v9234 = vsel %vm4283, %v9114, 0.0
  %v9235 = vadd.f32 %v9233, %v9234
  %v9236 = vsel %vm4283, %v9115, 0.0
  %v9237 = vadd.f32 %v9235, %v9236
  %v9238 = vsel %vm4283, %v9116, 0.0
  %v9239 = vadd.f32 %v9237, %v9238
  %v9240 = vsel %vm4283, %v9117, 0.0
  %v9241 = vadd.f32 %v9239, %v9240
  %v9242 = vsel %vm4283, %v9118, 0.0
  %v9243 = vadd.f32 %v9241, %v9242
  %v9244 = vsel %vm4283, %v9119, 0.0
  %v9245 = vadd.f32 %v9243, %v9244
  %v9246 = vsel %vm4283, %v9120, 0.0
  %v9247 = vadd.f32 %v9245, %v9246
  %v9248 = vrot.slane %v9247, 4
  %v9249 = vadd.f32 %v9247, %v9248
  %v9250 = vrot.slane %v9249, 2
  %v9251 = vadd.f32 %v9249, %v9250
  %v9252 = vrot.slane %v9251, 1
  %v9253 = vadd.f32 %v9251, %v9252
  %v9254 = vmul.f32 %v9056, 0.001953125
  %v9255 = vmul.f32 %v9253, 0.001953125
  %v9256 = vmul.f32 %v9254, %v9254
  %v9257 = vsub.f32 %v9255, %v9256
  %v9258 = vmax.f32 %v9257, 0.0
  %v9259 = vadd.f32 %v9258, 1e-05
  %v9260 = vrsqrt.pop %v9259
  %v9261 = vld [vmem:[%s5] sm:$0x1]
  %v9262 = vmul.f32 %v9260, %v9261
  %v9263 = vld [vmem:[%s6] sm:$0x1]
  %v9264 = vmul.f32 %v9254, %v9262
  %v9265 = vsub.f32 %v9263, %v9264
  %v9266 = vlaneseq
  %v9267 = vshrl.u32 %v9266, 7
  %v9268 = vsub.s32 0, %v9267
  %v9269 = vrot.slane %v9262, %v9268
  %v9270 = vmul.f32 %v8670, %v9269
  %v9271 = vmul.f32 %v8673, %v9269
  %v9272 = vmul.f32 %v8678, %v9269
  %v9273 = vmul.f32 %v8681, %v9269
  %v9274 = vmul.f32 %v8686, %v9269
  %v9275 = vmul.f32 %v8689, %v9269
  %v9276 = vmul.f32 %v8694, %v9269
  %v9277 = vmul.f32 %v8697, %v9269
  %v9278 = vmul.f32 %v8702, %v9269
  %v9279 = vmul.f32 %v8705, %v9269
  %v9280 = vmul.f32 %v8710, %v9269
  %v9281 = vmul.f32 %v8713, %v9269
  %v9282 = vmul.f32 %v8718, %v9269
  %v9283 = vmul.f32 %v8721, %v9269
  %v9284 = vmul.f32 %v8726, %v9269
  %v9285 = vmul.f32 %v8729, %v9269
  %v9286 = vmul.f32 %v8734, %v9269
  %v9287 = vmul.f32 %v8737, %v9269
  %v9288 = vmul.f32 %v8742, %v9269
  %v9289 = vmul.f32 %v8745, %v9269
  %v9290 = vmul.f32 %v8750, %v9269
  %v9291 = vmul.f32 %v8753, %v9269
  %v9292 = vmul.f32 %v8758, %v9269
  %v9293 = vmul.f32 %v8761, %v9269
  %v9294 = vmul.f32 %v8766, %v9269
  %v9295 = vmul.f32 %v8769, %v9269
  %v9296 = vmul.f32 %v8774, %v9269
  %v9297 = vmul.f32 %v8777, %v9269
  %v9298 = vmul.f32 %v8782, %v9269
  %v9299 = vmul.f32 %v8785, %v9269
  %v9300 = vmul.f32 %v8790, %v9269
  %v9301 = vmul.f32 %v8793, %v9269
  %v9302 = vmul.f32 %v8798, %v9269
  %v9303 = vmul.f32 %v8801, %v9269
  %v9304 = vmul.f32 %v8806, %v9269
  %v9305 = vmul.f32 %v8809, %v9269
  %v9306 = vmul.f32 %v8814, %v9269
  %v9307 = vmul.f32 %v8817, %v9269
  %v9308 = vmul.f32 %v8822, %v9269
  %v9309 = vmul.f32 %v8825, %v9269
  %v9310 = vmul.f32 %v8830, %v9269
  %v9311 = vmul.f32 %v8833, %v9269
  %v9312 = vmul.f32 %v8838, %v9269
  %v9313 = vmul.f32 %v8841, %v9269
  %v9314 = vmul.f32 %v8846, %v9269
  %v9315 = vmul.f32 %v8849, %v9269
  %v9316 = vmul.f32 %v8854, %v9269
  %v9317 = vmul.f32 %v8857, %v9269
  %v9318 = vmul.f32 %v8862, %v9269
  %v9319 = vmul.f32 %v8865, %v9269
  %v9320 = vmul.f32 %v8870, %v9269
  %v9321 = vmul.f32 %v8873, %v9269
  %v9322 = vmul.f32 %v8878, %v9269
  %v9323 = vmul.f32 %v8881, %v9269
  %v9324 = vmul.f32 %v8886, %v9269
  %v9325 = vmul.f32 %v8889, %v9269
  %v9326 = vmul.f32 %v8894, %v9269
  %v9327 = vmul.f32 %v8897, %v9269
  %v9328 = vmul.f32 %v8902, %v9269
  %v9329 = vmul.f32 %v8905, %v9269
  %v9330 = vmul.f32 %v8910, %v9269
  %v9331 = vmul.f32 %v8913, %v9269
  %v9332 = vmul.f32 %v8918, %v9269
  %v9333 = vmul.f32 %v8921, %v9269
  %v9335 = vlaneseq
  %v9336 = vshrl.u32 %v9335, 7
  %v9337 = vsub.s32 0, %v9336
  %v9338 = vrot.slane %v9265, %v9337
  %v9340 = vadd.f32 %v9270, %v9338
  %v9341 = vadd.f32 %v9271, %v9338
  %v9342 = vadd.f32 %v9272, %v9338
  %v9343 = vadd.f32 %v9273, %v9338
  %v9344 = vadd.f32 %v9274, %v9338
  %v9345 = vadd.f32 %v9275, %v9338
  %v9346 = vadd.f32 %v9276, %v9338
  %v9347 = vadd.f32 %v9277, %v9338
  %v9348 = vadd.f32 %v9278, %v9338
  %v9349 = vadd.f32 %v9279, %v9338
  %v9350 = vadd.f32 %v9280, %v9338
  %v9351 = vadd.f32 %v9281, %v9338
  %v9352 = vadd.f32 %v9282, %v9338
  %v9353 = vadd.f32 %v9283, %v9338
  %v9354 = vadd.f32 %v9284, %v9338
  %v9355 = vadd.f32 %v9285, %v9338
  %v9356 = vadd.f32 %v9286, %v9338
  %v9357 = vadd.f32 %v9287, %v9338
  %v9358 = vadd.f32 %v9288, %v9338
  %v9359 = vadd.f32 %v9289, %v9338
  %v9360 = vadd.f32 %v9290, %v9338
  %v9361 = vadd.f32 %v9291, %v9338
  %v9362 = vadd.f32 %v9292, %v9338
  %v9363 = vadd.f32 %v9293, %v9338
  %v9364 = vadd.f32 %v9294, %v9338
  %v9365 = vadd.f32 %v9295, %v9338
  %v9366 = vadd.f32 %v9296, %v9338
  %v9367 = vadd.f32 %v9297, %v9338
  %v9368 = vadd.f32 %v9298, %v9338
  %v9369 = vadd.f32 %v9299, %v9338
  %v9370 = vadd.f32 %v9300, %v9338
  %v9371 = vadd.f32 %v9301, %v9338
  %v9372 = vadd.f32 %v9302, %v9338
  %v9373 = vadd.f32 %v9303, %v9338
  %v9374 = vadd.f32 %v9304, %v9338
  %v9375 = vadd.f32 %v9305, %v9338
  %v9376 = vadd.f32 %v9306, %v9338
  %v9377 = vadd.f32 %v9307, %v9338
  %v9378 = vadd.f32 %v9308, %v9338
  %v9379 = vadd.f32 %v9309, %v9338
  %v9380 = vadd.f32 %v9310, %v9338
  %v9381 = vadd.f32 %v9311, %v9338
  %v9382 = vadd.f32 %v9312, %v9338
  %v9383 = vadd.f32 %v9313, %v9338
  %v9384 = vadd.f32 %v9314, %v9338
  %v9385 = vadd.f32 %v9315, %v9338
  %v9386 = vadd.f32 %v9316, %v9338
  %v9387 = vadd.f32 %v9317, %v9338
  %v9388 = vadd.f32 %v9318, %v9338
  %v9389 = vadd.f32 %v9319, %v9338
  %v9390 = vadd.f32 %v9320, %v9338
  %v9391 = vadd.f32 %v9321, %v9338
  %v9392 = vadd.f32 %v9322, %v9338
  %v9393 = vadd.f32 %v9323, %v9338
  %v9394 = vadd.f32 %v9324, %v9338
  %v9395 = vadd.f32 %v9325, %v9338
  %v9396 = vadd.f32 %v9326, %v9338
  %v9397 = vadd.f32 %v9327, %v9338
  %v9398 = vadd.f32 %v9328, %v9338
  %v9399 = vadd.f32 %v9329, %v9338
  %v9400 = vadd.f32 %v9330, %v9338
  %v9401 = vadd.f32 %v9331, %v9338
  %v9402 = vadd.f32 %v9332, %v9338
  %v9403 = vadd.f32 %v9333, %v9338
  %v9404 = vadd.f32 %v9340, %v92
  %v9405 = vadd.f32 %v9341, %v93
  %v9406 = vadd.f32 %v9342, %v94
  %v9407 = vadd.f32 %v9343, %v95
  %v9408 = vadd.f32 %v9344, %v96
  %v9409 = vadd.f32 %v9345, %v97
  %v9410 = vadd.f32 %v9346, %v98
  %v9411 = vadd.f32 %v9347, %v99
  %v9412 = vadd.f32 %v9348, %v100
  %v9413 = vadd.f32 %v9349, %v101
  %v9414 = vadd.f32 %v9350, %v102
  %v9415 = vadd.f32 %v9351, %v103
  %v9416 = vadd.f32 %v9352, %v104
  %v9417 = vadd.f32 %v9353, %v105
  %v9418 = vadd.f32 %v9354, %v106
  %v9419 = vadd.f32 %v9355, %v107
  %v9420 = vadd.f32 %v9356, %v108
  %v9421 = vadd.f32 %v9357, %v109
  %v9422 = vadd.f32 %v9358, %v110
  %v9423 = vadd.f32 %v9359, %v111
  %v9424 = vadd.f32 %v9360, %v112
  %v9425 = vadd.f32 %v9361, %v113
  %v9426 = vadd.f32 %v9362, %v114
  %v9427 = vadd.f32 %v9363, %v115
  %v9428 = vadd.f32 %v9364, %v116
  %v9429 = vadd.f32 %v9365, %v117
  %v9430 = vadd.f32 %v9366, %v118
  %v9431 = vadd.f32 %v9367, %v119
  %v9432 = vadd.f32 %v9368, %v120
  %v9433 = vadd.f32 %v9369, %v121
  %v9434 = vadd.f32 %v9370, %v122
  %v9435 = vadd.f32 %v9371, %v123
  %v9436 = vadd.f32 %v9372, %v124
  %v9437 = vadd.f32 %v9373, %v125
  %v9438 = vadd.f32 %v9374, %v126
  %v9439 = vadd.f32 %v9375, %v127
  %v9440 = vadd.f32 %v9376, %v128
  %v9441 = vadd.f32 %v9377, %v129
  %v9442 = vadd.f32 %v9378, %v130
  %v9443 = vadd.f32 %v9379, %v131
  %v9444 = vadd.f32 %v9380, %v132
  %v9445 = vadd.f32 %v9381, %v133
  %v9446 = vadd.f32 %v9382, %v134
  %v9447 = vadd.f32 %v9383, %v135
  %v9448 = vadd.f32 %v9384, %v136
  %v9449 = vadd.f32 %v9385, %v137
  %v9450 = vadd.f32 %v9386, %v138
  %v9451 = vadd.f32 %v9387, %v139
  %v9452 = vadd.f32 %v9388, %v140
  %v9453 = vadd.f32 %v9389, %v141
  %v9454 = vadd.f32 %v9390, %v142
  %v9455 = vadd.f32 %v9391, %v143
  %v9456 = vadd.f32 %v9392, %v144
  %v9457 = vadd.f32 %v9393, %v145
  %v9458 = vadd.f32 %v9394, %v146
  %v9459 = vadd.f32 %v9395, %v147
  %v9460 = vadd.f32 %v9396, %v148
  %v9461 = vadd.f32 %v9397, %v149
  %v9462 = vadd.f32 %v9398, %v150
  %v9463 = vadd.f32 %v9399, %v151
  %v9464 = vadd.f32 %v9400, %v152
  %v9465 = vadd.f32 %v9401, %v153
  %v9466 = vadd.f32 %v9402, %v154
  %v9467 = vadd.f32 %v9403, %v155
  %v9468 = vmax.f32 %v9404, 0.0
  %v9469 = vmax.f32 %v9405, 0.0
  %v9470 = vmax.f32 %v9406, 0.0
  %v9471 = vmax.f32 %v9407, 0.0
  %v9472 = vmax.f32 %v9408, 0.0
  %v9473 = vmax.f32 %v9409, 0.0
  %v9474 = vmax.f32 %v9410, 0.0
  %v9475 = vmax.f32 %v9411, 0.0
  %v9476 = vmax.f32 %v9412, 0.0
  %v9477 = vmax.f32 %v9413, 0.0
  %v9478 = vmax.f32 %v9414, 0.0
  %v9479 = vmax.f32 %v9415, 0.0
  %v9480 = vmax.f32 %v9416, 0.0
  %v9481 = vmax.f32 %v9417, 0.0
  %v9482 = vmax.f32 %v9418, 0.0
  %v9483 = vmax.f32 %v9419, 0.0
  %v9484 = vmax.f32 %v9420, 0.0
  %v9485 = vmax.f32 %v9421, 0.0
  %v9486 = vmax.f32 %v9422, 0.0
  %v9487 = vmax.f32 %v9423, 0.0
  %v9488 = vmax.f32 %v9424, 0.0
  %v9489 = vmax.f32 %v9425, 0.0
  %v9490 = vmax.f32 %v9426, 0.0
  %v9491 = vmax.f32 %v9427, 0.0
  %v9492 = vmax.f32 %v9428, 0.0
  %v9493 = vmax.f32 %v9429, 0.0
  %v9494 = vmax.f32 %v9430, 0.0
  %v9495 = vmax.f32 %v9431, 0.0
  %v9496 = vmax.f32 %v9432, 0.0
  %v9497 = vmax.f32 %v9433, 0.0
  %v9498 = vmax.f32 %v9434, 0.0
  %v9499 = vmax.f32 %v9435, 0.0
  %v9500 = vmax.f32 %v9436, 0.0
  %v9501 = vmax.f32 %v9437, 0.0
  %v9502 = vmax.f32 %v9438, 0.0
  %v9503 = vmax.f32 %v9439, 0.0
  %v9504 = vmax.f32 %v9440, 0.0
  %v9505 = vmax.f32 %v9441, 0.0
  %v9506 = vmax.f32 %v9442, 0.0
  %v9507 = vmax.f32 %v9443, 0.0
  %v9508 = vmax.f32 %v9444, 0.0
  %v9509 = vmax.f32 %v9445, 0.0
  %v9510 = vmax.f32 %v9446, 0.0
  %v9511 = vmax.f32 %v9447, 0.0
  %v9512 = vmax.f32 %v9448, 0.0
  %v9513 = vmax.f32 %v9449, 0.0
  %v9514 = vmax.f32 %v9450, 0.0
  %v9515 = vmax.f32 %v9451, 0.0
  %v9516 = vmax.f32 %v9452, 0.0
  %v9517 = vmax.f32 %v9453, 0.0
  %v9518 = vmax.f32 %v9454, 0.0
  %v9519 = vmax.f32 %v9455, 0.0
  %v9520 = vmax.f32 %v9456, 0.0
  %v9521 = vmax.f32 %v9457, 0.0
  %v9522 = vmax.f32 %v9458, 0.0
  %v9523 = vmax.f32 %v9459, 0.0
  %v9524 = vmax.f32 %v9460, 0.0
  %v9525 = vmax.f32 %v9461, 0.0
  %v9526 = vmax.f32 %v9462, 0.0
  %v9527 = vmax.f32 %v9463, 0.0
  %v9528 = vmax.f32 %v9464, 0.0
  %v9529 = vmax.f32 %v9465, 0.0
  %v9530 = vmax.f32 %v9466, 0.0
  %v9531 = vmax.f32 %v9467, 0.0
  %9532 = vst.msk [vmem:[%s7] sm:$0xff] %vm4283, %v9468
  %9533 = vst.msk [vmem:[%s7 + $0x8] sm:$0xff] %vm4283, %v9469
  %9534 = vst.msk [vmem:[%s7 + $0x10] sm:$0xff] %vm4283, %v9470
  %9535 = vst.msk [vmem:[%s7 + $0x18] sm:$0xff] %vm4283, %v9471
  %9536 = vst.msk [vmem:[%s7 + $0x20] sm:$0xff] %vm4283, %v9472
  %9537 = vst.msk [vmem:[%s7 + $0x28] sm:$0xff] %vm4283, %v9473
  %9538 = vst.msk [vmem:[%s7 + $0x30] sm:$0xff] %vm4283, %v9474
  %9539 = vst.msk [vmem:[%s7 + $0x38] sm:$0xff] %vm4283, %v9475
  %9540 = vst.msk [vmem:[%s7 + $0x40] sm:$0xff] %vm4283, %v9476
  %9541 = vst.msk [vmem:[%s7 + $0x48] sm:$0xff] %vm4283, %v9477
  %9542 = vst.msk [vmem:[%s7 + $0x50] sm:$0xff] %vm4283, %v9478
  %9543 = vst.msk [vmem:[%s7 + $0x58] sm:$0xff] %vm4283, %v9479
  %9544 = vst.msk [vmem:[%s7 + $0x60] sm:$0xff] %vm4283, %v9480
  %9545 = vst.msk [vmem:[%s7 + $0x68] sm:$0xff] %vm4283, %v9481
  %9546 = vst.msk [vmem:[%s7 + $0x70] sm:$0xff] %vm4283, %v9482
  %9547 = vst.msk [vmem:[%s7 + $0x78] sm:$0xff] %vm4283, %v9483
  %9548 = vst.msk [vmem:[%s7 + $0x80] sm:$0xff] %vm4283, %v9484
  %9549 = vst.msk [vmem:[%s7 + $0x88] sm:$0xff] %vm4283, %v9485
  %9550 = vst.msk [vmem:[%s7 + $0x90] sm:$0xff] %vm4283, %v9486
  %9551 = vst.msk [vmem:[%s7 + $0x98] sm:$0xff] %vm4283, %v9487
  %9552 = vst.msk [vmem:[%s7 + $0xa0] sm:$0xff] %vm4283, %v9488
  %9553 = vst.msk [vmem:[%s7 + $0xa8] sm:$0xff] %vm4283, %v9489
  %9554 = vst.msk [vmem:[%s7 + $0xb0] sm:$0xff] %vm4283, %v9490
  %9555 = vst.msk [vmem:[%s7 + $0xb8] sm:$0xff] %vm4283, %v9491
  %9556 = vst.msk [vmem:[%s7 + $0xc0] sm:$0xff] %vm4283, %v9492
  %9557 = vst.msk [vmem:[%s7 + $0xc8] sm:$0xff] %vm4283, %v9493
  %9558 = vst.msk [vmem:[%s7 + $0xd0] sm:$0xff] %vm4283, %v9494
  %9559 = vst.msk [vmem:[%s7 + $0xd8] sm:$0xff] %vm4283, %v9495
  %9560 = vst.msk [vmem:[%s7 + $0xe0] sm:$0xff] %vm4283, %v9496
  %9561 = vst.msk [vmem:[%s7 + $0xe8] sm:$0xff] %vm4283, %v9497
  %9562 = vst.msk [vmem:[%s7 + $0xf0] sm:$0xff] %vm4283, %v9498
  %9563 = vst.msk [vmem:[%s7 + $0xf8] sm:$0xff] %vm4283, %v9499
  %9564 = vst.msk [vmem:[%s7 + $0x100] sm:$0xff] %vm4283, %v9500
  %9565 = vst.msk [vmem:[%s7 + $0x108] sm:$0xff] %vm4283, %v9501
  %9566 = vst.msk [vmem:[%s7 + $0x110] sm:$0xff] %vm4283, %v9502
  %9567 = vst.msk [vmem:[%s7 + $0x118] sm:$0xff] %vm4283, %v9503
  %9568 = vst.msk [vmem:[%s7 + $0x120] sm:$0xff] %vm4283, %v9504
  %9569 = vst.msk [vmem:[%s7 + $0x128] sm:$0xff] %vm4283, %v9505
  %9570 = vst.msk [vmem:[%s7 + $0x130] sm:$0xff] %vm4283, %v9506
  %9571 = vst.msk [vmem:[%s7 + $0x138] sm:$0xff] %vm4283, %v9507
  %9572 = vst.msk [vmem:[%s7 + $0x140] sm:$0xff] %vm4283, %v9508
  %9573 = vst.msk [vmem:[%s7 + $0x148] sm:$0xff] %vm4283, %v9509
  %9574 = vst.msk [vmem:[%s7 + $0x150] sm:$0xff] %vm4283, %v9510
  %9575 = vst.msk [vmem:[%s7 + $0x158] sm:$0xff] %vm4283, %v9511
  %9576 = vst.msk [vmem:[%s7 + $0x160] sm:$0xff] %vm4283, %v9512
  %9577 = vst.msk [vmem:[%s7 + $0x168] sm:$0xff] %vm4283, %v9513
  %9578 = vst.msk [vmem:[%s7 + $0x170] sm:$0xff] %vm4283, %v9514
  %9579 = vst.msk [vmem:[%s7 + $0x178] sm:$0xff] %vm4283, %v9515
  %9580 = vst.msk [vmem:[%s7 + $0x180] sm:$0xff] %vm4283, %v9516
  %9581 = vst.msk [vmem:[%s7 + $0x188] sm:$0xff] %vm4283, %v9517
  %9582 = vst.msk [vmem:[%s7 + $0x190] sm:$0xff] %vm4283, %v9518
  %9583 = vst.msk [vmem:[%s7 + $0x198] sm:$0xff] %vm4283, %v9519
  %9584 = vst.msk [vmem:[%s7 + $0x1a0] sm:$0xff] %vm4283, %v9520
  %9585 = vst.msk [vmem:[%s7 + $0x1a8] sm:$0xff] %vm4283, %v9521
  %9586 = vst.msk [vmem:[%s7 + $0x1b0] sm:$0xff] %vm4283, %v9522
  %9587 = vst.msk [vmem:[%s7 + $0x1b8] sm:$0xff] %vm4283, %v9523
  %9588 = vst.msk [vmem:[%s7 + $0x1c0] sm:$0xff] %vm4283, %v9524
  %9589 = vst.msk [vmem:[%s7 + $0x1c8] sm:$0xff] %vm4283, %v9525
  %9590 = vst.msk [vmem:[%s7 + $0x1d0] sm:$0xff] %vm4283, %v9526
  %9591 = vst.msk [vmem:[%s7 + $0x1d8] sm:$0xff] %vm4283, %v9527
  %9592 = vst.msk [vmem:[%s7 + $0x1e0] sm:$0xff] %vm4283, %v9528
  %9593 = vst.msk [vmem:[%s7 + $0x1e8] sm:$0xff] %vm4283, %v9529
  %9594 = vst.msk [vmem:[%s7 + $0x1f0] sm:$0xff] %vm4283, %v9530
  %9595 = vst.msk [vmem:[%s7 + $0x1f8] sm:$0xff] %vm4283, %v9531
  // Predicated region
  $region30: #{tpu_custom_call.1} parent=0 // pred_check
    _
  $region31: #{tpu_custom_call.1} parent=0 // pred_check_branch
    %9597 = sbr.rel (0) target = $region33
  $region32: #{tpu_custom_call.1} parent=0 // pred_region
    _
  $region33: #{tpu_custom_call.1} parent=0 // pred_fallthru
    _
  // Predicated region
  $region34: #{tpu_custom_call.1} parent=0 // pred_check
    _
  $region35: #{tpu_custom_call.1} parent=0 // pred_check_branch
    %9599 = sbr.rel (0) target = $region37
  $region36: #{tpu_custom_call.1} parent=0 // pred_region
    _
  $region37: #{tpu_custom_call.1} parent=0 // pred_fallthru
    _

</llo_original>
